<compile_context>
chip_gen: v7x
topology: tpu7x:2x2x1
jax: 0.10.0
libtpu: 0.0.40
codegen_flags: <defaults>
</compile_context>

<pallas_src>
import functools
import math

import jax
import jax.numpy as jnp
from jax import lax
from jax.experimental import pallas as pl
from jax.experimental.pallas import tpu as pltpu

EPS = 1e-5


def _round_up(v, m):
    return (v + m - 1) // m * m


# --------------------------------------------------------------------------
# Fused Pallas kernel: BN1+ReLU -> conv1 -> BN2+ReLU -> conv2 + bias + residual
# --------------------------------------------------------------------------
def _basic_ds_block2_kernel(x_ref, m_ref, w1_ref, w2_ref, p_ref, o_ref,
                            a1_ref, a2_ref, *, TH, Wx):
    f32 = jnp.float32
    bf16 = jnp.bfloat16
    C = o_ref.shape[-1]
    M2 = (TH + 2) * Wx          # conv1 is computed on a (TH+2)-row halo window
    M3 = TH * Wx                # rows of the final output tile (flattened plane)

    s1 = p_ref[0]               # BN1 scale
    t1 = p_ref[1]               # BN1 shift
    s2 = p_ref[2]               # BN2 scale
    sh2 = p_ref[3]              # BN2 shift with conv1 bias folded in
    b2 = p_ref[4]               # conv2 bias

    # ---- stage 1: BN1 + ReLU on the raw input plane ------------------------
    # The 0/1 mask re-zeroes the spatial padding (relu(0*s1 + t1) != 0 in
    # general), which implements conv1's zero padding of relu(bn1(x)).
    x = x_ref[...]                                        # (QS, C) f32
    a1_ref[...] = jnp.maximum(x * s1 + t1, 0.0) * m_ref[...]

    # ---- stage 2: conv1 (3x3, pad=1, stride=1) + fused BN2 + ReLU ----------
    # 9 shifted contiguous-slab matmuls on the flattened plane (bf16 -> MXU,
    # f32 accumulate). The shifted mask supplies conv2's zero padding.
    acc1 = jnp.zeros((M2, C), f32)
    for kh in range(3):
        for kw in range(3):
            tap = a1_ref[pl.ds(kh * Wx + kw, M2), :].astype(bf16)
            acc1 = acc1 + jnp.dot(tap, w1_ref[kh * 3 + kw],
                                  preferred_element_type=f32)
    a2 = jnp.maximum(acc1 * s2 + sh2, 0.0) * m_ref[pl.ds(Wx + 1, M2), :]
    a2_ref[pl.ds(0, M2), :] = a2
    a2_ref[pl.ds(M2, 8), :] = jnp.zeros((8, C), f32)      # slack rows for edge taps

    # ---- stage 3: conv2 (3x3, pad=1) + bias + identity residual ------------
    acc2 = jnp.zeros((M3, C), f32)
    for kh in range(3):
        for kw in range(3):
            tap = a2_ref[pl.ds(kh * Wx + kw, M3), :].astype(bf16)
            acc2 = acc2 + jnp.dot(tap, w2_ref[kh * 3 + kw],
                                  preferred_element_type=f32)
    residual = x_ref[pl.ds(2 * Wx + 2, M3), :]            # raw input tile (f32 exact)
    o_ref[...] = acc2 + b2 + residual


# --------------------------------------------------------------------------
# Wrapper: layout plumbing + parameter folding + pallas_call
# --------------------------------------------------------------------------
def basic_ds_block2_forward(params, x_nchw, *, row_tile=32):
    N, C, H, W = x_nchw.shape
    assert params["conv1_w"].shape == (C, C, 3, 3), (
        "identity residual (downsample=None) requires in_planes == out_planes")

    f32 = jnp.float32
    TH = min(row_tile, H)
    Hpad = _round_up(H, TH)
    R = Hpad // TH
    Wx = _round_up(W + 4, 8)          # plane width: 2-pixel halo each side, 8-aligned
    Q0 = (TH + 4) * Wx                # flattened rows per slab (with 4-row halo)
    QS = Q0 + 8                       # + zero slack so edge taps never read OOB
    M2 = (TH + 2) * Wx
    M3 = TH * Wx

    # NCHW -> NHWC, zero-pad to the internal plane layout.
    x_nhwc = jnp.transpose(x_nchw, (0, 2, 3, 1)).astype(f32)
    xpp = jnp.pad(x_nhwc, ((0, 0), (2, Hpad - H + 2), (2, Wx - W - 2), (0, 0)))
    mask = jnp.zeros((Hpad + 4, Wx), f32).at[2:2 + H, 2:2 + W].set(1.0)

    # Overlapping row slabs (4-row halo), flattened to (rows, C), with 8 zero
    # slack rows appended.
    xs = jnp.stack([xpp[:, r * TH: r * TH + TH + 4] for r in range(R)], axis=1)
    xs = xs.reshape(N, R, Q0, C)
    xs = jnp.pad(xs, ((0, 0), (0, 0), (0, 8), (0, 0)))
    ms = jnp.stack([mask[r * TH: r * TH + TH + 4] for r in range(R)], axis=0)
    ms = ms.reshape(R, Q0, 1)
    ms = jnp.pad(ms, ((0, 0), (0, 8), (0, 0)))

    # Fold eval-mode BatchNorm into per-channel scale/shift; fold conv1's bias
    # into the BN2 shift so both BN+ReLU stages are pure matmul epilogues.
    s1 = params["bn1_gamma"] * lax.rsqrt(params["bn1_var"] + EPS)
    t1 = params["bn1_beta"] - params["bn1_mean"] * s1
    s2 = params["bn2_gamma"] * lax.rsqrt(params["bn2_var"] + EPS)
    t2 = params["bn2_beta"] - params["bn2_mean"] * s2
    sh2 = params["conv1_b"] * s2 + t2
    pmat = jnp.zeros((8, C), f32)
    pmat = (pmat.at[0].set(s1).at[1].set(t1).at[2].set(s2)
                .at[3].set(sh2).at[4].set(params["conv2_b"]))

    # OIHW -> (tap, Cin, Cout), bf16 for the MXU.
    w1 = jnp.transpose(params["conv1_w"], (2, 3, 1, 0)).reshape(9, C, C).astype(jnp.bfloat16)
    w2 = jnp.transpose(params["conv2_w"], (2, 3, 1, 0)).reshape(9, C, C).astype(jnp.bfloat16)

    kernel = functools.partial(_basic_ds_block2_kernel, TH=TH, Wx=Wx)

    out = pl.pallas_call(
        kernel,
        out_shape=jax.ShapeDtypeStruct((N, R, M3, C), f32),
        grid=(N, R),
        in_specs=[
            pl.BlockSpec((None, None, QS, C), lambda n, r: (n, r, 0, 0)),
            pl.BlockSpec((None, QS, 1), lambda n, r: (r, 0, 0)),
            pl.BlockSpec((9, C, C), lambda n, r: (0, 0, 0)),
            pl.BlockSpec((9, C, C), lambda n, r: (0, 0, 0)),
            pl.BlockSpec((8, C), lambda n, r: (0, 0)),
        ],
        out_specs=pl.BlockSpec((None, None, M3, C), lambda n, r: (n, r, 0, 0)),
        scratch_shapes=[
            pltpu.VMEM((QS, C), f32),        # a1 = relu(bn1(x)), zero-padded plane
            pltpu.VMEM((M2 + 8, C), f32),    # a2 = relu(bn2(conv1(a1))), padded plane
        ],
        compiler_params=pltpu.CompilerParams(
            dimension_semantics=("parallel", "parallel"),
            vmem_limit_bytes=32 * 1024 * 1024,
        ),
    )(xs, ms, w1, w2, pmat)

    out = out.reshape(N, Hpad, Wx, C)[:, :H, :W, :]
    return jnp.transpose(out, (0, 3, 1, 2))


# --------------------------------------------------------------------------
# Parameters + pure-lax reference (correctness check of the fused kernel)
# --------------------------------------------------------------------------
def init_params(key, planes):
    ks = jax.random.split(key, 12)
    bound = 1.0 / math.sqrt(planes * 9)
    u = lambda k, shp: jax.random.uniform(k, shp, jnp.float32, -bound, bound)
    p = {}
    p["bn1_gamma"] = 1.0 + 0.1 * jax.random.normal(ks[0], (planes,), jnp.float32)
    p["bn1_beta"] = 0.1 * jax.random.normal(ks[1], (planes,), jnp.float32)
    p["bn1_mean"] = 0.05 * jax.random.normal(ks[2], (planes,), jnp.float32)
    p["bn1_var"] = 1.0 + 0.1 * jax.random.uniform(ks[3], (planes,), jnp.float32)
    p["conv1_w"] = u(ks[4], (planes, planes, 3, 3))
    p["conv1_b"] = u(ks[5], (planes,))
    p["bn2_gamma"] = 1.0 + 0.1 * jax.random.normal(ks[6], (planes,), jnp.float32)
    p["bn2_beta"] = 0.1 * jax.random.normal(ks[7], (planes,), jnp.float32)
    p["bn2_mean"] = 0.05 * jax.random.normal(ks[8], (planes,), jnp.float32)
    p["bn2_var"] = 1.0 + 0.1 * jax.random.uniform(ks[9], (planes,), jnp.float32)
    p["conv2_w"] = u(ks[10], (planes, planes, 3, 3))
    p["conv2_b"] = u(ks[11], (planes,))
    return p


def reference_forward(params, x_nchw):
    def bn(x, g, b, m, v):
        r = lambda a: a.reshape(1, -1, 1, 1)
        return (x - r(m)) * lax.rsqrt(r(v) + EPS) * r(g) + r(b)

    def conv(x, w, b):
        y = lax.conv_general_dilated(
            x, w, window_strides=(1, 1), padding=((1, 1), (1, 1)),
            dimension_numbers=("NCHW", "OIHW", "NCHW"))
        return y + b.reshape(1, -1, 1, 1)

    x = x_nchw.astype(jnp.float32)
    h = conv(jax.nn.relu(bn(x, params["bn1_gamma"], params["bn1_beta"],
                            params["bn1_mean"], params["bn1_var"])),
             params["conv1_w"], params["conv1_b"])
    h = conv(jax.nn.relu(bn(h, params["bn2_gamma"], params["bn2_beta"],
                            params["bn2_mean"], params["bn2_var"])),
             params["conv2_w"], params["conv2_b"])
    return h + x


# --------------------------------------------------------------------------
if __name__ == "__main__":
    key = jax.random.PRNGKey(0)
    kx, kp = jax.random.split(key)

    N, C, H, W = 2, 32, 16, 16          # in_planes == out_planes (identity residual)
    x = jax.random.normal(kx, (N, C, H, W), jnp.float32)
    params = init_params(kp, C)

    fwd = jax.jit(basic_ds_block2_forward)
    out = jax.block_until_ready(fwd(params, x))
    assert out.shape == (N, C, H, W), out.shape

    ref = jax.block_until_ready(reference_forward(params, x))
    err = float(jnp.max(jnp.abs(out - ref)))
    # bf16 MXU operands with f32 accumulation: loose-but-meaningful tolerance.
    assert bool(jnp.allclose(out, ref, atol=5e-2, rtol=5e-2)), f"max abs err {err}"

    print("KERNEL_OK")
</pallas_src>

<mosaic_0001>
module attributes {stable_mosaic.version = 11 : i64} {
  func.func @_basic_ds_block2_kernel(%arg0: i32, %arg1: i32, %arg2: memref<1x1x488x32xf32, #tpu.memory_space<vmem>>, %arg3: memref<1x488x1xf32, #tpu.memory_space<vmem>>, %arg4: memref<9x32x32xbf16, #tpu.memory_space<vmem>>, %arg5: memref<9x32x32xbf16, #tpu.memory_space<vmem>>, %arg6: memref<8x32xf32, #tpu.memory_space<vmem>>, %arg7: memref<1x1x384x32xf32, #tpu.memory_space<vmem>>, %arg8: memref<488x32xf32, #tpu.memory_space<vmem>>, %arg9: memref<440x32xf32, #tpu.memory_space<vmem>>) attributes {dimension_semantics = [#tpu.dimension_semantics<parallel>, #tpu.dimension_semantics<parallel>], iteration_bounds = array<i64: 2, 1>, scalar_prefetch = 0 : i64, scratch_operands = 2 : i64, tpu.core_type = #tpu.core_type<tc>, window_params = [{transform_indices = @transform_0, window_bounds = array<i64: 1, 1, 488, 32>}, {transform_indices = @transform_1, window_bounds = array<i64: 1, 488, 1>}, {pipeline_mode = #tpu.pipeline_mode<synchronous>, transform_indices = @transform_2, window_bounds = array<i64: 9, 32, 32>}, {pipeline_mode = #tpu.pipeline_mode<synchronous>, transform_indices = @transform_3, window_bounds = array<i64: 9, 32, 32>}, {pipeline_mode = #tpu.pipeline_mode<synchronous>, transform_indices = @transform_4, window_bounds = array<i64: 8, 32>}, {transform_indices = @transform_5, window_bounds = array<i64: 1, 1, 384, 32>}]} {
    %c0 = arith.constant 0 : index
    %c0_0 = arith.constant 0 : index
    %0 = vector.load %arg6[%c0, %c0_0] : memref<8x32xf32, #tpu.memory_space<vmem>>, vector<1x32xf32>
    %1 = vector.shape_cast %0 : vector<1x32xf32> to vector<32xf32>
    %c1 = arith.constant 1 : index
    %c0_1 = arith.constant 0 : index
    %2 = vector.load %arg6[%c1, %c0_1] : memref<8x32xf32, #tpu.memory_space<vmem>>, vector<1x32xf32>
    %3 = vector.shape_cast %2 : vector<1x32xf32> to vector<32xf32>
    %c2 = arith.constant 2 : index
    %c0_2 = arith.constant 0 : index
    %4 = vector.load %arg6[%c2, %c0_2] : memref<8x32xf32, #tpu.memory_space<vmem>>, vector<1x32xf32>
    %5 = vector.shape_cast %4 : vector<1x32xf32> to vector<32xf32>
    %c3 = arith.constant 3 : index
    %c0_3 = arith.constant 0 : index
    %6 = vector.load %arg6[%c3, %c0_3] : memref<8x32xf32, #tpu.memory_space<vmem>>, vector<1x32xf32>
    %7 = vector.shape_cast %6 : vector<1x32xf32> to vector<32xf32>
    %c4 = arith.constant 4 : index
    %c0_4 = arith.constant 0 : index
    %8 = vector.load %arg6[%c4, %c0_4] : memref<8x32xf32, #tpu.memory_space<vmem>>, vector<1x32xf32>
    %9 = vector.shape_cast %8 : vector<1x32xf32> to vector<32xf32>
    %c0_5 = arith.constant 0 : index
    %c0_6 = arith.constant 0 : index
    %c0_7 = arith.constant 0 : index
    %c0_8 = arith.constant 0 : index
    %10 = vector.load %arg2[%c0_5, %c0_6, %c0_7, %c0_8] : memref<1x1x488x32xf32, #tpu.memory_space<vmem>>, vector<1x1x488x32xf32>
    %11 = vector.shape_cast %10 : vector<1x1x488x32xf32> to vector<488x32xf32>
    %12 = vector.shape_cast %1 : vector<32xf32> to vector<1x32xf32>
    %13 = vector.broadcast %12 : vector<1x32xf32> to vector<488x32xf32>
    %14 = arith.mulf %11, %13 : vector<488x32xf32>
    %15 = vector.shape_cast %3 : vector<32xf32> to vector<1x32xf32>
    %16 = vector.broadcast %15 : vector<1x32xf32> to vector<488x32xf32>
    %17 = arith.addf %14, %16 : vector<488x32xf32>
    %cst = arith.constant 0.000000e+00 : f32
    %18 = vector.broadcast %cst : f32 to vector<488x32xf32>
    %19 = arith.maximumf %17, %18 : vector<488x32xf32>
    %c0_9 = arith.constant 0 : index
    %c0_10 = arith.constant 0 : index
    %c0_11 = arith.constant 0 : index
    %20 = vector.load %arg3[%c0_9, %c0_10, %c0_11] : memref<1x488x1xf32, #tpu.memory_space<vmem>>, vector<1x488x1xf32>
    %21 = vector.shape_cast %20 : vector<1x488x1xf32> to vector<488x1xf32>
    %22 = vector.broadcast %21 : vector<488x1xf32> to vector<488x32xf32>
    %23 = arith.mulf %19, %22 : vector<488x32xf32>
    %c0_12 = arith.constant 0 : index
    %c0_13 = arith.constant 0 : index
    %24 = vector.load %arg8[%c0_12, %c0_13] : memref<488x32xf32, #tpu.memory_space<vmem>>, vector<488x32xf32>
    tpu.vector_store %arg8[%c0_12, %c0_13], %23 {strides = array<i32>} : memref<488x32xf32, #tpu.memory_space<vmem>>, vector<488x32xf32>,
    %cst_14 = arith.constant 0.000000e+00 : f32
    %25 = vector.broadcast %cst_14 : f32 to vector<432x32xf32>
    %c0_15 = arith.constant 0 : index
    %c0_16 = arith.constant 0 : index
    %26 = vector.load %arg8[%c0_15, %c0_16] : memref<488x32xf32, #tpu.memory_space<vmem>>, vector<432x32xf32>
    %27 = arith.truncf %26 : vector<432x32xf32> to vector<432x32xbf16>
    %c0_17 = arith.constant 0 : index
    %c0_18 = arith.constant 0 : index
    %c0_19 = arith.constant 0 : index
    %28 = vector.load %arg4[%c0_17, %c0_18, %c0_19] : memref<9x32x32xbf16, #tpu.memory_space<vmem>>, vector<1x32x32xbf16>
    %29 = vector.shape_cast %28 : vector<1x32x32xbf16> to vector<32x32xbf16>
    %cst_20 = arith.constant dense<0.000000e+00> : vector<432x32xf32>
    %30 = tpu.matmul %27, %29, %cst_20 {dimension_numbers = #tpu.dot_dimension_numbers<[1], [0], [0], [1], [0, 0, 1, 1], [], []>} : vector<432x32xbf16>, vector<32x32xbf16>, vector<432x32xf32> -> vector<432x32xf32>
    %31 = arith.addf %25, %30 : vector<432x32xf32>
    %c1_21 = arith.constant 1 : index
    %c0_22 = arith.constant 0 : index
    %32 = vector.load %arg8[%c1_21, %c0_22] : memref<488x32xf32, #tpu.memory_space<vmem>>, vector<432x32xf32>
    %33 = arith.truncf %32 : vector<432x32xf32> to vector<432x32xbf16>
    %c1_23 = arith.constant 1 : index
    %c0_24 = arith.constant 0 : index
    %c0_25 = arith.constant 0 : index
    %34 = vector.load %arg4[%c1_23, %c0_24, %c0_25] : memref<9x32x32xbf16, #tpu.memory_space<vmem>>, vector<1x32x32xbf16>
    %35 = vector.shape_cast %34 : vector<1x32x32xbf16> to vector<32x32xbf16>
    %cst_26 = arith.constant dense<0.000000e+00> : vector<432x32xf32>
    %36 = tpu.matmul %33, %35, %cst_26 {dimension_numbers = #tpu.dot_dimension_numbers<[1], [0], [0], [1], [0, 0, 1, 1], [], []>} : vector<432x32xbf16>, vector<32x32xbf16>, vector<432x32xf32> -> vector<432x32xf32>
    %37 = arith.addf %31, %36 : vector<432x32xf32>
    %c2_27 = arith.constant 2 : index
    %c0_28 = arith.constant 0 : index
    %38 = vector.load %arg8[%c2_27, %c0_28] : memref<488x32xf32, #tpu.memory_space<vmem>>, vector<432x32xf32>
    %39 = arith.truncf %38 : vector<432x32xf32> to vector<432x32xbf16>
    %c2_29 = arith.constant 2 : index
    %c0_30 = arith.constant 0 : index
    %c0_31 = arith.constant 0 : index
    %40 = vector.load %arg4[%c2_29, %c0_30, %c0_31] : memref<9x32x32xbf16, #tpu.memory_space<vmem>>, vector<1x32x32xbf16>
    %41 = vector.shape_cast %40 : vector<1x32x32xbf16> to vector<32x32xbf16>
    %cst_32 = arith.constant dense<0.000000e+00> : vector<432x32xf32>
    %42 = tpu.matmul %39, %41, %cst_32 {dimension_numbers = #tpu.dot_dimension_numbers<[1], [0], [0], [1], [0, 0, 1, 1], [], []>} : vector<432x32xbf16>, vector<32x32xbf16>, vector<432x32xf32> -> vector<432x32xf32>
    %43 = arith.addf %37, %42 : vector<432x32xf32>
    %c24 = arith.constant 24 : index
    %c0_33 = arith.constant 0 : index
    %44 = vector.load %arg8[%c24, %c0_33] : memref<488x32xf32, #tpu.memory_space<vmem>>, vector<432x32xf32>
    %45 = arith.truncf %44 : vector<432x32xf32> to vector<432x32xbf16>
    %c3_34 = arith.constant 3 : index
    %c0_35 = arith.constant 0 : index
    %c0_36 = arith.constant 0 : index
    %46 = vector.load %arg4[%c3_34, %c0_35, %c0_36] : memref<9x32x32xbf16, #tpu.memory_space<vmem>>, vector<1x32x32xbf16>
    %47 = vector.shape_cast %46 : vector<1x32x32xbf16> to vector<32x32xbf16>
    %cst_37 = arith.constant dense<0.000000e+00> : vector<432x32xf32>
    %48 = tpu.matmul %45, %47, %cst_37 {dimension_numbers = #tpu.dot_dimension_numbers<[1], [0], [0], [1], [0, 0, 1, 1], [], []>} : vector<432x32xbf16>, vector<32x32xbf16>, vector<432x32xf32> -> vector<432x32xf32>
    %49 = arith.addf %43, %48 : vector<432x32xf32>
    %c25 = arith.constant 25 : index
    %c0_38 = arith.constant 0 : index
    %50 = vector.load %arg8[%c25, %c0_38] : memref<488x32xf32, #tpu.memory_space<vmem>>, vector<432x32xf32>
    %51 = arith.truncf %50 : vector<432x32xf32> to vector<432x32xbf16>
    %c4_39 = arith.constant 4 : index
    %c0_40 = arith.constant 0 : index
    %c0_41 = arith.constant 0 : index
    %52 = vector.load %arg4[%c4_39, %c0_40, %c0_41] : memref<9x32x32xbf16, #tpu.memory_space<vmem>>, vector<1x32x32xbf16>
    %53 = vector.shape_cast %52 : vector<1x32x32xbf16> to vector<32x32xbf16>
    %cst_42 = arith.constant dense<0.000000e+00> : vector<432x32xf32>
    %54 = tpu.matmul %51, %53, %cst_42 {dimension_numbers = #tpu.dot_dimension_numbers<[1], [0], [0], [1], [0, 0, 1, 1], [], []>} : vector<432x32xbf16>, vector<32x32xbf16>, vector<432x32xf32> -> vector<432x32xf32>
    %55 = arith.addf %49, %54 : vector<432x32xf32>
    %c26 = arith.constant 26 : index
    %c0_43 = arith.constant 0 : index
    %56 = vector.load %arg8[%c26, %c0_43] : memref<488x32xf32, #tpu.memory_space<vmem>>, vector<432x32xf32>
    %57 = arith.truncf %56 : vector<432x32xf32> to vector<432x32xbf16>
    %c5 = arith.constant 5 : index
    %c0_44 = arith.constant 0 : index
    %c0_45 = arith.constant 0 : index
    %58 = vector.load %arg4[%c5, %c0_44, %c0_45] : memref<9x32x32xbf16, #tpu.memory_space<vmem>>, vector<1x32x32xbf16>
    %59 = vector.shape_cast %58 : vector<1x32x32xbf16> to vector<32x32xbf16>
    %cst_46 = arith.constant dense<0.000000e+00> : vector<432x32xf32>
    %60 = tpu.matmul %57, %59, %cst_46 {dimension_numbers = #tpu.dot_dimension_numbers<[1], [0], [0], [1], [0, 0, 1, 1], [], []>} : vector<432x32xbf16>, vector<32x32xbf16>, vector<432x32xf32> -> vector<432x32xf32>
    %61 = arith.addf %55, %60 : vector<432x32xf32>
    %c48 = arith.constant 48 : index
    %c0_47 = arith.constant 0 : index
    %62 = vector.load %arg8[%c48, %c0_47] : memref<488x32xf32, #tpu.memory_space<vmem>>, vector<432x32xf32>
    %63 = arith.truncf %62 : vector<432x32xf32> to vector<432x32xbf16>
    %c6 = arith.constant 6 : index
    %c0_48 = arith.constant 0 : index
    %c0_49 = arith.constant 0 : index
    %64 = vector.load %arg4[%c6, %c0_48, %c0_49] : memref<9x32x32xbf16, #tpu.memory_space<vmem>>, vector<1x32x32xbf16>
    %65 = vector.shape_cast %64 : vector<1x32x32xbf16> to vector<32x32xbf16>
    %cst_50 = arith.constant dense<0.000000e+00> : vector<432x32xf32>
    %66 = tpu.matmul %63, %65, %cst_50 {dimension_numbers = #tpu.dot_dimension_numbers<[1], [0], [0], [1], [0, 0, 1, 1], [], []>} : vector<432x32xbf16>, vector<32x32xbf16>, vector<432x32xf32> -> vector<432x32xf32>
    %67 = arith.addf %61, %66 : vector<432x32xf32>
    %c49 = arith.constant 49 : index
    %c0_51 = arith.constant 0 : index
    %68 = vector.load %arg8[%c49, %c0_51] : memref<488x32xf32, #tpu.memory_space<vmem>>, vector<432x32xf32>
    %69 = arith.truncf %68 : vector<432x32xf32> to vector<432x32xbf16>
    %c7 = arith.constant 7 : index
    %c0_52 = arith.constant 0 : index
    %c0_53 = arith.constant 0 : index
    %70 = vector.load %arg4[%c7, %c0_52, %c0_53] : memref<9x32x32xbf16, #tpu.memory_space<vmem>>, vector<1x32x32xbf16>
    %71 = vector.shape_cast %70 : vector<1x32x32xbf16> to vector<32x32xbf16>
    %cst_54 = arith.constant dense<0.000000e+00> : vector<432x32xf32>
    %72 = tpu.matmul %69, %71, %cst_54 {dimension_numbers = #tpu.dot_dimension_numbers<[1], [0], [0], [1], [0, 0, 1, 1], [], []>} : vector<432x32xbf16>, vector<32x32xbf16>, vector<432x32xf32> -> vector<432x32xf32>
    %73 = arith.addf %67, %72 : vector<432x32xf32>
    %c50 = arith.constant 50 : index
    %c0_55 = arith.constant 0 : index
    %74 = vector.load %arg8[%c50, %c0_55] : memref<488x32xf32, #tpu.memory_space<vmem>>, vector<432x32xf32>
    %75 = arith.truncf %74 : vector<432x32xf32> to vector<432x32xbf16>
    %c8 = arith.constant 8 : index
    %c0_56 = arith.constant 0 : index
    %c0_57 = arith.constant 0 : index
    %76 = vector.load %arg4[%c8, %c0_56, %c0_57] : memref<9x32x32xbf16, #tpu.memory_space<vmem>>, vector<1x32x32xbf16>
    %77 = vector.shape_cast %76 : vector<1x32x32xbf16> to vector<32x32xbf16>
    %cst_58 = arith.constant dense<0.000000e+00> : vector<432x32xf32>
    %78 = tpu.matmul %75, %77, %cst_58 {dimension_numbers = #tpu.dot_dimension_numbers<[1], [0], [0], [1], [0, 0, 1, 1], [], []>} : vector<432x32xbf16>, vector<32x32xbf16>, vector<432x32xf32> -> vector<432x32xf32>
    %79 = arith.addf %73, %78 : vector<432x32xf32>
    %80 = vector.shape_cast %5 : vector<32xf32> to vector<1x32xf32>
    %81 = vector.broadcast %80 : vector<1x32xf32> to vector<432x32xf32>
    %82 = arith.mulf %79, %81 : vector<432x32xf32>
    %83 = vector.shape_cast %7 : vector<32xf32> to vector<1x32xf32>
    %84 = vector.broadcast %83 : vector<1x32xf32> to vector<432x32xf32>
    %85 = arith.addf %82, %84 : vector<432x32xf32>
    %cst_59 = arith.constant 0.000000e+00 : f32
    %86 = vector.broadcast %cst_59 : f32 to vector<432x32xf32>
    %87 = arith.maximumf %85, %86 : vector<432x32xf32>
    %c0_60 = arith.constant 0 : index
    %c25_61 = arith.constant 25 : index
    %c0_62 = arith.constant 0 : index
    %88 = vector.load %arg3[%c0_60, %c25_61, %c0_62] : memref<1x488x1xf32, #tpu.memory_space<vmem>>, vector<1x432x1xf32>
    %89 = vector.shape_cast %88 : vector<1x432x1xf32> to vector<432x1xf32>
    %90 = vector.broadcast %89 : vector<432x1xf32> to vector<432x32xf32>
    %91 = arith.mulf %87, %90 : vector<432x32xf32>
    %c0_63 = arith.constant 0 : index
    %c0_64 = arith.constant 0 : index
    %92 = vector.load %arg9[%c0_63, %c0_64] : memref<440x32xf32, #tpu.memory_space<vmem>>, vector<432x32xf32>
    tpu.vector_store %arg9[%c0_63, %c0_64], %91 {strides = array<i32>} : memref<440x32xf32, #tpu.memory_space<vmem>>, vector<432x32xf32>,
    %cst_65 = arith.constant 0.000000e+00 : f32
    %93 = vector.broadcast %cst_65 : f32 to vector<8x32xf32>
    %c432 = arith.constant 432 : index
    %c0_66 = arith.constant 0 : index
    %94 = vector.load %arg9[%c432, %c0_66] : memref<440x32xf32, #tpu.memory_space<vmem>>, vector<8x32xf32>
    tpu.vector_store %arg9[%c432, %c0_66], %93 {strides = array<i32>} : memref<440x32xf32, #tpu.memory_space<vmem>>, vector<8x32xf32>,
    %cst_67 = arith.constant 0.000000e+00 : f32
    %95 = vector.broadcast %cst_67 : f32 to vector<384x32xf32>
    %c0_68 = arith.constant 0 : index
    %c0_69 = arith.constant 0 : index
    %96 = vector.load %arg9[%c0_68, %c0_69] : memref<440x32xf32, #tpu.memory_space<vmem>>, vector<384x32xf32>
    %97 = arith.truncf %96 : vector<384x32xf32> to vector<384x32xbf16>
    %c0_70 = arith.constant 0 : index
    %c0_71 = arith.constant 0 : index
    %c0_72 = arith.constant 0 : index
    %98 = vector.load %arg5[%c0_70, %c0_71, %c0_72] : memref<9x32x32xbf16, #tpu.memory_space<vmem>>, vector<1x32x32xbf16>
    %99 = vector.shape_cast %98 : vector<1x32x32xbf16> to vector<32x32xbf16>
    %cst_73 = arith.constant dense<0.000000e+00> : vector<384x32xf32>
    %100 = tpu.matmul %97, %99, %cst_73 {dimension_numbers = #tpu.dot_dimension_numbers<[1], [0], [0], [1], [0, 0, 1, 1], [], []>} : vector<384x32xbf16>, vector<32x32xbf16>, vector<384x32xf32> -> vector<384x32xf32>
    %101 = arith.addf %95, %100 : vector<384x32xf32>
    %c1_74 = arith.constant 1 : index
    %c0_75 = arith.constant 0 : index
    %102 = vector.load %arg9[%c1_74, %c0_75] : memref<440x32xf32, #tpu.memory_space<vmem>>, vector<384x32xf32>
    %103 = arith.truncf %102 : vector<384x32xf32> to vector<384x32xbf16>
    %c1_76 = arith.constant 1 : index
    %c0_77 = arith.constant 0 : index
    %c0_78 = arith.constant 0 : index
    %104 = vector.load %arg5[%c1_76, %c0_77, %c0_78] : memref<9x32x32xbf16, #tpu.memory_space<vmem>>, vector<1x32x32xbf16>
    %105 = vector.shape_cast %104 : vector<1x32x32xbf16> to vector<32x32xbf16>
    %cst_79 = arith.constant dense<0.000000e+00> : vector<384x32xf32>
    %106 = tpu.matmul %103, %105, %cst_79 {dimension_numbers = #tpu.dot_dimension_numbers<[1], [0], [0], [1], [0, 0, 1, 1], [], []>} : vector<384x32xbf16>, vector<32x32xbf16>, vector<384x32xf32> -> vector<384x32xf32>
    %107 = arith.addf %101, %106 : vector<384x32xf32>
    %c2_80 = arith.constant 2 : index
    %c0_81 = arith.constant 0 : index
    %108 = vector.load %arg9[%c2_80, %c0_81] : memref<440x32xf32, #tpu.memory_space<vmem>>, vector<384x32xf32>
    %109 = arith.truncf %108 : vector<384x32xf32> to vector<384x32xbf16>
    %c2_82 = arith.constant 2 : index
    %c0_83 = arith.constant 0 : index
    %c0_84 = arith.constant 0 : index
    %110 = vector.load %arg5[%c2_82, %c0_83, %c0_84] : memref<9x32x32xbf16, #tpu.memory_space<vmem>>, vector<1x32x32xbf16>
    %111 = vector.shape_cast %110 : vector<1x32x32xbf16> to vector<32x32xbf16>
    %cst_85 = arith.constant dense<0.000000e+00> : vector<384x32xf32>
    %112 = tpu.matmul %109, %111, %cst_85 {dimension_numbers = #tpu.dot_dimension_numbers<[1], [0], [0], [1], [0, 0, 1, 1], [], []>} : vector<384x32xbf16>, vector<32x32xbf16>, vector<384x32xf32> -> vector<384x32xf32>
    %113 = arith.addf %107, %112 : vector<384x32xf32>
    %c24_86 = arith.constant 24 : index
    %c0_87 = arith.constant 0 : index
    %114 = vector.load %arg9[%c24_86, %c0_87] : memref<440x32xf32, #tpu.memory_space<vmem>>, vector<384x32xf32>
    %115 = arith.truncf %114 : vector<384x32xf32> to vector<384x32xbf16>
    %c3_88 = arith.constant 3 : index
    %c0_89 = arith.constant 0 : index
    %c0_90 = arith.constant 0 : index
    %116 = vector.load %arg5[%c3_88, %c0_89, %c0_90] : memref<9x32x32xbf16, #tpu.memory_space<vmem>>, vector<1x32x32xbf16>
    %117 = vector.shape_cast %116 : vector<1x32x32xbf16> to vector<32x32xbf16>
    %cst_91 = arith.constant dense<0.000000e+00> : vector<384x32xf32>
    %118 = tpu.matmul %115, %117, %cst_91 {dimension_numbers = #tpu.dot_dimension_numbers<[1], [0], [0], [1], [0, 0, 1, 1], [], []>} : vector<384x32xbf16>, vector<32x32xbf16>, vector<384x32xf32> -> vector<384x32xf32>
    %119 = arith.addf %113, %118 : vector<384x32xf32>
    %c25_92 = arith.constant 25 : index
    %c0_93 = arith.constant 0 : index
    %120 = vector.load %arg9[%c25_92, %c0_93] : memref<440x32xf32, #tpu.memory_space<vmem>>, vector<384x32xf32>
    %121 = arith.truncf %120 : vector<384x32xf32> to vector<384x32xbf16>
    %c4_94 = arith.constant 4 : index
    %c0_95 = arith.constant 0 : index
    %c0_96 = arith.constant 0 : index
    %122 = vector.load %arg5[%c4_94, %c0_95, %c0_96] : memref<9x32x32xbf16, #tpu.memory_space<vmem>>, vector<1x32x32xbf16>
    %123 = vector.shape_cast %122 : vector<1x32x32xbf16> to vector<32x32xbf16>
    %cst_97 = arith.constant dense<0.000000e+00> : vector<384x32xf32>
    %124 = tpu.matmul %121, %123, %cst_97 {dimension_numbers = #tpu.dot_dimension_numbers<[1], [0], [0], [1], [0, 0, 1, 1], [], []>} : vector<384x32xbf16>, vector<32x32xbf16>, vector<384x32xf32> -> vector<384x32xf32>
    %125 = arith.addf %119, %124 : vector<384x32xf32>
    %c26_98 = arith.constant 26 : index
    %c0_99 = arith.constant 0 : index
    %126 = vector.load %arg9[%c26_98, %c0_99] : memref<440x32xf32, #tpu.memory_space<vmem>>, vector<384x32xf32>
    %127 = arith.truncf %126 : vector<384x32xf32> to vector<384x32xbf16>
    %c5_100 = arith.constant 5 : index
    %c0_101 = arith.constant 0 : index
    %c0_102 = arith.constant 0 : index
    %128 = vector.load %arg5[%c5_100, %c0_101, %c0_102] : memref<9x32x32xbf16, #tpu.memory_space<vmem>>, vector<1x32x32xbf16>
    %129 = vector.shape_cast %128 : vector<1x32x32xbf16> to vector<32x32xbf16>
    %cst_103 = arith.constant dense<0.000000e+00> : vector<384x32xf32>
    %130 = tpu.matmul %127, %129, %cst_103 {dimension_numbers = #tpu.dot_dimension_numbers<[1], [0], [0], [1], [0, 0, 1, 1], [], []>} : vector<384x32xbf16>, vector<32x32xbf16>, vector<384x32xf32> -> vector<384x32xf32>
    %131 = arith.addf %125, %130 : vector<384x32xf32>
    %c48_104 = arith.constant 48 : index
    %c0_105 = arith.constant 0 : index
    %132 = vector.load %arg9[%c48_104, %c0_105] : memref<440x32xf32, #tpu.memory_space<vmem>>, vector<384x32xf32>
    %133 = arith.truncf %132 : vector<384x32xf32> to vector<384x32xbf16>
    %c6_106 = arith.constant 6 : index
    %c0_107 = arith.constant 0 : index
    %c0_108 = arith.constant 0 : index
    %134 = vector.load %arg5[%c6_106, %c0_107, %c0_108] : memref<9x32x32xbf16, #tpu.memory_space<vmem>>, vector<1x32x32xbf16>
    %135 = vector.shape_cast %134 : vector<1x32x32xbf16> to vector<32x32xbf16>
    %cst_109 = arith.constant dense<0.000000e+00> : vector<384x32xf32>
    %136 = tpu.matmul %133, %135, %cst_109 {dimension_numbers = #tpu.dot_dimension_numbers<[1], [0], [0], [1], [0, 0, 1, 1], [], []>} : vector<384x32xbf16>, vector<32x32xbf16>, vector<384x32xf32> -> vector<384x32xf32>
    %137 = arith.addf %131, %136 : vector<384x32xf32>
    %c49_110 = arith.constant 49 : index
    %c0_111 = arith.constant 0 : index
    %138 = vector.load %arg9[%c49_110, %c0_111] : memref<440x32xf32, #tpu.memory_space<vmem>>, vector<384x32xf32>
    %139 = arith.truncf %138 : vector<384x32xf32> to vector<384x32xbf16>
    %c7_112 = arith.constant 7 : index
    %c0_113 = arith.constant 0 : index
    %c0_114 = arith.constant 0 : index
    %140 = vector.load %arg5[%c7_112, %c0_113, %c0_114] : memref<9x32x32xbf16, #tpu.memory_space<vmem>>, vector<1x32x32xbf16>
    %141 = vector.shape_cast %140 : vector<1x32x32xbf16> to vector<32x32xbf16>
    %cst_115 = arith.constant dense<0.000000e+00> : vector<384x32xf32>
    %142 = tpu.matmul %139, %141, %cst_115 {dimension_numbers = #tpu.dot_dimension_numbers<[1], [0], [0], [1], [0, 0, 1, 1], [], []>} : vector<384x32xbf16>, vector<32x32xbf16>, vector<384x32xf32> -> vector<384x32xf32>
    %143 = arith.addf %137, %142 : vector<384x32xf32>
    %c50_116 = arith.constant 50 : index
    %c0_117 = arith.constant 0 : index
    %144 = vector.load %arg9[%c50_116, %c0_117] : memref<440x32xf32, #tpu.memory_space<vmem>>, vector<384x32xf32>
    %145 = arith.truncf %144 : vector<384x32xf32> to vector<384x32xbf16>
    %c8_118 = arith.constant 8 : index
    %c0_119 = arith.constant 0 : index
    %c0_120 = arith.constant 0 : index
    %146 = vector.load %arg5[%c8_118, %c0_119, %c0_120] : memref<9x32x32xbf16, #tpu.memory_space<vmem>>, vector<1x32x32xbf16>
    %147 = vector.shape_cast %146 : vector<1x32x32xbf16> to vector<32x32xbf16>
    %cst_121 = arith.constant dense<0.000000e+00> : vector<384x32xf32>
    %148 = tpu.matmul %145, %147, %cst_121 {dimension_numbers = #tpu.dot_dimension_numbers<[1], [0], [0], [1], [0, 0, 1, 1], [], []>} : vector<384x32xbf16>, vector<32x32xbf16>, vector<384x32xf32> -> vector<384x32xf32>
    %149 = arith.addf %143, %148 : vector<384x32xf32>
    %c0_122 = arith.constant 0 : index
    %c0_123 = arith.constant 0 : index
    %c50_124 = arith.constant 50 : index
    %c0_125 = arith.constant 0 : index
    %150 = vector.load %arg2[%c0_122, %c0_123, %c50_124, %c0_125] : memref<1x1x488x32xf32, #tpu.memory_space<vmem>>, vector<1x1x384x32xf32>
    %151 = vector.shape_cast %150 : vector<1x1x384x32xf32> to vector<384x32xf32>
    %152 = vector.shape_cast %9 : vector<32xf32> to vector<1x32xf32>
    %153 = vector.broadcast %152 : vector<1x32xf32> to vector<384x32xf32>
    %154 = arith.addf %149, %153 : vector<384x32xf32>
    %155 = arith.addf %154, %151 : vector<384x32xf32>
    %c0_126 = arith.constant 0 : index
    %c0_127 = arith.constant 0 : index
    %c0_128 = arith.constant 0 : index
    %c0_129 = arith.constant 0 : index
    %156 = vector.load %arg7[%c0_126, %c0_127, %c0_128, %c0_129] : memref<1x1x384x32xf32, #tpu.memory_space<vmem>>, vector<1x1x384x32xf32>
    %157 = vector.shape_cast %156 : vector<1x1x384x32xf32> to vector<384x32xf32>
    %158 = vector.shape_cast %155 : vector<384x32xf32> to vector<1x1x384x32xf32>
    tpu.vector_store %arg7[%c0_126, %c0_127, %c0_128, %c0_129], %158 {strides = array<i32>} : memref<1x1x384x32xf32, #tpu.memory_space<vmem>>, vector<1x1x384x32xf32>,
    return
  }
  func.func @transform_0(%arg0: i32, %arg1: i32) -> (i32, i32, i32, i32) {
    %c0_i32 = arith.constant 0 : i32
    %c0_i32_0 = arith.constant 0 : i32
    %c0_i32_1 = arith.constant 0 : i32
    return %arg0, %arg1, %c0_i32, %c0_i32_0 : i32, i32, i32, i32
  }
  func.func @transform_1(%arg0: i32, %arg1: i32) -> (i32, i32, i32) {
    %c0_i32 = arith.constant 0 : i32
    %c0_i32_0 = arith.constant 0 : i32
    %c0_i32_1 = arith.constant 0 : i32
    return %arg1, %c0_i32, %c0_i32_0 : i32, i32, i32
  }
  func.func @transform_2(%arg0: i32, %arg1: i32) -> (i32, i32, i32) {
    %c0_i32 = arith.constant 0 : i32
    %c0_i32_0 = arith.constant 0 : i32
    %c0_i32_1 = arith.constant 0 : i32
    %c0_i32_2 = arith.constant 0 : i32
    return %c0_i32, %c0_i32_0, %c0_i32_1 : i32, i32, i32
  }
  func.func @transform_3(%arg0: i32, %arg1: i32) -> (i32, i32, i32) {
    %c0_i32 = arith.constant 0 : i32
    %c0_i32_0 = arith.constant 0 : i32
    %c0_i32_1 = arith.constant 0 : i32
    %c0_i32_2 = arith.constant 0 : i32
    return %c0_i32, %c0_i32_0, %c0_i32_1 : i32, i32, i32
  }
  func.func @transform_4(%arg0: i32, %arg1: i32) -> (i32, i32) {
    %c0_i32 = arith.constant 0 : i32
    %c0_i32_0 = arith.constant 0 : i32
    %c0_i32_1 = arith.constant 0 : i32
    return %c0_i32, %c0_i32_0 : i32, i32
  }
  func.func @transform_5(%arg0: i32, %arg1: i32) -> (i32, i32, i32, i32) {
    %c0_i32 = arith.constant 0 : i32
    %c0_i32_0 = arith.constant 0 : i32
    %c0_i32_1 = arith.constant 0 : i32
    return %arg0, %arg1, %c0_i32, %c0_i32_0 : i32, i32, i32, i32
  }
}

</mosaic_0001>

<llo_original>
// kernel: basic_ds_block2_forward.1
$region0: #{basic_ds_block2_forward.1}
  #allocation0 [shape = 'u32[]', space=smem, size = 0x4, offset = 0x4, fixed_abs, tag = 'smem constant byte address 0x4 - core index']
  #allocation1 [shape = 'u32[144,128]{1,0:T(1,128)}', space=vmem, size = 0x12000, scoped, tag = 'internal scratch']
  #allocation2 [shape = 'f32[488,32]{1,0:T(8,128)}', space=vmem, size = 0x3d000, scoped, tag = 'scratch operand']
  #allocation3 [shape = 'f32[440,32]{1,0:T(8,128)}', space=vmem, size = 0x37000, scoped, tag = 'scratch operand']
  %s0 = inlined_call_operand.vmem [shape: f32[2,1,488,32], index: 0, kind: input, shape index: {}]
  %s1 = inlined_call_operand.vmem [shape: f32[1,488,1], index: 1, kind: input, shape index: {}]
  %s2 = inlined_call_operand.vmem [shape: bf16[9,32,32], index: 2, kind: input, shape index: {}]
  %s3 = inlined_call_operand.vmem [shape: bf16[9,32,32], index: 3, kind: input, shape index: {}]
  %s4 = inlined_call_operand.vmem [shape: f32[8,32], index: 4, kind: input, shape index: {}]
  %s5 = inlined_call_operand.vmem [shape: f32[2,1,384,32], index: 5, kind: output, shape index: {}]
  %s6 = sld [smem:[#allocation0]]
  $region53: #{basic_ds_block2_forward.1} parent=0
    _
  %s8 = ssub.s32 1, %s6
  %s9 = scalar_select 0, %s8, %s6
  loop: start=0, step=1, limit=4
  $region2: #{basic_ds_block2_forward.1} parent=0 // loop_pre_header
    _
  $region3: #{basic_ds_block2_forward.1} parent=0 // loop_header
    %s11 = sphi 0, %s15
    %p12 = scmp.ge.s32.totalorder %s11, 4
    %s18 = sphi 0, %s30
    %s19 = sphi 0, %s26
    %s20 = sphi 0, %s18
    %s21 = sphi 0, %s19
    %s22 = sphi 0, %s20
    %s23 = sphi 0, %s21
    %s35 = sphi 0, %s37
    %s38 = sphi 0, %s35
    %s39 = sphi 0, %s38
    %s55 = sphi 0, %s39
    %s61 = sphi 0, %s63
    %s64 = sphi 0, %s61
    %s65 = sphi 0, %s64
    %s81 = sphi 0, %s65
    %s85 = sphi 0, %s85
    %s87 = sphi 0, %s85
    %s88 = sphi 0, %s87
    %s102 = sphi 0, %s88
    %s106 = sphi 0, %s106
    %s108 = sphi 0, %s106
    %s109 = sphi 0, %s108
    %s123 = sphi 0, %s109
    %s127 = sphi 0, %s127
    %s129 = sphi 0, %s127
    %s130 = sphi 0, %s129
    %s144 = sphi 0, %s130
    %s152 = sphi 0, %s154
    %s155 = sphi 0, %s152
    %s156 = sphi 0, %s155
    %s172 = sphi 0, %s156
  $region4: #{basic_ds_block2_forward.1} parent=0 // loop_header_branch
    %14 = sbr.rel (%p12) target = $region8
  $region5: #{basic_ds_block2_forward.1} parent=0 // loop_body
    %s16 = ssub.s32 %s11, 1
    %s17 = ssub.s32 %s11, 2
    %s24 = sadd.s32 1, %s19
    %p25 = scmp.ge.s32.totalorder %s24, 1
    %s26 = scalar_select %p25, 0, %s24
    %s27 = sadd.s32 1, %s18
    %s28 = scalar_select %p25, %s27, %s18
    %p29 = scmp.ge.s32.totalorder %s28, 2
    %s30 = scalar_select %p29, 0, %s28
    %s31 = ssub.s32 %s18, %s30
    %s32 = ssub.s32 %s19, %s26
    %s33 = sor.u32 %s31, %s32
    %p34 = scmp.eq.s32.totalorder %s33, 0
    %s36 = sadd.s32 %s35, 1
    %s37 = scalar_select %p34, %s35, %s36
    %p40 = pneg %p34
    %p41 = scmp.eq.s32.totalorder %s11, 1
    %p42 = por %p40, %p41
    %p43 = scmp.ne.s32.totalorder %s35, %s38
    %p44 = scmp.eq.s32.totalorder %s11, 0
    %p45 = por %p43, %p44
    %p46 = scmp.ne.s32.totalorder %s35, %s38
    %p47 = scmp.eq.s32.totalorder %s16, 1
    %p48 = por %p46, %p47
    %p49 = scmp.ne.s32.totalorder %s38, %s39
    %p50 = scmp.eq.s32.totalorder %s16, 0
    %p51 = por %p49, %p50
    %p52 = scmp.ne.s32.totalorder %s38, %s39
    %p53 = scmp.eq.s32.totalorder %s17, 1
    %p54 = por %p52, %p53
    %p56 = scmp.ne.s32.totalorder %s39, %s55
    %p57 = scmp.eq.s32.totalorder %s17, 0
    %p58 = por %p56, %p57
    %s59 = ssub.s32 %s19, %s26
    %p60 = scmp.eq.s32.totalorder %s59, 0
    %s62 = sadd.s32 %s61, 1
    %s63 = scalar_select %p60, %s61, %s62
    %p66 = pneg %p60
    %p67 = scmp.eq.s32.totalorder %s11, 1
    %p68 = por %p66, %p67
    %p69 = scmp.ne.s32.totalorder %s61, %s64
    %p70 = scmp.eq.s32.totalorder %s11, 0
    %p71 = por %p69, %p70
    %p72 = scmp.ne.s32.totalorder %s61, %s64
    %p73 = scmp.eq.s32.totalorder %s16, 1
    %p74 = por %p72, %p73
    %p75 = scmp.ne.s32.totalorder %s64, %s65
    %p76 = scmp.eq.s32.totalorder %s16, 0
    %p77 = por %p75, %p76
    %p78 = scmp.ne.s32.totalorder %s64, %s65
    %p79 = scmp.eq.s32.totalorder %s17, 1
    %p80 = por %p78, %p79
    %p82 = scmp.ne.s32.totalorder %s65, %s81
    %p83 = scmp.eq.s32.totalorder %s17, 0
    %p84 = por %p82, %p83
    %s86 = sadd.s32 %s85, 1
    %p89 = scmp.eq.s32.totalorder %s11, 1
    %p90 = scmp.ne.s32.totalorder %s85, %s87
    %p91 = scmp.eq.s32.totalorder %s11, 0
    %p92 = por %p90, %p91
    %p93 = scmp.ne.s32.totalorder %s85, %s87
    %p94 = scmp.eq.s32.totalorder %s16, 1
    %p95 = por %p93, %p94
    %p96 = scmp.ne.s32.totalorder %s87, %s88
    %p97 = scmp.eq.s32.totalorder %s16, 0
    %p98 = por %p96, %p97
    %p99 = scmp.ne.s32.totalorder %s87, %s88
    %p100 = scmp.eq.s32.totalorder %s17, 1
    %p101 = por %p99, %p100
    %p103 = scmp.ne.s32.totalorder %s88, %s102
    %p104 = scmp.eq.s32.totalorder %s17, 0
    %p105 = por %p103, %p104
    %s107 = sadd.s32 %s106, 1
    %p110 = scmp.eq.s32.totalorder %s11, 1
    %p111 = scmp.ne.s32.totalorder %s106, %s108
    %p112 = scmp.eq.s32.totalorder %s11, 0
    %p113 = por %p111, %p112
    %p114 = scmp.ne.s32.totalorder %s106, %s108
    %p115 = scmp.eq.s32.totalorder %s16, 1
    %p116 = por %p114, %p115
    %p117 = scmp.ne.s32.totalorder %s108, %s109
    %p118 = scmp.eq.s32.totalorder %s16, 0
    %p119 = por %p117, %p118
    %p120 = scmp.ne.s32.totalorder %s108, %s109
    %p121 = scmp.eq.s32.totalorder %s17, 1
    %p122 = por %p120, %p121
    %p124 = scmp.ne.s32.totalorder %s109, %s123
    %p125 = scmp.eq.s32.totalorder %s17, 0
    %p126 = por %p124, %p125
    %s128 = sadd.s32 %s127, 1
    %p131 = scmp.eq.s32.totalorder %s11, 1
    %p132 = scmp.ne.s32.totalorder %s127, %s129
    %p133 = scmp.eq.s32.totalorder %s11, 0
    %p134 = por %p132, %p133
    %p135 = scmp.ne.s32.totalorder %s127, %s129
    %p136 = scmp.eq.s32.totalorder %s16, 1
    %p137 = por %p135, %p136
    %p138 = scmp.ne.s32.totalorder %s129, %s130
    %p139 = scmp.eq.s32.totalorder %s16, 0
    %p140 = por %p138, %p139
    %p141 = scmp.ne.s32.totalorder %s129, %s130
    %p142 = scmp.eq.s32.totalorder %s17, 1
    %p143 = por %p141, %p142
    %p145 = scmp.ne.s32.totalorder %s130, %s144
    %p146 = scmp.eq.s32.totalorder %s17, 0
    %p147 = por %p145, %p146
    %s148 = ssub.s32 %s18, %s30
    %s149 = ssub.s32 %s19, %s26
    %s150 = sor.u32 %s148, %s149
    %p151 = scmp.eq.s32.totalorder %s150, 0
    %s153 = sadd.s32 %s152, 1
    %s154 = scalar_select %p151, %s152, %s153
    %p157 = pneg %p151
    %p158 = scmp.eq.s32.totalorder %s11, 1
    %p159 = por %p157, %p158
    %p160 = scmp.ne.s32.totalorder %s152, %s155
    %p161 = scmp.eq.s32.totalorder %s11, 0
    %p162 = por %p160, %p161
    %p163 = scmp.ne.s32.totalorder %s152, %s155
    %p164 = scmp.eq.s32.totalorder %s16, 1
    %p165 = por %p163, %p164
    %p166 = scmp.ne.s32.totalorder %s155, %s156
    %p167 = scmp.eq.s32.totalorder %s16, 0
    %p168 = por %p166, %p167
    %p169 = scmp.ne.s32.totalorder %s155, %s156
    %p170 = scmp.eq.s32.totalorder %s17, 1
    %p171 = por %p169, %p170
    %p173 = scmp.ne.s32.totalorder %s156, %s172
    %p174 = scmp.eq.s32.totalorder %s17, 0
    %p175 = por %p173, %p174
    %p176 = scmp.le.s32.totalorder 1, %s11
    %p177 = scmp.lt.s32.totalorder %s11, 3
    %p178 = pnand %p176, %p177
    %p179 = pneg %p178
    // Predicated region
    $region9: #{basic_ds_block2_forward.1} parent=5 // pred_check
      _
    $region10: #{basic_ds_block2_forward.1} parent=5 // pred_check_branch
      %181 = sbr.rel (%p178) target = $region12
    $region11: #{basic_ds_block2_forward.1} parent=5 // pred_region
      %s182 = ssub.s32 %s11, 1
      // Predicated region
      $region13: #{basic_ds_block2_forward.1} parent=11 // pred_check
        %p183 = pneg %p77
      $region14: #{basic_ds_block2_forward.1} parent=11 // pred_check_branch
        %185 = sbr.rel (%p183) target = $region16
      $region15: #{basic_ds_block2_forward.1} parent=11 // pred_region
        %p186 = scmp.lt.s32.totalorder %s21, 0
        %s187 = scalar_select %p186, %s21, 0
        %s188 = smul.addr %s187, 61
        %s189 = smul.addr %s188, 8
        %s190 = scalar_lea.vmem %s1, %s189
      $region16: #{basic_ds_block2_forward.1} parent=11 // pred_fallthru
        _
      // Predicated region
      $region17: #{basic_ds_block2_forward.1} parent=11 // pred_check
        %p191 = pneg %p98
      $region18: #{basic_ds_block2_forward.1} parent=11 // pred_check_branch
        %193 = sbr.rel (%p191) target = $region20
      $region19: #{basic_ds_block2_forward.1} parent=11 // pred_region
        _
      $region20: #{basic_ds_block2_forward.1} parent=11 // pred_fallthru
        _
      // Predicated region
      $region21: #{basic_ds_block2_forward.1} parent=11 // pred_check
        %p194 = pneg %p119
      $region22: #{basic_ds_block2_forward.1} parent=11 // pred_check_branch
        %196 = sbr.rel (%p194) target = $region24
      $region23: #{basic_ds_block2_forward.1} parent=11 // pred_region
        _
      $region24: #{basic_ds_block2_forward.1} parent=11 // pred_fallthru
        _
      // Predicated region
      $region25: #{basic_ds_block2_forward.1} parent=11 // pred_check
        %p197 = pneg %p140
      $region26: #{basic_ds_block2_forward.1} parent=11 // pred_check_branch
        %199 = sbr.rel (%p197) target = $region28
      $region27: #{basic_ds_block2_forward.1} parent=11 // pred_region
        _
      $region28: #{basic_ds_block2_forward.1} parent=11 // pred_fallthru
        _
    $region12: #{basic_ds_block2_forward.1} parent=5 // pred_fallthru
      _
    %p200 = scmp.lt.s32.totalorder %s11, 2
    // Predicated region
    $region29: #{basic_ds_block2_forward.1} parent=5 // pred_check
      %p201 = pneg %p200
    $region30: #{basic_ds_block2_forward.1} parent=5 // pred_check_branch
      %203 = sbr.rel (%p201) target = $region32
    $region31: #{basic_ds_block2_forward.1} parent=5 // pred_region
      // Predicated region
      $region33: #{basic_ds_block2_forward.1} parent=31 // pred_check
        %p204 = pneg %p45
      $region34: #{basic_ds_block2_forward.1} parent=31 // pred_check_branch
        %206 = sbr.rel (%p204) target = $region36
      $region35: #{basic_ds_block2_forward.1} parent=31 // pred_region
        %p207 = scmp.lt.s32.totalorder %s18, 1
        %s208 = scalar_select %p207, %s18, 1
        %p209 = scmp.lt.s32.totalorder %s19, 0
        %s210 = scalar_select %p209, %s19, 0
        %s211 = smul.addr %s210, 61
        %s212 = smul.addr %s208, 61
        %s213 = sadd.s32 %s211, %s212
        %s214 = smul.addr %s213, 8
        %s215 = scalar_lea.vmem %s0, %s214
      $region36: #{basic_ds_block2_forward.1} parent=31 // pred_fallthru
        _
    $region32: #{basic_ds_block2_forward.1} parent=5 // pred_fallthru
      _
    %p216 = scmp.le.s32.totalorder 1, %s11
    %p217 = scmp.lt.s32.totalorder %s11, 3
    %p218 = pnand %p216, %p217
    %p219 = pneg %p218
    // Predicated region
    $region37: #{basic_ds_block2_forward.1} parent=5 // pred_check
      _
    $region38: #{basic_ds_block2_forward.1} parent=5 // pred_check_branch
      %221 = sbr.rel (%p218) target = $region40
    $region39: #{basic_ds_block2_forward.1} parent=5 // pred_region
      %s222 = ssub.s32 %s11, 1
      %p223 = scmp.lt.s32.totalorder %s20, 1
      %s224 = scalar_select %p223, %s20, 1
      %p225 = scmp.lt.s32.totalorder %s21, 0
      %s226 = scalar_select %p225, %s21, 0
      %s227 = smul.addr %s226, 61
      %s228 = smul.addr %s224, 61
      %s229 = sadd.s32 %s227, %s228
      %s230 = smul.addr %s229, 8
      %s231 = scalar_lea.vmem %s0, %s230
      %p232 = pneg %p51
      %p233 = pneg %p48
      %p234 = scmp.lt.s32.totalorder %s21, 0
      %s235 = scalar_select %p234, %s21, 0
      %s236 = smul.addr %s235, 61
      %s237 = smul.addr %s236, 8
      %s238 = scalar_lea.vmem %s1, %s237
      %p239 = pneg %p77
      %p240 = pneg %p74
      %p241 = pneg %p98
      %p242 = pneg %p95
      %p243 = pneg %p119
      %p244 = pneg %p116
      %p245 = pneg %p140
      %p246 = pneg %p137
      %p247 = pneg %p168
      %p248 = pneg %p165
      %p249 = scmp.lt.s32.totalorder %s20, 1
      %s250 = scalar_select %p249, %s20, 1
      %p251 = scmp.lt.s32.totalorder %s21, 0
      %s252 = scalar_select %p251, %s21, 0
      %s253 = smul.addr %s252, 48
      %s254 = smul.addr %s250, 48
      %s255 = sadd.s32 %s253, %s254
      %s256 = smul.addr %s255, 8
      %s257 = scalar_lea.vmem %s5, %s256
      %p258 = scmp.lt.s32.totalorder %s20, 1
      %s259 = scalar_select %p258, %s20, 1
      %p260 = scmp.lt.s32.totalorder %s21, 0
      %s261 = scalar_select %p260, %s21, 0
      %s262 = smul.addr %s261, 61
      %s263 = smul.addr %s259, 61
      %s264 = sadd.s32 %s262, %s263
      %s265 = smul.addr %s264, 8
      %s266 = scalar_lea.vmem %s0, %s265
      %p267 = scmp.lt.s32.totalorder %s21, 0
      %s268 = scalar_select %p267, %s21, 0
      %s269 = smul.addr %s268, 61
      %s270 = smul.addr %s269, 8
      %s271 = scalar_lea.vmem %s1, %s270
      %p272 = scmp.lt.s32.totalorder %s20, 1
      %s273 = scalar_select %p272, %s20, 1
      %p274 = scmp.lt.s32.totalorder %s21, 0
      %s275 = scalar_select %p274, %s21, 0
      %s276 = smul.addr %s275, 48
      %s277 = smul.addr %s273, 48
      %s278 = sadd.s32 %s276, %s277
      %s279 = smul.addr %s278, 8
      %s280 = scalar_lea.vmem %s5, %s279
      %v282 = vld [vmem:[%s4] sm:$0x1]
      %v283 = vld [vmem:[%s4 + $0x1] sm:$0x1]
      %v284 = vld [vmem:[%s4 + $0x2] sm:$0x1]
      %v285 = vld [vmem:[%s4 + $0x3] sm:$0x1]
      %v286 = vld [vmem:[%s4 + $0x4] sm:$0x1]
      %v287 = vld [vmem:[%s266] sm:$0xff]
      %v288 = vld [vmem:[%s266 + $0x8] sm:$0xff]
      %v289 = vld [vmem:[%s266 + $0x10] sm:$0xff]
      %v290 = vld [vmem:[%s266 + $0x18] sm:$0xff]
      %v291 = vld [vmem:[%s266 + $0x20] sm:$0xff]
      %v292 = vld [vmem:[%s266 + $0x28] sm:$0xff]
      %v293 = vld [vmem:[%s266 + $0x30] sm:$0xff]
      %v294 = vld [vmem:[%s266 + $0x38] sm:$0xff]
      %v295 = vld [vmem:[%s266 + $0x40] sm:$0xff]
      %v296 = vld [vmem:[%s266 + $0x48] sm:$0xff]
      %v297 = vld [vmem:[%s266 + $0x50] sm:$0xff]
      %v298 = vld [vmem:[%s266 + $0x58] sm:$0xff]
      %v299 = vld [vmem:[%s266 + $0x60] sm:$0xff]
      %v300 = vld [vmem:[%s266 + $0x68] sm:$0xff]
      %v301 = vld [vmem:[%s266 + $0x70] sm:$0xff]
      %v302 = vld [vmem:[%s266 + $0x78] sm:$0xff]
      %v303 = vld [vmem:[%s266 + $0x80] sm:$0xff]
      %v304 = vld [vmem:[%s266 + $0x88] sm:$0xff]
      %v305 = vld [vmem:[%s266 + $0x90] sm:$0xff]
      %v306 = vld [vmem:[%s266 + $0x98] sm:$0xff]
      %v307 = vld [vmem:[%s266 + $0xa0] sm:$0xff]
      %v308 = vld [vmem:[%s266 + $0xa8] sm:$0xff]
      %v309 = vld [vmem:[%s266 + $0xb0] sm:$0xff]
      %v310 = vld [vmem:[%s266 + $0xb8] sm:$0xff]
      %v311 = vld [vmem:[%s266 + $0xc0] sm:$0xff]
      %v312 = vld [vmem:[%s266 + $0xc8] sm:$0xff]
      %v313 = vld [vmem:[%s266 + $0xd0] sm:$0xff]
      %v314 = vld [vmem:[%s266 + $0xd8] sm:$0xff]
      %v315 = vld [vmem:[%s266 + $0xe0] sm:$0xff]
      %v316 = vld [vmem:[%s266 + $0xe8] sm:$0xff]
      %v317 = vld [vmem:[%s266 + $0xf0] sm:$0xff]
      %v318 = vld [vmem:[%s266 + $0xf8] sm:$0xff]
      %v319 = vld [vmem:[%s266 + $0x100] sm:$0xff]
      %v320 = vld [vmem:[%s266 + $0x108] sm:$0xff]
      %v321 = vld [vmem:[%s266 + $0x110] sm:$0xff]
      %v322 = vld [vmem:[%s266 + $0x118] sm:$0xff]
      %v323 = vld [vmem:[%s266 + $0x120] sm:$0xff]
      %v324 = vld [vmem:[%s266 + $0x128] sm:$0xff]
      %v325 = vld [vmem:[%s266 + $0x130] sm:$0xff]
      %v326 = vld [vmem:[%s266 + $0x138] sm:$0xff]
      %v327 = vld [vmem:[%s266 + $0x140] sm:$0xff]
      %v328 = vld [vmem:[%s266 + $0x148] sm:$0xff]
      %v329 = vld [vmem:[%s266 + $0x150] sm:$0xff]
      %v330 = vld [vmem:[%s266 + $0x158] sm:$0xff]
      %v331 = vld [vmem:[%s266 + $0x160] sm:$0xff]
      %v332 = vld [vmem:[%s266 + $0x168] sm:$0xff]
      %v333 = vld [vmem:[%s266 + $0x170] sm:$0xff]
      %v334 = vld [vmem:[%s266 + $0x178] sm:$0xff]
      %v335 = vld [vmem:[%s266 + $0x180] sm:$0xff]
      %v336 = vld [vmem:[%s266 + $0x188] sm:$0xff]
      %v337 = vld [vmem:[%s266 + $0x190] sm:$0xff]
      %v338 = vld [vmem:[%s266 + $0x198] sm:$0xff]
      %v339 = vld [vmem:[%s266 + $0x1a0] sm:$0xff]
      %v340 = vld [vmem:[%s266 + $0x1a8] sm:$0xff]
      %v341 = vld [vmem:[%s266 + $0x1b0] sm:$0xff]
      %v342 = vld [vmem:[%s266 + $0x1b8] sm:$0xff]
      %v343 = vld [vmem:[%s266 + $0x1c0] sm:$0xff]
      %v344 = vld [vmem:[%s266 + $0x1c8] sm:$0xff]
      %v345 = vld [vmem:[%s266 + $0x1d0] sm:$0xff]
      %v346 = vld [vmem:[%s266 + $0x1d8] sm:$0xff]
      %v347 = vld [vmem:[%s266 + $0x1e0] sm:$0xff]
      %v348 = vlaneseq
      %v349 = vshrl.u32 %v348, 7
      %v350 = vsub.s32 0, %v349
      %v351 = vrot.slane %v282, %v350
      %v352 = vmul.f32 %v287, %v351
      %v353 = vmul.f32 %v288, %v351
      %v354 = vmul.f32 %v289, %v351
      %v355 = vmul.f32 %v290, %v351
      %v356 = vmul.f32 %v291, %v351
      %v357 = vmul.f32 %v292, %v351
      %v358 = vmul.f32 %v293, %v351
      %v359 = vmul.f32 %v294, %v351
      %v360 = vmul.f32 %v295, %v351
      %v361 = vmul.f32 %v296, %v351
      %v362 = vmul.f32 %v297, %v351
      %v363 = vmul.f32 %v298, %v351
      %v364 = vmul.f32 %v299, %v351
      %v365 = vmul.f32 %v300, %v351
      %v366 = vmul.f32 %v301, %v351
      %v367 = vmul.f32 %v302, %v351
      %v368 = vmul.f32 %v303, %v351
      %v369 = vmul.f32 %v304, %v351
      %v370 = vmul.f32 %v305, %v351
      %v371 = vmul.f32 %v306, %v351
      %v372 = vmul.f32 %v307, %v351
      %v373 = vmul.f32 %v308, %v351
      %v374 = vmul.f32 %v309, %v351
      %v375 = vmul.f32 %v310, %v351
      %v376 = vmul.f32 %v311, %v351
      %v377 = vmul.f32 %v312, %v351
      %v378 = vmul.f32 %v313, %v351
      %v379 = vmul.f32 %v314, %v351
      %v380 = vmul.f32 %v315, %v351
      %v381 = vmul.f32 %v316, %v351
      %v382 = vmul.f32 %v317, %v351
      %v383 = vmul.f32 %v318, %v351
      %v384 = vmul.f32 %v319, %v351
      %v385 = vmul.f32 %v320, %v351
      %v386 = vmul.f32 %v321, %v351
      %v387 = vmul.f32 %v322, %v351
      %v388 = vmul.f32 %v323, %v351
      %v389 = vmul.f32 %v324, %v351
      %v390 = vmul.f32 %v325, %v351
      %v391 = vmul.f32 %v326, %v351
      %v392 = vmul.f32 %v327, %v351
      %v393 = vmul.f32 %v328, %v351
      %v394 = vmul.f32 %v329, %v351
      %v395 = vmul.f32 %v330, %v351
      %v396 = vmul.f32 %v331, %v351
      %v397 = vmul.f32 %v332, %v351
      %v398 = vmul.f32 %v333, %v351
      %v399 = vmul.f32 %v334, %v351
      %v400 = vmul.f32 %v335, %v351
      %v401 = vmul.f32 %v336, %v351
      %v402 = vmul.f32 %v337, %v351
      %v403 = vmul.f32 %v338, %v351
      %v404 = vmul.f32 %v339, %v351
      %v405 = vmul.f32 %v340, %v351
      %v406 = vmul.f32 %v341, %v351
      %v407 = vmul.f32 %v342, %v351
      %v408 = vmul.f32 %v343, %v351
      %v409 = vmul.f32 %v344, %v351
      %v410 = vmul.f32 %v345, %v351
      %v411 = vmul.f32 %v346, %v351
      %v412 = vmul.f32 %v347, %v351
      %v413 = vlaneseq
      %v414 = vshrl.u32 %v413, 7
      %v415 = vsub.s32 0, %v414
      %v416 = vrot.slane %v283, %v415
      %v417 = vadd.f32 %v352, %v416
      %v418 = vadd.f32 %v353, %v416
      %v419 = vadd.f32 %v354, %v416
      %v420 = vadd.f32 %v355, %v416
      %v421 = vadd.f32 %v356, %v416
      %v422 = vadd.f32 %v357, %v416
      %v423 = vadd.f32 %v358, %v416
      %v424 = vadd.f32 %v359, %v416
      %v425 = vadd.f32 %v360, %v416
      %v426 = vadd.f32 %v361, %v416
      %v427 = vadd.f32 %v362, %v416
      %v428 = vadd.f32 %v363, %v416
      %v429 = vadd.f32 %v364, %v416
      %v430 = vadd.f32 %v365, %v416
      %v431 = vadd.f32 %v366, %v416
      %v432 = vadd.f32 %v367, %v416
      %v433 = vadd.f32 %v368, %v416
      %v434 = vadd.f32 %v369, %v416
      %v435 = vadd.f32 %v370, %v416
      %v436 = vadd.f32 %v371, %v416
      %v437 = vadd.f32 %v372, %v416
      %v438 = vadd.f32 %v373, %v416
      %v439 = vadd.f32 %v374, %v416
      %v440 = vadd.f32 %v375, %v416
      %v441 = vadd.f32 %v376, %v416
      %v442 = vadd.f32 %v377, %v416
      %v443 = vadd.f32 %v378, %v416
      %v444 = vadd.f32 %v379, %v416
      %v445 = vadd.f32 %v380, %v416
      %v446 = vadd.f32 %v381, %v416
      %v447 = vadd.f32 %v382, %v416
      %v448 = vadd.f32 %v383, %v416
      %v449 = vadd.f32 %v384, %v416
      %v450 = vadd.f32 %v385, %v416
      %v451 = vadd.f32 %v386, %v416
      %v452 = vadd.f32 %v387, %v416
      %v453 = vadd.f32 %v388, %v416
      %v454 = vadd.f32 %v389, %v416
      %v455 = vadd.f32 %v390, %v416
      %v456 = vadd.f32 %v391, %v416
      %v457 = vadd.f32 %v392, %v416
      %v458 = vadd.f32 %v393, %v416
      %v459 = vadd.f32 %v394, %v416
      %v460 = vadd.f32 %v395, %v416
      %v461 = vadd.f32 %v396, %v416
      %v462 = vadd.f32 %v397, %v416
      %v463 = vadd.f32 %v398, %v416
      %v464 = vadd.f32 %v399, %v416
      %v465 = vadd.f32 %v400, %v416
      %v466 = vadd.f32 %v401, %v416
      %v467 = vadd.f32 %v402, %v416
      %v468 = vadd.f32 %v403, %v416
      %v469 = vadd.f32 %v404, %v416
      %v470 = vadd.f32 %v405, %v416
      %v471 = vadd.f32 %v406, %v416
      %v472 = vadd.f32 %v407, %v416
      %v473 = vadd.f32 %v408, %v416
      %v474 = vadd.f32 %v409, %v416
      %v475 = vadd.f32 %v410, %v416
      %v476 = vadd.f32 %v411, %v416
      %v477 = vadd.f32 %v412, %v416
      %v478 = vmax.f32 %v417, 0.0
      %v479 = vmax.f32 %v418, 0.0
      %v480 = vmax.f32 %v419, 0.0
      %v481 = vmax.f32 %v420, 0.0
      %v482 = vmax.f32 %v421, 0.0
      %v483 = vmax.f32 %v422, 0.0
      %v484 = vmax.f32 %v423, 0.0
      %v485 = vmax.f32 %v424, 0.0
      %v486 = vmax.f32 %v425, 0.0
      %v487 = vmax.f32 %v426, 0.0
      %v488 = vmax.f32 %v427, 0.0
      %v489 = vmax.f32 %v428, 0.0
      %v490 = vmax.f32 %v429, 0.0
      %v491 = vmax.f32 %v430, 0.0
      %v492 = vmax.f32 %v431, 0.0
      %v493 = vmax.f32 %v432, 0.0
      %v494 = vmax.f32 %v433, 0.0
      %v495 = vmax.f32 %v434, 0.0
      %v496 = vmax.f32 %v435, 0.0
      %v497 = vmax.f32 %v436, 0.0
      %v498 = vmax.f32 %v437, 0.0
      %v499 = vmax.f32 %v438, 0.0
      %v500 = vmax.f32 %v439, 0.0
      %v501 = vmax.f32 %v440, 0.0
      %v502 = vmax.f32 %v441, 0.0
      %v503 = vmax.f32 %v442, 0.0
      %v504 = vmax.f32 %v443, 0.0
      %v505 = vmax.f32 %v444, 0.0
      %v506 = vmax.f32 %v445, 0.0
      %v507 = vmax.f32 %v446, 0.0
      %v508 = vmax.f32 %v447, 0.0
      %v509 = vmax.f32 %v448, 0.0
      %v510 = vmax.f32 %v449, 0.0
      %v511 = vmax.f32 %v450, 0.0
      %v512 = vmax.f32 %v451, 0.0
      %v513 = vmax.f32 %v452, 0.0
      %v514 = vmax.f32 %v453, 0.0
      %v515 = vmax.f32 %v454, 0.0
      %v516 = vmax.f32 %v455, 0.0
      %v517 = vmax.f32 %v456, 0.0
      %v518 = vmax.f32 %v457, 0.0
      %v519 = vmax.f32 %v458, 0.0
      %v520 = vmax.f32 %v459, 0.0
      %v521 = vmax.f32 %v460, 0.0
      %v522 = vmax.f32 %v461, 0.0
      %v523 = vmax.f32 %v462, 0.0
      %v524 = vmax.f32 %v463, 0.0
      %v525 = vmax.f32 %v464, 0.0
      %v526 = vmax.f32 %v465, 0.0
      %v527 = vmax.f32 %v466, 0.0
      %v528 = vmax.f32 %v467, 0.0
      %v529 = vmax.f32 %v468, 0.0
      %v530 = vmax.f32 %v469, 0.0
      %v531 = vmax.f32 %v470, 0.0
      %v532 = vmax.f32 %v471, 0.0
      %v533 = vmax.f32 %v472, 0.0
      %v534 = vmax.f32 %v473, 0.0
      %v535 = vmax.f32 %v474, 0.0
      %v536 = vmax.f32 %v475, 0.0
      %v537 = vmax.f32 %v476, 0.0
      %v538 = vmax.f32 %v477, 0.0
      %v539 = vld [vmem:[%s271] sm:$0xff]
      %v540 = vld [vmem:[%s271 + $0x8] sm:$0xff]
      %v541 = vld [vmem:[%s271 + $0x10] sm:$0xff]
      %v542 = vld [vmem:[%s271 + $0x18] sm:$0xff]
      %v543 = vld [vmem:[%s271 + $0x20] sm:$0xff]
      %v544 = vld [vmem:[%s271 + $0x28] sm:$0xff]
      %v545 = vld [vmem:[%s271 + $0x30] sm:$0xff]
      %v546 = vld [vmem:[%s271 + $0x38] sm:$0xff]
      %v547 = vld [vmem:[%s271 + $0x40] sm:$0xff]
      %v548 = vld [vmem:[%s271 + $0x48] sm:$0xff]
      %v549 = vld [vmem:[%s271 + $0x50] sm:$0xff]
      %v550 = vld [vmem:[%s271 + $0x58] sm:$0xff]
      %v551 = vld [vmem:[%s271 + $0x60] sm:$0xff]
      %v552 = vld [vmem:[%s271 + $0x68] sm:$0xff]
      %v553 = vld [vmem:[%s271 + $0x70] sm:$0xff]
      %v554 = vld [vmem:[%s271 + $0x78] sm:$0xff]
      %v555 = vld [vmem:[%s271 + $0x80] sm:$0xff]
      %v556 = vld [vmem:[%s271 + $0x88] sm:$0xff]
      %v557 = vld [vmem:[%s271 + $0x90] sm:$0xff]
      %v558 = vld [vmem:[%s271 + $0x98] sm:$0xff]
      %v559 = vld [vmem:[%s271 + $0xa0] sm:$0xff]
      %v560 = vld [vmem:[%s271 + $0xa8] sm:$0xff]
      %v561 = vld [vmem:[%s271 + $0xb0] sm:$0xff]
      %v562 = vld [vmem:[%s271 + $0xb8] sm:$0xff]
      %v563 = vld [vmem:[%s271 + $0xc0] sm:$0xff]
      %v564 = vld [vmem:[%s271 + $0xc8] sm:$0xff]
      %v565 = vld [vmem:[%s271 + $0xd0] sm:$0xff]
      %v566 = vld [vmem:[%s271 + $0xd8] sm:$0xff]
      %v567 = vld [vmem:[%s271 + $0xe0] sm:$0xff]
      %v568 = vld [vmem:[%s271 + $0xe8] sm:$0xff]
      %v569 = vld [vmem:[%s271 + $0xf0] sm:$0xff]
      %v570 = vld [vmem:[%s271 + $0xf8] sm:$0xff]
      %v571 = vld [vmem:[%s271 + $0x100] sm:$0xff]
      %v572 = vld [vmem:[%s271 + $0x108] sm:$0xff]
      %v573 = vld [vmem:[%s271 + $0x110] sm:$0xff]
      %v574 = vld [vmem:[%s271 + $0x118] sm:$0xff]
      %v575 = vld [vmem:[%s271 + $0x120] sm:$0xff]
      %v576 = vld [vmem:[%s271 + $0x128] sm:$0xff]
      %v577 = vld [vmem:[%s271 + $0x130] sm:$0xff]
      %v578 = vld [vmem:[%s271 + $0x138] sm:$0xff]
      %v579 = vld [vmem:[%s271 + $0x140] sm:$0xff]
      %v580 = vld [vmem:[%s271 + $0x148] sm:$0xff]
      %v581 = vld [vmem:[%s271 + $0x150] sm:$0xff]
      %v582 = vld [vmem:[%s271 + $0x158] sm:$0xff]
      %v583 = vld [vmem:[%s271 + $0x160] sm:$0xff]
      %v584 = vld [vmem:[%s271 + $0x168] sm:$0xff]
      %v585 = vld [vmem:[%s271 + $0x170] sm:$0xff]
      %v586 = vld [vmem:[%s271 + $0x178] sm:$0xff]
      %v587 = vld [vmem:[%s271 + $0x180] sm:$0xff]
      %v588 = vld [vmem:[%s271 + $0x188] sm:$0xff]
      %v589 = vld [vmem:[%s271 + $0x190] sm:$0xff]
      %v590 = vld [vmem:[%s271 + $0x198] sm:$0xff]
      %v591 = vld [vmem:[%s271 + $0x1a0] sm:$0xff]
      %v592 = vld [vmem:[%s271 + $0x1a8] sm:$0xff]
      %v593 = vld [vmem:[%s271 + $0x1b0] sm:$0xff]
      %v594 = vld [vmem:[%s271 + $0x1b8] sm:$0xff]
      %v595 = vld [vmem:[%s271 + $0x1c0] sm:$0xff]
      %v596 = vld [vmem:[%s271 + $0x1c8] sm:$0xff]
      %v597 = vld [vmem:[%s271 + $0x1d0] sm:$0xff]
      %v598 = vld [vmem:[%s271 + $0x1d8] sm:$0xff]
      %v599 = vld [vmem:[%s271 + $0x1e0] sm:$0xff]
      %601 = vset.pattern.permute.xlu0 0
      %602 = vperm.xlu0 %601, %v539
      %v603 = vpop.permute.xlu0 %602
      %606 = vset.pattern.permute.xlu0 0
      %607 = vperm.xlu0 %606, %v540
      %v608 = vpop.permute.xlu0 %607
      %611 = vset.pattern.permute.xlu0 0
      %612 = vperm.xlu0 %611, %v541
      %v613 = vpop.permute.xlu0 %612
      %616 = vset.pattern.permute.xlu0 0
      %617 = vperm.xlu0 %616, %v542
      %v618 = vpop.permute.xlu0 %617
      %621 = vset.pattern.permute.xlu0 0
      %622 = vperm.xlu0 %621, %v543
      %v623 = vpop.permute.xlu0 %622
      %626 = vset.pattern.permute.xlu0 0
      %627 = vperm.xlu0 %626, %v544
      %v628 = vpop.permute.xlu0 %627
      %631 = vset.pattern.permute.xlu0 0
      %632 = vperm.xlu0 %631, %v545
      %v633 = vpop.permute.xlu0 %632
      %636 = vset.pattern.permute.xlu0 0
      %637 = vperm.xlu0 %636, %v546
      %v638 = vpop.permute.xlu0 %637
      %641 = vset.pattern.permute.xlu0 0
      %642 = vperm.xlu0 %641, %v547
      %v643 = vpop.permute.xlu0 %642
      %646 = vset.pattern.permute.xlu0 0
      %647 = vperm.xlu0 %646, %v548
      %v648 = vpop.permute.xlu0 %647
      %651 = vset.pattern.permute.xlu0 0
      %652 = vperm.xlu0 %651, %v549
      %v653 = vpop.permute.xlu0 %652
      %656 = vset.pattern.permute.xlu0 0
      %657 = vperm.xlu0 %656, %v550
      %v658 = vpop.permute.xlu0 %657
      %661 = vset.pattern.permute.xlu0 0
      %662 = vperm.xlu0 %661, %v551
      %v663 = vpop.permute.xlu0 %662
      %666 = vset.pattern.permute.xlu0 0
      %667 = vperm.xlu0 %666, %v552
      %v668 = vpop.permute.xlu0 %667
      %671 = vset.pattern.permute.xlu0 0
      %672 = vperm.xlu0 %671, %v553
      %v673 = vpop.permute.xlu0 %672
      %676 = vset.pattern.permute.xlu0 0
      %677 = vperm.xlu0 %676, %v554
      %v678 = vpop.permute.xlu0 %677
      %681 = vset.pattern.permute.xlu0 0
      %682 = vperm.xlu0 %681, %v555
      %v683 = vpop.permute.xlu0 %682
      %686 = vset.pattern.permute.xlu0 0
      %687 = vperm.xlu0 %686, %v556
      %v688 = vpop.permute.xlu0 %687
      %691 = vset.pattern.permute.xlu0 0
      %692 = vperm.xlu0 %691, %v557
      %v693 = vpop.permute.xlu0 %692
      %696 = vset.pattern.permute.xlu0 0
      %697 = vperm.xlu0 %696, %v558
      %v698 = vpop.permute.xlu0 %697
      %701 = vset.pattern.permute.xlu0 0
      %702 = vperm.xlu0 %701, %v559
      %v703 = vpop.permute.xlu0 %702
      %706 = vset.pattern.permute.xlu0 0
      %707 = vperm.xlu0 %706, %v560
      %v708 = vpop.permute.xlu0 %707
      %711 = vset.pattern.permute.xlu0 0
      %712 = vperm.xlu0 %711, %v561
      %v713 = vpop.permute.xlu0 %712
      %716 = vset.pattern.permute.xlu0 0
      %717 = vperm.xlu0 %716, %v562
      %v718 = vpop.permute.xlu0 %717
      %721 = vset.pattern.permute.xlu0 0
      %722 = vperm.xlu0 %721, %v563
      %v723 = vpop.permute.xlu0 %722
      %726 = vset.pattern.permute.xlu0 0
      %727 = vperm.xlu0 %726, %v564
      %v728 = vpop.permute.xlu0 %727
      %731 = vset.pattern.permute.xlu0 0
      %732 = vperm.xlu0 %731, %v565
      %v733 = vpop.permute.xlu0 %732
      %736 = vset.pattern.permute.xlu0 0
      %737 = vperm.xlu0 %736, %v566
      %v738 = vpop.permute.xlu0 %737
      %741 = vset.pattern.permute.xlu0 0
      %742 = vperm.xlu0 %741, %v567
      %v743 = vpop.permute.xlu0 %742
      %746 = vset.pattern.permute.xlu0 0
      %747 = vperm.xlu0 %746, %v568
      %v748 = vpop.permute.xlu0 %747
      %751 = vset.pattern.permute.xlu0 0
      %752 = vperm.xlu0 %751, %v569
      %v753 = vpop.permute.xlu0 %752
      %756 = vset.pattern.permute.xlu0 0
      %757 = vperm.xlu0 %756, %v570
      %v758 = vpop.permute.xlu0 %757
      %761 = vset.pattern.permute.xlu0 0
      %762 = vperm.xlu0 %761, %v571
      %v763 = vpop.permute.xlu0 %762
      %766 = vset.pattern.permute.xlu0 0
      %767 = vperm.xlu0 %766, %v572
      %v768 = vpop.permute.xlu0 %767
      %771 = vset.pattern.permute.xlu0 0
      %772 = vperm.xlu0 %771, %v573
      %v773 = vpop.permute.xlu0 %772
      %776 = vset.pattern.permute.xlu0 0
      %777 = vperm.xlu0 %776, %v574
      %v778 = vpop.permute.xlu0 %777
      %781 = vset.pattern.permute.xlu0 0
      %782 = vperm.xlu0 %781, %v575
      %v783 = vpop.permute.xlu0 %782
      %786 = vset.pattern.permute.xlu0 0
      %787 = vperm.xlu0 %786, %v576
      %v788 = vpop.permute.xlu0 %787
      %791 = vset.pattern.permute.xlu0 0
      %792 = vperm.xlu0 %791, %v577
      %v793 = vpop.permute.xlu0 %792
      %796 = vset.pattern.permute.xlu0 0
      %797 = vperm.xlu0 %796, %v578
      %v798 = vpop.permute.xlu0 %797
      %801 = vset.pattern.permute.xlu0 0
      %802 = vperm.xlu0 %801, %v579
      %v803 = vpop.permute.xlu0 %802
      %806 = vset.pattern.permute.xlu0 0
      %807 = vperm.xlu0 %806, %v580
      %v808 = vpop.permute.xlu0 %807
      %811 = vset.pattern.permute.xlu0 0
      %812 = vperm.xlu0 %811, %v581
      %v813 = vpop.permute.xlu0 %812
      %816 = vset.pattern.permute.xlu0 0
      %817 = vperm.xlu0 %816, %v582
      %v818 = vpop.permute.xlu0 %817
      %821 = vset.pattern.permute.xlu0 0
      %822 = vperm.xlu0 %821, %v583
      %v823 = vpop.permute.xlu0 %822
      %826 = vset.pattern.permute.xlu0 0
      %827 = vperm.xlu0 %826, %v584
      %v828 = vpop.permute.xlu0 %827
      %831 = vset.pattern.permute.xlu0 0
      %832 = vperm.xlu0 %831, %v585
      %v833 = vpop.permute.xlu0 %832
      %836 = vset.pattern.permute.xlu0 0
      %837 = vperm.xlu0 %836, %v586
      %v838 = vpop.permute.xlu0 %837
      %841 = vset.pattern.permute.xlu0 0
      %842 = vperm.xlu0 %841, %v587
      %v843 = vpop.permute.xlu0 %842
      %846 = vset.pattern.permute.xlu0 0
      %847 = vperm.xlu0 %846, %v588
      %v848 = vpop.permute.xlu0 %847
      %851 = vset.pattern.permute.xlu0 0
      %852 = vperm.xlu0 %851, %v589
      %v853 = vpop.permute.xlu0 %852
      %856 = vset.pattern.permute.xlu0 0
      %857 = vperm.xlu0 %856, %v590
      %v858 = vpop.permute.xlu0 %857
      %861 = vset.pattern.permute.xlu0 0
      %862 = vperm.xlu0 %861, %v591
      %v863 = vpop.permute.xlu0 %862
      %866 = vset.pattern.permute.xlu0 0
      %867 = vperm.xlu0 %866, %v592
      %v868 = vpop.permute.xlu0 %867
      %871 = vset.pattern.permute.xlu0 0
      %872 = vperm.xlu0 %871, %v593
      %v873 = vpop.permute.xlu0 %872
      %876 = vset.pattern.permute.xlu0 0
      %877 = vperm.xlu0 %876, %v594
      %v878 = vpop.permute.xlu0 %877
      %881 = vset.pattern.permute.xlu0 0
      %882 = vperm.xlu0 %881, %v595
      %v883 = vpop.permute.xlu0 %882
      %886 = vset.pattern.permute.xlu0 0
      %887 = vperm.xlu0 %886, %v596
      %v888 = vpop.permute.xlu0 %887
      %891 = vset.pattern.permute.xlu0 0
      %892 = vperm.xlu0 %891, %v597
      %v893 = vpop.permute.xlu0 %892
      %896 = vset.pattern.permute.xlu0 0
      %897 = vperm.xlu0 %896, %v598
      %v898 = vpop.permute.xlu0 %897
      %901 = vset.pattern.permute.xlu0 0
      %902 = vperm.xlu0 %901, %v599
      %v903 = vpop.permute.xlu0 %902
      %v905 = vmul.f32 %v478, %v603
      %v906 = vmul.f32 %v479, %v608
      %v907 = vmul.f32 %v480, %v613
      %v908 = vmul.f32 %v481, %v618
      %v909 = vmul.f32 %v482, %v623
      %v910 = vmul.f32 %v483, %v628
      %v911 = vmul.f32 %v484, %v633
      %v912 = vmul.f32 %v485, %v638
      %v913 = vmul.f32 %v486, %v643
      %v914 = vmul.f32 %v487, %v648
      %v915 = vmul.f32 %v488, %v653
      %v916 = vmul.f32 %v489, %v658
      %v917 = vmul.f32 %v490, %v663
      %v918 = vmul.f32 %v491, %v668
      %v919 = vmul.f32 %v492, %v673
      %v920 = vmul.f32 %v493, %v678
      %v921 = vmul.f32 %v494, %v683
      %v922 = vmul.f32 %v495, %v688
      %v923 = vmul.f32 %v496, %v693
      %v924 = vmul.f32 %v497, %v698
      %v925 = vmul.f32 %v498, %v703
      %v926 = vmul.f32 %v499, %v708
      %v927 = vmul.f32 %v500, %v713
      %v928 = vmul.f32 %v501, %v718
      %v929 = vmul.f32 %v502, %v723
      %v930 = vmul.f32 %v503, %v728
      %v931 = vmul.f32 %v504, %v733
      %v932 = vmul.f32 %v505, %v738
      %v933 = vmul.f32 %v506, %v743
      %v934 = vmul.f32 %v507, %v748
      %v935 = vmul.f32 %v508, %v753
      %v936 = vmul.f32 %v509, %v758
      %v937 = vmul.f32 %v510, %v763
      %v938 = vmul.f32 %v511, %v768
      %v939 = vmul.f32 %v512, %v773
      %v940 = vmul.f32 %v513, %v778
      %v941 = vmul.f32 %v514, %v783
      %v942 = vmul.f32 %v515, %v788
      %v943 = vmul.f32 %v516, %v793
      %v944 = vmul.f32 %v517, %v798
      %v945 = vmul.f32 %v518, %v803
      %v946 = vmul.f32 %v519, %v808
      %v947 = vmul.f32 %v520, %v813
      %v948 = vmul.f32 %v521, %v818
      %v949 = vmul.f32 %v522, %v823
      %v950 = vmul.f32 %v523, %v828
      %v951 = vmul.f32 %v524, %v833
      %v952 = vmul.f32 %v525, %v838
      %v953 = vmul.f32 %v526, %v843
      %v954 = vmul.f32 %v527, %v848
      %v955 = vmul.f32 %v528, %v853
      %v956 = vmul.f32 %v529, %v858
      %v957 = vmul.f32 %v530, %v863
      %v958 = vmul.f32 %v531, %v868
      %v959 = vmul.f32 %v532, %v873
      %v960 = vmul.f32 %v533, %v878
      %v961 = vmul.f32 %v534, %v883
      %v962 = vmul.f32 %v535, %v888
      %v963 = vmul.f32 %v536, %v893
      %v964 = vmul.f32 %v537, %v898
      %v965 = vmul.f32 %v538, %v903
      %vm966 = vcmask 261120
      %967 = vst.msk [vmem:[#allocation2] sm:$0xff] %vm966, %v905
      %968 = vst.msk [vmem:[#allocation2 + $0x8] sm:$0xff] %vm966, %v906
      %969 = vst.msk [vmem:[#allocation2 + $0x10] sm:$0xff] %vm966, %v907
      %970 = vst.msk [vmem:[#allocation2 + $0x18] sm:$0xff] %vm966, %v908
      %971 = vst.msk [vmem:[#allocation2 + $0x20] sm:$0xff] %vm966, %v909
      %972 = vst.msk [vmem:[#allocation2 + $0x28] sm:$0xff] %vm966, %v910
      %973 = vst.msk [vmem:[#allocation2 + $0x30] sm:$0xff] %vm966, %v911
      %974 = vst.msk [vmem:[#allocation2 + $0x38] sm:$0xff] %vm966, %v912
      %975 = vst.msk [vmem:[#allocation2 + $0x40] sm:$0xff] %vm966, %v913
      %976 = vst.msk [vmem:[#allocation2 + $0x48] sm:$0xff] %vm966, %v914
      %977 = vst.msk [vmem:[#allocation2 + $0x50] sm:$0xff] %vm966, %v915
      %978 = vst.msk [vmem:[#allocation2 + $0x58] sm:$0xff] %vm966, %v916
      %979 = vst.msk [vmem:[#allocation2 + $0x60] sm:$0xff] %vm966, %v917
      %980 = vst.msk [vmem:[#allocation2 + $0x68] sm:$0xff] %vm966, %v918
      %981 = vst.msk [vmem:[#allocation2 + $0x70] sm:$0xff] %vm966, %v919
      %982 = vst.msk [vmem:[#allocation2 + $0x78] sm:$0xff] %vm966, %v920
      %983 = vst.msk [vmem:[#allocation2 + $0x80] sm:$0xff] %vm966, %v921
      %984 = vst.msk [vmem:[#allocation2 + $0x88] sm:$0xff] %vm966, %v922
      %985 = vst.msk [vmem:[#allocation2 + $0x90] sm:$0xff] %vm966, %v923
      %986 = vst.msk [vmem:[#allocation2 + $0x98] sm:$0xff] %vm966, %v924
      %987 = vst.msk [vmem:[#allocation2 + $0xa0] sm:$0xff] %vm966, %v925
      %988 = vst.msk [vmem:[#allocation2 + $0xa8] sm:$0xff] %vm966, %v926
      %989 = vst.msk [vmem:[#allocation2 + $0xb0] sm:$0xff] %vm966, %v927
      %990 = vst.msk [vmem:[#allocation2 + $0xb8] sm:$0xff] %vm966, %v928
      %991 = vst.msk [vmem:[#allocation2 + $0xc0] sm:$0xff] %vm966, %v929
      %992 = vst.msk [vmem:[#allocation2 + $0xc8] sm:$0xff] %vm966, %v930
      %993 = vst.msk [vmem:[#allocation2 + $0xd0] sm:$0xff] %vm966, %v931
      %994 = vst.msk [vmem:[#allocation2 + $0xd8] sm:$0xff] %vm966, %v932
      %995 = vst.msk [vmem:[#allocation2 + $0xe0] sm:$0xff] %vm966, %v933
      %996 = vst.msk [vmem:[#allocation2 + $0xe8] sm:$0xff] %vm966, %v934
      %997 = vst.msk [vmem:[#allocation2 + $0xf0] sm:$0xff] %vm966, %v935
      %998 = vst.msk [vmem:[#allocation2 + $0xf8] sm:$0xff] %vm966, %v936
      %999 = vst.msk [vmem:[#allocation2 + $0x100] sm:$0xff] %vm966, %v937
      %1000 = vst.msk [vmem:[#allocation2 + $0x108] sm:$0xff] %vm966, %v938
      %1001 = vst.msk [vmem:[#allocation2 + $0x110] sm:$0xff] %vm966, %v939
      %1002 = vst.msk [vmem:[#allocation2 + $0x118] sm:$0xff] %vm966, %v940
      %1003 = vst.msk [vmem:[#allocation2 + $0x120] sm:$0xff] %vm966, %v941
      %1004 = vst.msk [vmem:[#allocation2 + $0x128] sm:$0xff] %vm966, %v942
      %1005 = vst.msk [vmem:[#allocation2 + $0x130] sm:$0xff] %vm966, %v943
      %1006 = vst.msk [vmem:[#allocation2 + $0x138] sm:$0xff] %vm966, %v944
      %1007 = vst.msk [vmem:[#allocation2 + $0x140] sm:$0xff] %vm966, %v945
      %1008 = vst.msk [vmem:[#allocation2 + $0x148] sm:$0xff] %vm966, %v946
      %1009 = vst.msk [vmem:[#allocation2 + $0x150] sm:$0xff] %vm966, %v947
      %1010 = vst.msk [vmem:[#allocation2 + $0x158] sm:$0xff] %vm966, %v948
      %1011 = vst.msk [vmem:[#allocation2 + $0x160] sm:$0xff] %vm966, %v949
      %1012 = vst.msk [vmem:[#allocation2 + $0x168] sm:$0xff] %vm966, %v950
      %1013 = vst.msk [vmem:[#allocation2 + $0x170] sm:$0xff] %vm966, %v951
      %1014 = vst.msk [vmem:[#allocation2 + $0x178] sm:$0xff] %vm966, %v952
      %1015 = vst.msk [vmem:[#allocation2 + $0x180] sm:$0xff] %vm966, %v953
      %1016 = vst.msk [vmem:[#allocation2 + $0x188] sm:$0xff] %vm966, %v954
      %1017 = vst.msk [vmem:[#allocation2 + $0x190] sm:$0xff] %vm966, %v955
      %1018 = vst.msk [vmem:[#allocation2 + $0x198] sm:$0xff] %vm966, %v956
      %1019 = vst.msk [vmem:[#allocation2 + $0x1a0] sm:$0xff] %vm966, %v957
      %1020 = vst.msk [vmem:[#allocation2 + $0x1a8] sm:$0xff] %vm966, %v958
      %1021 = vst.msk [vmem:[#allocation2 + $0x1b0] sm:$0xff] %vm966, %v959
      %1022 = vst.msk [vmem:[#allocation2 + $0x1b8] sm:$0xff] %vm966, %v960
      %1023 = vst.msk [vmem:[#allocation2 + $0x1c0] sm:$0xff] %vm966, %v961
      %1024 = vst.msk [vmem:[#allocation2 + $0x1c8] sm:$0xff] %vm966, %v962
      %1025 = vst.msk [vmem:[#allocation2 + $0x1d0] sm:$0xff] %vm966, %v963
      %1026 = vst.msk [vmem:[#allocation2 + $0x1d8] sm:$0xff] %vm966, %v964
      %1027 = vst.msk [vmem:[#allocation2 + $0x1e0] sm:$0xff] %vm966, %v965
      %v1028 = vld [vmem:[#allocation2] sm:$0xff]
      %v1029 = vld [vmem:[#allocation2 + $0x8] sm:$0xff]
      %v1030 = vld [vmem:[#allocation2 + $0x10] sm:$0xff]
      %v1031 = vld [vmem:[#allocation2 + $0x18] sm:$0xff]
      %v1032 = vld [vmem:[#allocation2 + $0x20] sm:$0xff]
      %v1033 = vld [vmem:[#allocation2 + $0x28] sm:$0xff]
      %v1034 = vld [vmem:[#allocation2 + $0x30] sm:$0xff]
      %v1035 = vld [vmem:[#allocation2 + $0x38] sm:$0xff]
      %v1036 = vld [vmem:[#allocation2 + $0x40] sm:$0xff]
      %v1037 = vld [vmem:[#allocation2 + $0x48] sm:$0xff]
      %v1038 = vld [vmem:[#allocation2 + $0x50] sm:$0xff]
      %v1039 = vld [vmem:[#allocation2 + $0x58] sm:$0xff]
      %v1040 = vld [vmem:[#allocation2 + $0x60] sm:$0xff]
      %v1041 = vld [vmem:[#allocation2 + $0x68] sm:$0xff]
      %v1042 = vld [vmem:[#allocation2 + $0x70] sm:$0xff]
      %v1043 = vld [vmem:[#allocation2 + $0x78] sm:$0xff]
      %v1044 = vld [vmem:[#allocation2 + $0x80] sm:$0xff]
      %v1045 = vld [vmem:[#allocation2 + $0x88] sm:$0xff]
      %v1046 = vld [vmem:[#allocation2 + $0x90] sm:$0xff]
      %v1047 = vld [vmem:[#allocation2 + $0x98] sm:$0xff]
      %v1048 = vld [vmem:[#allocation2 + $0xa0] sm:$0xff]
      %v1049 = vld [vmem:[#allocation2 + $0xa8] sm:$0xff]
      %v1050 = vld [vmem:[#allocation2 + $0xb0] sm:$0xff]
      %v1051 = vld [vmem:[#allocation2 + $0xb8] sm:$0xff]
      %v1052 = vld [vmem:[#allocation2 + $0xc0] sm:$0xff]
      %v1053 = vld [vmem:[#allocation2 + $0xc8] sm:$0xff]
      %v1054 = vld [vmem:[#allocation2 + $0xd0] sm:$0xff]
      %v1055 = vld [vmem:[#allocation2 + $0xd8] sm:$0xff]
      %v1056 = vld [vmem:[#allocation2 + $0xe0] sm:$0xff]
      %v1057 = vld [vmem:[#allocation2 + $0xe8] sm:$0xff]
      %v1058 = vld [vmem:[#allocation2 + $0xf0] sm:$0xff]
      %v1059 = vld [vmem:[#allocation2 + $0xf8] sm:$0xff]
      %v1060 = vld [vmem:[#allocation2 + $0x100] sm:$0xff]
      %v1061 = vld [vmem:[#allocation2 + $0x108] sm:$0xff]
      %v1062 = vld [vmem:[#allocation2 + $0x110] sm:$0xff]
      %v1063 = vld [vmem:[#allocation2 + $0x118] sm:$0xff]
      %v1064 = vld [vmem:[#allocation2 + $0x120] sm:$0xff]
      %v1065 = vld [vmem:[#allocation2 + $0x128] sm:$0xff]
      %v1066 = vld [vmem:[#allocation2 + $0x130] sm:$0xff]
      %v1067 = vld [vmem:[#allocation2 + $0x138] sm:$0xff]
      %v1068 = vld [vmem:[#allocation2 + $0x140] sm:$0xff]
      %v1069 = vld [vmem:[#allocation2 + $0x148] sm:$0xff]
      %v1070 = vld [vmem:[#allocation2 + $0x150] sm:$0xff]
      %v1071 = vld [vmem:[#allocation2 + $0x158] sm:$0xff]
      %v1072 = vld [vmem:[#allocation2 + $0x160] sm:$0xff]
      %v1073 = vld [vmem:[#allocation2 + $0x168] sm:$0xff]
      %v1074 = vld [vmem:[#allocation2 + $0x170] sm:$0xff]
      %v1075 = vld [vmem:[#allocation2 + $0x178] sm:$0xff]
      %v1076 = vld [vmem:[#allocation2 + $0x180] sm:$0xff]
      %v1077 = vld [vmem:[#allocation2 + $0x188] sm:$0xff]
      %v1078 = vld [vmem:[#allocation2 + $0x190] sm:$0xff]
      %v1079 = vld [vmem:[#allocation2 + $0x198] sm:$0xff]
      %v1080 = vld [vmem:[#allocation2 + $0x1a0] sm:$0xff]
      %v1081 = vld [vmem:[#allocation2 + $0x1a8] sm:$0xff]
      %v1082 = vpack.c.bf16 %v1029, %v1028
      %v1083 = vpack.c.bf16 %v1031, %v1030
      %v1084 = vpack.c.bf16 %v1033, %v1032
      %v1085 = vpack.c.bf16 %v1035, %v1034
      %v1086 = vpack.c.bf16 %v1037, %v1036
      %v1087 = vpack.c.bf16 %v1039, %v1038
      %v1088 = vpack.c.bf16 %v1041, %v1040
      %v1089 = vpack.c.bf16 %v1043, %v1042
      %v1090 = vpack.c.bf16 %v1045, %v1044
      %v1091 = vpack.c.bf16 %v1047, %v1046
      %v1092 = vpack.c.bf16 %v1049, %v1048
      %v1093 = vpack.c.bf16 %v1051, %v1050
      %v1094 = vpack.c.bf16 %v1053, %v1052
      %v1095 = vpack.c.bf16 %v1055, %v1054
      %v1096 = vpack.c.bf16 %v1057, %v1056
      %v1097 = vpack.c.bf16 %v1059, %v1058
      %v1098 = vpack.c.bf16 %v1061, %v1060
      %v1099 = vpack.c.bf16 %v1063, %v1062
      %v1100 = vpack.c.bf16 %v1065, %v1064
      %v1101 = vpack.c.bf16 %v1067, %v1066
      %v1102 = vpack.c.bf16 %v1069, %v1068
      %v1103 = vpack.c.bf16 %v1071, %v1070
      %v1104 = vpack.c.bf16 %v1073, %v1072
      %v1105 = vpack.c.bf16 %v1075, %v1074
      %v1106 = vpack.c.bf16 %v1077, %v1076
      %v1107 = vpack.c.bf16 %v1079, %v1078
      %v1108 = vpack.c.bf16 %v1081, %v1080
      %v1109 = vld [vmem:[%s2] sm:$0xf]
      %v1110 = vld [vmem:[%s2 + $0x4] sm:$0xf]
      %v1111 = vld [vmem:[%s2 + $0x8] sm:$0xf]
      %v1112 = vld [vmem:[%s2 + $0xc] sm:$0xf]
      %v1113 = vld [vmem:[#allocation2 + $0x1] sm:$0xff]
      %v1114 = vld [vmem:[#allocation2 + $0x9] sm:$0xff]
      %v1115 = vld [vmem:[#allocation2 + $0x11] sm:$0xff]
      %v1116 = vld [vmem:[#allocation2 + $0x19] sm:$0xff]
      %v1117 = vld [vmem:[#allocation2 + $0x21] sm:$0xff]
      %v1118 = vld [vmem:[#allocation2 + $0x29] sm:$0xff]
      %v1119 = vld [vmem:[#allocation2 + $0x31] sm:$0xff]
      %v1120 = vld [vmem:[#allocation2 + $0x39] sm:$0xff]
      %v1121 = vld [vmem:[#allocation2 + $0x41] sm:$0xff]
      %v1122 = vld [vmem:[#allocation2 + $0x49] sm:$0xff]
      %v1123 = vld [vmem:[#allocation2 + $0x51] sm:$0xff]
      %v1124 = vld [vmem:[#allocation2 + $0x59] sm:$0xff]
      %v1125 = vld [vmem:[#allocation2 + $0x61] sm:$0xff]
      %v1126 = vld [vmem:[#allocation2 + $0x69] sm:$0xff]
      %v1127 = vld [vmem:[#allocation2 + $0x71] sm:$0xff]
      %v1128 = vld [vmem:[#allocation2 + $0x79] sm:$0xff]
      %v1129 = vld [vmem:[#allocation2 + $0x81] sm:$0xff]
      %v1130 = vld [vmem:[#allocation2 + $0x89] sm:$0xff]
      %v1131 = vld [vmem:[#allocation2 + $0x91] sm:$0xff]
      %v1132 = vld [vmem:[#allocation2 + $0x99] sm:$0xff]
      %v1133 = vld [vmem:[#allocation2 + $0xa1] sm:$0xff]
      %v1134 = vld [vmem:[#allocation2 + $0xa9] sm:$0xff]
      %v1135 = vld [vmem:[#allocation2 + $0xb1] sm:$0xff]
      %v1136 = vld [vmem:[#allocation2 + $0xb9] sm:$0xff]
      %v1137 = vld [vmem:[#allocation2 + $0xc1] sm:$0xff]
      %v1138 = vld [vmem:[#allocation2 + $0xc9] sm:$0xff]
      %v1139 = vld [vmem:[#allocation2 + $0xd1] sm:$0xff]
      %v1140 = vld [vmem:[#allocation2 + $0xd9] sm:$0xff]
      %v1141 = vld [vmem:[#allocation2 + $0xe1] sm:$0xff]
      %v1142 = vld [vmem:[#allocation2 + $0xe9] sm:$0xff]
      %v1143 = vld [vmem:[#allocation2 + $0xf1] sm:$0xff]
      %v1144 = vld [vmem:[#allocation2 + $0xf9] sm:$0xff]
      %v1145 = vld [vmem:[#allocation2 + $0x101] sm:$0xff]
      %v1146 = vld [vmem:[#allocation2 + $0x109] sm:$0xff]
      %v1147 = vld [vmem:[#allocation2 + $0x111] sm:$0xff]
      %v1148 = vld [vmem:[#allocation2 + $0x119] sm:$0xff]
      %v1149 = vld [vmem:[#allocation2 + $0x121] sm:$0xff]
      %v1150 = vld [vmem:[#allocation2 + $0x129] sm:$0xff]
      %v1151 = vld [vmem:[#allocation2 + $0x131] sm:$0xff]
      %v1152 = vld [vmem:[#allocation2 + $0x139] sm:$0xff]
      %v1153 = vld [vmem:[#allocation2 + $0x141] sm:$0xff]
      %v1154 = vld [vmem:[#allocation2 + $0x149] sm:$0xff]
      %v1155 = vld [vmem:[#allocation2 + $0x151] sm:$0xff]
      %v1156 = vld [vmem:[#allocation2 + $0x159] sm:$0xff]
      %v1157 = vld [vmem:[#allocation2 + $0x161] sm:$0xff]
      %v1158 = vld [vmem:[#allocation2 + $0x169] sm:$0xff]
      %v1159 = vld [vmem:[#allocation2 + $0x171] sm:$0xff]
      %v1160 = vld [vmem:[#allocation2 + $0x179] sm:$0xff]
      %v1161 = vld [vmem:[#allocation2 + $0x181] sm:$0xff]
      %v1162 = vld [vmem:[#allocation2 + $0x189] sm:$0xff]
      %v1163 = vld [vmem:[#allocation2 + $0x191] sm:$0xff]
      %v1164 = vld [vmem:[#allocation2 + $0x199] sm:$0xff]
      %v1165 = vld [vmem:[#allocation2 + $0x1a1] sm:$0xff]
      %v1166 = vld [vmem:[#allocation2 + $0x1a9] sm:$0xff]
      %v1167 = vpack.c.bf16 %v1114, %v1113
      %v1168 = vpack.c.bf16 %v1116, %v1115
      %v1169 = vpack.c.bf16 %v1118, %v1117
      %v1170 = vpack.c.bf16 %v1120, %v1119
      %v1171 = vpack.c.bf16 %v1122, %v1121
      %v1172 = vpack.c.bf16 %v1124, %v1123
      %v1173 = vpack.c.bf16 %v1126, %v1125
      %v1174 = vpack.c.bf16 %v1128, %v1127
      %v1175 = vpack.c.bf16 %v1130, %v1129
      %v1176 = vpack.c.bf16 %v1132, %v1131
      %v1177 = vpack.c.bf16 %v1134, %v1133
      %v1178 = vpack.c.bf16 %v1136, %v1135
      %v1179 = vpack.c.bf16 %v1138, %v1137
      %v1180 = vpack.c.bf16 %v1140, %v1139
      %v1181 = vpack.c.bf16 %v1142, %v1141
      %v1182 = vpack.c.bf16 %v1144, %v1143
      %v1183 = vpack.c.bf16 %v1146, %v1145
      %v1184 = vpack.c.bf16 %v1148, %v1147
      %v1185 = vpack.c.bf16 %v1150, %v1149
      %v1186 = vpack.c.bf16 %v1152, %v1151
      %v1187 = vpack.c.bf16 %v1154, %v1153
      %v1188 = vpack.c.bf16 %v1156, %v1155
      %v1189 = vpack.c.bf16 %v1158, %v1157
      %v1190 = vpack.c.bf16 %v1160, %v1159
      %v1191 = vpack.c.bf16 %v1162, %v1161
      %v1192 = vpack.c.bf16 %v1164, %v1163
      %v1193 = vpack.c.bf16 %v1166, %v1165
      %s1194 = scalar_lea.vmem %s2, 16
      %v1195 = vld [vmem:[%s1194] sm:$0xf]
      %v1196 = vld [vmem:[%s1194 + $0x4] sm:$0xf]
      %v1197 = vld [vmem:[%s1194 + $0x8] sm:$0xf]
      %v1198 = vld [vmem:[%s1194 + $0xc] sm:$0xf]
      %v1203 = vunpack.c.l.b16 %v1195
      %v1204 = vunpack.c.l.b16 %v1196
      %v1205 = vunpack.c.l.b16 %v1197
      %v1206 = vunpack.c.l.b16 %v1198
      %v1207 = vpack.c.b16 %v1204, %v1203
      %v1208 = vpack.c.b16 %v1206, %v1205
      %v1212 = vsel %vm966, %v1167, 0
      %v1215 = vsel %vm966, %v1168, 0
      %v1218 = vsel %vm966, %v1169, 0
      %v1221 = vsel %vm966, %v1170, 0
      %v1224 = vsel %vm966, %v1171, 0
      %v1227 = vsel %vm966, %v1172, 0
      %v1230 = vsel %vm966, %v1173, 0
      %v1233 = vsel %vm966, %v1174, 0
      %v1236 = vsel %vm966, %v1175, 0
      %v1239 = vsel %vm966, %v1176, 0
      %v1242 = vsel %vm966, %v1177, 0
      %v1245 = vsel %vm966, %v1178, 0
      %v1248 = vsel %vm966, %v1179, 0
      %v1251 = vsel %vm966, %v1180, 0
      %v1254 = vsel %vm966, %v1181, 0
      %v1257 = vsel %vm966, %v1182, 0
      %v1260 = vsel %vm966, %v1183, 0
      %v1263 = vsel %vm966, %v1184, 0
      %v1266 = vsel %vm966, %v1185, 0
      %v1269 = vsel %vm966, %v1186, 0
      %v1272 = vsel %vm966, %v1187, 0
      %v1275 = vsel %vm966, %v1188, 0
      %v1278 = vsel %vm966, %v1189, 0
      %v1281 = vsel %vm966, %v1190, 0
      %v1284 = vsel %vm966, %v1191, 0
      %v1287 = vsel %vm966, %v1192, 0
      %v1290 = vsel %vm966, %v1193, 0
      %1292 = vmatprep.subr.bf16.mxu0 0
      %1293 = vmatpush1.bf16.msra.mxu0 %v1207
      %1294 = vmatprep.subr.bf16.mxu0 0
      %1295 = vmatpush1.bf16.msra.mxu0 %v1208
      %1296 = vmatprep.subr.bf16.mxu0 0
      %1297 = vmatpush1.bf16.msra.mxu0 0
      %1298 = vmatprep.subr.bf16.mxu0 0
      %1299 = vmatpush1.bf16.msra.mxu0 0
      %1300 = vmatprep.subr.bf16.mxu0 0
      %1301 = vmatpush1.bf16.msra.mxu0 0
      %1302 = vmatprep.subr.bf16.mxu0 0
      %1303 = vmatpush1.bf16.msra.mxu0 0
      %1304 = vmatprep.subr.bf16.mxu0 0
      %1305 = vmatpush1.bf16.msra.mxu0 0
      %1306 = vmatprep.subr.bf16.mxu0 0
      %1307 = vmatpush1.bf16.msra.mxu0 0
      %1308 = vmatprep.subr.bf16.mxu0 0
      %1309 = vmatpush1.bf16.msra.mxu0 0
      %1310 = vmatprep.subr.bf16.mxu0 0
      %1311 = vmatpush1.bf16.msra.mxu0 0
      %1312 = vmatprep.subr.bf16.mxu0 0
      %1313 = vmatpush1.bf16.msra.mxu0 0
      %1314 = vmatprep.subr.bf16.mxu0 0
      %1315 = vmatpush1.bf16.msra.mxu0 0
      %1316 = vmatprep.subr.bf16.mxu0 0
      %1317 = vmatpush1.bf16.msra.mxu0 0
      %1318 = vmatprep.subr.bf16.mxu0 0
      %1319 = vmatpush1.bf16.msra.mxu0 0
      %1320 = vmatprep.subr.bf16.mxu0 0
      %1321 = vmatpush1.bf16.msra.mxu0 0
      %1322 = vmatprep.subr.bf16.mxu0 0
      %1323 = vmatpush1.bf16.msra.mxu0 0
      %1324 = vmatprep.mubr.bf16.mxu0 0
      %1325 = vmatmul.mubr.bf16.gmra.mrb[0].mxu0 %v1212
      %v1326 = vpop.f32.mrb[0].mxu0
      %v1327 = vadd.f32 0.0, %v1326
      %v1328 = vpop.f32.mrb[0].mxu0
      %v1329 = vpop.f32.mrb[0].mxu0
      %v1330 = vadd.f32 0.0, %v1329
      %v1331 = vpop.f32.mrb[0].mxu0
      %1332 = vmatprep.mubr.bf16.mxu0 0
      %1333 = vmatmul.mubr.bf16.gmra.mrb[0].mxu0 %v1215
      %v1334 = vpop.f32.mrb[0].mxu0
      %v1335 = vadd.f32 0.0, %v1334
      %v1336 = vpop.f32.mrb[0].mxu0
      %v1337 = vpop.f32.mrb[0].mxu0
      %v1338 = vadd.f32 0.0, %v1337
      %v1339 = vpop.f32.mrb[0].mxu0
      %1340 = vmatprep.mubr.bf16.mxu0 0
      %1341 = vmatmul.mubr.bf16.gmra.mrb[0].mxu0 %v1218
      %v1342 = vpop.f32.mrb[0].mxu0
      %v1343 = vadd.f32 0.0, %v1342
      %v1344 = vpop.f32.mrb[0].mxu0
      %v1345 = vpop.f32.mrb[0].mxu0
      %v1346 = vadd.f32 0.0, %v1345
      %v1347 = vpop.f32.mrb[0].mxu0
      %1348 = vmatprep.mubr.bf16.mxu0 0
      %1349 = vmatmul.mubr.bf16.gmra.mrb[0].mxu0 %v1221
      %v1350 = vpop.f32.mrb[0].mxu0
      %v1351 = vadd.f32 0.0, %v1350
      %v1352 = vpop.f32.mrb[0].mxu0
      %v1353 = vpop.f32.mrb[0].mxu0
      %v1354 = vadd.f32 0.0, %v1353
      %v1355 = vpop.f32.mrb[0].mxu0
      %1356 = vmatprep.mubr.bf16.mxu0 0
      %1357 = vmatmul.mubr.bf16.gmra.mrb[0].mxu0 %v1224
      %v1358 = vpop.f32.mrb[0].mxu0
      %v1359 = vadd.f32 0.0, %v1358
      %v1360 = vpop.f32.mrb[0].mxu0
      %v1361 = vpop.f32.mrb[0].mxu0
      %v1362 = vadd.f32 0.0, %v1361
      %v1363 = vpop.f32.mrb[0].mxu0
      %1364 = vmatprep.mubr.bf16.mxu0 0
      %1365 = vmatmul.mubr.bf16.gmra.mrb[0].mxu0 %v1227
      %v1366 = vpop.f32.mrb[0].mxu0
      %v1367 = vadd.f32 0.0, %v1366
      %v1368 = vpop.f32.mrb[0].mxu0
      %v1369 = vpop.f32.mrb[0].mxu0
      %v1370 = vadd.f32 0.0, %v1369
      %v1371 = vpop.f32.mrb[0].mxu0
      %1372 = vmatprep.mubr.bf16.mxu0 0
      %1373 = vmatmul.mubr.bf16.gmra.mrb[0].mxu0 %v1230
      %v1374 = vpop.f32.mrb[0].mxu0
      %v1375 = vadd.f32 0.0, %v1374
      %v1376 = vpop.f32.mrb[0].mxu0
      %v1377 = vpop.f32.mrb[0].mxu0
      %v1378 = vadd.f32 0.0, %v1377
      %v1379 = vpop.f32.mrb[0].mxu0
      %1380 = vmatprep.mubr.bf16.mxu0 0
      %1381 = vmatmul.mubr.bf16.gmra.mrb[0].mxu0 %v1233
      %v1382 = vpop.f32.mrb[0].mxu0
      %v1383 = vadd.f32 0.0, %v1382
      %v1384 = vpop.f32.mrb[0].mxu0
      %v1385 = vpop.f32.mrb[0].mxu0
      %v1386 = vadd.f32 0.0, %v1385
      %v1387 = vpop.f32.mrb[0].mxu0
      %1388 = vmatprep.mubr.bf16.mxu0 0
      %1389 = vmatmul.mubr.bf16.gmra.mrb[0].mxu0 %v1236
      %v1390 = vpop.f32.mrb[0].mxu0
      %v1391 = vadd.f32 0.0, %v1390
      %v1392 = vpop.f32.mrb[0].mxu0
      %v1393 = vpop.f32.mrb[0].mxu0
      %v1394 = vadd.f32 0.0, %v1393
      %v1395 = vpop.f32.mrb[0].mxu0
      %1396 = vmatprep.mubr.bf16.mxu0 0
      %1397 = vmatmul.mubr.bf16.gmra.mrb[0].mxu0 %v1239
      %v1398 = vpop.f32.mrb[0].mxu0
      %v1399 = vadd.f32 0.0, %v1398
      %v1400 = vpop.f32.mrb[0].mxu0
      %v1401 = vpop.f32.mrb[0].mxu0
      %v1402 = vadd.f32 0.0, %v1401
      %v1403 = vpop.f32.mrb[0].mxu0
      %1404 = vmatprep.mubr.bf16.mxu0 0
      %1405 = vmatmul.mubr.bf16.gmra.mrb[0].mxu0 %v1242
      %v1406 = vpop.f32.mrb[0].mxu0
      %v1407 = vadd.f32 0.0, %v1406
      %v1408 = vpop.f32.mrb[0].mxu0
      %v1409 = vpop.f32.mrb[0].mxu0
      %v1410 = vadd.f32 0.0, %v1409
      %v1411 = vpop.f32.mrb[0].mxu0
      %1412 = vmatprep.mubr.bf16.mxu0 0
      %1413 = vmatmul.mubr.bf16.gmra.mrb[0].mxu0 %v1245
      %v1414 = vpop.f32.mrb[0].mxu0
      %v1415 = vadd.f32 0.0, %v1414
      %v1416 = vpop.f32.mrb[0].mxu0
      %v1417 = vpop.f32.mrb[0].mxu0
      %v1418 = vadd.f32 0.0, %v1417
      %v1419 = vpop.f32.mrb[0].mxu0
      %1420 = vmatprep.mubr.bf16.mxu0 0
      %1421 = vmatmul.mubr.bf16.gmra.mrb[0].mxu0 %v1248
      %v1422 = vpop.f32.mrb[0].mxu0
      %v1423 = vadd.f32 0.0, %v1422
      %v1424 = vpop.f32.mrb[0].mxu0
      %v1425 = vpop.f32.mrb[0].mxu0
      %v1426 = vadd.f32 0.0, %v1425
      %v1427 = vpop.f32.mrb[0].mxu0
      %1428 = vmatprep.mubr.bf16.mxu0 0
      %1429 = vmatmul.mubr.bf16.gmra.mrb[0].mxu0 %v1251
      %v1430 = vpop.f32.mrb[0].mxu0
      %v1431 = vadd.f32 0.0, %v1430
      %v1432 = vpop.f32.mrb[0].mxu0
      %v1433 = vpop.f32.mrb[0].mxu0
      %v1434 = vadd.f32 0.0, %v1433
      %v1435 = vpop.f32.mrb[0].mxu0
      %1436 = vmatprep.mubr.bf16.mxu0 0
      %1437 = vmatmul.mubr.bf16.gmra.mrb[0].mxu0 %v1254
      %v1438 = vpop.f32.mrb[0].mxu0
      %v1439 = vadd.f32 0.0, %v1438
      %v1440 = vpop.f32.mrb[0].mxu0
      %v1441 = vpop.f32.mrb[0].mxu0
      %v1442 = vadd.f32 0.0, %v1441
      %v1443 = vpop.f32.mrb[0].mxu0
      %1444 = vmatprep.mubr.bf16.mxu0 0
      %1445 = vmatmul.mubr.bf16.gmra.mrb[0].mxu0 %v1257
      %v1446 = vpop.f32.mrb[0].mxu0
      %v1447 = vadd.f32 0.0, %v1446
      %v1448 = vpop.f32.mrb[0].mxu0
      %v1449 = vpop.f32.mrb[0].mxu0
      %v1450 = vadd.f32 0.0, %v1449
      %v1451 = vpop.f32.mrb[0].mxu0
      %1452 = vmatprep.mubr.bf16.mxu0 0
      %1453 = vmatmul.mubr.bf16.gmra.mrb[0].mxu0 %v1260
      %v1454 = vpop.f32.mrb[0].mxu0
      %v1455 = vadd.f32 0.0, %v1454
      %v1456 = vpop.f32.mrb[0].mxu0
      %v1457 = vpop.f32.mrb[0].mxu0
      %v1458 = vadd.f32 0.0, %v1457
      %v1459 = vpop.f32.mrb[0].mxu0
      %1460 = vmatprep.mubr.bf16.mxu0 0
      %1461 = vmatmul.mubr.bf16.gmra.mrb[0].mxu0 %v1263
      %v1462 = vpop.f32.mrb[0].mxu0
      %v1463 = vadd.f32 0.0, %v1462
      %v1464 = vpop.f32.mrb[0].mxu0
      %v1465 = vpop.f32.mrb[0].mxu0
      %v1466 = vadd.f32 0.0, %v1465
      %v1467 = vpop.f32.mrb[0].mxu0
      %1468 = vmatprep.mubr.bf16.mxu0 0
      %1469 = vmatmul.mubr.bf16.gmra.mrb[0].mxu0 %v1266
      %v1470 = vpop.f32.mrb[0].mxu0
      %v1471 = vadd.f32 0.0, %v1470
      %v1472 = vpop.f32.mrb[0].mxu0
      %v1473 = vpop.f32.mrb[0].mxu0
      %v1474 = vadd.f32 0.0, %v1473
      %v1475 = vpop.f32.mrb[0].mxu0
      %1476 = vmatprep.mubr.bf16.mxu0 0
      %1477 = vmatmul.mubr.bf16.gmra.mrb[0].mxu0 %v1269
      %v1478 = vpop.f32.mrb[0].mxu0
      %v1479 = vadd.f32 0.0, %v1478
      %v1480 = vpop.f32.mrb[0].mxu0
      %v1481 = vpop.f32.mrb[0].mxu0
      %v1482 = vadd.f32 0.0, %v1481
      %v1483 = vpop.f32.mrb[0].mxu0
      %1484 = vmatprep.mubr.bf16.mxu0 0
      %1485 = vmatmul.mubr.bf16.gmra.mrb[0].mxu0 %v1272
      %v1486 = vpop.f32.mrb[0].mxu0
      %v1487 = vadd.f32 0.0, %v1486
      %v1488 = vpop.f32.mrb[0].mxu0
      %v1489 = vpop.f32.mrb[0].mxu0
      %v1490 = vadd.f32 0.0, %v1489
      %v1491 = vpop.f32.mrb[0].mxu0
      %1492 = vmatprep.mubr.bf16.mxu0 0
      %1493 = vmatmul.mubr.bf16.gmra.mrb[0].mxu0 %v1275
      %v1494 = vpop.f32.mrb[0].mxu0
      %v1495 = vadd.f32 0.0, %v1494
      %v1496 = vpop.f32.mrb[0].mxu0
      %v1497 = vpop.f32.mrb[0].mxu0
      %v1498 = vadd.f32 0.0, %v1497
      %v1499 = vpop.f32.mrb[0].mxu0
      %1500 = vmatprep.mubr.bf16.mxu0 0
      %1501 = vmatmul.mubr.bf16.gmra.mrb[0].mxu0 %v1278
      %v1502 = vpop.f32.mrb[0].mxu0
      %v1503 = vadd.f32 0.0, %v1502
      %v1504 = vpop.f32.mrb[0].mxu0
      %v1505 = vpop.f32.mrb[0].mxu0
      %v1506 = vadd.f32 0.0, %v1505
      %v1507 = vpop.f32.mrb[0].mxu0
      %1508 = vmatprep.mubr.bf16.mxu0 0
      %1509 = vmatmul.mubr.bf16.gmra.mrb[0].mxu0 %v1281
      %v1510 = vpop.f32.mrb[0].mxu0
      %v1511 = vadd.f32 0.0, %v1510
      %v1512 = vpop.f32.mrb[0].mxu0
      %v1513 = vpop.f32.mrb[0].mxu0
      %v1514 = vadd.f32 0.0, %v1513
      %v1515 = vpop.f32.mrb[0].mxu0
      %1516 = vmatprep.mubr.bf16.mxu0 0
      %1517 = vmatmul.mubr.bf16.gmra.mrb[0].mxu0 %v1284
      %v1518 = vpop.f32.mrb[0].mxu0
      %v1519 = vadd.f32 0.0, %v1518
      %v1520 = vpop.f32.mrb[0].mxu0
      %v1521 = vpop.f32.mrb[0].mxu0
      %v1522 = vadd.f32 0.0, %v1521
      %v1523 = vpop.f32.mrb[0].mxu0
      %1524 = vmatprep.mubr.bf16.mxu0 0
      %1525 = vmatmul.mubr.bf16.gmra.mrb[0].mxu0 %v1287
      %v1526 = vpop.f32.mrb[0].mxu0
      %v1527 = vadd.f32 0.0, %v1526
      %v1528 = vpop.f32.mrb[0].mxu0
      %v1529 = vpop.f32.mrb[0].mxu0
      %v1530 = vadd.f32 0.0, %v1529
      %v1531 = vpop.f32.mrb[0].mxu0
      %1532 = vmatprep.mubr.bf16.mxu0 0
      %1533 = vmatmul.mubr.bf16.gmra.mrb[0].mxu0 %v1290
      %v1534 = vpop.f32.mrb[0].mxu0
      %v1535 = vadd.f32 0.0, %v1534
      %v1536 = vpop.f32.mrb[0].mxu0
      %v1537 = vpop.f32.mrb[0].mxu0
      %v1538 = vadd.f32 0.0, %v1537
      %v1539 = vpop.f32.mrb[0].mxu0
      %1540 = vdwg.mxu0
      %v1545 = vunpack.c.l.b16 %v1109
      %v1546 = vunpack.c.l.b16 %v1110
      %v1547 = vunpack.c.l.b16 %v1111
      %v1548 = vunpack.c.l.b16 %v1112
      %v1549 = vpack.c.b16 %v1546, %v1545
      %v1550 = vpack.c.b16 %v1548, %v1547
      %v1554 = vsel %vm966, %v1082, 0
      %v1557 = vsel %vm966, %v1083, 0
      %v1560 = vsel %vm966, %v1084, 0
      %v1563 = vsel %vm966, %v1085, 0
      %v1566 = vsel %vm966, %v1086, 0
      %v1569 = vsel %vm966, %v1087, 0
      %v1572 = vsel %vm966, %v1088, 0
      %v1575 = vsel %vm966, %v1089, 0
      %v1578 = vsel %vm966, %v1090, 0
      %v1581 = vsel %vm966, %v1091, 0
      %v1584 = vsel %vm966, %v1092, 0
      %v1587 = vsel %vm966, %v1093, 0
      %v1590 = vsel %vm966, %v1094, 0
      %v1593 = vsel %vm966, %v1095, 0
      %v1596 = vsel %vm966, %v1096, 0
      %v1599 = vsel %vm966, %v1097, 0
      %v1602 = vsel %vm966, %v1098, 0
      %v1605 = vsel %vm966, %v1099, 0
      %v1608 = vsel %vm966, %v1100, 0
      %v1611 = vsel %vm966, %v1101, 0
      %v1614 = vsel %vm966, %v1102, 0
      %v1617 = vsel %vm966, %v1103, 0
      %v1620 = vsel %vm966, %v1104, 0
      %v1623 = vsel %vm966, %v1105, 0
      %v1626 = vsel %vm966, %v1106, 0
      %v1629 = vsel %vm966, %v1107, 0
      %v1632 = vsel %vm966, %v1108, 0
      %1634 = vmatprep.subr.bf16.mxu0 0
      %1635 = vmatpush1.bf16.msra.mxu0 %v1549
      %1636 = vmatprep.subr.bf16.mxu0 0
      %1637 = vmatpush1.bf16.msra.mxu0 %v1550
      %1638 = vmatprep.subr.bf16.mxu0 0
      %1639 = vmatpush1.bf16.msra.mxu0 0
      %1640 = vmatprep.subr.bf16.mxu0 0
      %1641 = vmatpush1.bf16.msra.mxu0 0
      %1642 = vmatprep.subr.bf16.mxu0 0
      %1643 = vmatpush1.bf16.msra.mxu0 0
      %1644 = vmatprep.subr.bf16.mxu0 0
      %1645 = vmatpush1.bf16.msra.mxu0 0
      %1646 = vmatprep.subr.bf16.mxu0 0
      %1647 = vmatpush1.bf16.msra.mxu0 0
      %1648 = vmatprep.subr.bf16.mxu0 0
      %1649 = vmatpush1.bf16.msra.mxu0 0
      %1650 = vmatprep.subr.bf16.mxu0 0
      %1651 = vmatpush1.bf16.msra.mxu0 0
      %1652 = vmatprep.subr.bf16.mxu0 0
      %1653 = vmatpush1.bf16.msra.mxu0 0
      %1654 = vmatprep.subr.bf16.mxu0 0
      %1655 = vmatpush1.bf16.msra.mxu0 0
      %1656 = vmatprep.subr.bf16.mxu0 0
      %1657 = vmatpush1.bf16.msra.mxu0 0
      %1658 = vmatprep.subr.bf16.mxu0 0
      %1659 = vmatpush1.bf16.msra.mxu0 0
      %1660 = vmatprep.subr.bf16.mxu0 0
      %1661 = vmatpush1.bf16.msra.mxu0 0
      %1662 = vmatprep.subr.bf16.mxu0 0
      %1663 = vmatpush1.bf16.msra.mxu0 0
      %1664 = vmatprep.subr.bf16.mxu0 0
      %1665 = vmatpush1.bf16.msra.mxu0 0
      %1666 = vmatprep.mubr.bf16.mxu0 0
      %1667 = vmatmul.mubr.bf16.gmra.mrb[0].mxu0 %v1554
      %v1668 = vpop.f32.mrb[0].mxu0
      %v1669 = vadd.f32 %v1327, %v1668
      %v1670 = vpop.f32.mrb[0].mxu0
      %v1671 = vpop.f32.mrb[0].mxu0
      %v1672 = vadd.f32 %v1330, %v1671
      %v1673 = vpop.f32.mrb[0].mxu0
      %1674 = vmatprep.mubr.bf16.mxu0 0
      %1675 = vmatmul.mubr.bf16.gmra.mrb[0].mxu0 %v1557
      %v1676 = vpop.f32.mrb[0].mxu0
      %v1677 = vadd.f32 %v1335, %v1676
      %v1678 = vpop.f32.mrb[0].mxu0
      %v1679 = vpop.f32.mrb[0].mxu0
      %v1680 = vadd.f32 %v1338, %v1679
      %v1681 = vpop.f32.mrb[0].mxu0
      %1682 = vmatprep.mubr.bf16.mxu0 0
      %1683 = vmatmul.mubr.bf16.gmra.mrb[0].mxu0 %v1560
      %v1684 = vpop.f32.mrb[0].mxu0
      %v1685 = vadd.f32 %v1343, %v1684
      %v1686 = vpop.f32.mrb[0].mxu0
      %v1687 = vpop.f32.mrb[0].mxu0
      %v1688 = vadd.f32 %v1346, %v1687
      %v1689 = vpop.f32.mrb[0].mxu0
      %1690 = vmatprep.mubr.bf16.mxu0 0
      %1691 = vmatmul.mubr.bf16.gmra.mrb[0].mxu0 %v1563
      %v1692 = vpop.f32.mrb[0].mxu0
      %v1693 = vadd.f32 %v1351, %v1692
      %v1694 = vpop.f32.mrb[0].mxu0
      %v1695 = vpop.f32.mrb[0].mxu0
      %v1696 = vadd.f32 %v1354, %v1695
      %v1697 = vpop.f32.mrb[0].mxu0
      %1698 = vmatprep.mubr.bf16.mxu0 0
      %1699 = vmatmul.mubr.bf16.gmra.mrb[0].mxu0 %v1566
      %v1700 = vpop.f32.mrb[0].mxu0
      %v1701 = vadd.f32 %v1359, %v1700
      %v1702 = vpop.f32.mrb[0].mxu0
      %v1703 = vpop.f32.mrb[0].mxu0
      %v1704 = vadd.f32 %v1362, %v1703
      %v1705 = vpop.f32.mrb[0].mxu0
      %1706 = vmatprep.mubr.bf16.mxu0 0
      %1707 = vmatmul.mubr.bf16.gmra.mrb[0].mxu0 %v1569
      %v1708 = vpop.f32.mrb[0].mxu0
      %v1709 = vadd.f32 %v1367, %v1708
      %v1710 = vpop.f32.mrb[0].mxu0
      %v1711 = vpop.f32.mrb[0].mxu0
      %v1712 = vadd.f32 %v1370, %v1711
      %v1713 = vpop.f32.mrb[0].mxu0
      %1714 = vmatprep.mubr.bf16.mxu0 0
      %1715 = vmatmul.mubr.bf16.gmra.mrb[0].mxu0 %v1572
      %v1716 = vpop.f32.mrb[0].mxu0
      %v1717 = vadd.f32 %v1375, %v1716
      %v1718 = vpop.f32.mrb[0].mxu0
      %v1719 = vpop.f32.mrb[0].mxu0
      %v1720 = vadd.f32 %v1378, %v1719
      %v1721 = vpop.f32.mrb[0].mxu0
      %1722 = vmatprep.mubr.bf16.mxu0 0
      %1723 = vmatmul.mubr.bf16.gmra.mrb[0].mxu0 %v1575
      %v1724 = vpop.f32.mrb[0].mxu0
      %v1725 = vadd.f32 %v1383, %v1724
      %v1726 = vpop.f32.mrb[0].mxu0
      %v1727 = vpop.f32.mrb[0].mxu0
      %v1728 = vadd.f32 %v1386, %v1727
      %v1729 = vpop.f32.mrb[0].mxu0
      %1730 = vmatprep.mubr.bf16.mxu0 0
      %1731 = vmatmul.mubr.bf16.gmra.mrb[0].mxu0 %v1578
      %v1732 = vpop.f32.mrb[0].mxu0
      %v1733 = vadd.f32 %v1391, %v1732
      %v1734 = vpop.f32.mrb[0].mxu0
      %v1735 = vpop.f32.mrb[0].mxu0
      %v1736 = vadd.f32 %v1394, %v1735
      %v1737 = vpop.f32.mrb[0].mxu0
      %1738 = vmatprep.mubr.bf16.mxu0 0
      %1739 = vmatmul.mubr.bf16.gmra.mrb[0].mxu0 %v1581
      %v1740 = vpop.f32.mrb[0].mxu0
      %v1741 = vadd.f32 %v1399, %v1740
      %v1742 = vpop.f32.mrb[0].mxu0
      %v1743 = vpop.f32.mrb[0].mxu0
      %v1744 = vadd.f32 %v1402, %v1743
      %v1745 = vpop.f32.mrb[0].mxu0
      %1746 = vmatprep.mubr.bf16.mxu0 0
      %1747 = vmatmul.mubr.bf16.gmra.mrb[0].mxu0 %v1584
      %v1748 = vpop.f32.mrb[0].mxu0
      %v1749 = vadd.f32 %v1407, %v1748
      %v1750 = vpop.f32.mrb[0].mxu0
      %v1751 = vpop.f32.mrb[0].mxu0
      %v1752 = vadd.f32 %v1410, %v1751
      %v1753 = vpop.f32.mrb[0].mxu0
      %1754 = vmatprep.mubr.bf16.mxu0 0
      %1755 = vmatmul.mubr.bf16.gmra.mrb[0].mxu0 %v1587
      %v1756 = vpop.f32.mrb[0].mxu0
      %v1757 = vadd.f32 %v1415, %v1756
      %v1758 = vpop.f32.mrb[0].mxu0
      %v1759 = vpop.f32.mrb[0].mxu0
      %v1760 = vadd.f32 %v1418, %v1759
      %v1761 = vpop.f32.mrb[0].mxu0
      %1762 = vmatprep.mubr.bf16.mxu0 0
      %1763 = vmatmul.mubr.bf16.gmra.mrb[0].mxu0 %v1590
      %v1764 = vpop.f32.mrb[0].mxu0
      %v1765 = vadd.f32 %v1423, %v1764
      %v1766 = vpop.f32.mrb[0].mxu0
      %v1767 = vpop.f32.mrb[0].mxu0
      %v1768 = vadd.f32 %v1426, %v1767
      %v1769 = vpop.f32.mrb[0].mxu0
      %1770 = vmatprep.mubr.bf16.mxu0 0
      %1771 = vmatmul.mubr.bf16.gmra.mrb[0].mxu0 %v1593
      %v1772 = vpop.f32.mrb[0].mxu0
      %v1773 = vadd.f32 %v1431, %v1772
      %v1774 = vpop.f32.mrb[0].mxu0
      %v1775 = vpop.f32.mrb[0].mxu0
      %v1776 = vadd.f32 %v1434, %v1775
      %v1777 = vpop.f32.mrb[0].mxu0
      %1778 = vmatprep.mubr.bf16.mxu0 0
      %1779 = vmatmul.mubr.bf16.gmra.mrb[0].mxu0 %v1596
      %v1780 = vpop.f32.mrb[0].mxu0
      %v1781 = vadd.f32 %v1439, %v1780
      %v1782 = vpop.f32.mrb[0].mxu0
      %v1783 = vpop.f32.mrb[0].mxu0
      %v1784 = vadd.f32 %v1442, %v1783
      %v1785 = vpop.f32.mrb[0].mxu0
      %1786 = vmatprep.mubr.bf16.mxu0 0
      %1787 = vmatmul.mubr.bf16.gmra.mrb[0].mxu0 %v1599
      %v1788 = vpop.f32.mrb[0].mxu0
      %v1789 = vadd.f32 %v1447, %v1788
      %v1790 = vpop.f32.mrb[0].mxu0
      %v1791 = vpop.f32.mrb[0].mxu0
      %v1792 = vadd.f32 %v1450, %v1791
      %v1793 = vpop.f32.mrb[0].mxu0
      %1794 = vmatprep.mubr.bf16.mxu0 0
      %1795 = vmatmul.mubr.bf16.gmra.mrb[0].mxu0 %v1602
      %v1796 = vpop.f32.mrb[0].mxu0
      %v1797 = vadd.f32 %v1455, %v1796
      %v1798 = vpop.f32.mrb[0].mxu0
      %v1799 = vpop.f32.mrb[0].mxu0
      %v1800 = vadd.f32 %v1458, %v1799
      %v1801 = vpop.f32.mrb[0].mxu0
      %1802 = vmatprep.mubr.bf16.mxu0 0
      %1803 = vmatmul.mubr.bf16.gmra.mrb[0].mxu0 %v1605
      %v1804 = vpop.f32.mrb[0].mxu0
      %v1805 = vadd.f32 %v1463, %v1804
      %v1806 = vpop.f32.mrb[0].mxu0
      %v1807 = vpop.f32.mrb[0].mxu0
      %v1808 = vadd.f32 %v1466, %v1807
      %v1809 = vpop.f32.mrb[0].mxu0
      %1810 = vmatprep.mubr.bf16.mxu0 0
      %1811 = vmatmul.mubr.bf16.gmra.mrb[0].mxu0 %v1608
      %v1812 = vpop.f32.mrb[0].mxu0
      %v1813 = vadd.f32 %v1471, %v1812
      %v1814 = vpop.f32.mrb[0].mxu0
      %v1815 = vpop.f32.mrb[0].mxu0
      %v1816 = vadd.f32 %v1474, %v1815
      %v1817 = vpop.f32.mrb[0].mxu0
      %1818 = vmatprep.mubr.bf16.mxu0 0
      %1819 = vmatmul.mubr.bf16.gmra.mrb[0].mxu0 %v1611
      %v1820 = vpop.f32.mrb[0].mxu0
      %v1821 = vadd.f32 %v1479, %v1820
      %v1822 = vpop.f32.mrb[0].mxu0
      %v1823 = vpop.f32.mrb[0].mxu0
      %v1824 = vadd.f32 %v1482, %v1823
      %v1825 = vpop.f32.mrb[0].mxu0
      %1826 = vmatprep.mubr.bf16.mxu0 0
      %1827 = vmatmul.mubr.bf16.gmra.mrb[0].mxu0 %v1614
      %v1828 = vpop.f32.mrb[0].mxu0
      %v1829 = vadd.f32 %v1487, %v1828
      %v1830 = vpop.f32.mrb[0].mxu0
      %v1831 = vpop.f32.mrb[0].mxu0
      %v1832 = vadd.f32 %v1490, %v1831
      %v1833 = vpop.f32.mrb[0].mxu0
      %1834 = vmatprep.mubr.bf16.mxu0 0
      %1835 = vmatmul.mubr.bf16.gmra.mrb[0].mxu0 %v1617
      %v1836 = vpop.f32.mrb[0].mxu0
      %v1837 = vadd.f32 %v1495, %v1836
      %v1838 = vpop.f32.mrb[0].mxu0
      %v1839 = vpop.f32.mrb[0].mxu0
      %v1840 = vadd.f32 %v1498, %v1839
      %v1841 = vpop.f32.mrb[0].mxu0
      %1842 = vmatprep.mubr.bf16.mxu0 0
      %1843 = vmatmul.mubr.bf16.gmra.mrb[0].mxu0 %v1620
      %v1844 = vpop.f32.mrb[0].mxu0
      %v1845 = vadd.f32 %v1503, %v1844
      %v1846 = vpop.f32.mrb[0].mxu0
      %v1847 = vpop.f32.mrb[0].mxu0
      %v1848 = vadd.f32 %v1506, %v1847
      %v1849 = vpop.f32.mrb[0].mxu0
      %1850 = vmatprep.mubr.bf16.mxu0 0
      %1851 = vmatmul.mubr.bf16.gmra.mrb[0].mxu0 %v1623
      %v1852 = vpop.f32.mrb[0].mxu0
      %v1853 = vadd.f32 %v1511, %v1852
      %v1854 = vpop.f32.mrb[0].mxu0
      %v1855 = vpop.f32.mrb[0].mxu0
      %v1856 = vadd.f32 %v1514, %v1855
      %v1857 = vpop.f32.mrb[0].mxu0
      %1858 = vmatprep.mubr.bf16.mxu0 0
      %1859 = vmatmul.mubr.bf16.gmra.mrb[0].mxu0 %v1626
      %v1860 = vpop.f32.mrb[0].mxu0
      %v1861 = vadd.f32 %v1519, %v1860
      %v1862 = vpop.f32.mrb[0].mxu0
      %v1863 = vpop.f32.mrb[0].mxu0
      %v1864 = vadd.f32 %v1522, %v1863
      %v1865 = vpop.f32.mrb[0].mxu0
      %1866 = vmatprep.mubr.bf16.mxu0 0
      %1867 = vmatmul.mubr.bf16.gmra.mrb[0].mxu0 %v1629
      %v1868 = vpop.f32.mrb[0].mxu0
      %v1869 = vadd.f32 %v1527, %v1868
      %v1870 = vpop.f32.mrb[0].mxu0
      %v1871 = vpop.f32.mrb[0].mxu0
      %v1872 = vadd.f32 %v1530, %v1871
      %v1873 = vpop.f32.mrb[0].mxu0
      %1874 = vmatprep.mubr.bf16.mxu0 0
      %1875 = vmatmul.mubr.bf16.gmra.mrb[0].mxu0 %v1632
      %v1876 = vpop.f32.mrb[0].mxu0
      %v1877 = vadd.f32 %v1535, %v1876
      %v1878 = vpop.f32.mrb[0].mxu0
      %v1879 = vpop.f32.mrb[0].mxu0
      %v1880 = vadd.f32 %v1538, %v1879
      %v1881 = vpop.f32.mrb[0].mxu0
      %1882 = vdwg.mxu0
      %v1883 = vld [vmem:[#allocation2 + $0x2] sm:$0xff]
      %v1884 = vld [vmem:[#allocation2 + $0xa] sm:$0xff]
      %v1885 = vld [vmem:[#allocation2 + $0x12] sm:$0xff]
      %v1886 = vld [vmem:[#allocation2 + $0x1a] sm:$0xff]
      %v1887 = vld [vmem:[#allocation2 + $0x22] sm:$0xff]
      %v1888 = vld [vmem:[#allocation2 + $0x2a] sm:$0xff]
      %v1889 = vld [vmem:[#allocation2 + $0x32] sm:$0xff]
      %v1890 = vld [vmem:[#allocation2 + $0x3a] sm:$0xff]
      %v1891 = vld [vmem:[#allocation2 + $0x42] sm:$0xff]
      %v1892 = vld [vmem:[#allocation2 + $0x4a] sm:$0xff]
      %v1893 = vld [vmem:[#allocation2 + $0x52] sm:$0xff]
      %v1894 = vld [vmem:[#allocation2 + $0x5a] sm:$0xff]
      %v1895 = vld [vmem:[#allocation2 + $0x62] sm:$0xff]
      %v1896 = vld [vmem:[#allocation2 + $0x6a] sm:$0xff]
      %v1897 = vld [vmem:[#allocation2 + $0x72] sm:$0xff]
      %v1898 = vld [vmem:[#allocation2 + $0x7a] sm:$0xff]
      %v1899 = vld [vmem:[#allocation2 + $0x82] sm:$0xff]
      %v1900 = vld [vmem:[#allocation2 + $0x8a] sm:$0xff]
      %v1901 = vld [vmem:[#allocation2 + $0x92] sm:$0xff]
      %v1902 = vld [vmem:[#allocation2 + $0x9a] sm:$0xff]
      %v1903 = vld [vmem:[#allocation2 + $0xa2] sm:$0xff]
      %v1904 = vld [vmem:[#allocation2 + $0xaa] sm:$0xff]
      %v1905 = vld [vmem:[#allocation2 + $0xb2] sm:$0xff]
      %v1906 = vld [vmem:[#allocation2 + $0xba] sm:$0xff]
      %v1907 = vld [vmem:[#allocation2 + $0xc2] sm:$0xff]
      %v1908 = vld [vmem:[#allocation2 + $0xca] sm:$0xff]
      %v1909 = vld [vmem:[#allocation2 + $0xd2] sm:$0xff]
      %v1910 = vld [vmem:[#allocation2 + $0xda] sm:$0xff]
      %v1911 = vld [vmem:[#allocation2 + $0xe2] sm:$0xff]
      %v1912 = vld [vmem:[#allocation2 + $0xea] sm:$0xff]
      %v1913 = vld [vmem:[#allocation2 + $0xf2] sm:$0xff]
      %v1914 = vld [vmem:[#allocation2 + $0xfa] sm:$0xff]
      %v1915 = vld [vmem:[#allocation2 + $0x102] sm:$0xff]
      %v1916 = vld [vmem:[#allocation2 + $0x10a] sm:$0xff]
      %v1917 = vld [vmem:[#allocation2 + $0x112] sm:$0xff]
      %v1918 = vld [vmem:[#allocation2 + $0x11a] sm:$0xff]
      %v1919 = vld [vmem:[#allocation2 + $0x122] sm:$0xff]
      %v1920 = vld [vmem:[#allocation2 + $0x12a] sm:$0xff]
      %v1921 = vld [vmem:[#allocation2 + $0x132] sm:$0xff]
      %v1922 = vld [vmem:[#allocation2 + $0x13a] sm:$0xff]
      %v1923 = vld [vmem:[#allocation2 + $0x142] sm:$0xff]
      %v1924 = vld [vmem:[#allocation2 + $0x14a] sm:$0xff]
      %v1925 = vld [vmem:[#allocation2 + $0x152] sm:$0xff]
      %v1926 = vld [vmem:[#allocation2 + $0x15a] sm:$0xff]
      %v1927 = vld [vmem:[#allocation2 + $0x162] sm:$0xff]
      %v1928 = vld [vmem:[#allocation2 + $0x16a] sm:$0xff]
      %v1929 = vld [vmem:[#allocation2 + $0x172] sm:$0xff]
      %v1930 = vld [vmem:[#allocation2 + $0x17a] sm:$0xff]
      %v1931 = vld [vmem:[#allocation2 + $0x182] sm:$0xff]
      %v1932 = vld [vmem:[#allocation2 + $0x18a] sm:$0xff]
      %v1933 = vld [vmem:[#allocation2 + $0x192] sm:$0xff]
      %v1934 = vld [vmem:[#allocation2 + $0x19a] sm:$0xff]
      %v1935 = vld [vmem:[#allocation2 + $0x1a2] sm:$0xff]
      %v1936 = vld [vmem:[#allocation2 + $0x1aa] sm:$0xff]
      %v1937 = vpack.c.bf16 %v1884, %v1883
      %v1938 = vpack.c.bf16 %v1886, %v1885
      %v1939 = vpack.c.bf16 %v1888, %v1887
      %v1940 = vpack.c.bf16 %v1890, %v1889
      %v1941 = vpack.c.bf16 %v1892, %v1891
      %v1942 = vpack.c.bf16 %v1894, %v1893
      %v1943 = vpack.c.bf16 %v1896, %v1895
      %v1944 = vpack.c.bf16 %v1898, %v1897
      %v1945 = vpack.c.bf16 %v1900, %v1899
      %v1946 = vpack.c.bf16 %v1902, %v1901
      %v1947 = vpack.c.bf16 %v1904, %v1903
      %v1948 = vpack.c.bf16 %v1906, %v1905
      %v1949 = vpack.c.bf16 %v1908, %v1907
      %v1950 = vpack.c.bf16 %v1910, %v1909
      %v1951 = vpack.c.bf16 %v1912, %v1911
      %v1952 = vpack.c.bf16 %v1914, %v1913
      %v1953 = vpack.c.bf16 %v1916, %v1915
      %v1954 = vpack.c.bf16 %v1918, %v1917
      %v1955 = vpack.c.bf16 %v1920, %v1919
      %v1956 = vpack.c.bf16 %v1922, %v1921
      %v1957 = vpack.c.bf16 %v1924, %v1923
      %v1958 = vpack.c.bf16 %v1926, %v1925
      %v1959 = vpack.c.bf16 %v1928, %v1927
      %v1960 = vpack.c.bf16 %v1930, %v1929
      %v1961 = vpack.c.bf16 %v1932, %v1931
      %v1962 = vpack.c.bf16 %v1934, %v1933
      %v1963 = vpack.c.bf16 %v1936, %v1935
      %s1964 = scalar_lea.vmem %s2, 32
      %v1965 = vld [vmem:[%s1964] sm:$0xf]
      %v1966 = vld [vmem:[%s1964 + $0x4] sm:$0xf]
      %v1967 = vld [vmem:[%s1964 + $0x8] sm:$0xf]
      %v1968 = vld [vmem:[%s1964 + $0xc] sm:$0xf]
      %v1973 = vunpack.c.l.b16 %v1965
      %v1974 = vunpack.c.l.b16 %v1966
      %v1975 = vunpack.c.l.b16 %v1967
      %v1976 = vunpack.c.l.b16 %v1968
      %v1977 = vpack.c.b16 %v1974, %v1973
      %v1978 = vpack.c.b16 %v1976, %v1975
      %v1982 = vsel %vm966, %v1937, 0
      %v1985 = vsel %vm966, %v1938, 0
      %v1988 = vsel %vm966, %v1939, 0
      %v1991 = vsel %vm966, %v1940, 0
      %v1994 = vsel %vm966, %v1941, 0
      %v1997 = vsel %vm966, %v1942, 0
      %v2000 = vsel %vm966, %v1943, 0
      %v2003 = vsel %vm966, %v1944, 0
      %v2006 = vsel %vm966, %v1945, 0
      %v2009 = vsel %vm966, %v1946, 0
      %v2012 = vsel %vm966, %v1947, 0
      %v2015 = vsel %vm966, %v1948, 0
      %v2018 = vsel %vm966, %v1949, 0
      %v2021 = vsel %vm966, %v1950, 0
      %v2024 = vsel %vm966, %v1951, 0
      %v2027 = vsel %vm966, %v1952, 0
      %v2030 = vsel %vm966, %v1953, 0
      %v2033 = vsel %vm966, %v1954, 0
      %v2036 = vsel %vm966, %v1955, 0
      %v2039 = vsel %vm966, %v1956, 0
      %v2042 = vsel %vm966, %v1957, 0
      %v2045 = vsel %vm966, %v1958, 0
      %v2048 = vsel %vm966, %v1959, 0
      %v2051 = vsel %vm966, %v1960, 0
      %v2054 = vsel %vm966, %v1961, 0
      %v2057 = vsel %vm966, %v1962, 0
      %v2060 = vsel %vm966, %v1963, 0
      %2062 = vmatprep.subr.bf16.mxu0 0
      %2063 = vmatpush1.bf16.msra.mxu0 %v1977
      %2064 = vmatprep.subr.bf16.mxu0 0
      %2065 = vmatpush1.bf16.msra.mxu0 %v1978
      %2066 = vmatprep.subr.bf16.mxu0 0
      %2067 = vmatpush1.bf16.msra.mxu0 0
      %2068 = vmatprep.subr.bf16.mxu0 0
      %2069 = vmatpush1.bf16.msra.mxu0 0
      %2070 = vmatprep.subr.bf16.mxu0 0
      %2071 = vmatpush1.bf16.msra.mxu0 0
      %2072 = vmatprep.subr.bf16.mxu0 0
      %2073 = vmatpush1.bf16.msra.mxu0 0
      %2074 = vmatprep.subr.bf16.mxu0 0
      %2075 = vmatpush1.bf16.msra.mxu0 0
      %2076 = vmatprep.subr.bf16.mxu0 0
      %2077 = vmatpush1.bf16.msra.mxu0 0
      %2078 = vmatprep.subr.bf16.mxu0 0
      %2079 = vmatpush1.bf16.msra.mxu0 0
      %2080 = vmatprep.subr.bf16.mxu0 0
      %2081 = vmatpush1.bf16.msra.mxu0 0
      %2082 = vmatprep.subr.bf16.mxu0 0
      %2083 = vmatpush1.bf16.msra.mxu0 0
      %2084 = vmatprep.subr.bf16.mxu0 0
      %2085 = vmatpush1.bf16.msra.mxu0 0
      %2086 = vmatprep.subr.bf16.mxu0 0
      %2087 = vmatpush1.bf16.msra.mxu0 0
      %2088 = vmatprep.subr.bf16.mxu0 0
      %2089 = vmatpush1.bf16.msra.mxu0 0
      %2090 = vmatprep.subr.bf16.mxu0 0
      %2091 = vmatpush1.bf16.msra.mxu0 0
      %2092 = vmatprep.subr.bf16.mxu0 0
      %2093 = vmatpush1.bf16.msra.mxu0 0
      %2094 = vmatprep.mubr.bf16.mxu0 0
      %2095 = vmatmul.mubr.bf16.gmra.mrb[0].mxu0 %v1982
      %v2096 = vpop.f32.mrb[0].mxu0
      %v2097 = vadd.f32 0.0, %v2096
      %v2098 = vpop.f32.mrb[0].mxu0
      %v2099 = vpop.f32.mrb[0].mxu0
      %v2100 = vadd.f32 0.0, %v2099
      %v2101 = vpop.f32.mrb[0].mxu0
      %2102 = vmatprep.mubr.bf16.mxu0 0
      %2103 = vmatmul.mubr.bf16.gmra.mrb[0].mxu0 %v1985
      %v2104 = vpop.f32.mrb[0].mxu0
      %v2105 = vadd.f32 0.0, %v2104
      %v2106 = vpop.f32.mrb[0].mxu0
      %v2107 = vpop.f32.mrb[0].mxu0
      %v2108 = vadd.f32 0.0, %v2107
      %v2109 = vpop.f32.mrb[0].mxu0
      %2110 = vmatprep.mubr.bf16.mxu0 0
      %2111 = vmatmul.mubr.bf16.gmra.mrb[0].mxu0 %v1988
      %v2112 = vpop.f32.mrb[0].mxu0
      %v2113 = vadd.f32 0.0, %v2112
      %v2114 = vpop.f32.mrb[0].mxu0
      %v2115 = vpop.f32.mrb[0].mxu0
      %v2116 = vadd.f32 0.0, %v2115
      %v2117 = vpop.f32.mrb[0].mxu0
      %2118 = vmatprep.mubr.bf16.mxu0 0
      %2119 = vmatmul.mubr.bf16.gmra.mrb[0].mxu0 %v1991
      %v2120 = vpop.f32.mrb[0].mxu0
      %v2121 = vadd.f32 0.0, %v2120
      %v2122 = vpop.f32.mrb[0].mxu0
      %v2123 = vpop.f32.mrb[0].mxu0
      %v2124 = vadd.f32 0.0, %v2123
      %v2125 = vpop.f32.mrb[0].mxu0
      %2126 = vmatprep.mubr.bf16.mxu0 0
      %2127 = vmatmul.mubr.bf16.gmra.mrb[0].mxu0 %v1994
      %v2128 = vpop.f32.mrb[0].mxu0
      %v2129 = vadd.f32 0.0, %v2128
      %v2130 = vpop.f32.mrb[0].mxu0
      %v2131 = vpop.f32.mrb[0].mxu0
      %v2132 = vadd.f32 0.0, %v2131
      %v2133 = vpop.f32.mrb[0].mxu0
      %2134 = vmatprep.mubr.bf16.mxu0 0
      %2135 = vmatmul.mubr.bf16.gmra.mrb[0].mxu0 %v1997
      %v2136 = vpop.f32.mrb[0].mxu0
      %v2137 = vadd.f32 0.0, %v2136
      %v2138 = vpop.f32.mrb[0].mxu0
      %v2139 = vpop.f32.mrb[0].mxu0
      %v2140 = vadd.f32 0.0, %v2139
      %v2141 = vpop.f32.mrb[0].mxu0
      %2142 = vmatprep.mubr.bf16.mxu0 0
      %2143 = vmatmul.mubr.bf16.gmra.mrb[0].mxu0 %v2000
      %v2144 = vpop.f32.mrb[0].mxu0
      %v2145 = vadd.f32 0.0, %v2144
      %v2146 = vpop.f32.mrb[0].mxu0
      %v2147 = vpop.f32.mrb[0].mxu0
      %v2148 = vadd.f32 0.0, %v2147
      %v2149 = vpop.f32.mrb[0].mxu0
      %2150 = vmatprep.mubr.bf16.mxu0 0
      %2151 = vmatmul.mubr.bf16.gmra.mrb[0].mxu0 %v2003
      %v2152 = vpop.f32.mrb[0].mxu0
      %v2153 = vadd.f32 0.0, %v2152
      %v2154 = vpop.f32.mrb[0].mxu0
      %v2155 = vpop.f32.mrb[0].mxu0
      %v2156 = vadd.f32 0.0, %v2155
      %v2157 = vpop.f32.mrb[0].mxu0
      %2158 = vmatprep.mubr.bf16.mxu0 0
      %2159 = vmatmul.mubr.bf16.gmra.mrb[0].mxu0 %v2006
      %v2160 = vpop.f32.mrb[0].mxu0
      %v2161 = vadd.f32 0.0, %v2160
      %v2162 = vpop.f32.mrb[0].mxu0
      %v2163 = vpop.f32.mrb[0].mxu0
      %v2164 = vadd.f32 0.0, %v2163
      %v2165 = vpop.f32.mrb[0].mxu0
      %2166 = vmatprep.mubr.bf16.mxu0 0
      %2167 = vmatmul.mubr.bf16.gmra.mrb[0].mxu0 %v2009
      %v2168 = vpop.f32.mrb[0].mxu0
      %v2169 = vadd.f32 0.0, %v2168
      %v2170 = vpop.f32.mrb[0].mxu0
      %v2171 = vpop.f32.mrb[0].mxu0
      %v2172 = vadd.f32 0.0, %v2171
      %v2173 = vpop.f32.mrb[0].mxu0
      %2174 = vmatprep.mubr.bf16.mxu0 0
      %2175 = vmatmul.mubr.bf16.gmra.mrb[0].mxu0 %v2012
      %v2176 = vpop.f32.mrb[0].mxu0
      %v2177 = vadd.f32 0.0, %v2176
      %v2178 = vpop.f32.mrb[0].mxu0
      %v2179 = vpop.f32.mrb[0].mxu0
      %v2180 = vadd.f32 0.0, %v2179
      %v2181 = vpop.f32.mrb[0].mxu0
      %2182 = vmatprep.mubr.bf16.mxu0 0
      %2183 = vmatmul.mubr.bf16.gmra.mrb[0].mxu0 %v2015
      %v2184 = vpop.f32.mrb[0].mxu0
      %v2185 = vadd.f32 0.0, %v2184
      %v2186 = vpop.f32.mrb[0].mxu0
      %v2187 = vpop.f32.mrb[0].mxu0
      %v2188 = vadd.f32 0.0, %v2187
      %v2189 = vpop.f32.mrb[0].mxu0
      %2190 = vmatprep.mubr.bf16.mxu0 0
      %2191 = vmatmul.mubr.bf16.gmra.mrb[0].mxu0 %v2018
      %v2192 = vpop.f32.mrb[0].mxu0
      %v2193 = vadd.f32 0.0, %v2192
      %v2194 = vpop.f32.mrb[0].mxu0
      %v2195 = vpop.f32.mrb[0].mxu0
      %v2196 = vadd.f32 0.0, %v2195
      %v2197 = vpop.f32.mrb[0].mxu0
      %2198 = vmatprep.mubr.bf16.mxu0 0
      %2199 = vmatmul.mubr.bf16.gmra.mrb[0].mxu0 %v2021
      %v2200 = vpop.f32.mrb[0].mxu0
      %v2201 = vadd.f32 0.0, %v2200
      %v2202 = vpop.f32.mrb[0].mxu0
      %v2203 = vpop.f32.mrb[0].mxu0
      %v2204 = vadd.f32 0.0, %v2203
      %v2205 = vpop.f32.mrb[0].mxu0
      %2206 = vmatprep.mubr.bf16.mxu0 0
      %2207 = vmatmul.mubr.bf16.gmra.mrb[0].mxu0 %v2024
      %v2208 = vpop.f32.mrb[0].mxu0
      %v2209 = vadd.f32 0.0, %v2208
      %v2210 = vpop.f32.mrb[0].mxu0
      %v2211 = vpop.f32.mrb[0].mxu0
      %v2212 = vadd.f32 0.0, %v2211
      %v2213 = vpop.f32.mrb[0].mxu0
      %2214 = vmatprep.mubr.bf16.mxu0 0
      %2215 = vmatmul.mubr.bf16.gmra.mrb[0].mxu0 %v2027
      %v2216 = vpop.f32.mrb[0].mxu0
      %v2217 = vadd.f32 0.0, %v2216
      %v2218 = vpop.f32.mrb[0].mxu0
      %v2219 = vpop.f32.mrb[0].mxu0
      %v2220 = vadd.f32 0.0, %v2219
      %v2221 = vpop.f32.mrb[0].mxu0
      %2222 = vmatprep.mubr.bf16.mxu0 0
      %2223 = vmatmul.mubr.bf16.gmra.mrb[0].mxu0 %v2030
      %v2224 = vpop.f32.mrb[0].mxu0
      %v2225 = vadd.f32 0.0, %v2224
      %v2226 = vpop.f32.mrb[0].mxu0
      %v2227 = vpop.f32.mrb[0].mxu0
      %v2228 = vadd.f32 0.0, %v2227
      %v2229 = vpop.f32.mrb[0].mxu0
      %2230 = vmatprep.mubr.bf16.mxu0 0
      %2231 = vmatmul.mubr.bf16.gmra.mrb[0].mxu0 %v2033
      %v2232 = vpop.f32.mrb[0].mxu0
      %v2233 = vadd.f32 0.0, %v2232
      %v2234 = vpop.f32.mrb[0].mxu0
      %v2235 = vpop.f32.mrb[0].mxu0
      %v2236 = vadd.f32 0.0, %v2235
      %v2237 = vpop.f32.mrb[0].mxu0
      %2238 = vmatprep.mubr.bf16.mxu0 0
      %2239 = vmatmul.mubr.bf16.gmra.mrb[0].mxu0 %v2036
      %v2240 = vpop.f32.mrb[0].mxu0
      %v2241 = vadd.f32 0.0, %v2240
      %v2242 = vpop.f32.mrb[0].mxu0
      %v2243 = vpop.f32.mrb[0].mxu0
      %v2244 = vadd.f32 0.0, %v2243
      %v2245 = vpop.f32.mrb[0].mxu0
      %2246 = vmatprep.mubr.bf16.mxu0 0
      %2247 = vmatmul.mubr.bf16.gmra.mrb[0].mxu0 %v2039
      %v2248 = vpop.f32.mrb[0].mxu0
      %v2249 = vadd.f32 0.0, %v2248
      %v2250 = vpop.f32.mrb[0].mxu0
      %v2251 = vpop.f32.mrb[0].mxu0
      %v2252 = vadd.f32 0.0, %v2251
      %v2253 = vpop.f32.mrb[0].mxu0
      %2254 = vmatprep.mubr.bf16.mxu0 0
      %2255 = vmatmul.mubr.bf16.gmra.mrb[0].mxu0 %v2042
      %v2256 = vpop.f32.mrb[0].mxu0
      %v2257 = vadd.f32 0.0, %v2256
      %v2258 = vpop.f32.mrb[0].mxu0
      %v2259 = vpop.f32.mrb[0].mxu0
      %v2260 = vadd.f32 0.0, %v2259
      %v2261 = vpop.f32.mrb[0].mxu0
      %2262 = vmatprep.mubr.bf16.mxu0 0
      %2263 = vmatmul.mubr.bf16.gmra.mrb[0].mxu0 %v2045
      %v2264 = vpop.f32.mrb[0].mxu0
      %v2265 = vadd.f32 0.0, %v2264
      %v2266 = vpop.f32.mrb[0].mxu0
      %v2267 = vpop.f32.mrb[0].mxu0
      %v2268 = vadd.f32 0.0, %v2267
      %v2269 = vpop.f32.mrb[0].mxu0
      %2270 = vmatprep.mubr.bf16.mxu0 0
      %2271 = vmatmul.mubr.bf16.gmra.mrb[0].mxu0 %v2048
      %v2272 = vpop.f32.mrb[0].mxu0
      %v2273 = vadd.f32 0.0, %v2272
      %v2274 = vpop.f32.mrb[0].mxu0
      %v2275 = vpop.f32.mrb[0].mxu0
      %v2276 = vadd.f32 0.0, %v2275
      %v2277 = vpop.f32.mrb[0].mxu0
      %2278 = vmatprep.mubr.bf16.mxu0 0
      %2279 = vmatmul.mubr.bf16.gmra.mrb[0].mxu0 %v2051
      %v2280 = vpop.f32.mrb[0].mxu0
      %v2281 = vadd.f32 0.0, %v2280
      %v2282 = vpop.f32.mrb[0].mxu0
      %v2283 = vpop.f32.mrb[0].mxu0
      %v2284 = vadd.f32 0.0, %v2283
      %v2285 = vpop.f32.mrb[0].mxu0
      %2286 = vmatprep.mubr.bf16.mxu0 0
      %2287 = vmatmul.mubr.bf16.gmra.mrb[0].mxu0 %v2054
      %v2288 = vpop.f32.mrb[0].mxu0
      %v2289 = vadd.f32 0.0, %v2288
      %v2290 = vpop.f32.mrb[0].mxu0
      %v2291 = vpop.f32.mrb[0].mxu0
      %v2292 = vadd.f32 0.0, %v2291
      %v2293 = vpop.f32.mrb[0].mxu0
      %2294 = vmatprep.mubr.bf16.mxu0 0
      %2295 = vmatmul.mubr.bf16.gmra.mrb[0].mxu0 %v2057
      %v2296 = vpop.f32.mrb[0].mxu0
      %v2297 = vadd.f32 0.0, %v2296
      %v2298 = vpop.f32.mrb[0].mxu0
      %v2299 = vpop.f32.mrb[0].mxu0
      %v2300 = vadd.f32 0.0, %v2299
      %v2301 = vpop.f32.mrb[0].mxu0
      %2302 = vmatprep.mubr.bf16.mxu0 0
      %2303 = vmatmul.mubr.bf16.gmra.mrb[0].mxu0 %v2060
      %v2304 = vpop.f32.mrb[0].mxu0
      %v2305 = vadd.f32 0.0, %v2304
      %v2306 = vpop.f32.mrb[0].mxu0
      %v2307 = vpop.f32.mrb[0].mxu0
      %v2308 = vadd.f32 0.0, %v2307
      %v2309 = vpop.f32.mrb[0].mxu0
      %2310 = vdwg.mxu0
      %v2311 = vadd.f32 %v1669, %v2097
      %v2312 = vadd.f32 %v1672, %v2100
      %v2313 = vadd.f32 %v1677, %v2105
      %v2314 = vadd.f32 %v1680, %v2108
      %v2315 = vadd.f32 %v1685, %v2113
      %v2316 = vadd.f32 %v1688, %v2116
      %v2317 = vadd.f32 %v1693, %v2121
      %v2318 = vadd.f32 %v1696, %v2124
      %v2319 = vadd.f32 %v1701, %v2129
      %v2320 = vadd.f32 %v1704, %v2132
      %v2321 = vadd.f32 %v1709, %v2137
      %v2322 = vadd.f32 %v1712, %v2140
      %v2323 = vadd.f32 %v1717, %v2145
      %v2324 = vadd.f32 %v1720, %v2148
      %v2325 = vadd.f32 %v1725, %v2153
      %v2326 = vadd.f32 %v1728, %v2156
      %v2327 = vadd.f32 %v1733, %v2161
      %v2328 = vadd.f32 %v1736, %v2164
      %v2329 = vadd.f32 %v1741, %v2169
      %v2330 = vadd.f32 %v1744, %v2172
      %v2331 = vadd.f32 %v1749, %v2177
      %v2332 = vadd.f32 %v1752, %v2180
      %v2333 = vadd.f32 %v1757, %v2185
      %v2334 = vadd.f32 %v1760, %v2188
      %v2335 = vadd.f32 %v1765, %v2193
      %v2336 = vadd.f32 %v1768, %v2196
      %v2337 = vadd.f32 %v1773, %v2201
      %v2338 = vadd.f32 %v1776, %v2204
      %v2339 = vadd.f32 %v1781, %v2209
      %v2340 = vadd.f32 %v1784, %v2212
      %v2341 = vadd.f32 %v1789, %v2217
      %v2342 = vadd.f32 %v1792, %v2220
      %v2343 = vadd.f32 %v1797, %v2225
      %v2344 = vadd.f32 %v1800, %v2228
      %v2345 = vadd.f32 %v1805, %v2233
      %v2346 = vadd.f32 %v1808, %v2236
      %v2347 = vadd.f32 %v1813, %v2241
      %v2348 = vadd.f32 %v1816, %v2244
      %v2349 = vadd.f32 %v1821, %v2249
      %v2350 = vadd.f32 %v1824, %v2252
      %v2351 = vadd.f32 %v1829, %v2257
      %v2352 = vadd.f32 %v1832, %v2260
      %v2353 = vadd.f32 %v1837, %v2265
      %v2354 = vadd.f32 %v1840, %v2268
      %v2355 = vadd.f32 %v1845, %v2273
      %v2356 = vadd.f32 %v1848, %v2276
      %v2357 = vadd.f32 %v1853, %v2281
      %v2358 = vadd.f32 %v1856, %v2284
      %v2359 = vadd.f32 %v1861, %v2289
      %v2360 = vadd.f32 %v1864, %v2292
      %v2361 = vadd.f32 %v1869, %v2297
      %v2362 = vadd.f32 %v1872, %v2300
      %v2363 = vadd.f32 %v1877, %v2305
      %v2364 = vadd.f32 %v1880, %v2308
      %v2365 = vld [vmem:[#allocation2 + $0x18] sm:$0xff]
      %v2366 = vld [vmem:[#allocation2 + $0x20] sm:$0xff]
      %v2367 = vld [vmem:[#allocation2 + $0x28] sm:$0xff]
      %v2368 = vld [vmem:[#allocation2 + $0x30] sm:$0xff]
      %v2369 = vld [vmem:[#allocation2 + $0x38] sm:$0xff]
      %v2370 = vld [vmem:[#allocation2 + $0x40] sm:$0xff]
      %v2371 = vld [vmem:[#allocation2 + $0x48] sm:$0xff]
      %v2372 = vld [vmem:[#allocation2 + $0x50] sm:$0xff]
      %v2373 = vld [vmem:[#allocation2 + $0x58] sm:$0xff]
      %v2374 = vld [vmem:[#allocation2 + $0x60] sm:$0xff]
      %v2375 = vld [vmem:[#allocation2 + $0x68] sm:$0xff]
      %v2376 = vld [vmem:[#allocation2 + $0x70] sm:$0xff]
      %v2377 = vld [vmem:[#allocation2 + $0x78] sm:$0xff]
      %v2378 = vld [vmem:[#allocation2 + $0x80] sm:$0xff]
      %v2379 = vld [vmem:[#allocation2 + $0x88] sm:$0xff]
      %v2380 = vld [vmem:[#allocation2 + $0x90] sm:$0xff]
      %v2381 = vld [vmem:[#allocation2 + $0x98] sm:$0xff]
      %v2382 = vld [vmem:[#allocation2 + $0xa0] sm:$0xff]
      %v2383 = vld [vmem:[#allocation2 + $0xa8] sm:$0xff]
      %v2384 = vld [vmem:[#allocation2 + $0xb0] sm:$0xff]
      %v2385 = vld [vmem:[#allocation2 + $0xb8] sm:$0xff]
      %v2386 = vld [vmem:[#allocation2 + $0xc0] sm:$0xff]
      %v2387 = vld [vmem:[#allocation2 + $0xc8] sm:$0xff]
      %v2388 = vld [vmem:[#allocation2 + $0xd0] sm:$0xff]
      %v2389 = vld [vmem:[#allocation2 + $0xd8] sm:$0xff]
      %v2390 = vld [vmem:[#allocation2 + $0xe0] sm:$0xff]
      %v2391 = vld [vmem:[#allocation2 + $0xe8] sm:$0xff]
      %v2392 = vld [vmem:[#allocation2 + $0xf0] sm:$0xff]
      %v2393 = vld [vmem:[#allocation2 + $0xf8] sm:$0xff]
      %v2394 = vld [vmem:[#allocation2 + $0x100] sm:$0xff]
      %v2395 = vld [vmem:[#allocation2 + $0x108] sm:$0xff]
      %v2396 = vld [vmem:[#allocation2 + $0x110] sm:$0xff]
      %v2397 = vld [vmem:[#allocation2 + $0x118] sm:$0xff]
      %v2398 = vld [vmem:[#allocation2 + $0x120] sm:$0xff]
      %v2399 = vld [vmem:[#allocation2 + $0x128] sm:$0xff]
      %v2400 = vld [vmem:[#allocation2 + $0x130] sm:$0xff]
      %v2401 = vld [vmem:[#allocation2 + $0x138] sm:$0xff]
      %v2402 = vld [vmem:[#allocation2 + $0x140] sm:$0xff]
      %v2403 = vld [vmem:[#allocation2 + $0x148] sm:$0xff]
      %v2404 = vld [vmem:[#allocation2 + $0x150] sm:$0xff]
      %v2405 = vld [vmem:[#allocation2 + $0x158] sm:$0xff]
      %v2406 = vld [vmem:[#allocation2 + $0x160] sm:$0xff]
      %v2407 = vld [vmem:[#allocation2 + $0x168] sm:$0xff]
      %v2408 = vld [vmem:[#allocation2 + $0x170] sm:$0xff]
      %v2409 = vld [vmem:[#allocation2 + $0x178] sm:$0xff]
      %v2410 = vld [vmem:[#allocation2 + $0x180] sm:$0xff]
      %v2411 = vld [vmem:[#allocation2 + $0x188] sm:$0xff]
      %v2412 = vld [vmem:[#allocation2 + $0x190] sm:$0xff]
      %v2413 = vld [vmem:[#allocation2 + $0x198] sm:$0xff]
      %v2414 = vld [vmem:[#allocation2 + $0x1a0] sm:$0xff]
      %v2415 = vld [vmem:[#allocation2 + $0x1a8] sm:$0xff]
      %v2416 = vld [vmem:[#allocation2 + $0x1b0] sm:$0xff]
      %v2417 = vld [vmem:[#allocation2 + $0x1b8] sm:$0xff]
      %v2418 = vld [vmem:[#allocation2 + $0x1c0] sm:$0xff]
      %v2419 = vpack.c.bf16 %v2366, %v2365
      %v2420 = vpack.c.bf16 %v2368, %v2367
      %v2421 = vpack.c.bf16 %v2370, %v2369
      %v2422 = vpack.c.bf16 %v2372, %v2371
      %v2423 = vpack.c.bf16 %v2374, %v2373
      %v2424 = vpack.c.bf16 %v2376, %v2375
      %v2425 = vpack.c.bf16 %v2378, %v2377
      %v2426 = vpack.c.bf16 %v2380, %v2379
      %v2427 = vpack.c.bf16 %v2382, %v2381
      %v2428 = vpack.c.bf16 %v2384, %v2383
      %v2429 = vpack.c.bf16 %v2386, %v2385
      %v2430 = vpack.c.bf16 %v2388, %v2387
      %v2431 = vpack.c.bf16 %v2390, %v2389
      %v2432 = vpack.c.bf16 %v2392, %v2391
      %v2433 = vpack.c.bf16 %v2394, %v2393
      %v2434 = vpack.c.bf16 %v2396, %v2395
      %v2435 = vpack.c.bf16 %v2398, %v2397
      %v2436 = vpack.c.bf16 %v2400, %v2399
      %v2437 = vpack.c.bf16 %v2402, %v2401
      %v2438 = vpack.c.bf16 %v2404, %v2403
      %v2439 = vpack.c.bf16 %v2406, %v2405
      %v2440 = vpack.c.bf16 %v2408, %v2407
      %v2441 = vpack.c.bf16 %v2410, %v2409
      %v2442 = vpack.c.bf16 %v2412, %v2411
      %v2443 = vpack.c.bf16 %v2414, %v2413
      %v2444 = vpack.c.bf16 %v2416, %v2415
      %v2445 = vpack.c.bf16 %v2418, %v2417
      %s2446 = scalar_lea.vmem %s2, 48
      %v2447 = vld [vmem:[%s2446] sm:$0xf]
      %v2448 = vld [vmem:[%s2446 + $0x4] sm:$0xf]
      %v2449 = vld [vmem:[%s2446 + $0x8] sm:$0xf]
      %v2450 = vld [vmem:[%s2446 + $0xc] sm:$0xf]
      %v2455 = vunpack.c.l.b16 %v2447
      %v2456 = vunpack.c.l.b16 %v2448
      %v2457 = vunpack.c.l.b16 %v2449
      %v2458 = vunpack.c.l.b16 %v2450
      %v2459 = vpack.c.b16 %v2456, %v2455
      %v2460 = vpack.c.b16 %v2458, %v2457
      %v2464 = vsel %vm966, %v2419, 0
      %v2467 = vsel %vm966, %v2420, 0
      %v2470 = vsel %vm966, %v2421, 0
      %v2473 = vsel %vm966, %v2422, 0
      %v2476 = vsel %vm966, %v2423, 0
      %v2479 = vsel %vm966, %v2424, 0
      %v2482 = vsel %vm966, %v2425, 0
      %v2485 = vsel %vm966, %v2426, 0
      %v2488 = vsel %vm966, %v2427, 0
      %v2491 = vsel %vm966, %v2428, 0
      %v2494 = vsel %vm966, %v2429, 0
      %v2497 = vsel %vm966, %v2430, 0
      %v2500 = vsel %vm966, %v2431, 0
      %v2503 = vsel %vm966, %v2432, 0
      %v2506 = vsel %vm966, %v2433, 0
      %v2509 = vsel %vm966, %v2434, 0
      %v2512 = vsel %vm966, %v2435, 0
      %v2515 = vsel %vm966, %v2436, 0
      %v2518 = vsel %vm966, %v2437, 0
      %v2521 = vsel %vm966, %v2438, 0
      %v2524 = vsel %vm966, %v2439, 0
      %v2527 = vsel %vm966, %v2440, 0
      %v2530 = vsel %vm966, %v2441, 0
      %v2533 = vsel %vm966, %v2442, 0
      %v2536 = vsel %vm966, %v2443, 0
      %v2539 = vsel %vm966, %v2444, 0
      %v2542 = vsel %vm966, %v2445, 0
      %2544 = vmatprep.subr.bf16.mxu0 0
      %2545 = vmatpush1.bf16.msra.mxu0 %v2459
      %2546 = vmatprep.subr.bf16.mxu0 0
      %2547 = vmatpush1.bf16.msra.mxu0 %v2460
      %2548 = vmatprep.subr.bf16.mxu0 0
      %2549 = vmatpush1.bf16.msra.mxu0 0
      %2550 = vmatprep.subr.bf16.mxu0 0
      %2551 = vmatpush1.bf16.msra.mxu0 0
      %2552 = vmatprep.subr.bf16.mxu0 0
      %2553 = vmatpush1.bf16.msra.mxu0 0
      %2554 = vmatprep.subr.bf16.mxu0 0
      %2555 = vmatpush1.bf16.msra.mxu0 0
      %2556 = vmatprep.subr.bf16.mxu0 0
      %2557 = vmatpush1.bf16.msra.mxu0 0
      %2558 = vmatprep.subr.bf16.mxu0 0
      %2559 = vmatpush1.bf16.msra.mxu0 0
      %2560 = vmatprep.subr.bf16.mxu0 0
      %2561 = vmatpush1.bf16.msra.mxu0 0
      %2562 = vmatprep.subr.bf16.mxu0 0
      %2563 = vmatpush1.bf16.msra.mxu0 0
      %2564 = vmatprep.subr.bf16.mxu0 0
      %2565 = vmatpush1.bf16.msra.mxu0 0
      %2566 = vmatprep.subr.bf16.mxu0 0
      %2567 = vmatpush1.bf16.msra.mxu0 0
      %2568 = vmatprep.subr.bf16.mxu0 0
      %2569 = vmatpush1.bf16.msra.mxu0 0
      %2570 = vmatprep.subr.bf16.mxu0 0
      %2571 = vmatpush1.bf16.msra.mxu0 0
      %2572 = vmatprep.subr.bf16.mxu0 0
      %2573 = vmatpush1.bf16.msra.mxu0 0
      %2574 = vmatprep.subr.bf16.mxu0 0
      %2575 = vmatpush1.bf16.msra.mxu0 0
      %2576 = vmatprep.mubr.bf16.mxu0 0
      %2577 = vmatmul.mubr.bf16.gmra.mrb[0].mxu0 %v2464
      %v2578 = vpop.f32.mrb[0].mxu0
      %v2579 = vadd.f32 0.0, %v2578
      %v2580 = vpop.f32.mrb[0].mxu0
      %v2581 = vpop.f32.mrb[0].mxu0
      %v2582 = vadd.f32 0.0, %v2581
      %v2583 = vpop.f32.mrb[0].mxu0
      %2584 = vmatprep.mubr.bf16.mxu0 0
      %2585 = vmatmul.mubr.bf16.gmra.mrb[0].mxu0 %v2467
      %v2586 = vpop.f32.mrb[0].mxu0
      %v2587 = vadd.f32 0.0, %v2586
      %v2588 = vpop.f32.mrb[0].mxu0
      %v2589 = vpop.f32.mrb[0].mxu0
      %v2590 = vadd.f32 0.0, %v2589
      %v2591 = vpop.f32.mrb[0].mxu0
      %2592 = vmatprep.mubr.bf16.mxu0 0
      %2593 = vmatmul.mubr.bf16.gmra.mrb[0].mxu0 %v2470
      %v2594 = vpop.f32.mrb[0].mxu0
      %v2595 = vadd.f32 0.0, %v2594
      %v2596 = vpop.f32.mrb[0].mxu0
      %v2597 = vpop.f32.mrb[0].mxu0
      %v2598 = vadd.f32 0.0, %v2597
      %v2599 = vpop.f32.mrb[0].mxu0
      %2600 = vmatprep.mubr.bf16.mxu0 0
      %2601 = vmatmul.mubr.bf16.gmra.mrb[0].mxu0 %v2473
      %v2602 = vpop.f32.mrb[0].mxu0
      %v2603 = vadd.f32 0.0, %v2602
      %v2604 = vpop.f32.mrb[0].mxu0
      %v2605 = vpop.f32.mrb[0].mxu0
      %v2606 = vadd.f32 0.0, %v2605
      %v2607 = vpop.f32.mrb[0].mxu0
      %2608 = vmatprep.mubr.bf16.mxu0 0
      %2609 = vmatmul.mubr.bf16.gmra.mrb[0].mxu0 %v2476
      %v2610 = vpop.f32.mrb[0].mxu0
      %v2611 = vadd.f32 0.0, %v2610
      %v2612 = vpop.f32.mrb[0].mxu0
      %v2613 = vpop.f32.mrb[0].mxu0
      %v2614 = vadd.f32 0.0, %v2613
      %v2615 = vpop.f32.mrb[0].mxu0
      %2616 = vmatprep.mubr.bf16.mxu0 0
      %2617 = vmatmul.mubr.bf16.gmra.mrb[0].mxu0 %v2479
      %v2618 = vpop.f32.mrb[0].mxu0
      %v2619 = vadd.f32 0.0, %v2618
      %v2620 = vpop.f32.mrb[0].mxu0
      %v2621 = vpop.f32.mrb[0].mxu0
      %v2622 = vadd.f32 0.0, %v2621
      %v2623 = vpop.f32.mrb[0].mxu0
      %2624 = vmatprep.mubr.bf16.mxu0 0
      %2625 = vmatmul.mubr.bf16.gmra.mrb[0].mxu0 %v2482
      %v2626 = vpop.f32.mrb[0].mxu0
      %v2627 = vadd.f32 0.0, %v2626
      %v2628 = vpop.f32.mrb[0].mxu0
      %v2629 = vpop.f32.mrb[0].mxu0
      %v2630 = vadd.f32 0.0, %v2629
      %v2631 = vpop.f32.mrb[0].mxu0
      %2632 = vmatprep.mubr.bf16.mxu0 0
      %2633 = vmatmul.mubr.bf16.gmra.mrb[0].mxu0 %v2485
      %v2634 = vpop.f32.mrb[0].mxu0
      %v2635 = vadd.f32 0.0, %v2634
      %v2636 = vpop.f32.mrb[0].mxu0
      %v2637 = vpop.f32.mrb[0].mxu0
      %v2638 = vadd.f32 0.0, %v2637
      %v2639 = vpop.f32.mrb[0].mxu0
      %2640 = vmatprep.mubr.bf16.mxu0 0
      %2641 = vmatmul.mubr.bf16.gmra.mrb[0].mxu0 %v2488
      %v2642 = vpop.f32.mrb[0].mxu0
      %v2643 = vadd.f32 0.0, %v2642
      %v2644 = vpop.f32.mrb[0].mxu0
      %v2645 = vpop.f32.mrb[0].mxu0
      %v2646 = vadd.f32 0.0, %v2645
      %v2647 = vpop.f32.mrb[0].mxu0
      %2648 = vmatprep.mubr.bf16.mxu0 0
      %2649 = vmatmul.mubr.bf16.gmra.mrb[0].mxu0 %v2491
      %v2650 = vpop.f32.mrb[0].mxu0
      %v2651 = vadd.f32 0.0, %v2650
      %v2652 = vpop.f32.mrb[0].mxu0
      %v2653 = vpop.f32.mrb[0].mxu0
      %v2654 = vadd.f32 0.0, %v2653
      %v2655 = vpop.f32.mrb[0].mxu0
      %2656 = vmatprep.mubr.bf16.mxu0 0
      %2657 = vmatmul.mubr.bf16.gmra.mrb[0].mxu0 %v2494
      %v2658 = vpop.f32.mrb[0].mxu0
      %v2659 = vadd.f32 0.0, %v2658
      %v2660 = vpop.f32.mrb[0].mxu0
      %v2661 = vpop.f32.mrb[0].mxu0
      %v2662 = vadd.f32 0.0, %v2661
      %v2663 = vpop.f32.mrb[0].mxu0
      %2664 = vmatprep.mubr.bf16.mxu0 0
      %2665 = vmatmul.mubr.bf16.gmra.mrb[0].mxu0 %v2497
      %v2666 = vpop.f32.mrb[0].mxu0
      %v2667 = vadd.f32 0.0, %v2666
      %v2668 = vpop.f32.mrb[0].mxu0
      %v2669 = vpop.f32.mrb[0].mxu0
      %v2670 = vadd.f32 0.0, %v2669
      %v2671 = vpop.f32.mrb[0].mxu0
      %2672 = vmatprep.mubr.bf16.mxu0 0
      %2673 = vmatmul.mubr.bf16.gmra.mrb[0].mxu0 %v2500
      %v2674 = vpop.f32.mrb[0].mxu0
      %v2675 = vadd.f32 0.0, %v2674
      %v2676 = vpop.f32.mrb[0].mxu0
      %v2677 = vpop.f32.mrb[0].mxu0
      %v2678 = vadd.f32 0.0, %v2677
      %v2679 = vpop.f32.mrb[0].mxu0
      %2680 = vmatprep.mubr.bf16.mxu0 0
      %2681 = vmatmul.mubr.bf16.gmra.mrb[0].mxu0 %v2503
      %v2682 = vpop.f32.mrb[0].mxu0
      %v2683 = vadd.f32 0.0, %v2682
      %v2684 = vpop.f32.mrb[0].mxu0
      %v2685 = vpop.f32.mrb[0].mxu0
      %v2686 = vadd.f32 0.0, %v2685
      %v2687 = vpop.f32.mrb[0].mxu0
      %2688 = vmatprep.mubr.bf16.mxu0 0
      %2689 = vmatmul.mubr.bf16.gmra.mrb[0].mxu0 %v2506
      %v2690 = vpop.f32.mrb[0].mxu0
      %v2691 = vadd.f32 0.0, %v2690
      %v2692 = vpop.f32.mrb[0].mxu0
      %v2693 = vpop.f32.mrb[0].mxu0
      %v2694 = vadd.f32 0.0, %v2693
      %v2695 = vpop.f32.mrb[0].mxu0
      %2696 = vmatprep.mubr.bf16.mxu0 0
      %2697 = vmatmul.mubr.bf16.gmra.mrb[0].mxu0 %v2509
      %v2698 = vpop.f32.mrb[0].mxu0
      %v2699 = vadd.f32 0.0, %v2698
      %v2700 = vpop.f32.mrb[0].mxu0
      %v2701 = vpop.f32.mrb[0].mxu0
      %v2702 = vadd.f32 0.0, %v2701
      %v2703 = vpop.f32.mrb[0].mxu0
      %2704 = vmatprep.mubr.bf16.mxu0 0
      %2705 = vmatmul.mubr.bf16.gmra.mrb[0].mxu0 %v2512
      %v2706 = vpop.f32.mrb[0].mxu0
      %v2707 = vadd.f32 0.0, %v2706
      %v2708 = vpop.f32.mrb[0].mxu0
      %v2709 = vpop.f32.mrb[0].mxu0
      %v2710 = vadd.f32 0.0, %v2709
      %v2711 = vpop.f32.mrb[0].mxu0
      %2712 = vmatprep.mubr.bf16.mxu0 0
      %2713 = vmatmul.mubr.bf16.gmra.mrb[0].mxu0 %v2515
      %v2714 = vpop.f32.mrb[0].mxu0
      %v2715 = vadd.f32 0.0, %v2714
      %v2716 = vpop.f32.mrb[0].mxu0
      %v2717 = vpop.f32.mrb[0].mxu0
      %v2718 = vadd.f32 0.0, %v2717
      %v2719 = vpop.f32.mrb[0].mxu0
      %2720 = vmatprep.mubr.bf16.mxu0 0
      %2721 = vmatmul.mubr.bf16.gmra.mrb[0].mxu0 %v2518
      %v2722 = vpop.f32.mrb[0].mxu0
      %v2723 = vadd.f32 0.0, %v2722
      %v2724 = vpop.f32.mrb[0].mxu0
      %v2725 = vpop.f32.mrb[0].mxu0
      %v2726 = vadd.f32 0.0, %v2725
      %v2727 = vpop.f32.mrb[0].mxu0
      %2728 = vmatprep.mubr.bf16.mxu0 0
      %2729 = vmatmul.mubr.bf16.gmra.mrb[0].mxu0 %v2521
      %v2730 = vpop.f32.mrb[0].mxu0
      %v2731 = vadd.f32 0.0, %v2730
      %v2732 = vpop.f32.mrb[0].mxu0
      %v2733 = vpop.f32.mrb[0].mxu0
      %v2734 = vadd.f32 0.0, %v2733
      %v2735 = vpop.f32.mrb[0].mxu0
      %2736 = vmatprep.mubr.bf16.mxu0 0
      %2737 = vmatmul.mubr.bf16.gmra.mrb[0].mxu0 %v2524
      %v2738 = vpop.f32.mrb[0].mxu0
      %v2739 = vadd.f32 0.0, %v2738
      %v2740 = vpop.f32.mrb[0].mxu0
      %v2741 = vpop.f32.mrb[0].mxu0
      %v2742 = vadd.f32 0.0, %v2741
      %v2743 = vpop.f32.mrb[0].mxu0
      %2744 = vmatprep.mubr.bf16.mxu0 0
      %2745 = vmatmul.mubr.bf16.gmra.mrb[0].mxu0 %v2527
      %v2746 = vpop.f32.mrb[0].mxu0
      %v2747 = vadd.f32 0.0, %v2746
      %v2748 = vpop.f32.mrb[0].mxu0
      %v2749 = vpop.f32.mrb[0].mxu0
      %v2750 = vadd.f32 0.0, %v2749
      %v2751 = vpop.f32.mrb[0].mxu0
      %2752 = vmatprep.mubr.bf16.mxu0 0
      %2753 = vmatmul.mubr.bf16.gmra.mrb[0].mxu0 %v2530
      %v2754 = vpop.f32.mrb[0].mxu0
      %v2755 = vadd.f32 0.0, %v2754
      %v2756 = vpop.f32.mrb[0].mxu0
      %v2757 = vpop.f32.mrb[0].mxu0
      %v2758 = vadd.f32 0.0, %v2757
      %v2759 = vpop.f32.mrb[0].mxu0
      %2760 = vmatprep.mubr.bf16.mxu0 0
      %2761 = vmatmul.mubr.bf16.gmra.mrb[0].mxu0 %v2533
      %v2762 = vpop.f32.mrb[0].mxu0
      %v2763 = vadd.f32 0.0, %v2762
      %v2764 = vpop.f32.mrb[0].mxu0
      %v2765 = vpop.f32.mrb[0].mxu0
      %v2766 = vadd.f32 0.0, %v2765
      %v2767 = vpop.f32.mrb[0].mxu0
      %2768 = vmatprep.mubr.bf16.mxu0 0
      %2769 = vmatmul.mubr.bf16.gmra.mrb[0].mxu0 %v2536
      %v2770 = vpop.f32.mrb[0].mxu0
      %v2771 = vadd.f32 0.0, %v2770
      %v2772 = vpop.f32.mrb[0].mxu0
      %v2773 = vpop.f32.mrb[0].mxu0
      %v2774 = vadd.f32 0.0, %v2773
      %v2775 = vpop.f32.mrb[0].mxu0
      %2776 = vmatprep.mubr.bf16.mxu0 0
      %2777 = vmatmul.mubr.bf16.gmra.mrb[0].mxu0 %v2539
      %v2778 = vpop.f32.mrb[0].mxu0
      %v2779 = vadd.f32 0.0, %v2778
      %v2780 = vpop.f32.mrb[0].mxu0
      %v2781 = vpop.f32.mrb[0].mxu0
      %v2782 = vadd.f32 0.0, %v2781
      %v2783 = vpop.f32.mrb[0].mxu0
      %2784 = vmatprep.mubr.bf16.mxu0 0
      %2785 = vmatmul.mubr.bf16.gmra.mrb[0].mxu0 %v2542
      %v2786 = vpop.f32.mrb[0].mxu0
      %v2787 = vadd.f32 0.0, %v2786
      %v2788 = vpop.f32.mrb[0].mxu0
      %v2789 = vpop.f32.mrb[0].mxu0
      %v2790 = vadd.f32 0.0, %v2789
      %v2791 = vpop.f32.mrb[0].mxu0
      %2792 = vdwg.mxu0
      %v2793 = vadd.f32 %v2311, %v2579
      %v2794 = vadd.f32 %v2312, %v2582
      %v2795 = vadd.f32 %v2313, %v2587
      %v2796 = vadd.f32 %v2314, %v2590
      %v2797 = vadd.f32 %v2315, %v2595
      %v2798 = vadd.f32 %v2316, %v2598
      %v2799 = vadd.f32 %v2317, %v2603
      %v2800 = vadd.f32 %v2318, %v2606
      %v2801 = vadd.f32 %v2319, %v2611
      %v2802 = vadd.f32 %v2320, %v2614
      %v2803 = vadd.f32 %v2321, %v2619
      %v2804 = vadd.f32 %v2322, %v2622
      %v2805 = vadd.f32 %v2323, %v2627
      %v2806 = vadd.f32 %v2324, %v2630
      %v2807 = vadd.f32 %v2325, %v2635
      %v2808 = vadd.f32 %v2326, %v2638
      %v2809 = vadd.f32 %v2327, %v2643
      %v2810 = vadd.f32 %v2328, %v2646
      %v2811 = vadd.f32 %v2329, %v2651
      %v2812 = vadd.f32 %v2330, %v2654
      %v2813 = vadd.f32 %v2331, %v2659
      %v2814 = vadd.f32 %v2332, %v2662
      %v2815 = vadd.f32 %v2333, %v2667
      %v2816 = vadd.f32 %v2334, %v2670
      %v2817 = vadd.f32 %v2335, %v2675
      %v2818 = vadd.f32 %v2336, %v2678
      %v2819 = vadd.f32 %v2337, %v2683
      %v2820 = vadd.f32 %v2338, %v2686
      %v2821 = vadd.f32 %v2339, %v2691
      %v2822 = vadd.f32 %v2340, %v2694
      %v2823 = vadd.f32 %v2341, %v2699
      %v2824 = vadd.f32 %v2342, %v2702
      %v2825 = vadd.f32 %v2343, %v2707
      %v2826 = vadd.f32 %v2344, %v2710
      %v2827 = vadd.f32 %v2345, %v2715
      %v2828 = vadd.f32 %v2346, %v2718
      %v2829 = vadd.f32 %v2347, %v2723
      %v2830 = vadd.f32 %v2348, %v2726
      %v2831 = vadd.f32 %v2349, %v2731
      %v2832 = vadd.f32 %v2350, %v2734
      %v2833 = vadd.f32 %v2351, %v2739
      %v2834 = vadd.f32 %v2352, %v2742
      %v2835 = vadd.f32 %v2353, %v2747
      %v2836 = vadd.f32 %v2354, %v2750
      %v2837 = vadd.f32 %v2355, %v2755
      %v2838 = vadd.f32 %v2356, %v2758
      %v2839 = vadd.f32 %v2357, %v2763
      %v2840 = vadd.f32 %v2358, %v2766
      %v2841 = vadd.f32 %v2359, %v2771
      %v2842 = vadd.f32 %v2360, %v2774
      %v2843 = vadd.f32 %v2361, %v2779
      %v2844 = vadd.f32 %v2362, %v2782
      %v2845 = vadd.f32 %v2363, %v2787
      %v2846 = vadd.f32 %v2364, %v2790
      %v2847 = vld [vmem:[#allocation2 + $0x19] sm:$0xff]
      %v2848 = vld [vmem:[#allocation2 + $0x21] sm:$0xff]
      %v2849 = vld [vmem:[#allocation2 + $0x29] sm:$0xff]
      %v2850 = vld [vmem:[#allocation2 + $0x31] sm:$0xff]
      %v2851 = vld [vmem:[#allocation2 + $0x39] sm:$0xff]
      %v2852 = vld [vmem:[#allocation2 + $0x41] sm:$0xff]
      %v2853 = vld [vmem:[#allocation2 + $0x49] sm:$0xff]
      %v2854 = vld [vmem:[#allocation2 + $0x51] sm:$0xff]
      %v2855 = vld [vmem:[#allocation2 + $0x59] sm:$0xff]
      %v2856 = vld [vmem:[#allocation2 + $0x61] sm:$0xff]
      %v2857 = vld [vmem:[#allocation2 + $0x69] sm:$0xff]
      %v2858 = vld [vmem:[#allocation2 + $0x71] sm:$0xff]
      %v2859 = vld [vmem:[#allocation2 + $0x79] sm:$0xff]
      %v2860 = vld [vmem:[#allocation2 + $0x81] sm:$0xff]
      %v2861 = vld [vmem:[#allocation2 + $0x89] sm:$0xff]
      %v2862 = vld [vmem:[#allocation2 + $0x91] sm:$0xff]
      %v2863 = vld [vmem:[#allocation2 + $0x99] sm:$0xff]
      %v2864 = vld [vmem:[#allocation2 + $0xa1] sm:$0xff]
      %v2865 = vld [vmem:[#allocation2 + $0xa9] sm:$0xff]
      %v2866 = vld [vmem:[#allocation2 + $0xb1] sm:$0xff]
      %v2867 = vld [vmem:[#allocation2 + $0xb9] sm:$0xff]
      %v2868 = vld [vmem:[#allocation2 + $0xc1] sm:$0xff]
      %v2869 = vld [vmem:[#allocation2 + $0xc9] sm:$0xff]
      %v2870 = vld [vmem:[#allocation2 + $0xd1] sm:$0xff]
      %v2871 = vld [vmem:[#allocation2 + $0xd9] sm:$0xff]
      %v2872 = vld [vmem:[#allocation2 + $0xe1] sm:$0xff]
      %v2873 = vld [vmem:[#allocation2 + $0xe9] sm:$0xff]
      %v2874 = vld [vmem:[#allocation2 + $0xf1] sm:$0xff]
      %v2875 = vld [vmem:[#allocation2 + $0xf9] sm:$0xff]
      %v2876 = vld [vmem:[#allocation2 + $0x101] sm:$0xff]
      %v2877 = vld [vmem:[#allocation2 + $0x109] sm:$0xff]
      %v2878 = vld [vmem:[#allocation2 + $0x111] sm:$0xff]
      %v2879 = vld [vmem:[#allocation2 + $0x119] sm:$0xff]
      %v2880 = vld [vmem:[#allocation2 + $0x121] sm:$0xff]
      %v2881 = vld [vmem:[#allocation2 + $0x129] sm:$0xff]
      %v2882 = vld [vmem:[#allocation2 + $0x131] sm:$0xff]
      %v2883 = vld [vmem:[#allocation2 + $0x139] sm:$0xff]
      %v2884 = vld [vmem:[#allocation2 + $0x141] sm:$0xff]
      %v2885 = vld [vmem:[#allocation2 + $0x149] sm:$0xff]
      %v2886 = vld [vmem:[#allocation2 + $0x151] sm:$0xff]
      %v2887 = vld [vmem:[#allocation2 + $0x159] sm:$0xff]
      %v2888 = vld [vmem:[#allocation2 + $0x161] sm:$0xff]
      %v2889 = vld [vmem:[#allocation2 + $0x169] sm:$0xff]
      %v2890 = vld [vmem:[#allocation2 + $0x171] sm:$0xff]
      %v2891 = vld [vmem:[#allocation2 + $0x179] sm:$0xff]
      %v2892 = vld [vmem:[#allocation2 + $0x181] sm:$0xff]
      %v2893 = vld [vmem:[#allocation2 + $0x189] sm:$0xff]
      %v2894 = vld [vmem:[#allocation2 + $0x191] sm:$0xff]
      %v2895 = vld [vmem:[#allocation2 + $0x199] sm:$0xff]
      %v2896 = vld [vmem:[#allocation2 + $0x1a1] sm:$0xff]
      %v2897 = vld [vmem:[#allocation2 + $0x1a9] sm:$0xff]
      %v2898 = vld [vmem:[#allocation2 + $0x1b1] sm:$0xff]
      %v2899 = vld [vmem:[#allocation2 + $0x1b9] sm:$0xff]
      %v2900 = vld [vmem:[#allocation2 + $0x1c1] sm:$0xff]
      %v2901 = vpack.c.bf16 %v2848, %v2847
      %v2902 = vpack.c.bf16 %v2850, %v2849
      %v2903 = vpack.c.bf16 %v2852, %v2851
      %v2904 = vpack.c.bf16 %v2854, %v2853
      %v2905 = vpack.c.bf16 %v2856, %v2855
      %v2906 = vpack.c.bf16 %v2858, %v2857
      %v2907 = vpack.c.bf16 %v2860, %v2859
      %v2908 = vpack.c.bf16 %v2862, %v2861
      %v2909 = vpack.c.bf16 %v2864, %v2863
      %v2910 = vpack.c.bf16 %v2866, %v2865
      %v2911 = vpack.c.bf16 %v2868, %v2867
      %v2912 = vpack.c.bf16 %v2870, %v2869
      %v2913 = vpack.c.bf16 %v2872, %v2871
      %v2914 = vpack.c.bf16 %v2874, %v2873
      %v2915 = vpack.c.bf16 %v2876, %v2875
      %v2916 = vpack.c.bf16 %v2878, %v2877
      %v2917 = vpack.c.bf16 %v2880, %v2879
      %v2918 = vpack.c.bf16 %v2882, %v2881
      %v2919 = vpack.c.bf16 %v2884, %v2883
      %v2920 = vpack.c.bf16 %v2886, %v2885
      %v2921 = vpack.c.bf16 %v2888, %v2887
      %v2922 = vpack.c.bf16 %v2890, %v2889
      %v2923 = vpack.c.bf16 %v2892, %v2891
      %v2924 = vpack.c.bf16 %v2894, %v2893
      %v2925 = vpack.c.bf16 %v2896, %v2895
      %v2926 = vpack.c.bf16 %v2898, %v2897
      %v2927 = vpack.c.bf16 %v2900, %v2899
      %s2928 = scalar_lea.vmem %s2, 64
      %v2929 = vld [vmem:[%s2928] sm:$0xf]
      %v2930 = vld [vmem:[%s2928 + $0x4] sm:$0xf]
      %v2931 = vld [vmem:[%s2928 + $0x8] sm:$0xf]
      %v2932 = vld [vmem:[%s2928 + $0xc] sm:$0xf]
      %v2937 = vunpack.c.l.b16 %v2929
      %v2938 = vunpack.c.l.b16 %v2930
      %v2939 = vunpack.c.l.b16 %v2931
      %v2940 = vunpack.c.l.b16 %v2932
      %v2941 = vpack.c.b16 %v2938, %v2937
      %v2942 = vpack.c.b16 %v2940, %v2939
      %v2946 = vsel %vm966, %v2901, 0
      %v2949 = vsel %vm966, %v2902, 0
      %v2952 = vsel %vm966, %v2903, 0
      %v2955 = vsel %vm966, %v2904, 0
      %v2958 = vsel %vm966, %v2905, 0
      %v2961 = vsel %vm966, %v2906, 0
      %v2964 = vsel %vm966, %v2907, 0
      %v2967 = vsel %vm966, %v2908, 0
      %v2970 = vsel %vm966, %v2909, 0
      %v2973 = vsel %vm966, %v2910, 0
      %v2976 = vsel %vm966, %v2911, 0
      %v2979 = vsel %vm966, %v2912, 0
      %v2982 = vsel %vm966, %v2913, 0
      %v2985 = vsel %vm966, %v2914, 0
      %v2988 = vsel %vm966, %v2915, 0
      %v2991 = vsel %vm966, %v2916, 0
      %v2994 = vsel %vm966, %v2917, 0
      %v2997 = vsel %vm966, %v2918, 0
      %v3000 = vsel %vm966, %v2919, 0
      %v3003 = vsel %vm966, %v2920, 0
      %v3006 = vsel %vm966, %v2921, 0
      %v3009 = vsel %vm966, %v2922, 0
      %v3012 = vsel %vm966, %v2923, 0
      %v3015 = vsel %vm966, %v2924, 0
      %v3018 = vsel %vm966, %v2925, 0
      %v3021 = vsel %vm966, %v2926, 0
      %v3024 = vsel %vm966, %v2927, 0
      %3026 = vmatprep.subr.bf16.mxu0 0
      %3027 = vmatpush1.bf16.msra.mxu0 %v2941
      %3028 = vmatprep.subr.bf16.mxu0 0
      %3029 = vmatpush1.bf16.msra.mxu0 %v2942
      %3030 = vmatprep.subr.bf16.mxu0 0
      %3031 = vmatpush1.bf16.msra.mxu0 0
      %3032 = vmatprep.subr.bf16.mxu0 0
      %3033 = vmatpush1.bf16.msra.mxu0 0
      %3034 = vmatprep.subr.bf16.mxu0 0
      %3035 = vmatpush1.bf16.msra.mxu0 0
      %3036 = vmatprep.subr.bf16.mxu0 0
      %3037 = vmatpush1.bf16.msra.mxu0 0
      %3038 = vmatprep.subr.bf16.mxu0 0
      %3039 = vmatpush1.bf16.msra.mxu0 0
      %3040 = vmatprep.subr.bf16.mxu0 0
      %3041 = vmatpush1.bf16.msra.mxu0 0
      %3042 = vmatprep.subr.bf16.mxu0 0
      %3043 = vmatpush1.bf16.msra.mxu0 0
      %3044 = vmatprep.subr.bf16.mxu0 0
      %3045 = vmatpush1.bf16.msra.mxu0 0
      %3046 = vmatprep.subr.bf16.mxu0 0
      %3047 = vmatpush1.bf16.msra.mxu0 0
      %3048 = vmatprep.subr.bf16.mxu0 0
      %3049 = vmatpush1.bf16.msra.mxu0 0
      %3050 = vmatprep.subr.bf16.mxu0 0
      %3051 = vmatpush1.bf16.msra.mxu0 0
      %3052 = vmatprep.subr.bf16.mxu0 0
      %3053 = vmatpush1.bf16.msra.mxu0 0
      %3054 = vmatprep.subr.bf16.mxu0 0
      %3055 = vmatpush1.bf16.msra.mxu0 0
      %3056 = vmatprep.subr.bf16.mxu0 0
      %3057 = vmatpush1.bf16.msra.mxu0 0
      %3058 = vmatprep.mubr.bf16.mxu0 0
      %3059 = vmatmul.mubr.bf16.gmra.mrb[0].mxu0 %v2946
      %v3060 = vpop.f32.mrb[0].mxu0
      %v3061 = vadd.f32 0.0, %v3060
      %v3062 = vpop.f32.mrb[0].mxu0
      %v3063 = vpop.f32.mrb[0].mxu0
      %v3064 = vadd.f32 0.0, %v3063
      %v3065 = vpop.f32.mrb[0].mxu0
      %3066 = vmatprep.mubr.bf16.mxu0 0
      %3067 = vmatmul.mubr.bf16.gmra.mrb[0].mxu0 %v2949
      %v3068 = vpop.f32.mrb[0].mxu0
      %v3069 = vadd.f32 0.0, %v3068
      %v3070 = vpop.f32.mrb[0].mxu0
      %v3071 = vpop.f32.mrb[0].mxu0
      %v3072 = vadd.f32 0.0, %v3071
      %v3073 = vpop.f32.mrb[0].mxu0
      %3074 = vmatprep.mubr.bf16.mxu0 0
      %3075 = vmatmul.mubr.bf16.gmra.mrb[0].mxu0 %v2952
      %v3076 = vpop.f32.mrb[0].mxu0
      %v3077 = vadd.f32 0.0, %v3076
      %v3078 = vpop.f32.mrb[0].mxu0
      %v3079 = vpop.f32.mrb[0].mxu0
      %v3080 = vadd.f32 0.0, %v3079
      %v3081 = vpop.f32.mrb[0].mxu0
      %3082 = vmatprep.mubr.bf16.mxu0 0
      %3083 = vmatmul.mubr.bf16.gmra.mrb[0].mxu0 %v2955
      %v3084 = vpop.f32.mrb[0].mxu0
      %v3085 = vadd.f32 0.0, %v3084
      %v3086 = vpop.f32.mrb[0].mxu0
      %v3087 = vpop.f32.mrb[0].mxu0
      %v3088 = vadd.f32 0.0, %v3087
      %v3089 = vpop.f32.mrb[0].mxu0
      %3090 = vmatprep.mubr.bf16.mxu0 0
      %3091 = vmatmul.mubr.bf16.gmra.mrb[0].mxu0 %v2958
      %v3092 = vpop.f32.mrb[0].mxu0
      %v3093 = vadd.f32 0.0, %v3092
      %v3094 = vpop.f32.mrb[0].mxu0
      %v3095 = vpop.f32.mrb[0].mxu0
      %v3096 = vadd.f32 0.0, %v3095
      %v3097 = vpop.f32.mrb[0].mxu0
      %3098 = vmatprep.mubr.bf16.mxu0 0
      %3099 = vmatmul.mubr.bf16.gmra.mrb[0].mxu0 %v2961
      %v3100 = vpop.f32.mrb[0].mxu0
      %v3101 = vadd.f32 0.0, %v3100
      %v3102 = vpop.f32.mrb[0].mxu0
      %v3103 = vpop.f32.mrb[0].mxu0
      %v3104 = vadd.f32 0.0, %v3103
      %v3105 = vpop.f32.mrb[0].mxu0
      %3106 = vmatprep.mubr.bf16.mxu0 0
      %3107 = vmatmul.mubr.bf16.gmra.mrb[0].mxu0 %v2964
      %v3108 = vpop.f32.mrb[0].mxu0
      %v3109 = vadd.f32 0.0, %v3108
      %v3110 = vpop.f32.mrb[0].mxu0
      %v3111 = vpop.f32.mrb[0].mxu0
      %v3112 = vadd.f32 0.0, %v3111
      %v3113 = vpop.f32.mrb[0].mxu0
      %3114 = vmatprep.mubr.bf16.mxu0 0
      %3115 = vmatmul.mubr.bf16.gmra.mrb[0].mxu0 %v2967
      %v3116 = vpop.f32.mrb[0].mxu0
      %v3117 = vadd.f32 0.0, %v3116
      %v3118 = vpop.f32.mrb[0].mxu0
      %v3119 = vpop.f32.mrb[0].mxu0
      %v3120 = vadd.f32 0.0, %v3119
      %v3121 = vpop.f32.mrb[0].mxu0
      %3122 = vmatprep.mubr.bf16.mxu0 0
      %3123 = vmatmul.mubr.bf16.gmra.mrb[0].mxu0 %v2970
      %v3124 = vpop.f32.mrb[0].mxu0
      %v3125 = vadd.f32 0.0, %v3124
      %v3126 = vpop.f32.mrb[0].mxu0
      %v3127 = vpop.f32.mrb[0].mxu0
      %v3128 = vadd.f32 0.0, %v3127
      %v3129 = vpop.f32.mrb[0].mxu0
      %3130 = vmatprep.mubr.bf16.mxu0 0
      %3131 = vmatmul.mubr.bf16.gmra.mrb[0].mxu0 %v2973
      %v3132 = vpop.f32.mrb[0].mxu0
      %v3133 = vadd.f32 0.0, %v3132
      %v3134 = vpop.f32.mrb[0].mxu0
      %v3135 = vpop.f32.mrb[0].mxu0
      %v3136 = vadd.f32 0.0, %v3135
      %v3137 = vpop.f32.mrb[0].mxu0
      %3138 = vmatprep.mubr.bf16.mxu0 0
      %3139 = vmatmul.mubr.bf16.gmra.mrb[0].mxu0 %v2976
      %v3140 = vpop.f32.mrb[0].mxu0
      %v3141 = vadd.f32 0.0, %v3140
      %v3142 = vpop.f32.mrb[0].mxu0
      %v3143 = vpop.f32.mrb[0].mxu0
      %v3144 = vadd.f32 0.0, %v3143
      %v3145 = vpop.f32.mrb[0].mxu0
      %3146 = vmatprep.mubr.bf16.mxu0 0
      %3147 = vmatmul.mubr.bf16.gmra.mrb[0].mxu0 %v2979
      %v3148 = vpop.f32.mrb[0].mxu0
      %v3149 = vadd.f32 0.0, %v3148
      %v3150 = vpop.f32.mrb[0].mxu0
      %v3151 = vpop.f32.mrb[0].mxu0
      %v3152 = vadd.f32 0.0, %v3151
      %v3153 = vpop.f32.mrb[0].mxu0
      %3154 = vmatprep.mubr.bf16.mxu0 0
      %3155 = vmatmul.mubr.bf16.gmra.mrb[0].mxu0 %v2982
      %v3156 = vpop.f32.mrb[0].mxu0
      %v3157 = vadd.f32 0.0, %v3156
      %v3158 = vpop.f32.mrb[0].mxu0
      %v3159 = vpop.f32.mrb[0].mxu0
      %v3160 = vadd.f32 0.0, %v3159
      %v3161 = vpop.f32.mrb[0].mxu0
      %3162 = vmatprep.mubr.bf16.mxu0 0
      %3163 = vmatmul.mubr.bf16.gmra.mrb[0].mxu0 %v2985
      %v3164 = vpop.f32.mrb[0].mxu0
      %v3165 = vadd.f32 0.0, %v3164
      %v3166 = vpop.f32.mrb[0].mxu0
      %v3167 = vpop.f32.mrb[0].mxu0
      %v3168 = vadd.f32 0.0, %v3167
      %v3169 = vpop.f32.mrb[0].mxu0
      %3170 = vmatprep.mubr.bf16.mxu0 0
      %3171 = vmatmul.mubr.bf16.gmra.mrb[0].mxu0 %v2988
      %v3172 = vpop.f32.mrb[0].mxu0
      %v3173 = vadd.f32 0.0, %v3172
      %v3174 = vpop.f32.mrb[0].mxu0
      %v3175 = vpop.f32.mrb[0].mxu0
      %v3176 = vadd.f32 0.0, %v3175
      %v3177 = vpop.f32.mrb[0].mxu0
      %3178 = vmatprep.mubr.bf16.mxu0 0
      %3179 = vmatmul.mubr.bf16.gmra.mrb[0].mxu0 %v2991
      %v3180 = vpop.f32.mrb[0].mxu0
      %v3181 = vadd.f32 0.0, %v3180
      %v3182 = vpop.f32.mrb[0].mxu0
      %v3183 = vpop.f32.mrb[0].mxu0
      %v3184 = vadd.f32 0.0, %v3183
      %v3185 = vpop.f32.mrb[0].mxu0
      %3186 = vmatprep.mubr.bf16.mxu0 0
      %3187 = vmatmul.mubr.bf16.gmra.mrb[0].mxu0 %v2994
      %v3188 = vpop.f32.mrb[0].mxu0
      %v3189 = vadd.f32 0.0, %v3188
      %v3190 = vpop.f32.mrb[0].mxu0
      %v3191 = vpop.f32.mrb[0].mxu0
      %v3192 = vadd.f32 0.0, %v3191
      %v3193 = vpop.f32.mrb[0].mxu0
      %3194 = vmatprep.mubr.bf16.mxu0 0
      %3195 = vmatmul.mubr.bf16.gmra.mrb[0].mxu0 %v2997
      %v3196 = vpop.f32.mrb[0].mxu0
      %v3197 = vadd.f32 0.0, %v3196
      %v3198 = vpop.f32.mrb[0].mxu0
      %v3199 = vpop.f32.mrb[0].mxu0
      %v3200 = vadd.f32 0.0, %v3199
      %v3201 = vpop.f32.mrb[0].mxu0
      %3202 = vmatprep.mubr.bf16.mxu0 0
      %3203 = vmatmul.mubr.bf16.gmra.mrb[0].mxu0 %v3000
      %v3204 = vpop.f32.mrb[0].mxu0
      %v3205 = vadd.f32 0.0, %v3204
      %v3206 = vpop.f32.mrb[0].mxu0
      %v3207 = vpop.f32.mrb[0].mxu0
      %v3208 = vadd.f32 0.0, %v3207
      %v3209 = vpop.f32.mrb[0].mxu0
      %3210 = vmatprep.mubr.bf16.mxu0 0
      %3211 = vmatmul.mubr.bf16.gmra.mrb[0].mxu0 %v3003
      %v3212 = vpop.f32.mrb[0].mxu0
      %v3213 = vadd.f32 0.0, %v3212
      %v3214 = vpop.f32.mrb[0].mxu0
      %v3215 = vpop.f32.mrb[0].mxu0
      %v3216 = vadd.f32 0.0, %v3215
      %v3217 = vpop.f32.mrb[0].mxu0
      %3218 = vmatprep.mubr.bf16.mxu0 0
      %3219 = vmatmul.mubr.bf16.gmra.mrb[0].mxu0 %v3006
      %v3220 = vpop.f32.mrb[0].mxu0
      %v3221 = vadd.f32 0.0, %v3220
      %v3222 = vpop.f32.mrb[0].mxu0
      %v3223 = vpop.f32.mrb[0].mxu0
      %v3224 = vadd.f32 0.0, %v3223
      %v3225 = vpop.f32.mrb[0].mxu0
      %3226 = vmatprep.mubr.bf16.mxu0 0
      %3227 = vmatmul.mubr.bf16.gmra.mrb[0].mxu0 %v3009
      %v3228 = vpop.f32.mrb[0].mxu0
      %v3229 = vadd.f32 0.0, %v3228
      %v3230 = vpop.f32.mrb[0].mxu0
      %v3231 = vpop.f32.mrb[0].mxu0
      %v3232 = vadd.f32 0.0, %v3231
      %v3233 = vpop.f32.mrb[0].mxu0
      %3234 = vmatprep.mubr.bf16.mxu0 0
      %3235 = vmatmul.mubr.bf16.gmra.mrb[0].mxu0 %v3012
      %v3236 = vpop.f32.mrb[0].mxu0
      %v3237 = vadd.f32 0.0, %v3236
      %v3238 = vpop.f32.mrb[0].mxu0
      %v3239 = vpop.f32.mrb[0].mxu0
      %v3240 = vadd.f32 0.0, %v3239
      %v3241 = vpop.f32.mrb[0].mxu0
      %3242 = vmatprep.mubr.bf16.mxu0 0
      %3243 = vmatmul.mubr.bf16.gmra.mrb[0].mxu0 %v3015
      %v3244 = vpop.f32.mrb[0].mxu0
      %v3245 = vadd.f32 0.0, %v3244
      %v3246 = vpop.f32.mrb[0].mxu0
      %v3247 = vpop.f32.mrb[0].mxu0
      %v3248 = vadd.f32 0.0, %v3247
      %v3249 = vpop.f32.mrb[0].mxu0
      %3250 = vmatprep.mubr.bf16.mxu0 0
      %3251 = vmatmul.mubr.bf16.gmra.mrb[0].mxu0 %v3018
      %v3252 = vpop.f32.mrb[0].mxu0
      %v3253 = vadd.f32 0.0, %v3252
      %v3254 = vpop.f32.mrb[0].mxu0
      %v3255 = vpop.f32.mrb[0].mxu0
      %v3256 = vadd.f32 0.0, %v3255
      %v3257 = vpop.f32.mrb[0].mxu0
      %3258 = vmatprep.mubr.bf16.mxu0 0
      %3259 = vmatmul.mubr.bf16.gmra.mrb[0].mxu0 %v3021
      %v3260 = vpop.f32.mrb[0].mxu0
      %v3261 = vadd.f32 0.0, %v3260
      %v3262 = vpop.f32.mrb[0].mxu0
      %v3263 = vpop.f32.mrb[0].mxu0
      %v3264 = vadd.f32 0.0, %v3263
      %v3265 = vpop.f32.mrb[0].mxu0
      %3266 = vmatprep.mubr.bf16.mxu0 0
      %3267 = vmatmul.mubr.bf16.gmra.mrb[0].mxu0 %v3024
      %v3268 = vpop.f32.mrb[0].mxu0
      %v3269 = vadd.f32 0.0, %v3268
      %v3270 = vpop.f32.mrb[0].mxu0
      %v3271 = vpop.f32.mrb[0].mxu0
      %v3272 = vadd.f32 0.0, %v3271
      %v3273 = vpop.f32.mrb[0].mxu0
      %3274 = vdwg.mxu0
      %v3275 = vadd.f32 %v2793, %v3061
      %v3276 = vadd.f32 %v2794, %v3064
      %v3277 = vadd.f32 %v2795, %v3069
      %v3278 = vadd.f32 %v2796, %v3072
      %v3279 = vadd.f32 %v2797, %v3077
      %v3280 = vadd.f32 %v2798, %v3080
      %v3281 = vadd.f32 %v2799, %v3085
      %v3282 = vadd.f32 %v2800, %v3088
      %v3283 = vadd.f32 %v2801, %v3093
      %v3284 = vadd.f32 %v2802, %v3096
      %v3285 = vadd.f32 %v2803, %v3101
      %v3286 = vadd.f32 %v2804, %v3104
      %v3287 = vadd.f32 %v2805, %v3109
      %v3288 = vadd.f32 %v2806, %v3112
      %v3289 = vadd.f32 %v2807, %v3117
      %v3290 = vadd.f32 %v2808, %v3120
      %v3291 = vadd.f32 %v2809, %v3125
      %v3292 = vadd.f32 %v2810, %v3128
      %v3293 = vadd.f32 %v2811, %v3133
      %v3294 = vadd.f32 %v2812, %v3136
      %v3295 = vadd.f32 %v2813, %v3141
      %v3296 = vadd.f32 %v2814, %v3144
      %v3297 = vadd.f32 %v2815, %v3149
      %v3298 = vadd.f32 %v2816, %v3152
      %v3299 = vadd.f32 %v2817, %v3157
      %v3300 = vadd.f32 %v2818, %v3160
      %v3301 = vadd.f32 %v2819, %v3165
      %v3302 = vadd.f32 %v2820, %v3168
      %v3303 = vadd.f32 %v2821, %v3173
      %v3304 = vadd.f32 %v2822, %v3176
      %v3305 = vadd.f32 %v2823, %v3181
      %v3306 = vadd.f32 %v2824, %v3184
      %v3307 = vadd.f32 %v2825, %v3189
      %v3308 = vadd.f32 %v2826, %v3192
      %v3309 = vadd.f32 %v2827, %v3197
      %v3310 = vadd.f32 %v2828, %v3200
      %v3311 = vadd.f32 %v2829, %v3205
      %v3312 = vadd.f32 %v2830, %v3208
      %v3313 = vadd.f32 %v2831, %v3213
      %v3314 = vadd.f32 %v2832, %v3216
      %v3315 = vadd.f32 %v2833, %v3221
      %v3316 = vadd.f32 %v2834, %v3224
      %v3317 = vadd.f32 %v2835, %v3229
      %v3318 = vadd.f32 %v2836, %v3232
      %v3319 = vadd.f32 %v2837, %v3237
      %v3320 = vadd.f32 %v2838, %v3240
      %v3321 = vadd.f32 %v2839, %v3245
      %v3322 = vadd.f32 %v2840, %v3248
      %v3323 = vadd.f32 %v2841, %v3253
      %v3324 = vadd.f32 %v2842, %v3256
      %v3325 = vadd.f32 %v2843, %v3261
      %v3326 = vadd.f32 %v2844, %v3264
      %v3327 = vadd.f32 %v2845, %v3269
      %v3328 = vadd.f32 %v2846, %v3272
      %v3329 = vld [vmem:[#allocation2 + $0x1a] sm:$0xff]
      %v3330 = vld [vmem:[#allocation2 + $0x22] sm:$0xff]
      %v3331 = vld [vmem:[#allocation2 + $0x2a] sm:$0xff]
      %v3332 = vld [vmem:[#allocation2 + $0x32] sm:$0xff]
      %v3333 = vld [vmem:[#allocation2 + $0x3a] sm:$0xff]
      %v3334 = vld [vmem:[#allocation2 + $0x42] sm:$0xff]
      %v3335 = vld [vmem:[#allocation2 + $0x4a] sm:$0xff]
      %v3336 = vld [vmem:[#allocation2 + $0x52] sm:$0xff]
      %v3337 = vld [vmem:[#allocation2 + $0x5a] sm:$0xff]
      %v3338 = vld [vmem:[#allocation2 + $0x62] sm:$0xff]
      %v3339 = vld [vmem:[#allocation2 + $0x6a] sm:$0xff]
      %v3340 = vld [vmem:[#allocation2 + $0x72] sm:$0xff]
      %v3341 = vld [vmem:[#allocation2 + $0x7a] sm:$0xff]
      %v3342 = vld [vmem:[#allocation2 + $0x82] sm:$0xff]
      %v3343 = vld [vmem:[#allocation2 + $0x8a] sm:$0xff]
      %v3344 = vld [vmem:[#allocation2 + $0x92] sm:$0xff]
      %v3345 = vld [vmem:[#allocation2 + $0x9a] sm:$0xff]
      %v3346 = vld [vmem:[#allocation2 + $0xa2] sm:$0xff]
      %v3347 = vld [vmem:[#allocation2 + $0xaa] sm:$0xff]
      %v3348 = vld [vmem:[#allocation2 + $0xb2] sm:$0xff]
      %v3349 = vld [vmem:[#allocation2 + $0xba] sm:$0xff]
      %v3350 = vld [vmem:[#allocation2 + $0xc2] sm:$0xff]
      %v3351 = vld [vmem:[#allocation2 + $0xca] sm:$0xff]
      %v3352 = vld [vmem:[#allocation2 + $0xd2] sm:$0xff]
      %v3353 = vld [vmem:[#allocation2 + $0xda] sm:$0xff]
      %v3354 = vld [vmem:[#allocation2 + $0xe2] sm:$0xff]
      %v3355 = vld [vmem:[#allocation2 + $0xea] sm:$0xff]
      %v3356 = vld [vmem:[#allocation2 + $0xf2] sm:$0xff]
      %v3357 = vld [vmem:[#allocation2 + $0xfa] sm:$0xff]
      %v3358 = vld [vmem:[#allocation2 + $0x102] sm:$0xff]
      %v3359 = vld [vmem:[#allocation2 + $0x10a] sm:$0xff]
      %v3360 = vld [vmem:[#allocation2 + $0x112] sm:$0xff]
      %v3361 = vld [vmem:[#allocation2 + $0x11a] sm:$0xff]
      %v3362 = vld [vmem:[#allocation2 + $0x122] sm:$0xff]
      %v3363 = vld [vmem:[#allocation2 + $0x12a] sm:$0xff]
      %v3364 = vld [vmem:[#allocation2 + $0x132] sm:$0xff]
      %v3365 = vld [vmem:[#allocation2 + $0x13a] sm:$0xff]
      %v3366 = vld [vmem:[#allocation2 + $0x142] sm:$0xff]
      %v3367 = vld [vmem:[#allocation2 + $0x14a] sm:$0xff]
      %v3368 = vld [vmem:[#allocation2 + $0x152] sm:$0xff]
      %v3369 = vld [vmem:[#allocation2 + $0x15a] sm:$0xff]
      %v3370 = vld [vmem:[#allocation2 + $0x162] sm:$0xff]
      %v3371 = vld [vmem:[#allocation2 + $0x16a] sm:$0xff]
      %v3372 = vld [vmem:[#allocation2 + $0x172] sm:$0xff]
      %v3373 = vld [vmem:[#allocation2 + $0x17a] sm:$0xff]
      %v3374 = vld [vmem:[#allocation2 + $0x182] sm:$0xff]
      %v3375 = vld [vmem:[#allocation2 + $0x18a] sm:$0xff]
      %v3376 = vld [vmem:[#allocation2 + $0x192] sm:$0xff]
      %v3377 = vld [vmem:[#allocation2 + $0x19a] sm:$0xff]
      %v3378 = vld [vmem:[#allocation2 + $0x1a2] sm:$0xff]
      %v3379 = vld [vmem:[#allocation2 + $0x1aa] sm:$0xff]
      %v3380 = vld [vmem:[#allocation2 + $0x1b2] sm:$0xff]
      %v3381 = vld [vmem:[#allocation2 + $0x1ba] sm:$0xff]
      %v3382 = vld [vmem:[#allocation2 + $0x1c2] sm:$0xff]
      %v3383 = vpack.c.bf16 %v3330, %v3329
      %v3384 = vpack.c.bf16 %v3332, %v3331
      %v3385 = vpack.c.bf16 %v3334, %v3333
      %v3386 = vpack.c.bf16 %v3336, %v3335
      %v3387 = vpack.c.bf16 %v3338, %v3337
      %v3388 = vpack.c.bf16 %v3340, %v3339
      %v3389 = vpack.c.bf16 %v3342, %v3341
      %v3390 = vpack.c.bf16 %v3344, %v3343
      %v3391 = vpack.c.bf16 %v3346, %v3345
      %v3392 = vpack.c.bf16 %v3348, %v3347
      %v3393 = vpack.c.bf16 %v3350, %v3349
      %v3394 = vpack.c.bf16 %v3352, %v3351
      %v3395 = vpack.c.bf16 %v3354, %v3353
      %v3396 = vpack.c.bf16 %v3356, %v3355
      %v3397 = vpack.c.bf16 %v3358, %v3357
      %v3398 = vpack.c.bf16 %v3360, %v3359
      %v3399 = vpack.c.bf16 %v3362, %v3361
      %v3400 = vpack.c.bf16 %v3364, %v3363
      %v3401 = vpack.c.bf16 %v3366, %v3365
      %v3402 = vpack.c.bf16 %v3368, %v3367
      %v3403 = vpack.c.bf16 %v3370, %v3369
      %v3404 = vpack.c.bf16 %v3372, %v3371
      %v3405 = vpack.c.bf16 %v3374, %v3373
      %v3406 = vpack.c.bf16 %v3376, %v3375
      %v3407 = vpack.c.bf16 %v3378, %v3377
      %v3408 = vpack.c.bf16 %v3380, %v3379
      %v3409 = vpack.c.bf16 %v3382, %v3381
      %s3410 = scalar_lea.vmem %s2, 80
      %v3411 = vld [vmem:[%s3410] sm:$0xf]
      %v3412 = vld [vmem:[%s3410 + $0x4] sm:$0xf]
      %v3413 = vld [vmem:[%s3410 + $0x8] sm:$0xf]
      %v3414 = vld [vmem:[%s3410 + $0xc] sm:$0xf]
      %v3419 = vunpack.c.l.b16 %v3411
      %v3420 = vunpack.c.l.b16 %v3412
      %v3421 = vunpack.c.l.b16 %v3413
      %v3422 = vunpack.c.l.b16 %v3414
      %v3423 = vpack.c.b16 %v3420, %v3419
      %v3424 = vpack.c.b16 %v3422, %v3421
      %v3428 = vsel %vm966, %v3383, 0
      %v3431 = vsel %vm966, %v3384, 0
      %v3434 = vsel %vm966, %v3385, 0
      %v3437 = vsel %vm966, %v3386, 0
      %v3440 = vsel %vm966, %v3387, 0
      %v3443 = vsel %vm966, %v3388, 0
      %v3446 = vsel %vm966, %v3389, 0
      %v3449 = vsel %vm966, %v3390, 0
      %v3452 = vsel %vm966, %v3391, 0
      %v3455 = vsel %vm966, %v3392, 0
      %v3458 = vsel %vm966, %v3393, 0
      %v3461 = vsel %vm966, %v3394, 0
      %v3464 = vsel %vm966, %v3395, 0
      %v3467 = vsel %vm966, %v3396, 0
      %v3470 = vsel %vm966, %v3397, 0
      %v3473 = vsel %vm966, %v3398, 0
      %v3476 = vsel %vm966, %v3399, 0
      %v3479 = vsel %vm966, %v3400, 0
      %v3482 = vsel %vm966, %v3401, 0
      %v3485 = vsel %vm966, %v3402, 0
      %v3488 = vsel %vm966, %v3403, 0
      %v3491 = vsel %vm966, %v3404, 0
      %v3494 = vsel %vm966, %v3405, 0
      %v3497 = vsel %vm966, %v3406, 0
      %v3500 = vsel %vm966, %v3407, 0
      %v3503 = vsel %vm966, %v3408, 0
      %v3506 = vsel %vm966, %v3409, 0
      %3508 = vmatprep.subr.bf16.mxu0 0
      %3509 = vmatpush1.bf16.msra.mxu0 %v3423
      %3510 = vmatprep.subr.bf16.mxu0 0
      %3511 = vmatpush1.bf16.msra.mxu0 %v3424
      %3512 = vmatprep.subr.bf16.mxu0 0
      %3513 = vmatpush1.bf16.msra.mxu0 0
      %3514 = vmatprep.subr.bf16.mxu0 0
      %3515 = vmatpush1.bf16.msra.mxu0 0
      %3516 = vmatprep.subr.bf16.mxu0 0
      %3517 = vmatpush1.bf16.msra.mxu0 0
      %3518 = vmatprep.subr.bf16.mxu0 0
      %3519 = vmatpush1.bf16.msra.mxu0 0
      %3520 = vmatprep.subr.bf16.mxu0 0
      %3521 = vmatpush1.bf16.msra.mxu0 0
      %3522 = vmatprep.subr.bf16.mxu0 0
      %3523 = vmatpush1.bf16.msra.mxu0 0
      %3524 = vmatprep.subr.bf16.mxu0 0
      %3525 = vmatpush1.bf16.msra.mxu0 0
      %3526 = vmatprep.subr.bf16.mxu0 0
      %3527 = vmatpush1.bf16.msra.mxu0 0
      %3528 = vmatprep.subr.bf16.mxu0 0
      %3529 = vmatpush1.bf16.msra.mxu0 0
      %3530 = vmatprep.subr.bf16.mxu0 0
      %3531 = vmatpush1.bf16.msra.mxu0 0
      %3532 = vmatprep.subr.bf16.mxu0 0
      %3533 = vmatpush1.bf16.msra.mxu0 0
      %3534 = vmatprep.subr.bf16.mxu0 0
      %3535 = vmatpush1.bf16.msra.mxu0 0
      %3536 = vmatprep.subr.bf16.mxu0 0
      %3537 = vmatpush1.bf16.msra.mxu0 0
      %3538 = vmatprep.subr.bf16.mxu0 0
      %3539 = vmatpush1.bf16.msra.mxu0 0
      %3540 = vmatprep.mubr.bf16.mxu0 0
      %3541 = vmatmul.mubr.bf16.gmra.mrb[0].mxu0 %v3428
      %v3542 = vpop.f32.mrb[0].mxu0
      %v3543 = vadd.f32 0.0, %v3542
      %v3544 = vpop.f32.mrb[0].mxu0
      %v3545 = vpop.f32.mrb[0].mxu0
      %v3546 = vadd.f32 0.0, %v3545
      %v3547 = vpop.f32.mrb[0].mxu0
      %3548 = vmatprep.mubr.bf16.mxu0 0
      %3549 = vmatmul.mubr.bf16.gmra.mrb[0].mxu0 %v3431
      %v3550 = vpop.f32.mrb[0].mxu0
      %v3551 = vadd.f32 0.0, %v3550
      %v3552 = vpop.f32.mrb[0].mxu0
      %v3553 = vpop.f32.mrb[0].mxu0
      %v3554 = vadd.f32 0.0, %v3553
      %v3555 = vpop.f32.mrb[0].mxu0
      %3556 = vmatprep.mubr.bf16.mxu0 0
      %3557 = vmatmul.mubr.bf16.gmra.mrb[0].mxu0 %v3434
      %v3558 = vpop.f32.mrb[0].mxu0
      %v3559 = vadd.f32 0.0, %v3558
      %v3560 = vpop.f32.mrb[0].mxu0
      %v3561 = vpop.f32.mrb[0].mxu0
      %v3562 = vadd.f32 0.0, %v3561
      %v3563 = vpop.f32.mrb[0].mxu0
      %3564 = vmatprep.mubr.bf16.mxu0 0
      %3565 = vmatmul.mubr.bf16.gmra.mrb[0].mxu0 %v3437
      %v3566 = vpop.f32.mrb[0].mxu0
      %v3567 = vadd.f32 0.0, %v3566
      %v3568 = vpop.f32.mrb[0].mxu0
      %v3569 = vpop.f32.mrb[0].mxu0
      %v3570 = vadd.f32 0.0, %v3569
      %v3571 = vpop.f32.mrb[0].mxu0
      %3572 = vmatprep.mubr.bf16.mxu0 0
      %3573 = vmatmul.mubr.bf16.gmra.mrb[0].mxu0 %v3440
      %v3574 = vpop.f32.mrb[0].mxu0
      %v3575 = vadd.f32 0.0, %v3574
      %v3576 = vpop.f32.mrb[0].mxu0
      %v3577 = vpop.f32.mrb[0].mxu0
      %v3578 = vadd.f32 0.0, %v3577
      %v3579 = vpop.f32.mrb[0].mxu0
      %3580 = vmatprep.mubr.bf16.mxu0 0
      %3581 = vmatmul.mubr.bf16.gmra.mrb[0].mxu0 %v3443
      %v3582 = vpop.f32.mrb[0].mxu0
      %v3583 = vadd.f32 0.0, %v3582
      %v3584 = vpop.f32.mrb[0].mxu0
      %v3585 = vpop.f32.mrb[0].mxu0
      %v3586 = vadd.f32 0.0, %v3585
      %v3587 = vpop.f32.mrb[0].mxu0
      %3588 = vmatprep.mubr.bf16.mxu0 0
      %3589 = vmatmul.mubr.bf16.gmra.mrb[0].mxu0 %v3446
      %v3590 = vpop.f32.mrb[0].mxu0
      %v3591 = vadd.f32 0.0, %v3590
      %v3592 = vpop.f32.mrb[0].mxu0
      %v3593 = vpop.f32.mrb[0].mxu0
      %v3594 = vadd.f32 0.0, %v3593
      %v3595 = vpop.f32.mrb[0].mxu0
      %3596 = vmatprep.mubr.bf16.mxu0 0
      %3597 = vmatmul.mubr.bf16.gmra.mrb[0].mxu0 %v3449
      %v3598 = vpop.f32.mrb[0].mxu0
      %v3599 = vadd.f32 0.0, %v3598
      %v3600 = vpop.f32.mrb[0].mxu0
      %v3601 = vpop.f32.mrb[0].mxu0
      %v3602 = vadd.f32 0.0, %v3601
      %v3603 = vpop.f32.mrb[0].mxu0
      %3604 = vmatprep.mubr.bf16.mxu0 0
      %3605 = vmatmul.mubr.bf16.gmra.mrb[0].mxu0 %v3452
      %v3606 = vpop.f32.mrb[0].mxu0
      %v3607 = vadd.f32 0.0, %v3606
      %v3608 = vpop.f32.mrb[0].mxu0
      %v3609 = vpop.f32.mrb[0].mxu0
      %v3610 = vadd.f32 0.0, %v3609
      %v3611 = vpop.f32.mrb[0].mxu0
      %3612 = vmatprep.mubr.bf16.mxu0 0
      %3613 = vmatmul.mubr.bf16.gmra.mrb[0].mxu0 %v3455
      %v3614 = vpop.f32.mrb[0].mxu0
      %v3615 = vadd.f32 0.0, %v3614
      %v3616 = vpop.f32.mrb[0].mxu0
      %v3617 = vpop.f32.mrb[0].mxu0
      %v3618 = vadd.f32 0.0, %v3617
      %v3619 = vpop.f32.mrb[0].mxu0
      %3620 = vmatprep.mubr.bf16.mxu0 0
      %3621 = vmatmul.mubr.bf16.gmra.mrb[0].mxu0 %v3458
      %v3622 = vpop.f32.mrb[0].mxu0
      %v3623 = vadd.f32 0.0, %v3622
      %v3624 = vpop.f32.mrb[0].mxu0
      %v3625 = vpop.f32.mrb[0].mxu0
      %v3626 = vadd.f32 0.0, %v3625
      %v3627 = vpop.f32.mrb[0].mxu0
      %3628 = vmatprep.mubr.bf16.mxu0 0
      %3629 = vmatmul.mubr.bf16.gmra.mrb[0].mxu0 %v3461
      %v3630 = vpop.f32.mrb[0].mxu0
      %v3631 = vadd.f32 0.0, %v3630
      %v3632 = vpop.f32.mrb[0].mxu0
      %v3633 = vpop.f32.mrb[0].mxu0
      %v3634 = vadd.f32 0.0, %v3633
      %v3635 = vpop.f32.mrb[0].mxu0
      %3636 = vmatprep.mubr.bf16.mxu0 0
      %3637 = vmatmul.mubr.bf16.gmra.mrb[0].mxu0 %v3464
      %v3638 = vpop.f32.mrb[0].mxu0
      %v3639 = vadd.f32 0.0, %v3638
      %v3640 = vpop.f32.mrb[0].mxu0
      %v3641 = vpop.f32.mrb[0].mxu0
      %v3642 = vadd.f32 0.0, %v3641
      %v3643 = vpop.f32.mrb[0].mxu0
      %3644 = vmatprep.mubr.bf16.mxu0 0
      %3645 = vmatmul.mubr.bf16.gmra.mrb[0].mxu0 %v3467
      %v3646 = vpop.f32.mrb[0].mxu0
      %v3647 = vadd.f32 0.0, %v3646
      %v3648 = vpop.f32.mrb[0].mxu0
      %v3649 = vpop.f32.mrb[0].mxu0
      %v3650 = vadd.f32 0.0, %v3649
      %v3651 = vpop.f32.mrb[0].mxu0
      %3652 = vmatprep.mubr.bf16.mxu0 0
      %3653 = vmatmul.mubr.bf16.gmra.mrb[0].mxu0 %v3470
      %v3654 = vpop.f32.mrb[0].mxu0
      %v3655 = vadd.f32 0.0, %v3654
      %v3656 = vpop.f32.mrb[0].mxu0
      %v3657 = vpop.f32.mrb[0].mxu0
      %v3658 = vadd.f32 0.0, %v3657
      %v3659 = vpop.f32.mrb[0].mxu0
      %3660 = vmatprep.mubr.bf16.mxu0 0
      %3661 = vmatmul.mubr.bf16.gmra.mrb[0].mxu0 %v3473
      %v3662 = vpop.f32.mrb[0].mxu0
      %v3663 = vadd.f32 0.0, %v3662
      %v3664 = vpop.f32.mrb[0].mxu0
      %v3665 = vpop.f32.mrb[0].mxu0
      %v3666 = vadd.f32 0.0, %v3665
      %v3667 = vpop.f32.mrb[0].mxu0
      %3668 = vmatprep.mubr.bf16.mxu0 0
      %3669 = vmatmul.mubr.bf16.gmra.mrb[0].mxu0 %v3476
      %v3670 = vpop.f32.mrb[0].mxu0
      %v3671 = vadd.f32 0.0, %v3670
      %v3672 = vpop.f32.mrb[0].mxu0
      %v3673 = vpop.f32.mrb[0].mxu0
      %v3674 = vadd.f32 0.0, %v3673
      %v3675 = vpop.f32.mrb[0].mxu0
      %3676 = vmatprep.mubr.bf16.mxu0 0
      %3677 = vmatmul.mubr.bf16.gmra.mrb[0].mxu0 %v3479
      %v3678 = vpop.f32.mrb[0].mxu0
      %v3679 = vadd.f32 0.0, %v3678
      %v3680 = vpop.f32.mrb[0].mxu0
      %v3681 = vpop.f32.mrb[0].mxu0
      %v3682 = vadd.f32 0.0, %v3681
      %v3683 = vpop.f32.mrb[0].mxu0
      %3684 = vmatprep.mubr.bf16.mxu0 0
      %3685 = vmatmul.mubr.bf16.gmra.mrb[0].mxu0 %v3482
      %v3686 = vpop.f32.mrb[0].mxu0
      %v3687 = vadd.f32 0.0, %v3686
      %v3688 = vpop.f32.mrb[0].mxu0
      %v3689 = vpop.f32.mrb[0].mxu0
      %v3690 = vadd.f32 0.0, %v3689
      %v3691 = vpop.f32.mrb[0].mxu0
      %3692 = vmatprep.mubr.bf16.mxu0 0
      %3693 = vmatmul.mubr.bf16.gmra.mrb[0].mxu0 %v3485
      %v3694 = vpop.f32.mrb[0].mxu0
      %v3695 = vadd.f32 0.0, %v3694
      %v3696 = vpop.f32.mrb[0].mxu0
      %v3697 = vpop.f32.mrb[0].mxu0
      %v3698 = vadd.f32 0.0, %v3697
      %v3699 = vpop.f32.mrb[0].mxu0
      %3700 = vmatprep.mubr.bf16.mxu0 0
      %3701 = vmatmul.mubr.bf16.gmra.mrb[0].mxu0 %v3488
      %v3702 = vpop.f32.mrb[0].mxu0
      %v3703 = vadd.f32 0.0, %v3702
      %v3704 = vpop.f32.mrb[0].mxu0
      %v3705 = vpop.f32.mrb[0].mxu0
      %v3706 = vadd.f32 0.0, %v3705
      %v3707 = vpop.f32.mrb[0].mxu0
      %3708 = vmatprep.mubr.bf16.mxu0 0
      %3709 = vmatmul.mubr.bf16.gmra.mrb[0].mxu0 %v3491
      %v3710 = vpop.f32.mrb[0].mxu0
      %v3711 = vadd.f32 0.0, %v3710
      %v3712 = vpop.f32.mrb[0].mxu0
      %v3713 = vpop.f32.mrb[0].mxu0
      %v3714 = vadd.f32 0.0, %v3713
      %v3715 = vpop.f32.mrb[0].mxu0
      %3716 = vmatprep.mubr.bf16.mxu0 0
      %3717 = vmatmul.mubr.bf16.gmra.mrb[0].mxu0 %v3494
      %v3718 = vpop.f32.mrb[0].mxu0
      %v3719 = vadd.f32 0.0, %v3718
      %v3720 = vpop.f32.mrb[0].mxu0
      %v3721 = vpop.f32.mrb[0].mxu0
      %v3722 = vadd.f32 0.0, %v3721
      %v3723 = vpop.f32.mrb[0].mxu0
      %3724 = vmatprep.mubr.bf16.mxu0 0
      %3725 = vmatmul.mubr.bf16.gmra.mrb[0].mxu0 %v3497
      %v3726 = vpop.f32.mrb[0].mxu0
      %v3727 = vadd.f32 0.0, %v3726
      %v3728 = vpop.f32.mrb[0].mxu0
      %v3729 = vpop.f32.mrb[0].mxu0
      %v3730 = vadd.f32 0.0, %v3729
      %v3731 = vpop.f32.mrb[0].mxu0
      %3732 = vmatprep.mubr.bf16.mxu0 0
      %3733 = vmatmul.mubr.bf16.gmra.mrb[0].mxu0 %v3500
      %v3734 = vpop.f32.mrb[0].mxu0
      %v3735 = vadd.f32 0.0, %v3734
      %v3736 = vpop.f32.mrb[0].mxu0
      %v3737 = vpop.f32.mrb[0].mxu0
      %v3738 = vadd.f32 0.0, %v3737
      %v3739 = vpop.f32.mrb[0].mxu0
      %3740 = vmatprep.mubr.bf16.mxu0 0
      %3741 = vmatmul.mubr.bf16.gmra.mrb[0].mxu0 %v3503
      %v3742 = vpop.f32.mrb[0].mxu0
      %v3743 = vadd.f32 0.0, %v3742
      %v3744 = vpop.f32.mrb[0].mxu0
      %v3745 = vpop.f32.mrb[0].mxu0
      %v3746 = vadd.f32 0.0, %v3745
      %v3747 = vpop.f32.mrb[0].mxu0
      %3748 = vmatprep.mubr.bf16.mxu0 0
      %3749 = vmatmul.mubr.bf16.gmra.mrb[0].mxu0 %v3506
      %v3750 = vpop.f32.mrb[0].mxu0
      %v3751 = vadd.f32 0.0, %v3750
      %v3752 = vpop.f32.mrb[0].mxu0
      %v3753 = vpop.f32.mrb[0].mxu0
      %v3754 = vadd.f32 0.0, %v3753
      %v3755 = vpop.f32.mrb[0].mxu0
      %3756 = vdwg.mxu0
      %v3757 = vadd.f32 %v3275, %v3543
      %v3758 = vadd.f32 %v3276, %v3546
      %v3759 = vadd.f32 %v3277, %v3551
      %v3760 = vadd.f32 %v3278, %v3554
      %v3761 = vadd.f32 %v3279, %v3559
      %v3762 = vadd.f32 %v3280, %v3562
      %v3763 = vadd.f32 %v3281, %v3567
      %v3764 = vadd.f32 %v3282, %v3570
      %v3765 = vadd.f32 %v3283, %v3575
      %v3766 = vadd.f32 %v3284, %v3578
      %v3767 = vadd.f32 %v3285, %v3583
      %v3768 = vadd.f32 %v3286, %v3586
      %v3769 = vadd.f32 %v3287, %v3591
      %v3770 = vadd.f32 %v3288, %v3594
      %v3771 = vadd.f32 %v3289, %v3599
      %v3772 = vadd.f32 %v3290, %v3602
      %v3773 = vadd.f32 %v3291, %v3607
      %v3774 = vadd.f32 %v3292, %v3610
      %v3775 = vadd.f32 %v3293, %v3615
      %v3776 = vadd.f32 %v3294, %v3618
      %v3777 = vadd.f32 %v3295, %v3623
      %v3778 = vadd.f32 %v3296, %v3626
      %v3779 = vadd.f32 %v3297, %v3631
      %v3780 = vadd.f32 %v3298, %v3634
      %v3781 = vadd.f32 %v3299, %v3639
      %v3782 = vadd.f32 %v3300, %v3642
      %v3783 = vadd.f32 %v3301, %v3647
      %v3784 = vadd.f32 %v3302, %v3650
      %v3785 = vadd.f32 %v3303, %v3655
      %v3786 = vadd.f32 %v3304, %v3658
      %v3787 = vadd.f32 %v3305, %v3663
      %v3788 = vadd.f32 %v3306, %v3666
      %v3789 = vadd.f32 %v3307, %v3671
      %v3790 = vadd.f32 %v3308, %v3674
      %v3791 = vadd.f32 %v3309, %v3679
      %v3792 = vadd.f32 %v3310, %v3682
      %v3793 = vadd.f32 %v3311, %v3687
      %v3794 = vadd.f32 %v3312, %v3690
      %v3795 = vadd.f32 %v3313, %v3695
      %v3796 = vadd.f32 %v3314, %v3698
      %v3797 = vadd.f32 %v3315, %v3703
      %v3798 = vadd.f32 %v3316, %v3706
      %v3799 = vadd.f32 %v3317, %v3711
      %v3800 = vadd.f32 %v3318, %v3714
      %v3801 = vadd.f32 %v3319, %v3719
      %v3802 = vadd.f32 %v3320, %v3722
      %v3803 = vadd.f32 %v3321, %v3727
      %v3804 = vadd.f32 %v3322, %v3730
      %v3805 = vadd.f32 %v3323, %v3735
      %v3806 = vadd.f32 %v3324, %v3738
      %v3807 = vadd.f32 %v3325, %v3743
      %v3808 = vadd.f32 %v3326, %v3746
      %v3809 = vadd.f32 %v3327, %v3751
      %v3810 = vadd.f32 %v3328, %v3754
      %v3811 = vld [vmem:[#allocation2 + $0x30] sm:$0xff]
      %v3812 = vld [vmem:[#allocation2 + $0x38] sm:$0xff]
      %v3813 = vld [vmem:[#allocation2 + $0x40] sm:$0xff]
      %v3814 = vld [vmem:[#allocation2 + $0x48] sm:$0xff]
      %v3815 = vld [vmem:[#allocation2 + $0x50] sm:$0xff]
      %v3816 = vld [vmem:[#allocation2 + $0x58] sm:$0xff]
      %v3817 = vld [vmem:[#allocation2 + $0x60] sm:$0xff]
      %v3818 = vld [vmem:[#allocation2 + $0x68] sm:$0xff]
      %v3819 = vld [vmem:[#allocation2 + $0x70] sm:$0xff]
      %v3820 = vld [vmem:[#allocation2 + $0x78] sm:$0xff]
      %v3821 = vld [vmem:[#allocation2 + $0x80] sm:$0xff]
      %v3822 = vld [vmem:[#allocation2 + $0x88] sm:$0xff]
      %v3823 = vld [vmem:[#allocation2 + $0x90] sm:$0xff]
      %v3824 = vld [vmem:[#allocation2 + $0x98] sm:$0xff]
      %v3825 = vld [vmem:[#allocation2 + $0xa0] sm:$0xff]
      %v3826 = vld [vmem:[#allocation2 + $0xa8] sm:$0xff]
      %v3827 = vld [vmem:[#allocation2 + $0xb0] sm:$0xff]
      %v3828 = vld [vmem:[#allocation2 + $0xb8] sm:$0xff]
      %v3829 = vld [vmem:[#allocation2 + $0xc0] sm:$0xff]
      %v3830 = vld [vmem:[#allocation2 + $0xc8] sm:$0xff]
      %v3831 = vld [vmem:[#allocation2 + $0xd0] sm:$0xff]
      %v3832 = vld [vmem:[#allocation2 + $0xd8] sm:$0xff]
      %v3833 = vld [vmem:[#allocation2 + $0xe0] sm:$0xff]
      %v3834 = vld [vmem:[#allocation2 + $0xe8] sm:$0xff]
      %v3835 = vld [vmem:[#allocation2 + $0xf0] sm:$0xff]
      %v3836 = vld [vmem:[#allocation2 + $0xf8] sm:$0xff]
      %v3837 = vld [vmem:[#allocation2 + $0x100] sm:$0xff]
      %v3838 = vld [vmem:[#allocation2 + $0x108] sm:$0xff]
      %v3839 = vld [vmem:[#allocation2 + $0x110] sm:$0xff]
      %v3840 = vld [vmem:[#allocation2 + $0x118] sm:$0xff]
      %v3841 = vld [vmem:[#allocation2 + $0x120] sm:$0xff]
      %v3842 = vld [vmem:[#allocation2 + $0x128] sm:$0xff]
      %v3843 = vld [vmem:[#allocation2 + $0x130] sm:$0xff]
      %v3844 = vld [vmem:[#allocation2 + $0x138] sm:$0xff]
      %v3845 = vld [vmem:[#allocation2 + $0x140] sm:$0xff]
      %v3846 = vld [vmem:[#allocation2 + $0x148] sm:$0xff]
      %v3847 = vld [vmem:[#allocation2 + $0x150] sm:$0xff]
      %v3848 = vld [vmem:[#allocation2 + $0x158] sm:$0xff]
      %v3849 = vld [vmem:[#allocation2 + $0x160] sm:$0xff]
      %v3850 = vld [vmem:[#allocation2 + $0x168] sm:$0xff]
      %v3851 = vld [vmem:[#allocation2 + $0x170] sm:$0xff]
      %v3852 = vld [vmem:[#allocation2 + $0x178] sm:$0xff]
      %v3853 = vld [vmem:[#allocation2 + $0x180] sm:$0xff]
      %v3854 = vld [vmem:[#allocation2 + $0x188] sm:$0xff]
      %v3855 = vld [vmem:[#allocation2 + $0x190] sm:$0xff]
      %v3856 = vld [vmem:[#allocation2 + $0x198] sm:$0xff]
      %v3857 = vld [vmem:[#allocation2 + $0x1a0] sm:$0xff]
      %v3858 = vld [vmem:[#allocation2 + $0x1a8] sm:$0xff]
      %v3859 = vld [vmem:[#allocation2 + $0x1b0] sm:$0xff]
      %v3860 = vld [vmem:[#allocation2 + $0x1b8] sm:$0xff]
      %v3861 = vld [vmem:[#allocation2 + $0x1c0] sm:$0xff]
      %v3862 = vld [vmem:[#allocation2 + $0x1c8] sm:$0xff]
      %v3863 = vld [vmem:[#allocation2 + $0x1d0] sm:$0xff]
      %v3864 = vld [vmem:[#allocation2 + $0x1d8] sm:$0xff]
      %v3865 = vpack.c.bf16 %v3812, %v3811
      %v3866 = vpack.c.bf16 %v3814, %v3813
      %v3867 = vpack.c.bf16 %v3816, %v3815
      %v3868 = vpack.c.bf16 %v3818, %v3817
      %v3869 = vpack.c.bf16 %v3820, %v3819
      %v3870 = vpack.c.bf16 %v3822, %v3821
      %v3871 = vpack.c.bf16 %v3824, %v3823
      %v3872 = vpack.c.bf16 %v3826, %v3825
      %v3873 = vpack.c.bf16 %v3828, %v3827
      %v3874 = vpack.c.bf16 %v3830, %v3829
      %v3875 = vpack.c.bf16 %v3832, %v3831
      %v3876 = vpack.c.bf16 %v3834, %v3833
      %v3877 = vpack.c.bf16 %v3836, %v3835
      %v3878 = vpack.c.bf16 %v3838, %v3837
      %v3879 = vpack.c.bf16 %v3840, %v3839
      %v3880 = vpack.c.bf16 %v3842, %v3841
      %v3881 = vpack.c.bf16 %v3844, %v3843
      %v3882 = vpack.c.bf16 %v3846, %v3845
      %v3883 = vpack.c.bf16 %v3848, %v3847
      %v3884 = vpack.c.bf16 %v3850, %v3849
      %v3885 = vpack.c.bf16 %v3852, %v3851
      %v3886 = vpack.c.bf16 %v3854, %v3853
      %v3887 = vpack.c.bf16 %v3856, %v3855
      %v3888 = vpack.c.bf16 %v3858, %v3857
      %v3889 = vpack.c.bf16 %v3860, %v3859
      %v3890 = vpack.c.bf16 %v3862, %v3861
      %v3891 = vpack.c.bf16 %v3864, %v3863
      %s3892 = scalar_lea.vmem %s2, 96
      %v3893 = vld [vmem:[%s3892] sm:$0xf]
      %v3894 = vld [vmem:[%s3892 + $0x4] sm:$0xf]
      %v3895 = vld [vmem:[%s3892 + $0x8] sm:$0xf]
      %v3896 = vld [vmem:[%s3892 + $0xc] sm:$0xf]
      %v3901 = vunpack.c.l.b16 %v3893
      %v3902 = vunpack.c.l.b16 %v3894
      %v3903 = vunpack.c.l.b16 %v3895
      %v3904 = vunpack.c.l.b16 %v3896
      %v3905 = vpack.c.b16 %v3902, %v3901
      %v3906 = vpack.c.b16 %v3904, %v3903
      %v3910 = vsel %vm966, %v3865, 0
      %v3913 = vsel %vm966, %v3866, 0
      %v3916 = vsel %vm966, %v3867, 0
      %v3919 = vsel %vm966, %v3868, 0
      %v3922 = vsel %vm966, %v3869, 0
      %v3925 = vsel %vm966, %v3870, 0
      %v3928 = vsel %vm966, %v3871, 0
      %v3931 = vsel %vm966, %v3872, 0
      %v3934 = vsel %vm966, %v3873, 0
      %v3937 = vsel %vm966, %v3874, 0
      %v3940 = vsel %vm966, %v3875, 0
      %v3943 = vsel %vm966, %v3876, 0
      %v3946 = vsel %vm966, %v3877, 0
      %v3949 = vsel %vm966, %v3878, 0
      %v3952 = vsel %vm966, %v3879, 0
      %v3955 = vsel %vm966, %v3880, 0
      %v3958 = vsel %vm966, %v3881, 0
      %v3961 = vsel %vm966, %v3882, 0
      %v3964 = vsel %vm966, %v3883, 0
      %v3967 = vsel %vm966, %v3884, 0
      %v3970 = vsel %vm966, %v3885, 0
      %v3973 = vsel %vm966, %v3886, 0
      %v3976 = vsel %vm966, %v3887, 0
      %v3979 = vsel %vm966, %v3888, 0
      %v3982 = vsel %vm966, %v3889, 0
      %v3985 = vsel %vm966, %v3890, 0
      %v3988 = vsel %vm966, %v3891, 0
      %3990 = vmatprep.subr.bf16.mxu0 0
      %3991 = vmatpush1.bf16.msra.mxu0 %v3905
      %3992 = vmatprep.subr.bf16.mxu0 0
      %3993 = vmatpush1.bf16.msra.mxu0 %v3906
      %3994 = vmatprep.subr.bf16.mxu0 0
      %3995 = vmatpush1.bf16.msra.mxu0 0
      %3996 = vmatprep.subr.bf16.mxu0 0
      %3997 = vmatpush1.bf16.msra.mxu0 0
      %3998 = vmatprep.subr.bf16.mxu0 0
      %3999 = vmatpush1.bf16.msra.mxu0 0
      %4000 = vmatprep.subr.bf16.mxu0 0
      %4001 = vmatpush1.bf16.msra.mxu0 0
      %4002 = vmatprep.subr.bf16.mxu0 0
      %4003 = vmatpush1.bf16.msra.mxu0 0
      %4004 = vmatprep.subr.bf16.mxu0 0
      %4005 = vmatpush1.bf16.msra.mxu0 0
      %4006 = vmatprep.subr.bf16.mxu0 0
      %4007 = vmatpush1.bf16.msra.mxu0 0
      %4008 = vmatprep.subr.bf16.mxu0 0
      %4009 = vmatpush1.bf16.msra.mxu0 0
      %4010 = vmatprep.subr.bf16.mxu0 0
      %4011 = vmatpush1.bf16.msra.mxu0 0
      %4012 = vmatprep.subr.bf16.mxu0 0
      %4013 = vmatpush1.bf16.msra.mxu0 0
      %4014 = vmatprep.subr.bf16.mxu0 0
      %4015 = vmatpush1.bf16.msra.mxu0 0
      %4016 = vmatprep.subr.bf16.mxu0 0
      %4017 = vmatpush1.bf16.msra.mxu0 0
      %4018 = vmatprep.subr.bf16.mxu0 0
      %4019 = vmatpush1.bf16.msra.mxu0 0
      %4020 = vmatprep.subr.bf16.mxu0 0
      %4021 = vmatpush1.bf16.msra.mxu0 0
      %4022 = vmatprep.mubr.bf16.mxu0 0
      %4023 = vmatmul.mubr.bf16.gmra.mrb[0].mxu0 %v3910
      %v4024 = vpop.f32.mrb[0].mxu0
      %v4025 = vadd.f32 0.0, %v4024
      %v4026 = vpop.f32.mrb[0].mxu0
      %v4027 = vpop.f32.mrb[0].mxu0
      %v4028 = vadd.f32 0.0, %v4027
      %v4029 = vpop.f32.mrb[0].mxu0
      %4030 = vmatprep.mubr.bf16.mxu0 0
      %4031 = vmatmul.mubr.bf16.gmra.mrb[0].mxu0 %v3913
      %v4032 = vpop.f32.mrb[0].mxu0
      %v4033 = vadd.f32 0.0, %v4032
      %v4034 = vpop.f32.mrb[0].mxu0
      %v4035 = vpop.f32.mrb[0].mxu0
      %v4036 = vadd.f32 0.0, %v4035
      %v4037 = vpop.f32.mrb[0].mxu0
      %4038 = vmatprep.mubr.bf16.mxu0 0
      %4039 = vmatmul.mubr.bf16.gmra.mrb[0].mxu0 %v3916
      %v4040 = vpop.f32.mrb[0].mxu0
      %v4041 = vadd.f32 0.0, %v4040
      %v4042 = vpop.f32.mrb[0].mxu0
      %v4043 = vpop.f32.mrb[0].mxu0
      %v4044 = vadd.f32 0.0, %v4043
      %v4045 = vpop.f32.mrb[0].mxu0
      %4046 = vmatprep.mubr.bf16.mxu0 0
      %4047 = vmatmul.mubr.bf16.gmra.mrb[0].mxu0 %v3919
      %v4048 = vpop.f32.mrb[0].mxu0
      %v4049 = vadd.f32 0.0, %v4048
      %v4050 = vpop.f32.mrb[0].mxu0
      %v4051 = vpop.f32.mrb[0].mxu0
      %v4052 = vadd.f32 0.0, %v4051
      %v4053 = vpop.f32.mrb[0].mxu0
      %4054 = vmatprep.mubr.bf16.mxu0 0
      %4055 = vmatmul.mubr.bf16.gmra.mrb[0].mxu0 %v3922
      %v4056 = vpop.f32.mrb[0].mxu0
      %v4057 = vadd.f32 0.0, %v4056
      %v4058 = vpop.f32.mrb[0].mxu0
      %v4059 = vpop.f32.mrb[0].mxu0
      %v4060 = vadd.f32 0.0, %v4059
      %v4061 = vpop.f32.mrb[0].mxu0
      %4062 = vmatprep.mubr.bf16.mxu0 0
      %4063 = vmatmul.mubr.bf16.gmra.mrb[0].mxu0 %v3925
      %v4064 = vpop.f32.mrb[0].mxu0
      %v4065 = vadd.f32 0.0, %v4064
      %v4066 = vpop.f32.mrb[0].mxu0
      %v4067 = vpop.f32.mrb[0].mxu0
      %v4068 = vadd.f32 0.0, %v4067
      %v4069 = vpop.f32.mrb[0].mxu0
      %4070 = vmatprep.mubr.bf16.mxu0 0
      %4071 = vmatmul.mubr.bf16.gmra.mrb[0].mxu0 %v3928
      %v4072 = vpop.f32.mrb[0].mxu0
      %v4073 = vadd.f32 0.0, %v4072
      %v4074 = vpop.f32.mrb[0].mxu0
      %v4075 = vpop.f32.mrb[0].mxu0
      %v4076 = vadd.f32 0.0, %v4075
      %v4077 = vpop.f32.mrb[0].mxu0
      %4078 = vmatprep.mubr.bf16.mxu0 0
      %4079 = vmatmul.mubr.bf16.gmra.mrb[0].mxu0 %v3931
      %v4080 = vpop.f32.mrb[0].mxu0
      %v4081 = vadd.f32 0.0, %v4080
      %v4082 = vpop.f32.mrb[0].mxu0
      %v4083 = vpop.f32.mrb[0].mxu0
      %v4084 = vadd.f32 0.0, %v4083
      %v4085 = vpop.f32.mrb[0].mxu0
      %4086 = vmatprep.mubr.bf16.mxu0 0
      %4087 = vmatmul.mubr.bf16.gmra.mrb[0].mxu0 %v3934
      %v4088 = vpop.f32.mrb[0].mxu0
      %v4089 = vadd.f32 0.0, %v4088
      %v4090 = vpop.f32.mrb[0].mxu0
      %v4091 = vpop.f32.mrb[0].mxu0
      %v4092 = vadd.f32 0.0, %v4091
      %v4093 = vpop.f32.mrb[0].mxu0
      %4094 = vmatprep.mubr.bf16.mxu0 0
      %4095 = vmatmul.mubr.bf16.gmra.mrb[0].mxu0 %v3937
      %v4096 = vpop.f32.mrb[0].mxu0
      %v4097 = vadd.f32 0.0, %v4096
      %v4098 = vpop.f32.mrb[0].mxu0
      %v4099 = vpop.f32.mrb[0].mxu0
      %v4100 = vadd.f32 0.0, %v4099
      %v4101 = vpop.f32.mrb[0].mxu0
      %4102 = vmatprep.mubr.bf16.mxu0 0
      %4103 = vmatmul.mubr.bf16.gmra.mrb[0].mxu0 %v3940
      %v4104 = vpop.f32.mrb[0].mxu0
      %v4105 = vadd.f32 0.0, %v4104
      %v4106 = vpop.f32.mrb[0].mxu0
      %v4107 = vpop.f32.mrb[0].mxu0
      %v4108 = vadd.f32 0.0, %v4107
      %v4109 = vpop.f32.mrb[0].mxu0
      %4110 = vmatprep.mubr.bf16.mxu0 0
      %4111 = vmatmul.mubr.bf16.gmra.mrb[0].mxu0 %v3943
      %v4112 = vpop.f32.mrb[0].mxu0
      %v4113 = vadd.f32 0.0, %v4112
      %v4114 = vpop.f32.mrb[0].mxu0
      %v4115 = vpop.f32.mrb[0].mxu0
      %v4116 = vadd.f32 0.0, %v4115
      %v4117 = vpop.f32.mrb[0].mxu0
      %4118 = vmatprep.mubr.bf16.mxu0 0
      %4119 = vmatmul.mubr.bf16.gmra.mrb[0].mxu0 %v3946
      %v4120 = vpop.f32.mrb[0].mxu0
      %v4121 = vadd.f32 0.0, %v4120
      %v4122 = vpop.f32.mrb[0].mxu0
      %v4123 = vpop.f32.mrb[0].mxu0
      %v4124 = vadd.f32 0.0, %v4123
      %v4125 = vpop.f32.mrb[0].mxu0
      %4126 = vmatprep.mubr.bf16.mxu0 0
      %4127 = vmatmul.mubr.bf16.gmra.mrb[0].mxu0 %v3949
      %v4128 = vpop.f32.mrb[0].mxu0
      %v4129 = vadd.f32 0.0, %v4128
      %v4130 = vpop.f32.mrb[0].mxu0
      %v4131 = vpop.f32.mrb[0].mxu0
      %v4132 = vadd.f32 0.0, %v4131
      %v4133 = vpop.f32.mrb[0].mxu0
      %4134 = vmatprep.mubr.bf16.mxu0 0
      %4135 = vmatmul.mubr.bf16.gmra.mrb[0].mxu0 %v3952
      %v4136 = vpop.f32.mrb[0].mxu0
      %v4137 = vadd.f32 0.0, %v4136
      %v4138 = vpop.f32.mrb[0].mxu0
      %v4139 = vpop.f32.mrb[0].mxu0
      %v4140 = vadd.f32 0.0, %v4139
      %v4141 = vpop.f32.mrb[0].mxu0
      %4142 = vmatprep.mubr.bf16.mxu0 0
      %4143 = vmatmul.mubr.bf16.gmra.mrb[0].mxu0 %v3955
      %v4144 = vpop.f32.mrb[0].mxu0
      %v4145 = vadd.f32 0.0, %v4144
      %v4146 = vpop.f32.mrb[0].mxu0
      %v4147 = vpop.f32.mrb[0].mxu0
      %v4148 = vadd.f32 0.0, %v4147
      %v4149 = vpop.f32.mrb[0].mxu0
      %4150 = vmatprep.mubr.bf16.mxu0 0
      %4151 = vmatmul.mubr.bf16.gmra.mrb[0].mxu0 %v3958
      %v4152 = vpop.f32.mrb[0].mxu0
      %v4153 = vadd.f32 0.0, %v4152
      %v4154 = vpop.f32.mrb[0].mxu0
      %v4155 = vpop.f32.mrb[0].mxu0
      %v4156 = vadd.f32 0.0, %v4155
      %v4157 = vpop.f32.mrb[0].mxu0
      %4158 = vmatprep.mubr.bf16.mxu0 0
      %4159 = vmatmul.mubr.bf16.gmra.mrb[0].mxu0 %v3961
      %v4160 = vpop.f32.mrb[0].mxu0
      %v4161 = vadd.f32 0.0, %v4160
      %v4162 = vpop.f32.mrb[0].mxu0
      %v4163 = vpop.f32.mrb[0].mxu0
      %v4164 = vadd.f32 0.0, %v4163
      %v4165 = vpop.f32.mrb[0].mxu0
      %4166 = vmatprep.mubr.bf16.mxu0 0
      %4167 = vmatmul.mubr.bf16.gmra.mrb[0].mxu0 %v3964
      %v4168 = vpop.f32.mrb[0].mxu0
      %v4169 = vadd.f32 0.0, %v4168
      %v4170 = vpop.f32.mrb[0].mxu0
      %v4171 = vpop.f32.mrb[0].mxu0
      %v4172 = vadd.f32 0.0, %v4171
      %v4173 = vpop.f32.mrb[0].mxu0
      %4174 = vmatprep.mubr.bf16.mxu0 0
      %4175 = vmatmul.mubr.bf16.gmra.mrb[0].mxu0 %v3967
      %v4176 = vpop.f32.mrb[0].mxu0
      %v4177 = vadd.f32 0.0, %v4176
      %v4178 = vpop.f32.mrb[0].mxu0
      %v4179 = vpop.f32.mrb[0].mxu0
      %v4180 = vadd.f32 0.0, %v4179
      %v4181 = vpop.f32.mrb[0].mxu0
      %4182 = vmatprep.mubr.bf16.mxu0 0
      %4183 = vmatmul.mubr.bf16.gmra.mrb[0].mxu0 %v3970
      %v4184 = vpop.f32.mrb[0].mxu0
      %v4185 = vadd.f32 0.0, %v4184
      %v4186 = vpop.f32.mrb[0].mxu0
      %v4187 = vpop.f32.mrb[0].mxu0
      %v4188 = vadd.f32 0.0, %v4187
      %v4189 = vpop.f32.mrb[0].mxu0
      %4190 = vmatprep.mubr.bf16.mxu0 0
      %4191 = vmatmul.mubr.bf16.gmra.mrb[0].mxu0 %v3973
      %v4192 = vpop.f32.mrb[0].mxu0
      %v4193 = vadd.f32 0.0, %v4192
      %v4194 = vpop.f32.mrb[0].mxu0
      %v4195 = vpop.f32.mrb[0].mxu0
      %v4196 = vadd.f32 0.0, %v4195
      %v4197 = vpop.f32.mrb[0].mxu0
      %4198 = vmatprep.mubr.bf16.mxu0 0
      %4199 = vmatmul.mubr.bf16.gmra.mrb[0].mxu0 %v3976
      %v4200 = vpop.f32.mrb[0].mxu0
      %v4201 = vadd.f32 0.0, %v4200
      %v4202 = vpop.f32.mrb[0].mxu0
      %v4203 = vpop.f32.mrb[0].mxu0
      %v4204 = vadd.f32 0.0, %v4203
      %v4205 = vpop.f32.mrb[0].mxu0
      %4206 = vmatprep.mubr.bf16.mxu0 0
      %4207 = vmatmul.mubr.bf16.gmra.mrb[0].mxu0 %v3979
      %v4208 = vpop.f32.mrb[0].mxu0
      %v4209 = vadd.f32 0.0, %v4208
      %v4210 = vpop.f32.mrb[0].mxu0
      %v4211 = vpop.f32.mrb[0].mxu0
      %v4212 = vadd.f32 0.0, %v4211
      %v4213 = vpop.f32.mrb[0].mxu0
      %4214 = vmatprep.mubr.bf16.mxu0 0
      %4215 = vmatmul.mubr.bf16.gmra.mrb[0].mxu0 %v3982
      %v4216 = vpop.f32.mrb[0].mxu0
      %v4217 = vadd.f32 0.0, %v4216
      %v4218 = vpop.f32.mrb[0].mxu0
      %v4219 = vpop.f32.mrb[0].mxu0
      %v4220 = vadd.f32 0.0, %v4219
      %v4221 = vpop.f32.mrb[0].mxu0
      %4222 = vmatprep.mubr.bf16.mxu0 0
      %4223 = vmatmul.mubr.bf16.gmra.mrb[0].mxu0 %v3985
      %v4224 = vpop.f32.mrb[0].mxu0
      %v4225 = vadd.f32 0.0, %v4224
      %v4226 = vpop.f32.mrb[0].mxu0
      %v4227 = vpop.f32.mrb[0].mxu0
      %v4228 = vadd.f32 0.0, %v4227
      %v4229 = vpop.f32.mrb[0].mxu0
      %4230 = vmatprep.mubr.bf16.mxu0 0
      %4231 = vmatmul.mubr.bf16.gmra.mrb[0].mxu0 %v3988
      %v4232 = vpop.f32.mrb[0].mxu0
      %v4233 = vadd.f32 0.0, %v4232
      %v4234 = vpop.f32.mrb[0].mxu0
      %v4235 = vpop.f32.mrb[0].mxu0
      %v4236 = vadd.f32 0.0, %v4235
      %v4237 = vpop.f32.mrb[0].mxu0
      %4238 = vdwg.mxu0
      %v4239 = vadd.f32 %v3757, %v4025
      %v4240 = vadd.f32 %v3758, %v4028
      %v4241 = vadd.f32 %v3759, %v4033
      %v4242 = vadd.f32 %v3760, %v4036
      %v4243 = vadd.f32 %v3761, %v4041
      %v4244 = vadd.f32 %v3762, %v4044
      %v4245 = vadd.f32 %v3763, %v4049
      %v4246 = vadd.f32 %v3764, %v4052
      %v4247 = vadd.f32 %v3765, %v4057
      %v4248 = vadd.f32 %v3766, %v4060
      %v4249 = vadd.f32 %v3767, %v4065
      %v4250 = vadd.f32 %v3768, %v4068
      %v4251 = vadd.f32 %v3769, %v4073
      %v4252 = vadd.f32 %v3770, %v4076
      %v4253 = vadd.f32 %v3771, %v4081
      %v4254 = vadd.f32 %v3772, %v4084
      %v4255 = vadd.f32 %v3773, %v4089
      %v4256 = vadd.f32 %v3774, %v4092
      %v4257 = vadd.f32 %v3775, %v4097
      %v4258 = vadd.f32 %v3776, %v4100
      %v4259 = vadd.f32 %v3777, %v4105
      %v4260 = vadd.f32 %v3778, %v4108
      %v4261 = vadd.f32 %v3779, %v4113
      %v4262 = vadd.f32 %v3780, %v4116
      %v4263 = vadd.f32 %v3781, %v4121
      %v4264 = vadd.f32 %v3782, %v4124
      %v4265 = vadd.f32 %v3783, %v4129
      %v4266 = vadd.f32 %v3784, %v4132
      %v4267 = vadd.f32 %v3785, %v4137
      %v4268 = vadd.f32 %v3786, %v4140
      %v4269 = vadd.f32 %v3787, %v4145
      %v4270 = vadd.f32 %v3788, %v4148
      %v4271 = vadd.f32 %v3789, %v4153
      %v4272 = vadd.f32 %v3790, %v4156
      %v4273 = vadd.f32 %v3791, %v4161
      %v4274 = vadd.f32 %v3792, %v4164
      %v4275 = vadd.f32 %v3793, %v4169
      %v4276 = vadd.f32 %v3794, %v4172
      %v4277 = vadd.f32 %v3795, %v4177
      %v4278 = vadd.f32 %v3796, %v4180
      %v4279 = vadd.f32 %v3797, %v4185
      %v4280 = vadd.f32 %v3798, %v4188
      %v4281 = vadd.f32 %v3799, %v4193
      %v4282 = vadd.f32 %v3800, %v4196
      %v4283 = vadd.f32 %v3801, %v4201
      %v4284 = vadd.f32 %v3802, %v4204
      %v4285 = vadd.f32 %v3803, %v4209
      %v4286 = vadd.f32 %v3804, %v4212
      %v4287 = vadd.f32 %v3805, %v4217
      %v4288 = vadd.f32 %v3806, %v4220
      %v4289 = vadd.f32 %v3807, %v4225
      %v4290 = vadd.f32 %v3808, %v4228
      %v4291 = vadd.f32 %v3809, %v4233
      %v4292 = vadd.f32 %v3810, %v4236
      %v4293 = vld [vmem:[#allocation2 + $0x31] sm:$0xff]
      %v4294 = vld [vmem:[#allocation2 + $0x39] sm:$0xff]
      %v4295 = vld [vmem:[#allocation2 + $0x41] sm:$0xff]
      %v4296 = vld [vmem:[#allocation2 + $0x49] sm:$0xff]
      %v4297 = vld [vmem:[#allocation2 + $0x51] sm:$0xff]
      %v4298 = vld [vmem:[#allocation2 + $0x59] sm:$0xff]
      %v4299 = vld [vmem:[#allocation2 + $0x61] sm:$0xff]
      %v4300 = vld [vmem:[#allocation2 + $0x69] sm:$0xff]
      %v4301 = vld [vmem:[#allocation2 + $0x71] sm:$0xff]
      %v4302 = vld [vmem:[#allocation2 + $0x79] sm:$0xff]
      %v4303 = vld [vmem:[#allocation2 + $0x81] sm:$0xff]
      %v4304 = vld [vmem:[#allocation2 + $0x89] sm:$0xff]
      %v4305 = vld [vmem:[#allocation2 + $0x91] sm:$0xff]
      %v4306 = vld [vmem:[#allocation2 + $0x99] sm:$0xff]
      %v4307 = vld [vmem:[#allocation2 + $0xa1] sm:$0xff]
      %v4308 = vld [vmem:[#allocation2 + $0xa9] sm:$0xff]
      %v4309 = vld [vmem:[#allocation2 + $0xb1] sm:$0xff]
      %v4310 = vld [vmem:[#allocation2 + $0xb9] sm:$0xff]
      %v4311 = vld [vmem:[#allocation2 + $0xc1] sm:$0xff]
      %v4312 = vld [vmem:[#allocation2 + $0xc9] sm:$0xff]
      %v4313 = vld [vmem:[#allocation2 + $0xd1] sm:$0xff]
      %v4314 = vld [vmem:[#allocation2 + $0xd9] sm:$0xff]
      %v4315 = vld [vmem:[#allocation2 + $0xe1] sm:$0xff]
      %v4316 = vld [vmem:[#allocation2 + $0xe9] sm:$0xff]
      %v4317 = vld [vmem:[#allocation2 + $0xf1] sm:$0xff]
      %v4318 = vld [vmem:[#allocation2 + $0xf9] sm:$0xff]
      %v4319 = vld [vmem:[#allocation2 + $0x101] sm:$0xff]
      %v4320 = vld [vmem:[#allocation2 + $0x109] sm:$0xff]
      %v4321 = vld [vmem:[#allocation2 + $0x111] sm:$0xff]
      %v4322 = vld [vmem:[#allocation2 + $0x119] sm:$0xff]
      %v4323 = vld [vmem:[#allocation2 + $0x121] sm:$0xff]
      %v4324 = vld [vmem:[#allocation2 + $0x129] sm:$0xff]
      %v4325 = vld [vmem:[#allocation2 + $0x131] sm:$0xff]
      %v4326 = vld [vmem:[#allocation2 + $0x139] sm:$0xff]
      %v4327 = vld [vmem:[#allocation2 + $0x141] sm:$0xff]
      %v4328 = vld [vmem:[#allocation2 + $0x149] sm:$0xff]
      %v4329 = vld [vmem:[#allocation2 + $0x151] sm:$0xff]
      %v4330 = vld [vmem:[#allocation2 + $0x159] sm:$0xff]
      %v4331 = vld [vmem:[#allocation2 + $0x161] sm:$0xff]
      %v4332 = vld [vmem:[#allocation2 + $0x169] sm:$0xff]
      %v4333 = vld [vmem:[#allocation2 + $0x171] sm:$0xff]
      %v4334 = vld [vmem:[#allocation2 + $0x179] sm:$0xff]
      %v4335 = vld [vmem:[#allocation2 + $0x181] sm:$0xff]
      %v4336 = vld [vmem:[#allocation2 + $0x189] sm:$0xff]
      %v4337 = vld [vmem:[#allocation2 + $0x191] sm:$0xff]
      %v4338 = vld [vmem:[#allocation2 + $0x199] sm:$0xff]
      %v4339 = vld [vmem:[#allocation2 + $0x1a1] sm:$0xff]
      %v4340 = vld [vmem:[#allocation2 + $0x1a9] sm:$0xff]
      %v4341 = vld [vmem:[#allocation2 + $0x1b1] sm:$0xff]
      %v4342 = vld [vmem:[#allocation2 + $0x1b9] sm:$0xff]
      %v4343 = vld [vmem:[#allocation2 + $0x1c1] sm:$0xff]
      %v4344 = vld [vmem:[#allocation2 + $0x1c9] sm:$0xff]
      %v4345 = vld [vmem:[#allocation2 + $0x1d1] sm:$0xff]
      %v4346 = vld [vmem:[#allocation2 + $0x1d9] sm:$0xff]
      %v4347 = vpack.c.bf16 %v4294, %v4293
      %v4348 = vpack.c.bf16 %v4296, %v4295
      %v4349 = vpack.c.bf16 %v4298, %v4297
      %v4350 = vpack.c.bf16 %v4300, %v4299
      %v4351 = vpack.c.bf16 %v4302, %v4301
      %v4352 = vpack.c.bf16 %v4304, %v4303
      %v4353 = vpack.c.bf16 %v4306, %v4305
      %v4354 = vpack.c.bf16 %v4308, %v4307
      %v4355 = vpack.c.bf16 %v4310, %v4309
      %v4356 = vpack.c.bf16 %v4312, %v4311
      %v4357 = vpack.c.bf16 %v4314, %v4313
      %v4358 = vpack.c.bf16 %v4316, %v4315
      %v4359 = vpack.c.bf16 %v4318, %v4317
      %v4360 = vpack.c.bf16 %v4320, %v4319
      %v4361 = vpack.c.bf16 %v4322, %v4321
      %v4362 = vpack.c.bf16 %v4324, %v4323
      %v4363 = vpack.c.bf16 %v4326, %v4325
      %v4364 = vpack.c.bf16 %v4328, %v4327
      %v4365 = vpack.c.bf16 %v4330, %v4329
      %v4366 = vpack.c.bf16 %v4332, %v4331
      %v4367 = vpack.c.bf16 %v4334, %v4333
      %v4368 = vpack.c.bf16 %v4336, %v4335
      %v4369 = vpack.c.bf16 %v4338, %v4337
      %v4370 = vpack.c.bf16 %v4340, %v4339
      %v4371 = vpack.c.bf16 %v4342, %v4341
      %v4372 = vpack.c.bf16 %v4344, %v4343
      %v4373 = vpack.c.bf16 %v4346, %v4345
      %s4374 = scalar_lea.vmem %s2, 112
      %v4375 = vld [vmem:[%s4374] sm:$0xf]
      %v4376 = vld [vmem:[%s4374 + $0x4] sm:$0xf]
      %v4377 = vld [vmem:[%s4374 + $0x8] sm:$0xf]
      %v4378 = vld [vmem:[%s4374 + $0xc] sm:$0xf]
      %v4383 = vunpack.c.l.b16 %v4375
      %v4384 = vunpack.c.l.b16 %v4376
      %v4385 = vunpack.c.l.b16 %v4377
      %v4386 = vunpack.c.l.b16 %v4378
      %v4387 = vpack.c.b16 %v4384, %v4383
      %v4388 = vpack.c.b16 %v4386, %v4385
      %v4392 = vsel %vm966, %v4347, 0
      %v4395 = vsel %vm966, %v4348, 0
      %v4398 = vsel %vm966, %v4349, 0
      %v4401 = vsel %vm966, %v4350, 0
      %v4404 = vsel %vm966, %v4351, 0
      %v4407 = vsel %vm966, %v4352, 0
      %v4410 = vsel %vm966, %v4353, 0
      %v4413 = vsel %vm966, %v4354, 0
      %v4416 = vsel %vm966, %v4355, 0
      %v4419 = vsel %vm966, %v4356, 0
      %v4422 = vsel %vm966, %v4357, 0
      %v4425 = vsel %vm966, %v4358, 0
      %v4428 = vsel %vm966, %v4359, 0
      %v4431 = vsel %vm966, %v4360, 0
      %v4434 = vsel %vm966, %v4361, 0
      %v4437 = vsel %vm966, %v4362, 0
      %v4440 = vsel %vm966, %v4363, 0
      %v4443 = vsel %vm966, %v4364, 0
      %v4446 = vsel %vm966, %v4365, 0
      %v4449 = vsel %vm966, %v4366, 0
      %v4452 = vsel %vm966, %v4367, 0
      %v4455 = vsel %vm966, %v4368, 0
      %v4458 = vsel %vm966, %v4369, 0
      %v4461 = vsel %vm966, %v4370, 0
      %v4464 = vsel %vm966, %v4371, 0
      %v4467 = vsel %vm966, %v4372, 0
      %v4470 = vsel %vm966, %v4373, 0
      %4472 = vmatprep.subr.bf16.mxu0 0
      %4473 = vmatpush1.bf16.msra.mxu0 %v4387
      %4474 = vmatprep.subr.bf16.mxu0 0
      %4475 = vmatpush1.bf16.msra.mxu0 %v4388
      %4476 = vmatprep.subr.bf16.mxu0 0
      %4477 = vmatpush1.bf16.msra.mxu0 0
      %4478 = vmatprep.subr.bf16.mxu0 0
      %4479 = vmatpush1.bf16.msra.mxu0 0
      %4480 = vmatprep.subr.bf16.mxu0 0
      %4481 = vmatpush1.bf16.msra.mxu0 0
      %4482 = vmatprep.subr.bf16.mxu0 0
      %4483 = vmatpush1.bf16.msra.mxu0 0
      %4484 = vmatprep.subr.bf16.mxu0 0
      %4485 = vmatpush1.bf16.msra.mxu0 0
      %4486 = vmatprep.subr.bf16.mxu0 0
      %4487 = vmatpush1.bf16.msra.mxu0 0
      %4488 = vmatprep.subr.bf16.mxu0 0
      %4489 = vmatpush1.bf16.msra.mxu0 0
      %4490 = vmatprep.subr.bf16.mxu0 0
      %4491 = vmatpush1.bf16.msra.mxu0 0
      %4492 = vmatprep.subr.bf16.mxu0 0
      %4493 = vmatpush1.bf16.msra.mxu0 0
      %4494 = vmatprep.subr.bf16.mxu0 0
      %4495 = vmatpush1.bf16.msra.mxu0 0
      %4496 = vmatprep.subr.bf16.mxu0 0
      %4497 = vmatpush1.bf16.msra.mxu0 0
      %4498 = vmatprep.subr.bf16.mxu0 0
      %4499 = vmatpush1.bf16.msra.mxu0 0
      %4500 = vmatprep.subr.bf16.mxu0 0
      %4501 = vmatpush1.bf16.msra.mxu0 0
      %4502 = vmatprep.subr.bf16.mxu0 0
      %4503 = vmatpush1.bf16.msra.mxu0 0
      %4504 = vmatprep.mubr.bf16.mxu0 0
      %4505 = vmatmul.mubr.bf16.gmra.mrb[0].mxu0 %v4392
      %v4506 = vpop.f32.mrb[0].mxu0
      %v4507 = vadd.f32 0.0, %v4506
      %v4508 = vpop.f32.mrb[0].mxu0
      %v4509 = vpop.f32.mrb[0].mxu0
      %v4510 = vadd.f32 0.0, %v4509
      %v4511 = vpop.f32.mrb[0].mxu0
      %4512 = vmatprep.mubr.bf16.mxu0 0
      %4513 = vmatmul.mubr.bf16.gmra.mrb[0].mxu0 %v4395
      %v4514 = vpop.f32.mrb[0].mxu0
      %v4515 = vadd.f32 0.0, %v4514
      %v4516 = vpop.f32.mrb[0].mxu0
      %v4517 = vpop.f32.mrb[0].mxu0
      %v4518 = vadd.f32 0.0, %v4517
      %v4519 = vpop.f32.mrb[0].mxu0
      %4520 = vmatprep.mubr.bf16.mxu0 0
      %4521 = vmatmul.mubr.bf16.gmra.mrb[0].mxu0 %v4398
      %v4522 = vpop.f32.mrb[0].mxu0
      %v4523 = vadd.f32 0.0, %v4522
      %v4524 = vpop.f32.mrb[0].mxu0
      %v4525 = vpop.f32.mrb[0].mxu0
      %v4526 = vadd.f32 0.0, %v4525
      %v4527 = vpop.f32.mrb[0].mxu0
      %4528 = vmatprep.mubr.bf16.mxu0 0
      %4529 = vmatmul.mubr.bf16.gmra.mrb[0].mxu0 %v4401
      %v4530 = vpop.f32.mrb[0].mxu0
      %v4531 = vadd.f32 0.0, %v4530
      %v4532 = vpop.f32.mrb[0].mxu0
      %v4533 = vpop.f32.mrb[0].mxu0
      %v4534 = vadd.f32 0.0, %v4533
      %v4535 = vpop.f32.mrb[0].mxu0
      %4536 = vmatprep.mubr.bf16.mxu0 0
      %4537 = vmatmul.mubr.bf16.gmra.mrb[0].mxu0 %v4404
      %v4538 = vpop.f32.mrb[0].mxu0
      %v4539 = vadd.f32 0.0, %v4538
      %v4540 = vpop.f32.mrb[0].mxu0
      %v4541 = vpop.f32.mrb[0].mxu0
      %v4542 = vadd.f32 0.0, %v4541
      %v4543 = vpop.f32.mrb[0].mxu0
      %4544 = vmatprep.mubr.bf16.mxu0 0
      %4545 = vmatmul.mubr.bf16.gmra.mrb[0].mxu0 %v4407
      %v4546 = vpop.f32.mrb[0].mxu0
      %v4547 = vadd.f32 0.0, %v4546
      %v4548 = vpop.f32.mrb[0].mxu0
      %v4549 = vpop.f32.mrb[0].mxu0
      %v4550 = vadd.f32 0.0, %v4549
      %v4551 = vpop.f32.mrb[0].mxu0
      %4552 = vmatprep.mubr.bf16.mxu0 0
      %4553 = vmatmul.mubr.bf16.gmra.mrb[0].mxu0 %v4410
      %v4554 = vpop.f32.mrb[0].mxu0
      %v4555 = vadd.f32 0.0, %v4554
      %v4556 = vpop.f32.mrb[0].mxu0
      %v4557 = vpop.f32.mrb[0].mxu0
      %v4558 = vadd.f32 0.0, %v4557
      %v4559 = vpop.f32.mrb[0].mxu0
      %4560 = vmatprep.mubr.bf16.mxu0 0
      %4561 = vmatmul.mubr.bf16.gmra.mrb[0].mxu0 %v4413
      %v4562 = vpop.f32.mrb[0].mxu0
      %v4563 = vadd.f32 0.0, %v4562
      %v4564 = vpop.f32.mrb[0].mxu0
      %v4565 = vpop.f32.mrb[0].mxu0
      %v4566 = vadd.f32 0.0, %v4565
      %v4567 = vpop.f32.mrb[0].mxu0
      %4568 = vmatprep.mubr.bf16.mxu0 0
      %4569 = vmatmul.mubr.bf16.gmra.mrb[0].mxu0 %v4416
      %v4570 = vpop.f32.mrb[0].mxu0
      %v4571 = vadd.f32 0.0, %v4570
      %v4572 = vpop.f32.mrb[0].mxu0
      %v4573 = vpop.f32.mrb[0].mxu0
      %v4574 = vadd.f32 0.0, %v4573
      %v4575 = vpop.f32.mrb[0].mxu0
      %4576 = vmatprep.mubr.bf16.mxu0 0
      %4577 = vmatmul.mubr.bf16.gmra.mrb[0].mxu0 %v4419
      %v4578 = vpop.f32.mrb[0].mxu0
      %v4579 = vadd.f32 0.0, %v4578
      %v4580 = vpop.f32.mrb[0].mxu0
      %v4581 = vpop.f32.mrb[0].mxu0
      %v4582 = vadd.f32 0.0, %v4581
      %v4583 = vpop.f32.mrb[0].mxu0
      %4584 = vmatprep.mubr.bf16.mxu0 0
      %4585 = vmatmul.mubr.bf16.gmra.mrb[0].mxu0 %v4422
      %v4586 = vpop.f32.mrb[0].mxu0
      %v4587 = vadd.f32 0.0, %v4586
      %v4588 = vpop.f32.mrb[0].mxu0
      %v4589 = vpop.f32.mrb[0].mxu0
      %v4590 = vadd.f32 0.0, %v4589
      %v4591 = vpop.f32.mrb[0].mxu0
      %4592 = vmatprep.mubr.bf16.mxu0 0
      %4593 = vmatmul.mubr.bf16.gmra.mrb[0].mxu0 %v4425
      %v4594 = vpop.f32.mrb[0].mxu0
      %v4595 = vadd.f32 0.0, %v4594
      %v4596 = vpop.f32.mrb[0].mxu0
      %v4597 = vpop.f32.mrb[0].mxu0
      %v4598 = vadd.f32 0.0, %v4597
      %v4599 = vpop.f32.mrb[0].mxu0
      %4600 = vmatprep.mubr.bf16.mxu0 0
      %4601 = vmatmul.mubr.bf16.gmra.mrb[0].mxu0 %v4428
      %v4602 = vpop.f32.mrb[0].mxu0
      %v4603 = vadd.f32 0.0, %v4602
      %v4604 = vpop.f32.mrb[0].mxu0
      %v4605 = vpop.f32.mrb[0].mxu0
      %v4606 = vadd.f32 0.0, %v4605
      %v4607 = vpop.f32.mrb[0].mxu0
      %4608 = vmatprep.mubr.bf16.mxu0 0
      %4609 = vmatmul.mubr.bf16.gmra.mrb[0].mxu0 %v4431
      %v4610 = vpop.f32.mrb[0].mxu0
      %v4611 = vadd.f32 0.0, %v4610
      %v4612 = vpop.f32.mrb[0].mxu0
      %v4613 = vpop.f32.mrb[0].mxu0
      %v4614 = vadd.f32 0.0, %v4613
      %v4615 = vpop.f32.mrb[0].mxu0
      %4616 = vmatprep.mubr.bf16.mxu0 0
      %4617 = vmatmul.mubr.bf16.gmra.mrb[0].mxu0 %v4434
      %v4618 = vpop.f32.mrb[0].mxu0
      %v4619 = vadd.f32 0.0, %v4618
      %v4620 = vpop.f32.mrb[0].mxu0
      %v4621 = vpop.f32.mrb[0].mxu0
      %v4622 = vadd.f32 0.0, %v4621
      %v4623 = vpop.f32.mrb[0].mxu0
      %4624 = vmatprep.mubr.bf16.mxu0 0
      %4625 = vmatmul.mubr.bf16.gmra.mrb[0].mxu0 %v4437
      %v4626 = vpop.f32.mrb[0].mxu0
      %v4627 = vadd.f32 0.0, %v4626
      %v4628 = vpop.f32.mrb[0].mxu0
      %v4629 = vpop.f32.mrb[0].mxu0
      %v4630 = vadd.f32 0.0, %v4629
      %v4631 = vpop.f32.mrb[0].mxu0
      %4632 = vmatprep.mubr.bf16.mxu0 0
      %4633 = vmatmul.mubr.bf16.gmra.mrb[0].mxu0 %v4440
      %v4634 = vpop.f32.mrb[0].mxu0
      %v4635 = vadd.f32 0.0, %v4634
      %v4636 = vpop.f32.mrb[0].mxu0
      %v4637 = vpop.f32.mrb[0].mxu0
      %v4638 = vadd.f32 0.0, %v4637
      %v4639 = vpop.f32.mrb[0].mxu0
      %4640 = vmatprep.mubr.bf16.mxu0 0
      %4641 = vmatmul.mubr.bf16.gmra.mrb[0].mxu0 %v4443
      %v4642 = vpop.f32.mrb[0].mxu0
      %v4643 = vadd.f32 0.0, %v4642
      %v4644 = vpop.f32.mrb[0].mxu0
      %v4645 = vpop.f32.mrb[0].mxu0
      %v4646 = vadd.f32 0.0, %v4645
      %v4647 = vpop.f32.mrb[0].mxu0
      %4648 = vmatprep.mubr.bf16.mxu0 0
      %4649 = vmatmul.mubr.bf16.gmra.mrb[0].mxu0 %v4446
      %v4650 = vpop.f32.mrb[0].mxu0
      %v4651 = vadd.f32 0.0, %v4650
      %v4652 = vpop.f32.mrb[0].mxu0
      %v4653 = vpop.f32.mrb[0].mxu0
      %v4654 = vadd.f32 0.0, %v4653
      %v4655 = vpop.f32.mrb[0].mxu0
      %4656 = vmatprep.mubr.bf16.mxu0 0
      %4657 = vmatmul.mubr.bf16.gmra.mrb[0].mxu0 %v4449
      %v4658 = vpop.f32.mrb[0].mxu0
      %v4659 = vadd.f32 0.0, %v4658
      %v4660 = vpop.f32.mrb[0].mxu0
      %v4661 = vpop.f32.mrb[0].mxu0
      %v4662 = vadd.f32 0.0, %v4661
      %v4663 = vpop.f32.mrb[0].mxu0
      %4664 = vmatprep.mubr.bf16.mxu0 0
      %4665 = vmatmul.mubr.bf16.gmra.mrb[0].mxu0 %v4452
      %v4666 = vpop.f32.mrb[0].mxu0
      %v4667 = vadd.f32 0.0, %v4666
      %v4668 = vpop.f32.mrb[0].mxu0
      %v4669 = vpop.f32.mrb[0].mxu0
      %v4670 = vadd.f32 0.0, %v4669
      %v4671 = vpop.f32.mrb[0].mxu0
      %4672 = vmatprep.mubr.bf16.mxu0 0
      %4673 = vmatmul.mubr.bf16.gmra.mrb[0].mxu0 %v4455
      %v4674 = vpop.f32.mrb[0].mxu0
      %v4675 = vadd.f32 0.0, %v4674
      %v4676 = vpop.f32.mrb[0].mxu0
      %v4677 = vpop.f32.mrb[0].mxu0
      %v4678 = vadd.f32 0.0, %v4677
      %v4679 = vpop.f32.mrb[0].mxu0
      %4680 = vmatprep.mubr.bf16.mxu0 0
      %4681 = vmatmul.mubr.bf16.gmra.mrb[0].mxu0 %v4458
      %v4682 = vpop.f32.mrb[0].mxu0
      %v4683 = vadd.f32 0.0, %v4682
      %v4684 = vpop.f32.mrb[0].mxu0
      %v4685 = vpop.f32.mrb[0].mxu0
      %v4686 = vadd.f32 0.0, %v4685
      %v4687 = vpop.f32.mrb[0].mxu0
      %4688 = vmatprep.mubr.bf16.mxu0 0
      %4689 = vmatmul.mubr.bf16.gmra.mrb[0].mxu0 %v4461
      %v4690 = vpop.f32.mrb[0].mxu0
      %v4691 = vadd.f32 0.0, %v4690
      %v4692 = vpop.f32.mrb[0].mxu0
      %v4693 = vpop.f32.mrb[0].mxu0
      %v4694 = vadd.f32 0.0, %v4693
      %v4695 = vpop.f32.mrb[0].mxu0
      %4696 = vmatprep.mubr.bf16.mxu0 0
      %4697 = vmatmul.mubr.bf16.gmra.mrb[0].mxu0 %v4464
      %v4698 = vpop.f32.mrb[0].mxu0
      %v4699 = vadd.f32 0.0, %v4698
      %v4700 = vpop.f32.mrb[0].mxu0
      %v4701 = vpop.f32.mrb[0].mxu0
      %v4702 = vadd.f32 0.0, %v4701
      %v4703 = vpop.f32.mrb[0].mxu0
      %4704 = vmatprep.mubr.bf16.mxu0 0
      %4705 = vmatmul.mubr.bf16.gmra.mrb[0].mxu0 %v4467
      %v4706 = vpop.f32.mrb[0].mxu0
      %v4707 = vadd.f32 0.0, %v4706
      %v4708 = vpop.f32.mrb[0].mxu0
      %v4709 = vpop.f32.mrb[0].mxu0
      %v4710 = vadd.f32 0.0, %v4709
      %v4711 = vpop.f32.mrb[0].mxu0
      %4712 = vmatprep.mubr.bf16.mxu0 0
      %4713 = vmatmul.mubr.bf16.gmra.mrb[0].mxu0 %v4470
      %v4714 = vpop.f32.mrb[0].mxu0
      %v4715 = vadd.f32 0.0, %v4714
      %v4716 = vpop.f32.mrb[0].mxu0
      %v4717 = vpop.f32.mrb[0].mxu0
      %v4718 = vadd.f32 0.0, %v4717
      %v4719 = vpop.f32.mrb[0].mxu0
      %4720 = vdwg.mxu0
      %v4721 = vadd.f32 %v4239, %v4507
      %v4722 = vadd.f32 %v4240, %v4510
      %v4723 = vadd.f32 %v4241, %v4515
      %v4724 = vadd.f32 %v4242, %v4518
      %v4725 = vadd.f32 %v4243, %v4523
      %v4726 = vadd.f32 %v4244, %v4526
      %v4727 = vadd.f32 %v4245, %v4531
      %v4728 = vadd.f32 %v4246, %v4534
      %v4729 = vadd.f32 %v4247, %v4539
      %v4730 = vadd.f32 %v4248, %v4542
      %v4731 = vadd.f32 %v4249, %v4547
      %v4732 = vadd.f32 %v4250, %v4550
      %v4733 = vadd.f32 %v4251, %v4555
      %v4734 = vadd.f32 %v4252, %v4558
      %v4735 = vadd.f32 %v4253, %v4563
      %v4736 = vadd.f32 %v4254, %v4566
      %v4737 = vadd.f32 %v4255, %v4571
      %v4738 = vadd.f32 %v4256, %v4574
      %v4739 = vadd.f32 %v4257, %v4579
      %v4740 = vadd.f32 %v4258, %v4582
      %v4741 = vadd.f32 %v4259, %v4587
      %v4742 = vadd.f32 %v4260, %v4590
      %v4743 = vadd.f32 %v4261, %v4595
      %v4744 = vadd.f32 %v4262, %v4598
      %v4745 = vadd.f32 %v4263, %v4603
      %v4746 = vadd.f32 %v4264, %v4606
      %v4747 = vadd.f32 %v4265, %v4611
      %v4748 = vadd.f32 %v4266, %v4614
      %v4749 = vadd.f32 %v4267, %v4619
      %v4750 = vadd.f32 %v4268, %v4622
      %v4751 = vadd.f32 %v4269, %v4627
      %v4752 = vadd.f32 %v4270, %v4630
      %v4753 = vadd.f32 %v4271, %v4635
      %v4754 = vadd.f32 %v4272, %v4638
      %v4755 = vadd.f32 %v4273, %v4643
      %v4756 = vadd.f32 %v4274, %v4646
      %v4757 = vadd.f32 %v4275, %v4651
      %v4758 = vadd.f32 %v4276, %v4654
      %v4759 = vadd.f32 %v4277, %v4659
      %v4760 = vadd.f32 %v4278, %v4662
      %v4761 = vadd.f32 %v4279, %v4667
      %v4762 = vadd.f32 %v4280, %v4670
      %v4763 = vadd.f32 %v4281, %v4675
      %v4764 = vadd.f32 %v4282, %v4678
      %v4765 = vadd.f32 %v4283, %v4683
      %v4766 = vadd.f32 %v4284, %v4686
      %v4767 = vadd.f32 %v4285, %v4691
      %v4768 = vadd.f32 %v4286, %v4694
      %v4769 = vadd.f32 %v4287, %v4699
      %v4770 = vadd.f32 %v4288, %v4702
      %v4771 = vadd.f32 %v4289, %v4707
      %v4772 = vadd.f32 %v4290, %v4710
      %v4773 = vadd.f32 %v4291, %v4715
      %v4774 = vadd.f32 %v4292, %v4718
      %v4775 = vld [vmem:[#allocation2 + $0x32] sm:$0xff]
      %v4776 = vld [vmem:[#allocation2 + $0x3a] sm:$0xff]
      %v4777 = vld [vmem:[#allocation2 + $0x42] sm:$0xff]
      %v4778 = vld [vmem:[#allocation2 + $0x4a] sm:$0xff]
      %v4779 = vld [vmem:[#allocation2 + $0x52] sm:$0xff]
      %v4780 = vld [vmem:[#allocation2 + $0x5a] sm:$0xff]
      %v4781 = vld [vmem:[#allocation2 + $0x62] sm:$0xff]
      %v4782 = vld [vmem:[#allocation2 + $0x6a] sm:$0xff]
      %v4783 = vld [vmem:[#allocation2 + $0x72] sm:$0xff]
      %v4784 = vld [vmem:[#allocation2 + $0x7a] sm:$0xff]
      %v4785 = vld [vmem:[#allocation2 + $0x82] sm:$0xff]
      %v4786 = vld [vmem:[#allocation2 + $0x8a] sm:$0xff]
      %v4787 = vld [vmem:[#allocation2 + $0x92] sm:$0xff]
      %v4788 = vld [vmem:[#allocation2 + $0x9a] sm:$0xff]
      %v4789 = vld [vmem:[#allocation2 + $0xa2] sm:$0xff]
      %v4790 = vld [vmem:[#allocation2 + $0xaa] sm:$0xff]
      %v4791 = vld [vmem:[#allocation2 + $0xb2] sm:$0xff]
      %v4792 = vld [vmem:[#allocation2 + $0xba] sm:$0xff]
      %v4793 = vld [vmem:[#allocation2 + $0xc2] sm:$0xff]
      %v4794 = vld [vmem:[#allocation2 + $0xca] sm:$0xff]
      %v4795 = vld [vmem:[#allocation2 + $0xd2] sm:$0xff]
      %v4796 = vld [vmem:[#allocation2 + $0xda] sm:$0xff]
      %v4797 = vld [vmem:[#allocation2 + $0xe2] sm:$0xff]
      %v4798 = vld [vmem:[#allocation2 + $0xea] sm:$0xff]
      %v4799 = vld [vmem:[#allocation2 + $0xf2] sm:$0xff]
      %v4800 = vld [vmem:[#allocation2 + $0xfa] sm:$0xff]
      %v4801 = vld [vmem:[#allocation2 + $0x102] sm:$0xff]
      %v4802 = vld [vmem:[#allocation2 + $0x10a] sm:$0xff]
      %v4803 = vld [vmem:[#allocation2 + $0x112] sm:$0xff]
      %v4804 = vld [vmem:[#allocation2 + $0x11a] sm:$0xff]
      %v4805 = vld [vmem:[#allocation2 + $0x122] sm:$0xff]
      %v4806 = vld [vmem:[#allocation2 + $0x12a] sm:$0xff]
      %v4807 = vld [vmem:[#allocation2 + $0x132] sm:$0xff]
      %v4808 = vld [vmem:[#allocation2 + $0x13a] sm:$0xff]
      %v4809 = vld [vmem:[#allocation2 + $0x142] sm:$0xff]
      %v4810 = vld [vmem:[#allocation2 + $0x14a] sm:$0xff]
      %v4811 = vld [vmem:[#allocation2 + $0x152] sm:$0xff]
      %v4812 = vld [vmem:[#allocation2 + $0x15a] sm:$0xff]
      %v4813 = vld [vmem:[#allocation2 + $0x162] sm:$0xff]
      %v4814 = vld [vmem:[#allocation2 + $0x16a] sm:$0xff]
      %v4815 = vld [vmem:[#allocation2 + $0x172] sm:$0xff]
      %v4816 = vld [vmem:[#allocation2 + $0x17a] sm:$0xff]
      %v4817 = vld [vmem:[#allocation2 + $0x182] sm:$0xff]
      %v4818 = vld [vmem:[#allocation2 + $0x18a] sm:$0xff]
      %v4819 = vld [vmem:[#allocation2 + $0x192] sm:$0xff]
      %v4820 = vld [vmem:[#allocation2 + $0x19a] sm:$0xff]
      %v4821 = vld [vmem:[#allocation2 + $0x1a2] sm:$0xff]
      %v4822 = vld [vmem:[#allocation2 + $0x1aa] sm:$0xff]
      %v4823 = vld [vmem:[#allocation2 + $0x1b2] sm:$0xff]
      %v4824 = vld [vmem:[#allocation2 + $0x1ba] sm:$0xff]
      %v4825 = vld [vmem:[#allocation2 + $0x1c2] sm:$0xff]
      %v4826 = vld [vmem:[#allocation2 + $0x1ca] sm:$0xff]
      %v4827 = vld [vmem:[#allocation2 + $0x1d2] sm:$0xff]
      %v4828 = vld [vmem:[#allocation2 + $0x1da] sm:$0xff]
      %v4829 = vpack.c.bf16 %v4776, %v4775
      %v4830 = vpack.c.bf16 %v4778, %v4777
      %v4831 = vpack.c.bf16 %v4780, %v4779
      %v4832 = vpack.c.bf16 %v4782, %v4781
      %v4833 = vpack.c.bf16 %v4784, %v4783
      %v4834 = vpack.c.bf16 %v4786, %v4785
      %v4835 = vpack.c.bf16 %v4788, %v4787
      %v4836 = vpack.c.bf16 %v4790, %v4789
      %v4837 = vpack.c.bf16 %v4792, %v4791
      %v4838 = vpack.c.bf16 %v4794, %v4793
      %v4839 = vpack.c.bf16 %v4796, %v4795
      %v4840 = vpack.c.bf16 %v4798, %v4797
      %v4841 = vpack.c.bf16 %v4800, %v4799
      %v4842 = vpack.c.bf16 %v4802, %v4801
      %v4843 = vpack.c.bf16 %v4804, %v4803
      %v4844 = vpack.c.bf16 %v4806, %v4805
      %v4845 = vpack.c.bf16 %v4808, %v4807
      %v4846 = vpack.c.bf16 %v4810, %v4809
      %v4847 = vpack.c.bf16 %v4812, %v4811
      %v4848 = vpack.c.bf16 %v4814, %v4813
      %v4849 = vpack.c.bf16 %v4816, %v4815
      %v4850 = vpack.c.bf16 %v4818, %v4817
      %v4851 = vpack.c.bf16 %v4820, %v4819
      %v4852 = vpack.c.bf16 %v4822, %v4821
      %v4853 = vpack.c.bf16 %v4824, %v4823
      %v4854 = vpack.c.bf16 %v4826, %v4825
      %v4855 = vpack.c.bf16 %v4828, %v4827
      %s4856 = scalar_lea.vmem %s2, 128
      %v4857 = vld [vmem:[%s4856] sm:$0xf]
      %v4858 = vld [vmem:[%s4856 + $0x4] sm:$0xf]
      %v4859 = vld [vmem:[%s4856 + $0x8] sm:$0xf]
      %v4860 = vld [vmem:[%s4856 + $0xc] sm:$0xf]
      %v4865 = vunpack.c.l.b16 %v4857
      %v4866 = vunpack.c.l.b16 %v4858
      %v4867 = vunpack.c.l.b16 %v4859
      %v4868 = vunpack.c.l.b16 %v4860
      %v4869 = vpack.c.b16 %v4866, %v4865
      %v4870 = vpack.c.b16 %v4868, %v4867
      %v4874 = vsel %vm966, %v4829, 0
      %v4877 = vsel %vm966, %v4830, 0
      %v4880 = vsel %vm966, %v4831, 0
      %v4883 = vsel %vm966, %v4832, 0
      %v4886 = vsel %vm966, %v4833, 0
      %v4889 = vsel %vm966, %v4834, 0
      %v4892 = vsel %vm966, %v4835, 0
      %v4895 = vsel %vm966, %v4836, 0
      %v4898 = vsel %vm966, %v4837, 0
      %v4901 = vsel %vm966, %v4838, 0
      %v4904 = vsel %vm966, %v4839, 0
      %v4907 = vsel %vm966, %v4840, 0
      %v4910 = vsel %vm966, %v4841, 0
      %v4913 = vsel %vm966, %v4842, 0
      %v4916 = vsel %vm966, %v4843, 0
      %v4919 = vsel %vm966, %v4844, 0
      %v4922 = vsel %vm966, %v4845, 0
      %v4925 = vsel %vm966, %v4846, 0
      %v4928 = vsel %vm966, %v4847, 0
      %v4931 = vsel %vm966, %v4848, 0
      %v4934 = vsel %vm966, %v4849, 0
      %v4937 = vsel %vm966, %v4850, 0
      %v4940 = vsel %vm966, %v4851, 0
      %v4943 = vsel %vm966, %v4852, 0
      %v4946 = vsel %vm966, %v4853, 0
      %v4949 = vsel %vm966, %v4854, 0
      %v4952 = vsel %vm966, %v4855, 0
      %4954 = vmatprep.subr.bf16.mxu0 0
      %4955 = vmatpush1.bf16.msra.mxu0 %v4869
      %4956 = vmatprep.subr.bf16.mxu0 0
      %4957 = vmatpush1.bf16.msra.mxu0 %v4870
      %4958 = vmatprep.subr.bf16.mxu0 0
      %4959 = vmatpush1.bf16.msra.mxu0 0
      %4960 = vmatprep.subr.bf16.mxu0 0
      %4961 = vmatpush1.bf16.msra.mxu0 0
      %4962 = vmatprep.subr.bf16.mxu0 0
      %4963 = vmatpush1.bf16.msra.mxu0 0
      %4964 = vmatprep.subr.bf16.mxu0 0
      %4965 = vmatpush1.bf16.msra.mxu0 0
      %4966 = vmatprep.subr.bf16.mxu0 0
      %4967 = vmatpush1.bf16.msra.mxu0 0
      %4968 = vmatprep.subr.bf16.mxu0 0
      %4969 = vmatpush1.bf16.msra.mxu0 0
      %4970 = vmatprep.subr.bf16.mxu0 0
      %4971 = vmatpush1.bf16.msra.mxu0 0
      %4972 = vmatprep.subr.bf16.mxu0 0
      %4973 = vmatpush1.bf16.msra.mxu0 0
      %4974 = vmatprep.subr.bf16.mxu0 0
      %4975 = vmatpush1.bf16.msra.mxu0 0
      %4976 = vmatprep.subr.bf16.mxu0 0
      %4977 = vmatpush1.bf16.msra.mxu0 0
      %4978 = vmatprep.subr.bf16.mxu0 0
      %4979 = vmatpush1.bf16.msra.mxu0 0
      %4980 = vmatprep.subr.bf16.mxu0 0
      %4981 = vmatpush1.bf16.msra.mxu0 0
      %4982 = vmatprep.subr.bf16.mxu0 0
      %4983 = vmatpush1.bf16.msra.mxu0 0
      %4984 = vmatprep.subr.bf16.mxu0 0
      %4985 = vmatpush1.bf16.msra.mxu0 0
      %4986 = vmatprep.mubr.bf16.mxu0 0
      %4987 = vmatmul.mubr.bf16.gmra.mrb[0].mxu0 %v4874
      %v4988 = vpop.f32.mrb[0].mxu0
      %v4989 = vadd.f32 0.0, %v4988
      %v4990 = vpop.f32.mrb[0].mxu0
      %v4991 = vpop.f32.mrb[0].mxu0
      %v4992 = vadd.f32 0.0, %v4991
      %v4993 = vpop.f32.mrb[0].mxu0
      %4994 = vmatprep.mubr.bf16.mxu0 0
      %4995 = vmatmul.mubr.bf16.gmra.mrb[0].mxu0 %v4877
      %v4996 = vpop.f32.mrb[0].mxu0
      %v4997 = vadd.f32 0.0, %v4996
      %v4998 = vpop.f32.mrb[0].mxu0
      %v4999 = vpop.f32.mrb[0].mxu0
      %v5000 = vadd.f32 0.0, %v4999
      %v5001 = vpop.f32.mrb[0].mxu0
      %5002 = vmatprep.mubr.bf16.mxu0 0
      %5003 = vmatmul.mubr.bf16.gmra.mrb[0].mxu0 %v4880
      %v5004 = vpop.f32.mrb[0].mxu0
      %v5005 = vadd.f32 0.0, %v5004
      %v5006 = vpop.f32.mrb[0].mxu0
      %v5007 = vpop.f32.mrb[0].mxu0
      %v5008 = vadd.f32 0.0, %v5007
      %v5009 = vpop.f32.mrb[0].mxu0
      %5010 = vmatprep.mubr.bf16.mxu0 0
      %5011 = vmatmul.mubr.bf16.gmra.mrb[0].mxu0 %v4883
      %v5012 = vpop.f32.mrb[0].mxu0
      %v5013 = vadd.f32 0.0, %v5012
      %v5014 = vpop.f32.mrb[0].mxu0
      %v5015 = vpop.f32.mrb[0].mxu0
      %v5016 = vadd.f32 0.0, %v5015
      %v5017 = vpop.f32.mrb[0].mxu0
      %5018 = vmatprep.mubr.bf16.mxu0 0
      %5019 = vmatmul.mubr.bf16.gmra.mrb[0].mxu0 %v4886
      %v5020 = vpop.f32.mrb[0].mxu0
      %v5021 = vadd.f32 0.0, %v5020
      %v5022 = vpop.f32.mrb[0].mxu0
      %v5023 = vpop.f32.mrb[0].mxu0
      %v5024 = vadd.f32 0.0, %v5023
      %v5025 = vpop.f32.mrb[0].mxu0
      %5026 = vmatprep.mubr.bf16.mxu0 0
      %5027 = vmatmul.mubr.bf16.gmra.mrb[0].mxu0 %v4889
      %v5028 = vpop.f32.mrb[0].mxu0
      %v5029 = vadd.f32 0.0, %v5028
      %v5030 = vpop.f32.mrb[0].mxu0
      %v5031 = vpop.f32.mrb[0].mxu0
      %v5032 = vadd.f32 0.0, %v5031
      %v5033 = vpop.f32.mrb[0].mxu0
      %5034 = vmatprep.mubr.bf16.mxu0 0
      %5035 = vmatmul.mubr.bf16.gmra.mrb[0].mxu0 %v4892
      %v5036 = vpop.f32.mrb[0].mxu0
      %v5037 = vadd.f32 0.0, %v5036
      %v5038 = vpop.f32.mrb[0].mxu0
      %v5039 = vpop.f32.mrb[0].mxu0
      %v5040 = vadd.f32 0.0, %v5039
      %v5041 = vpop.f32.mrb[0].mxu0
      %5042 = vmatprep.mubr.bf16.mxu0 0
      %5043 = vmatmul.mubr.bf16.gmra.mrb[0].mxu0 %v4895
      %v5044 = vpop.f32.mrb[0].mxu0
      %v5045 = vadd.f32 0.0, %v5044
      %v5046 = vpop.f32.mrb[0].mxu0
      %v5047 = vpop.f32.mrb[0].mxu0
      %v5048 = vadd.f32 0.0, %v5047
      %v5049 = vpop.f32.mrb[0].mxu0
      %5050 = vmatprep.mubr.bf16.mxu0 0
      %5051 = vmatmul.mubr.bf16.gmra.mrb[0].mxu0 %v4898
      %v5052 = vpop.f32.mrb[0].mxu0
      %v5053 = vadd.f32 0.0, %v5052
      %v5054 = vpop.f32.mrb[0].mxu0
      %v5055 = vpop.f32.mrb[0].mxu0
      %v5056 = vadd.f32 0.0, %v5055
      %v5057 = vpop.f32.mrb[0].mxu0
      %5058 = vmatprep.mubr.bf16.mxu0 0
      %5059 = vmatmul.mubr.bf16.gmra.mrb[0].mxu0 %v4901
      %v5060 = vpop.f32.mrb[0].mxu0
      %v5061 = vadd.f32 0.0, %v5060
      %v5062 = vpop.f32.mrb[0].mxu0
      %v5063 = vpop.f32.mrb[0].mxu0
      %v5064 = vadd.f32 0.0, %v5063
      %v5065 = vpop.f32.mrb[0].mxu0
      %5066 = vmatprep.mubr.bf16.mxu0 0
      %5067 = vmatmul.mubr.bf16.gmra.mrb[0].mxu0 %v4904
      %v5068 = vpop.f32.mrb[0].mxu0
      %v5069 = vadd.f32 0.0, %v5068
      %v5070 = vpop.f32.mrb[0].mxu0
      %v5071 = vpop.f32.mrb[0].mxu0
      %v5072 = vadd.f32 0.0, %v5071
      %v5073 = vpop.f32.mrb[0].mxu0
      %5074 = vmatprep.mubr.bf16.mxu0 0
      %5075 = vmatmul.mubr.bf16.gmra.mrb[0].mxu0 %v4907
      %v5076 = vpop.f32.mrb[0].mxu0
      %v5077 = vadd.f32 0.0, %v5076
      %v5078 = vpop.f32.mrb[0].mxu0
      %v5079 = vpop.f32.mrb[0].mxu0
      %v5080 = vadd.f32 0.0, %v5079
      %v5081 = vpop.f32.mrb[0].mxu0
      %5082 = vmatprep.mubr.bf16.mxu0 0
      %5083 = vmatmul.mubr.bf16.gmra.mrb[0].mxu0 %v4910
      %v5084 = vpop.f32.mrb[0].mxu0
      %v5085 = vadd.f32 0.0, %v5084
      %v5086 = vpop.f32.mrb[0].mxu0
      %v5087 = vpop.f32.mrb[0].mxu0
      %v5088 = vadd.f32 0.0, %v5087
      %v5089 = vpop.f32.mrb[0].mxu0
      %5090 = vmatprep.mubr.bf16.mxu0 0
      %5091 = vmatmul.mubr.bf16.gmra.mrb[0].mxu0 %v4913
      %v5092 = vpop.f32.mrb[0].mxu0
      %v5093 = vadd.f32 0.0, %v5092
      %v5094 = vpop.f32.mrb[0].mxu0
      %v5095 = vpop.f32.mrb[0].mxu0
      %v5096 = vadd.f32 0.0, %v5095
      %v5097 = vpop.f32.mrb[0].mxu0
      %5098 = vmatprep.mubr.bf16.mxu0 0
      %5099 = vmatmul.mubr.bf16.gmra.mrb[0].mxu0 %v4916
      %v5100 = vpop.f32.mrb[0].mxu0
      %v5101 = vadd.f32 0.0, %v5100
      %v5102 = vpop.f32.mrb[0].mxu0
      %v5103 = vpop.f32.mrb[0].mxu0
      %v5104 = vadd.f32 0.0, %v5103
      %v5105 = vpop.f32.mrb[0].mxu0
      %5106 = vmatprep.mubr.bf16.mxu0 0
      %5107 = vmatmul.mubr.bf16.gmra.mrb[0].mxu0 %v4919
      %v5108 = vpop.f32.mrb[0].mxu0
      %v5109 = vadd.f32 0.0, %v5108
      %v5110 = vpop.f32.mrb[0].mxu0
      %v5111 = vpop.f32.mrb[0].mxu0
      %v5112 = vadd.f32 0.0, %v5111
      %v5113 = vpop.f32.mrb[0].mxu0
      %5114 = vmatprep.mubr.bf16.mxu0 0
      %5115 = vmatmul.mubr.bf16.gmra.mrb[0].mxu0 %v4922
      %v5116 = vpop.f32.mrb[0].mxu0
      %v5117 = vadd.f32 0.0, %v5116
      %v5118 = vpop.f32.mrb[0].mxu0
      %v5119 = vpop.f32.mrb[0].mxu0
      %v5120 = vadd.f32 0.0, %v5119
      %v5121 = vpop.f32.mrb[0].mxu0
      %5122 = vmatprep.mubr.bf16.mxu0 0
      %5123 = vmatmul.mubr.bf16.gmra.mrb[0].mxu0 %v4925
      %v5124 = vpop.f32.mrb[0].mxu0
      %v5125 = vadd.f32 0.0, %v5124
      %v5126 = vpop.f32.mrb[0].mxu0
      %v5127 = vpop.f32.mrb[0].mxu0
      %v5128 = vadd.f32 0.0, %v5127
      %v5129 = vpop.f32.mrb[0].mxu0
      %5130 = vmatprep.mubr.bf16.mxu0 0
      %5131 = vmatmul.mubr.bf16.gmra.mrb[0].mxu0 %v4928
      %v5132 = vpop.f32.mrb[0].mxu0
      %v5133 = vadd.f32 0.0, %v5132
      %v5134 = vpop.f32.mrb[0].mxu0
      %v5135 = vpop.f32.mrb[0].mxu0
      %v5136 = vadd.f32 0.0, %v5135
      %v5137 = vpop.f32.mrb[0].mxu0
      %5138 = vmatprep.mubr.bf16.mxu0 0
      %5139 = vmatmul.mubr.bf16.gmra.mrb[0].mxu0 %v4931
      %v5140 = vpop.f32.mrb[0].mxu0
      %v5141 = vadd.f32 0.0, %v5140
      %v5142 = vpop.f32.mrb[0].mxu0
      %v5143 = vpop.f32.mrb[0].mxu0
      %v5144 = vadd.f32 0.0, %v5143
      %v5145 = vpop.f32.mrb[0].mxu0
      %5146 = vmatprep.mubr.bf16.mxu0 0
      %5147 = vmatmul.mubr.bf16.gmra.mrb[0].mxu0 %v4934
      %v5148 = vpop.f32.mrb[0].mxu0
      %v5149 = vadd.f32 0.0, %v5148
      %v5150 = vpop.f32.mrb[0].mxu0
      %v5151 = vpop.f32.mrb[0].mxu0
      %v5152 = vadd.f32 0.0, %v5151
      %v5153 = vpop.f32.mrb[0].mxu0
      %5154 = vmatprep.mubr.bf16.mxu0 0
      %5155 = vmatmul.mubr.bf16.gmra.mrb[0].mxu0 %v4937
      %v5156 = vpop.f32.mrb[0].mxu0
      %v5157 = vadd.f32 0.0, %v5156
      %v5158 = vpop.f32.mrb[0].mxu0
      %v5159 = vpop.f32.mrb[0].mxu0
      %v5160 = vadd.f32 0.0, %v5159
      %v5161 = vpop.f32.mrb[0].mxu0
      %5162 = vmatprep.mubr.bf16.mxu0 0
      %5163 = vmatmul.mubr.bf16.gmra.mrb[0].mxu0 %v4940
      %v5164 = vpop.f32.mrb[0].mxu0
      %v5165 = vadd.f32 0.0, %v5164
      %v5166 = vpop.f32.mrb[0].mxu0
      %v5167 = vpop.f32.mrb[0].mxu0
      %v5168 = vadd.f32 0.0, %v5167
      %v5169 = vpop.f32.mrb[0].mxu0
      %5170 = vmatprep.mubr.bf16.mxu0 0
      %5171 = vmatmul.mubr.bf16.gmra.mrb[0].mxu0 %v4943
      %v5172 = vpop.f32.mrb[0].mxu0
      %v5173 = vadd.f32 0.0, %v5172
      %v5174 = vpop.f32.mrb[0].mxu0
      %v5175 = vpop.f32.mrb[0].mxu0
      %v5176 = vadd.f32 0.0, %v5175
      %v5177 = vpop.f32.mrb[0].mxu0
      %5178 = vmatprep.mubr.bf16.mxu0 0
      %5179 = vmatmul.mubr.bf16.gmra.mrb[0].mxu0 %v4946
      %v5180 = vpop.f32.mrb[0].mxu0
      %v5181 = vadd.f32 0.0, %v5180
      %v5182 = vpop.f32.mrb[0].mxu0
      %v5183 = vpop.f32.mrb[0].mxu0
      %v5184 = vadd.f32 0.0, %v5183
      %v5185 = vpop.f32.mrb[0].mxu0
      %5186 = vmatprep.mubr.bf16.mxu0 0
      %5187 = vmatmul.mubr.bf16.gmra.mrb[0].mxu0 %v4949
      %v5188 = vpop.f32.mrb[0].mxu0
      %v5189 = vadd.f32 0.0, %v5188
      %v5190 = vpop.f32.mrb[0].mxu0
      %v5191 = vpop.f32.mrb[0].mxu0
      %v5192 = vadd.f32 0.0, %v5191
      %v5193 = vpop.f32.mrb[0].mxu0
      %5194 = vmatprep.mubr.bf16.mxu0 0
      %5195 = vmatmul.mubr.bf16.gmra.mrb[0].mxu0 %v4952
      %v5196 = vpop.f32.mrb[0].mxu0
      %v5197 = vadd.f32 0.0, %v5196
      %v5198 = vpop.f32.mrb[0].mxu0
      %v5199 = vpop.f32.mrb[0].mxu0
      %v5200 = vadd.f32 0.0, %v5199
      %v5201 = vpop.f32.mrb[0].mxu0
      %5202 = vdwg.mxu0
      %v5203 = vadd.f32 %v4721, %v4989
      %v5204 = vadd.f32 %v4722, %v4992
      %v5205 = vadd.f32 %v4723, %v4997
      %v5206 = vadd.f32 %v4724, %v5000
      %v5207 = vadd.f32 %v4725, %v5005
      %v5208 = vadd.f32 %v4726, %v5008
      %v5209 = vadd.f32 %v4727, %v5013
      %v5210 = vadd.f32 %v4728, %v5016
      %v5211 = vadd.f32 %v4729, %v5021
      %v5212 = vadd.f32 %v4730, %v5024
      %v5213 = vadd.f32 %v4731, %v5029
      %v5214 = vadd.f32 %v4732, %v5032
      %v5215 = vadd.f32 %v4733, %v5037
      %v5216 = vadd.f32 %v4734, %v5040
      %v5217 = vadd.f32 %v4735, %v5045
      %v5218 = vadd.f32 %v4736, %v5048
      %v5219 = vadd.f32 %v4737, %v5053
      %v5220 = vadd.f32 %v4738, %v5056
      %v5221 = vadd.f32 %v4739, %v5061
      %v5222 = vadd.f32 %v4740, %v5064
      %v5223 = vadd.f32 %v4741, %v5069
      %v5224 = vadd.f32 %v4742, %v5072
      %v5225 = vadd.f32 %v4743, %v5077
      %v5226 = vadd.f32 %v4744, %v5080
      %v5227 = vadd.f32 %v4745, %v5085
      %v5228 = vadd.f32 %v4746, %v5088
      %v5229 = vadd.f32 %v4747, %v5093
      %v5230 = vadd.f32 %v4748, %v5096
      %v5231 = vadd.f32 %v4749, %v5101
      %v5232 = vadd.f32 %v4750, %v5104
      %v5233 = vadd.f32 %v4751, %v5109
      %v5234 = vadd.f32 %v4752, %v5112
      %v5235 = vadd.f32 %v4753, %v5117
      %v5236 = vadd.f32 %v4754, %v5120
      %v5237 = vadd.f32 %v4755, %v5125
      %v5238 = vadd.f32 %v4756, %v5128
      %v5239 = vadd.f32 %v4757, %v5133
      %v5240 = vadd.f32 %v4758, %v5136
      %v5241 = vadd.f32 %v4759, %v5141
      %v5242 = vadd.f32 %v4760, %v5144
      %v5243 = vadd.f32 %v4761, %v5149
      %v5244 = vadd.f32 %v4762, %v5152
      %v5245 = vadd.f32 %v4763, %v5157
      %v5246 = vadd.f32 %v4764, %v5160
      %v5247 = vadd.f32 %v4765, %v5165
      %v5248 = vadd.f32 %v4766, %v5168
      %v5249 = vadd.f32 %v4767, %v5173
      %v5250 = vadd.f32 %v4768, %v5176
      %v5251 = vadd.f32 %v4769, %v5181
      %v5252 = vadd.f32 %v4770, %v5184
      %v5253 = vadd.f32 %v4771, %v5189
      %v5254 = vadd.f32 %v4772, %v5192
      %v5255 = vadd.f32 %v4773, %v5197
      %v5256 = vadd.f32 %v4774, %v5200
      %v5257 = vlaneseq
      %v5258 = vshrl.u32 %v5257, 7
      %v5259 = vsub.s32 0, %v5258
      %v5260 = vrot.slane %v284, %v5259
      %v5261 = vmul.f32 %v5203, %v5260
      %v5262 = vmul.f32 %v5204, %v5260
      %v5263 = vmul.f32 %v5205, %v5260
      %v5264 = vmul.f32 %v5206, %v5260
      %v5265 = vmul.f32 %v5207, %v5260
      %v5266 = vmul.f32 %v5208, %v5260
      %v5267 = vmul.f32 %v5209, %v5260
      %v5268 = vmul.f32 %v5210, %v5260
      %v5269 = vmul.f32 %v5211, %v5260
      %v5270 = vmul.f32 %v5212, %v5260
      %v5271 = vmul.f32 %v5213, %v5260
      %v5272 = vmul.f32 %v5214, %v5260
      %v5273 = vmul.f32 %v5215, %v5260
      %v5274 = vmul.f32 %v5216, %v5260
      %v5275 = vmul.f32 %v5217, %v5260
      %v5276 = vmul.f32 %v5218, %v5260
      %v5277 = vmul.f32 %v5219, %v5260
      %v5278 = vmul.f32 %v5220, %v5260
      %v5279 = vmul.f32 %v5221, %v5260
      %v5280 = vmul.f32 %v5222, %v5260
      %v5281 = vmul.f32 %v5223, %v5260
      %v5282 = vmul.f32 %v5224, %v5260
      %v5283 = vmul.f32 %v5225, %v5260
      %v5284 = vmul.f32 %v5226, %v5260
      %v5285 = vmul.f32 %v5227, %v5260
      %v5286 = vmul.f32 %v5228, %v5260
      %v5287 = vmul.f32 %v5229, %v5260
      %v5288 = vmul.f32 %v5230, %v5260
      %v5289 = vmul.f32 %v5231, %v5260
      %v5290 = vmul.f32 %v5232, %v5260
      %v5291 = vmul.f32 %v5233, %v5260
      %v5292 = vmul.f32 %v5234, %v5260
      %v5293 = vmul.f32 %v5235, %v5260
      %v5294 = vmul.f32 %v5236, %v5260
      %v5295 = vmul.f32 %v5237, %v5260
      %v5296 = vmul.f32 %v5238, %v5260
      %v5297 = vmul.f32 %v5239, %v5260
      %v5298 = vmul.f32 %v5240, %v5260
      %v5299 = vmul.f32 %v5241, %v5260
      %v5300 = vmul.f32 %v5242, %v5260
      %v5301 = vmul.f32 %v5243, %v5260
      %v5302 = vmul.f32 %v5244, %v5260
      %v5303 = vmul.f32 %v5245, %v5260
      %v5304 = vmul.f32 %v5246, %v5260
      %v5305 = vmul.f32 %v5247, %v5260
      %v5306 = vmul.f32 %v5248, %v5260
      %v5307 = vmul.f32 %v5249, %v5260
      %v5308 = vmul.f32 %v5250, %v5260
      %v5309 = vmul.f32 %v5251, %v5260
      %v5310 = vmul.f32 %v5252, %v5260
      %v5311 = vmul.f32 %v5253, %v5260
      %v5312 = vmul.f32 %v5254, %v5260
      %v5313 = vmul.f32 %v5255, %v5260
      %v5314 = vmul.f32 %v5256, %v5260
      %v5315 = vlaneseq
      %v5316 = vshrl.u32 %v5315, 7
      %v5317 = vsub.s32 0, %v5316
      %v5318 = vrot.slane %v285, %v5317
      %v5319 = vadd.f32 %v5261, %v5318
      %v5320 = vadd.f32 %v5262, %v5318
      %v5321 = vadd.f32 %v5263, %v5318
      %v5322 = vadd.f32 %v5264, %v5318
      %v5323 = vadd.f32 %v5265, %v5318
      %v5324 = vadd.f32 %v5266, %v5318
      %v5325 = vadd.f32 %v5267, %v5318
      %v5326 = vadd.f32 %v5268, %v5318
      %v5327 = vadd.f32 %v5269, %v5318
      %v5328 = vadd.f32 %v5270, %v5318
      %v5329 = vadd.f32 %v5271, %v5318
      %v5330 = vadd.f32 %v5272, %v5318
      %v5331 = vadd.f32 %v5273, %v5318
      %v5332 = vadd.f32 %v5274, %v5318
      %v5333 = vadd.f32 %v5275, %v5318
      %v5334 = vadd.f32 %v5276, %v5318
      %v5335 = vadd.f32 %v5277, %v5318
      %v5336 = vadd.f32 %v5278, %v5318
      %v5337 = vadd.f32 %v5279, %v5318
      %v5338 = vadd.f32 %v5280, %v5318
      %v5339 = vadd.f32 %v5281, %v5318
      %v5340 = vadd.f32 %v5282, %v5318
      %v5341 = vadd.f32 %v5283, %v5318
      %v5342 = vadd.f32 %v5284, %v5318
      %v5343 = vadd.f32 %v5285, %v5318
      %v5344 = vadd.f32 %v5286, %v5318
      %v5345 = vadd.f32 %v5287, %v5318
      %v5346 = vadd.f32 %v5288, %v5318
      %v5347 = vadd.f32 %v5289, %v5318
      %v5348 = vadd.f32 %v5290, %v5318
      %v5349 = vadd.f32 %v5291, %v5318
      %v5350 = vadd.f32 %v5292, %v5318
      %v5351 = vadd.f32 %v5293, %v5318
      %v5352 = vadd.f32 %v5294, %v5318
      %v5353 = vadd.f32 %v5295, %v5318
      %v5354 = vadd.f32 %v5296, %v5318
      %v5355 = vadd.f32 %v5297, %v5318
      %v5356 = vadd.f32 %v5298, %v5318
      %v5357 = vadd.f32 %v5299, %v5318
      %v5358 = vadd.f32 %v5300, %v5318
      %v5359 = vadd.f32 %v5301, %v5318
      %v5360 = vadd.f32 %v5302, %v5318
      %v5361 = vadd.f32 %v5303, %v5318
      %v5362 = vadd.f32 %v5304, %v5318
      %v5363 = vadd.f32 %v5305, %v5318
      %v5364 = vadd.f32 %v5306, %v5318
      %v5365 = vadd.f32 %v5307, %v5318
      %v5366 = vadd.f32 %v5308, %v5318
      %v5367 = vadd.f32 %v5309, %v5318
      %v5368 = vadd.f32 %v5310, %v5318
      %v5369 = vadd.f32 %v5311, %v5318
      %v5370 = vadd.f32 %v5312, %v5318
      %v5371 = vadd.f32 %v5313, %v5318
      %v5372 = vadd.f32 %v5314, %v5318
      %v5373 = vmax.f32 %v5319, 0.0
      %v5374 = vmax.f32 %v5320, 0.0
      %v5375 = vmax.f32 %v5321, 0.0
      %v5376 = vmax.f32 %v5322, 0.0
      %v5377 = vmax.f32 %v5323, 0.0
      %v5378 = vmax.f32 %v5324, 0.0
      %v5379 = vmax.f32 %v5325, 0.0
      %v5380 = vmax.f32 %v5326, 0.0
      %v5381 = vmax.f32 %v5327, 0.0
      %v5382 = vmax.f32 %v5328, 0.0
      %v5383 = vmax.f32 %v5329, 0.0
      %v5384 = vmax.f32 %v5330, 0.0
      %v5385 = vmax.f32 %v5331, 0.0
      %v5386 = vmax.f32 %v5332, 0.0
      %v5387 = vmax.f32 %v5333, 0.0
      %v5388 = vmax.f32 %v5334, 0.0
      %v5389 = vmax.f32 %v5335, 0.0
      %v5390 = vmax.f32 %v5336, 0.0
      %v5391 = vmax.f32 %v5337, 0.0
      %v5392 = vmax.f32 %v5338, 0.0
      %v5393 = vmax.f32 %v5339, 0.0
      %v5394 = vmax.f32 %v5340, 0.0
      %v5395 = vmax.f32 %v5341, 0.0
      %v5396 = vmax.f32 %v5342, 0.0
      %v5397 = vmax.f32 %v5343, 0.0
      %v5398 = vmax.f32 %v5344, 0.0
      %v5399 = vmax.f32 %v5345, 0.0
      %v5400 = vmax.f32 %v5346, 0.0
      %v5401 = vmax.f32 %v5347, 0.0
      %v5402 = vmax.f32 %v5348, 0.0
      %v5403 = vmax.f32 %v5349, 0.0
      %v5404 = vmax.f32 %v5350, 0.0
      %v5405 = vmax.f32 %v5351, 0.0
      %v5406 = vmax.f32 %v5352, 0.0
      %v5407 = vmax.f32 %v5353, 0.0
      %v5408 = vmax.f32 %v5354, 0.0
      %v5409 = vmax.f32 %v5355, 0.0
      %v5410 = vmax.f32 %v5356, 0.0
      %v5411 = vmax.f32 %v5357, 0.0
      %v5412 = vmax.f32 %v5358, 0.0
      %v5413 = vmax.f32 %v5359, 0.0
      %v5414 = vmax.f32 %v5360, 0.0
      %v5415 = vmax.f32 %v5361, 0.0
      %v5416 = vmax.f32 %v5362, 0.0
      %v5417 = vmax.f32 %v5363, 0.0
      %v5418 = vmax.f32 %v5364, 0.0
      %v5419 = vmax.f32 %v5365, 0.0
      %v5420 = vmax.f32 %v5366, 0.0
      %v5421 = vmax.f32 %v5367, 0.0
      %v5422 = vmax.f32 %v5368, 0.0
      %v5423 = vmax.f32 %v5369, 0.0
      %v5424 = vmax.f32 %v5370, 0.0
      %v5425 = vmax.f32 %v5371, 0.0
      %v5426 = vmax.f32 %v5372, 0.0
      %v5427 = vld [vmem:[%s271 + $0x19] sm:$0xff]
      %v5428 = vld [vmem:[%s271 + $0x21] sm:$0xff]
      %v5429 = vld [vmem:[%s271 + $0x29] sm:$0xff]
      %v5430 = vld [vmem:[%s271 + $0x31] sm:$0xff]
      %v5431 = vld [vmem:[%s271 + $0x39] sm:$0xff]
      %v5432 = vld [vmem:[%s271 + $0x41] sm:$0xff]
      %v5433 = vld [vmem:[%s271 + $0x49] sm:$0xff]
      %v5434 = vld [vmem:[%s271 + $0x51] sm:$0xff]
      %v5435 = vld [vmem:[%s271 + $0x59] sm:$0xff]
      %v5436 = vld [vmem:[%s271 + $0x61] sm:$0xff]
      %v5437 = vld [vmem:[%s271 + $0x69] sm:$0xff]
      %v5438 = vld [vmem:[%s271 + $0x71] sm:$0xff]
      %v5439 = vld [vmem:[%s271 + $0x79] sm:$0xff]
      %v5440 = vld [vmem:[%s271 + $0x81] sm:$0xff]
      %v5441 = vld [vmem:[%s271 + $0x89] sm:$0xff]
      %v5442 = vld [vmem:[%s271 + $0x91] sm:$0xff]
      %v5443 = vld [vmem:[%s271 + $0x99] sm:$0xff]
      %v5444 = vld [vmem:[%s271 + $0xa1] sm:$0xff]
      %v5445 = vld [vmem:[%s271 + $0xa9] sm:$0xff]
      %v5446 = vld [vmem:[%s271 + $0xb1] sm:$0xff]
      %v5447 = vld [vmem:[%s271 + $0xb9] sm:$0xff]
      %v5448 = vld [vmem:[%s271 + $0xc1] sm:$0xff]
      %v5449 = vld [vmem:[%s271 + $0xc9] sm:$0xff]
      %v5450 = vld [vmem:[%s271 + $0xd1] sm:$0xff]
      %v5451 = vld [vmem:[%s271 + $0xd9] sm:$0xff]
      %v5452 = vld [vmem:[%s271 + $0xe1] sm:$0xff]
      %v5453 = vld [vmem:[%s271 + $0xe9] sm:$0xff]
      %v5454 = vld [vmem:[%s271 + $0xf1] sm:$0xff]
      %v5455 = vld [vmem:[%s271 + $0xf9] sm:$0xff]
      %v5456 = vld [vmem:[%s271 + $0x101] sm:$0xff]
      %v5457 = vld [vmem:[%s271 + $0x109] sm:$0xff]
      %v5458 = vld [vmem:[%s271 + $0x111] sm:$0xff]
      %v5459 = vld [vmem:[%s271 + $0x119] sm:$0xff]
      %v5460 = vld [vmem:[%s271 + $0x121] sm:$0xff]
      %v5461 = vld [vmem:[%s271 + $0x129] sm:$0xff]
      %v5462 = vld [vmem:[%s271 + $0x131] sm:$0xff]
      %v5463 = vld [vmem:[%s271 + $0x139] sm:$0xff]
      %v5464 = vld [vmem:[%s271 + $0x141] sm:$0xff]
      %v5465 = vld [vmem:[%s271 + $0x149] sm:$0xff]
      %v5466 = vld [vmem:[%s271 + $0x151] sm:$0xff]
      %v5467 = vld [vmem:[%s271 + $0x159] sm:$0xff]
      %v5468 = vld [vmem:[%s271 + $0x161] sm:$0xff]
      %v5469 = vld [vmem:[%s271 + $0x169] sm:$0xff]
      %v5470 = vld [vmem:[%s271 + $0x171] sm:$0xff]
      %v5471 = vld [vmem:[%s271 + $0x179] sm:$0xff]
      %v5472 = vld [vmem:[%s271 + $0x181] sm:$0xff]
      %v5473 = vld [vmem:[%s271 + $0x189] sm:$0xff]
      %v5474 = vld [vmem:[%s271 + $0x191] sm:$0xff]
      %v5475 = vld [vmem:[%s271 + $0x199] sm:$0xff]
      %v5476 = vld [vmem:[%s271 + $0x1a1] sm:$0xff]
      %v5477 = vld [vmem:[%s271 + $0x1a9] sm:$0xff]
      %v5478 = vld [vmem:[%s271 + $0x1b1] sm:$0xff]
      %v5479 = vld [vmem:[%s271 + $0x1b9] sm:$0xff]
      %v5480 = vld [vmem:[%s271 + $0x1c1] sm:$0xff]
      %5482 = vset.pattern.permute.xlu0 0
      %5483 = vperm.xlu0 %5482, %v5427
      %v5484 = vpop.permute.xlu0 %5483
      %5487 = vset.pattern.permute.xlu0 0
      %5488 = vperm.xlu0 %5487, %v5428
      %v5489 = vpop.permute.xlu0 %5488
      %5492 = vset.pattern.permute.xlu0 0
      %5493 = vperm.xlu0 %5492, %v5429
      %v5494 = vpop.permute.xlu0 %5493
      %5497 = vset.pattern.permute.xlu0 0
      %5498 = vperm.xlu0 %5497, %v5430
      %v5499 = vpop.permute.xlu0 %5498
      %5502 = vset.pattern.permute.xlu0 0
      %5503 = vperm.xlu0 %5502, %v5431
      %v5504 = vpop.permute.xlu0 %5503
      %5507 = vset.pattern.permute.xlu0 0
      %5508 = vperm.xlu0 %5507, %v5432
      %v5509 = vpop.permute.xlu0 %5508
      %5512 = vset.pattern.permute.xlu0 0
      %5513 = vperm.xlu0 %5512, %v5433
      %v5514 = vpop.permute.xlu0 %5513
      %5517 = vset.pattern.permute.xlu0 0
      %5518 = vperm.xlu0 %5517, %v5434
      %v5519 = vpop.permute.xlu0 %5518
      %5522 = vset.pattern.permute.xlu0 0
      %5523 = vperm.xlu0 %5522, %v5435
      %v5524 = vpop.permute.xlu0 %5523
      %5527 = vset.pattern.permute.xlu0 0
      %5528 = vperm.xlu0 %5527, %v5436
      %v5529 = vpop.permute.xlu0 %5528
      %5532 = vset.pattern.permute.xlu0 0
      %5533 = vperm.xlu0 %5532, %v5437
      %v5534 = vpop.permute.xlu0 %5533
      %5537 = vset.pattern.permute.xlu0 0
      %5538 = vperm.xlu0 %5537, %v5438
      %v5539 = vpop.permute.xlu0 %5538
      %5542 = vset.pattern.permute.xlu0 0
      %5543 = vperm.xlu0 %5542, %v5439
      %v5544 = vpop.permute.xlu0 %5543
      %5547 = vset.pattern.permute.xlu0 0
      %5548 = vperm.xlu0 %5547, %v5440
      %v5549 = vpop.permute.xlu0 %5548
      %5552 = vset.pattern.permute.xlu0 0
      %5553 = vperm.xlu0 %5552, %v5441
      %v5554 = vpop.permute.xlu0 %5553
      %5557 = vset.pattern.permute.xlu0 0
      %5558 = vperm.xlu0 %5557, %v5442
      %v5559 = vpop.permute.xlu0 %5558
      %5562 = vset.pattern.permute.xlu0 0
      %5563 = vperm.xlu0 %5562, %v5443
      %v5564 = vpop.permute.xlu0 %5563
      %5567 = vset.pattern.permute.xlu0 0
      %5568 = vperm.xlu0 %5567, %v5444
      %v5569 = vpop.permute.xlu0 %5568
      %5572 = vset.pattern.permute.xlu0 0
      %5573 = vperm.xlu0 %5572, %v5445
      %v5574 = vpop.permute.xlu0 %5573
      %5577 = vset.pattern.permute.xlu0 0
      %5578 = vperm.xlu0 %5577, %v5446
      %v5579 = vpop.permute.xlu0 %5578
      %5582 = vset.pattern.permute.xlu0 0
      %5583 = vperm.xlu0 %5582, %v5447
      %v5584 = vpop.permute.xlu0 %5583
      %5587 = vset.pattern.permute.xlu0 0
      %5588 = vperm.xlu0 %5587, %v5448
      %v5589 = vpop.permute.xlu0 %5588
      %5592 = vset.pattern.permute.xlu0 0
      %5593 = vperm.xlu0 %5592, %v5449
      %v5594 = vpop.permute.xlu0 %5593
      %5597 = vset.pattern.permute.xlu0 0
      %5598 = vperm.xlu0 %5597, %v5450
      %v5599 = vpop.permute.xlu0 %5598
      %5602 = vset.pattern.permute.xlu0 0
      %5603 = vperm.xlu0 %5602, %v5451
      %v5604 = vpop.permute.xlu0 %5603
      %5607 = vset.pattern.permute.xlu0 0
      %5608 = vperm.xlu0 %5607, %v5452
      %v5609 = vpop.permute.xlu0 %5608
      %5612 = vset.pattern.permute.xlu0 0
      %5613 = vperm.xlu0 %5612, %v5453
      %v5614 = vpop.permute.xlu0 %5613
      %5617 = vset.pattern.permute.xlu0 0
      %5618 = vperm.xlu0 %5617, %v5454
      %v5619 = vpop.permute.xlu0 %5618
      %5622 = vset.pattern.permute.xlu0 0
      %5623 = vperm.xlu0 %5622, %v5455
      %v5624 = vpop.permute.xlu0 %5623
      %5627 = vset.pattern.permute.xlu0 0
      %5628 = vperm.xlu0 %5627, %v5456
      %v5629 = vpop.permute.xlu0 %5628
      %5632 = vset.pattern.permute.xlu0 0
      %5633 = vperm.xlu0 %5632, %v5457
      %v5634 = vpop.permute.xlu0 %5633
      %5637 = vset.pattern.permute.xlu0 0
      %5638 = vperm.xlu0 %5637, %v5458
      %v5639 = vpop.permute.xlu0 %5638
      %5642 = vset.pattern.permute.xlu0 0
      %5643 = vperm.xlu0 %5642, %v5459
      %v5644 = vpop.permute.xlu0 %5643
      %5647 = vset.pattern.permute.xlu0 0
      %5648 = vperm.xlu0 %5647, %v5460
      %v5649 = vpop.permute.xlu0 %5648
      %5652 = vset.pattern.permute.xlu0 0
      %5653 = vperm.xlu0 %5652, %v5461
      %v5654 = vpop.permute.xlu0 %5653
      %5657 = vset.pattern.permute.xlu0 0
      %5658 = vperm.xlu0 %5657, %v5462
      %v5659 = vpop.permute.xlu0 %5658
      %5662 = vset.pattern.permute.xlu0 0
      %5663 = vperm.xlu0 %5662, %v5463
      %v5664 = vpop.permute.xlu0 %5663
      %5667 = vset.pattern.permute.xlu0 0
      %5668 = vperm.xlu0 %5667, %v5464
      %v5669 = vpop.permute.xlu0 %5668
      %5672 = vset.pattern.permute.xlu0 0
      %5673 = vperm.xlu0 %5672, %v5465
      %v5674 = vpop.permute.xlu0 %5673
      %5677 = vset.pattern.permute.xlu0 0
      %5678 = vperm.xlu0 %5677, %v5466
      %v5679 = vpop.permute.xlu0 %5678
      %5682 = vset.pattern.permute.xlu0 0
      %5683 = vperm.xlu0 %5682, %v5467
      %v5684 = vpop.permute.xlu0 %5683
      %5687 = vset.pattern.permute.xlu0 0
      %5688 = vperm.xlu0 %5687, %v5468
      %v5689 = vpop.permute.xlu0 %5688
      %5692 = vset.pattern.permute.xlu0 0
      %5693 = vperm.xlu0 %5692, %v5469
      %v5694 = vpop.permute.xlu0 %5693
      %5697 = vset.pattern.permute.xlu0 0
      %5698 = vperm.xlu0 %5697, %v5470
      %v5699 = vpop.permute.xlu0 %5698
      %5702 = vset.pattern.permute.xlu0 0
      %5703 = vperm.xlu0 %5702, %v5471
      %v5704 = vpop.permute.xlu0 %5703
      %5707 = vset.pattern.permute.xlu0 0
      %5708 = vperm.xlu0 %5707, %v5472
      %v5709 = vpop.permute.xlu0 %5708
      %5712 = vset.pattern.permute.xlu0 0
      %5713 = vperm.xlu0 %5712, %v5473
      %v5714 = vpop.permute.xlu0 %5713
      %5717 = vset.pattern.permute.xlu0 0
      %5718 = vperm.xlu0 %5717, %v5474
      %v5719 = vpop.permute.xlu0 %5718
      %5722 = vset.pattern.permute.xlu0 0
      %5723 = vperm.xlu0 %5722, %v5475
      %v5724 = vpop.permute.xlu0 %5723
      %5727 = vset.pattern.permute.xlu0 0
      %5728 = vperm.xlu0 %5727, %v5476
      %v5729 = vpop.permute.xlu0 %5728
      %5732 = vset.pattern.permute.xlu0 0
      %5733 = vperm.xlu0 %5732, %v5477
      %v5734 = vpop.permute.xlu0 %5733
      %5737 = vset.pattern.permute.xlu0 0
      %5738 = vperm.xlu0 %5737, %v5478
      %v5739 = vpop.permute.xlu0 %5738
      %5742 = vset.pattern.permute.xlu0 0
      %5743 = vperm.xlu0 %5742, %v5479
      %v5744 = vpop.permute.xlu0 %5743
      %5747 = vset.pattern.permute.xlu0 0
      %5748 = vperm.xlu0 %5747, %v5480
      %v5749 = vpop.permute.xlu0 %5748
      %v5751 = vmul.f32 %v5373, %v5484
      %v5752 = vmul.f32 %v5374, %v5489
      %v5753 = vmul.f32 %v5375, %v5494
      %v5754 = vmul.f32 %v5376, %v5499
      %v5755 = vmul.f32 %v5377, %v5504
      %v5756 = vmul.f32 %v5378, %v5509
      %v5757 = vmul.f32 %v5379, %v5514
      %v5758 = vmul.f32 %v5380, %v5519
      %v5759 = vmul.f32 %v5381, %v5524
      %v5760 = vmul.f32 %v5382, %v5529
      %v5761 = vmul.f32 %v5383, %v5534
      %v5762 = vmul.f32 %v5384, %v5539
      %v5763 = vmul.f32 %v5385, %v5544
      %v5764 = vmul.f32 %v5386, %v5549
      %v5765 = vmul.f32 %v5387, %v5554
      %v5766 = vmul.f32 %v5388, %v5559
      %v5767 = vmul.f32 %v5389, %v5564
      %v5768 = vmul.f32 %v5390, %v5569
      %v5769 = vmul.f32 %v5391, %v5574
      %v5770 = vmul.f32 %v5392, %v5579
      %v5771 = vmul.f32 %v5393, %v5584
      %v5772 = vmul.f32 %v5394, %v5589
      %v5773 = vmul.f32 %v5395, %v5594
      %v5774 = vmul.f32 %v5396, %v5599
      %v5775 = vmul.f32 %v5397, %v5604
      %v5776 = vmul.f32 %v5398, %v5609
      %v5777 = vmul.f32 %v5399, %v5614
      %v5778 = vmul.f32 %v5400, %v5619
      %v5779 = vmul.f32 %v5401, %v5624
      %v5780 = vmul.f32 %v5402, %v5629
      %v5781 = vmul.f32 %v5403, %v5634
      %v5782 = vmul.f32 %v5404, %v5639
      %v5783 = vmul.f32 %v5405, %v5644
      %v5784 = vmul.f32 %v5406, %v5649
      %v5785 = vmul.f32 %v5407, %v5654
      %v5786 = vmul.f32 %v5408, %v5659
      %v5787 = vmul.f32 %v5409, %v5664
      %v5788 = vmul.f32 %v5410, %v5669
      %v5789 = vmul.f32 %v5411, %v5674
      %v5790 = vmul.f32 %v5412, %v5679
      %v5791 = vmul.f32 %v5413, %v5684
      %v5792 = vmul.f32 %v5414, %v5689
      %v5793 = vmul.f32 %v5415, %v5694
      %v5794 = vmul.f32 %v5416, %v5699
      %v5795 = vmul.f32 %v5417, %v5704
      %v5796 = vmul.f32 %v5418, %v5709
      %v5797 = vmul.f32 %v5419, %v5714
      %v5798 = vmul.f32 %v5420, %v5719
      %v5799 = vmul.f32 %v5421, %v5724
      %v5800 = vmul.f32 %v5422, %v5729
      %v5801 = vmul.f32 %v5423, %v5734
      %v5802 = vmul.f32 %v5424, %v5739
      %v5803 = vmul.f32 %v5425, %v5744
      %v5804 = vmul.f32 %v5426, %v5749
      %5805 = vst.msk [vmem:[#allocation3] sm:$0xff] %vm966, %v5751
      %5806 = vst.msk [vmem:[#allocation3 + $0x8] sm:$0xff] %vm966, %v5752
      %5807 = vst.msk [vmem:[#allocation3 + $0x10] sm:$0xff] %vm966, %v5753
      %5808 = vst.msk [vmem:[#allocation3 + $0x18] sm:$0xff] %vm966, %v5754
      %5809 = vst.msk [vmem:[#allocation3 + $0x20] sm:$0xff] %vm966, %v5755
      %5810 = vst.msk [vmem:[#allocation3 + $0x28] sm:$0xff] %vm966, %v5756
      %5811 = vst.msk [vmem:[#allocation3 + $0x30] sm:$0xff] %vm966, %v5757
      %5812 = vst.msk [vmem:[#allocation3 + $0x38] sm:$0xff] %vm966, %v5758
      %5813 = vst.msk [vmem:[#allocation3 + $0x40] sm:$0xff] %vm966, %v5759
      %5814 = vst.msk [vmem:[#allocation3 + $0x48] sm:$0xff] %vm966, %v5760
      %5815 = vst.msk [vmem:[#allocation3 + $0x50] sm:$0xff] %vm966, %v5761
      %5816 = vst.msk [vmem:[#allocation3 + $0x58] sm:$0xff] %vm966, %v5762
      %5817 = vst.msk [vmem:[#allocation3 + $0x60] sm:$0xff] %vm966, %v5763
      %5818 = vst.msk [vmem:[#allocation3 + $0x68] sm:$0xff] %vm966, %v5764
      %5819 = vst.msk [vmem:[#allocation3 + $0x70] sm:$0xff] %vm966, %v5765
      %5820 = vst.msk [vmem:[#allocation3 + $0x78] sm:$0xff] %vm966, %v5766
      %5821 = vst.msk [vmem:[#allocation3 + $0x80] sm:$0xff] %vm966, %v5767
      %5822 = vst.msk [vmem:[#allocation3 + $0x88] sm:$0xff] %vm966, %v5768
      %5823 = vst.msk [vmem:[#allocation3 + $0x90] sm:$0xff] %vm966, %v5769
      %5824 = vst.msk [vmem:[#allocation3 + $0x98] sm:$0xff] %vm966, %v5770
      %5825 = vst.msk [vmem:[#allocation3 + $0xa0] sm:$0xff] %vm966, %v5771
      %5826 = vst.msk [vmem:[#allocation3 + $0xa8] sm:$0xff] %vm966, %v5772
      %5827 = vst.msk [vmem:[#allocation3 + $0xb0] sm:$0xff] %vm966, %v5773
      %5828 = vst.msk [vmem:[#allocation3 + $0xb8] sm:$0xff] %vm966, %v5774
      %5829 = vst.msk [vmem:[#allocation3 + $0xc0] sm:$0xff] %vm966, %v5775
      %5830 = vst.msk [vmem:[#allocation3 + $0xc8] sm:$0xff] %vm966, %v5776
      %5831 = vst.msk [vmem:[#allocation3 + $0xd0] sm:$0xff] %vm966, %v5777
      %5832 = vst.msk [vmem:[#allocation3 + $0xd8] sm:$0xff] %vm966, %v5778
      %5833 = vst.msk [vmem:[#allocation3 + $0xe0] sm:$0xff] %vm966, %v5779
      %5834 = vst.msk [vmem:[#allocation3 + $0xe8] sm:$0xff] %vm966, %v5780
      %5835 = vst.msk [vmem:[#allocation3 + $0xf0] sm:$0xff] %vm966, %v5781
      %5836 = vst.msk [vmem:[#allocation3 + $0xf8] sm:$0xff] %vm966, %v5782
      %5837 = vst.msk [vmem:[#allocation3 + $0x100] sm:$0xff] %vm966, %v5783
      %5838 = vst.msk [vmem:[#allocation3 + $0x108] sm:$0xff] %vm966, %v5784
      %5839 = vst.msk [vmem:[#allocation3 + $0x110] sm:$0xff] %vm966, %v5785
      %5840 = vst.msk [vmem:[#allocation3 + $0x118] sm:$0xff] %vm966, %v5786
      %5841 = vst.msk [vmem:[#allocation3 + $0x120] sm:$0xff] %vm966, %v5787
      %5842 = vst.msk [vmem:[#allocation3 + $0x128] sm:$0xff] %vm966, %v5788
      %5843 = vst.msk [vmem:[#allocation3 + $0x130] sm:$0xff] %vm966, %v5789
      %5844 = vst.msk [vmem:[#allocation3 + $0x138] sm:$0xff] %vm966, %v5790
      %5845 = vst.msk [vmem:[#allocation3 + $0x140] sm:$0xff] %vm966, %v5791
      %5846 = vst.msk [vmem:[#allocation3 + $0x148] sm:$0xff] %vm966, %v5792
      %5847 = vst.msk [vmem:[#allocation3 + $0x150] sm:$0xff] %vm966, %v5793
      %5848 = vst.msk [vmem:[#allocation3 + $0x158] sm:$0xff] %vm966, %v5794
      %5849 = vst.msk [vmem:[#allocation3 + $0x160] sm:$0xff] %vm966, %v5795
      %5850 = vst.msk [vmem:[#allocation3 + $0x168] sm:$0xff] %vm966, %v5796
      %5851 = vst.msk [vmem:[#allocation3 + $0x170] sm:$0xff] %vm966, %v5797
      %5852 = vst.msk [vmem:[#allocation3 + $0x178] sm:$0xff] %vm966, %v5798
      %5853 = vst.msk [vmem:[#allocation3 + $0x180] sm:$0xff] %vm966, %v5799
      %5854 = vst.msk [vmem:[#allocation3 + $0x188] sm:$0xff] %vm966, %v5800
      %5855 = vst.msk [vmem:[#allocation3 + $0x190] sm:$0xff] %vm966, %v5801
      %5856 = vst.msk [vmem:[#allocation3 + $0x198] sm:$0xff] %vm966, %v5802
      %5857 = vst.msk [vmem:[#allocation3 + $0x1a0] sm:$0xff] %vm966, %v5803
      %5858 = vst.msk [vmem:[#allocation3 + $0x1a8] sm:$0xff] %vm966, %v5804
      %5859 = vst.msk [vmem:[#allocation3 + $0x1b0] sm:$0xff] %vm966, 0.0
      %v5860 = vld [vmem:[#allocation3] sm:$0xff]
      %v5861 = vld [vmem:[#allocation3 + $0x8] sm:$0xff]
      %v5862 = vld [vmem:[#allocation3 + $0x10] sm:$0xff]
      %v5863 = vld [vmem:[#allocation3 + $0x18] sm:$0xff]
      %v5864 = vld [vmem:[#allocation3 + $0x20] sm:$0xff]
      %v5865 = vld [vmem:[#allocation3 + $0x28] sm:$0xff]
      %v5866 = vld [vmem:[#allocation3 + $0x30] sm:$0xff]
      %v5867 = vld [vmem:[#allocation3 + $0x38] sm:$0xff]
      %v5868 = vld [vmem:[#allocation3 + $0x40] sm:$0xff]
      %v5869 = vld [vmem:[#allocation3 + $0x48] sm:$0xff]
      %v5870 = vld [vmem:[#allocation3 + $0x50] sm:$0xff]
      %v5871 = vld [vmem:[#allocation3 + $0x58] sm:$0xff]
      %v5872 = vld [vmem:[#allocation3 + $0x60] sm:$0xff]
      %v5873 = vld [vmem:[#allocation3 + $0x68] sm:$0xff]
      %v5874 = vld [vmem:[#allocation3 + $0x70] sm:$0xff]
      %v5875 = vld [vmem:[#allocation3 + $0x78] sm:$0xff]
      %v5876 = vld [vmem:[#allocation3 + $0x80] sm:$0xff]
      %v5877 = vld [vmem:[#allocation3 + $0x88] sm:$0xff]
      %v5878 = vld [vmem:[#allocation3 + $0x90] sm:$0xff]
      %v5879 = vld [vmem:[#allocation3 + $0x98] sm:$0xff]
      %v5880 = vld [vmem:[#allocation3 + $0xa0] sm:$0xff]
      %v5881 = vld [vmem:[#allocation3 + $0xa8] sm:$0xff]
      %v5882 = vld [vmem:[#allocation3 + $0xb0] sm:$0xff]
      %v5883 = vld [vmem:[#allocation3 + $0xb8] sm:$0xff]
      %v5884 = vld [vmem:[#allocation3 + $0xc0] sm:$0xff]
      %v5885 = vld [vmem:[#allocation3 + $0xc8] sm:$0xff]
      %v5886 = vld [vmem:[#allocation3 + $0xd0] sm:$0xff]
      %v5887 = vld [vmem:[#allocation3 + $0xd8] sm:$0xff]
      %v5888 = vld [vmem:[#allocation3 + $0xe0] sm:$0xff]
      %v5889 = vld [vmem:[#allocation3 + $0xe8] sm:$0xff]
      %v5890 = vld [vmem:[#allocation3 + $0xf0] sm:$0xff]
      %v5891 = vld [vmem:[#allocation3 + $0xf8] sm:$0xff]
      %v5892 = vld [vmem:[#allocation3 + $0x100] sm:$0xff]
      %v5893 = vld [vmem:[#allocation3 + $0x108] sm:$0xff]
      %v5894 = vld [vmem:[#allocation3 + $0x110] sm:$0xff]
      %v5895 = vld [vmem:[#allocation3 + $0x118] sm:$0xff]
      %v5896 = vld [vmem:[#allocation3 + $0x120] sm:$0xff]
      %v5897 = vld [vmem:[#allocation3 + $0x128] sm:$0xff]
      %v5898 = vld [vmem:[#allocation3 + $0x130] sm:$0xff]
      %v5899 = vld [vmem:[#allocation3 + $0x138] sm:$0xff]
      %v5900 = vld [vmem:[#allocation3 + $0x140] sm:$0xff]
      %v5901 = vld [vmem:[#allocation3 + $0x148] sm:$0xff]
      %v5902 = vld [vmem:[#allocation3 + $0x150] sm:$0xff]
      %v5903 = vld [vmem:[#allocation3 + $0x158] sm:$0xff]
      %v5904 = vld [vmem:[#allocation3 + $0x160] sm:$0xff]
      %v5905 = vld [vmem:[#allocation3 + $0x168] sm:$0xff]
      %v5906 = vld [vmem:[#allocation3 + $0x170] sm:$0xff]
      %v5907 = vld [vmem:[#allocation3 + $0x178] sm:$0xff]
      %v5908 = vpack.c.bf16 %v5861, %v5860
      %v5909 = vpack.c.bf16 %v5863, %v5862
      %v5910 = vpack.c.bf16 %v5865, %v5864
      %v5911 = vpack.c.bf16 %v5867, %v5866
      %v5912 = vpack.c.bf16 %v5869, %v5868
      %v5913 = vpack.c.bf16 %v5871, %v5870
      %v5914 = vpack.c.bf16 %v5873, %v5872
      %v5915 = vpack.c.bf16 %v5875, %v5874
      %v5916 = vpack.c.bf16 %v5877, %v5876
      %v5917 = vpack.c.bf16 %v5879, %v5878
      %v5918 = vpack.c.bf16 %v5881, %v5880
      %v5919 = vpack.c.bf16 %v5883, %v5882
      %v5920 = vpack.c.bf16 %v5885, %v5884
      %v5921 = vpack.c.bf16 %v5887, %v5886
      %v5922 = vpack.c.bf16 %v5889, %v5888
      %v5923 = vpack.c.bf16 %v5891, %v5890
      %v5924 = vpack.c.bf16 %v5893, %v5892
      %v5925 = vpack.c.bf16 %v5895, %v5894
      %v5926 = vpack.c.bf16 %v5897, %v5896
      %v5927 = vpack.c.bf16 %v5899, %v5898
      %v5928 = vpack.c.bf16 %v5901, %v5900
      %v5929 = vpack.c.bf16 %v5903, %v5902
      %v5930 = vpack.c.bf16 %v5905, %v5904
      %v5931 = vpack.c.bf16 %v5907, %v5906
      %v5932 = vld [vmem:[%s3] sm:$0xf]
      %v5933 = vld [vmem:[%s3 + $0x4] sm:$0xf]
      %v5934 = vld [vmem:[%s3 + $0x8] sm:$0xf]
      %v5935 = vld [vmem:[%s3 + $0xc] sm:$0xf]
      %v5936 = vld [vmem:[#allocation3 + $0x1] sm:$0xff]
      %v5937 = vld [vmem:[#allocation3 + $0x9] sm:$0xff]
      %v5938 = vld [vmem:[#allocation3 + $0x11] sm:$0xff]
      %v5939 = vld [vmem:[#allocation3 + $0x19] sm:$0xff]
      %v5940 = vld [vmem:[#allocation3 + $0x21] sm:$0xff]
      %v5941 = vld [vmem:[#allocation3 + $0x29] sm:$0xff]
      %v5942 = vld [vmem:[#allocation3 + $0x31] sm:$0xff]
      %v5943 = vld [vmem:[#allocation3 + $0x39] sm:$0xff]
      %v5944 = vld [vmem:[#allocation3 + $0x41] sm:$0xff]
      %v5945 = vld [vmem:[#allocation3 + $0x49] sm:$0xff]
      %v5946 = vld [vmem:[#allocation3 + $0x51] sm:$0xff]
      %v5947 = vld [vmem:[#allocation3 + $0x59] sm:$0xff]
      %v5948 = vld [vmem:[#allocation3 + $0x61] sm:$0xff]
      %v5949 = vld [vmem:[#allocation3 + $0x69] sm:$0xff]
      %v5950 = vld [vmem:[#allocation3 + $0x71] sm:$0xff]
      %v5951 = vld [vmem:[#allocation3 + $0x79] sm:$0xff]
      %v5952 = vld [vmem:[#allocation3 + $0x81] sm:$0xff]
      %v5953 = vld [vmem:[#allocation3 + $0x89] sm:$0xff]
      %v5954 = vld [vmem:[#allocation3 + $0x91] sm:$0xff]
      %v5955 = vld [vmem:[#allocation3 + $0x99] sm:$0xff]
      %v5956 = vld [vmem:[#allocation3 + $0xa1] sm:$0xff]
      %v5957 = vld [vmem:[#allocation3 + $0xa9] sm:$0xff]
      %v5958 = vld [vmem:[#allocation3 + $0xb1] sm:$0xff]
      %v5959 = vld [vmem:[#allocation3 + $0xb9] sm:$0xff]
      %v5960 = vld [vmem:[#allocation3 + $0xc1] sm:$0xff]
      %v5961 = vld [vmem:[#allocation3 + $0xc9] sm:$0xff]
      %v5962 = vld [vmem:[#allocation3 + $0xd1] sm:$0xff]
      %v5963 = vld [vmem:[#allocation3 + $0xd9] sm:$0xff]
      %v5964 = vld [vmem:[#allocation3 + $0xe1] sm:$0xff]
      %v5965 = vld [vmem:[#allocation3 + $0xe9] sm:$0xff]
      %v5966 = vld [vmem:[#allocation3 + $0xf1] sm:$0xff]
      %v5967 = vld [vmem:[#allocation3 + $0xf9] sm:$0xff]
      %v5968 = vld [vmem:[#allocation3 + $0x101] sm:$0xff]
      %v5969 = vld [vmem:[#allocation3 + $0x109] sm:$0xff]
      %v5970 = vld [vmem:[#allocation3 + $0x111] sm:$0xff]
      %v5971 = vld [vmem:[#allocation3 + $0x119] sm:$0xff]
      %v5972 = vld [vmem:[#allocation3 + $0x121] sm:$0xff]
      %v5973 = vld [vmem:[#allocation3 + $0x129] sm:$0xff]
      %v5974 = vld [vmem:[#allocation3 + $0x131] sm:$0xff]
      %v5975 = vld [vmem:[#allocation3 + $0x139] sm:$0xff]
      %v5976 = vld [vmem:[#allocation3 + $0x141] sm:$0xff]
      %v5977 = vld [vmem:[#allocation3 + $0x149] sm:$0xff]
      %v5978 = vld [vmem:[#allocation3 + $0x151] sm:$0xff]
      %v5979 = vld [vmem:[#allocation3 + $0x159] sm:$0xff]
      %v5980 = vld [vmem:[#allocation3 + $0x161] sm:$0xff]
      %v5981 = vld [vmem:[#allocation3 + $0x169] sm:$0xff]
      %v5982 = vld [vmem:[#allocation3 + $0x171] sm:$0xff]
      %v5983 = vld [vmem:[#allocation3 + $0x179] sm:$0xff]
      %v5984 = vpack.c.bf16 %v5937, %v5936
      %v5985 = vpack.c.bf16 %v5939, %v5938
      %v5986 = vpack.c.bf16 %v5941, %v5940
      %v5987 = vpack.c.bf16 %v5943, %v5942
      %v5988 = vpack.c.bf16 %v5945, %v5944
      %v5989 = vpack.c.bf16 %v5947, %v5946
      %v5990 = vpack.c.bf16 %v5949, %v5948
      %v5991 = vpack.c.bf16 %v5951, %v5950
      %v5992 = vpack.c.bf16 %v5953, %v5952
      %v5993 = vpack.c.bf16 %v5955, %v5954
      %v5994 = vpack.c.bf16 %v5957, %v5956
      %v5995 = vpack.c.bf16 %v5959, %v5958
      %v5996 = vpack.c.bf16 %v5961, %v5960
      %v5997 = vpack.c.bf16 %v5963, %v5962
      %v5998 = vpack.c.bf16 %v5965, %v5964
      %v5999 = vpack.c.bf16 %v5967, %v5966
      %v6000 = vpack.c.bf16 %v5969, %v5968
      %v6001 = vpack.c.bf16 %v5971, %v5970
      %v6002 = vpack.c.bf16 %v5973, %v5972
      %v6003 = vpack.c.bf16 %v5975, %v5974
      %v6004 = vpack.c.bf16 %v5977, %v5976
      %v6005 = vpack.c.bf16 %v5979, %v5978
      %v6006 = vpack.c.bf16 %v5981, %v5980
      %v6007 = vpack.c.bf16 %v5983, %v5982
      %s6008 = scalar_lea.vmem %s3, 16
      %v6009 = vld [vmem:[%s6008] sm:$0xf]
      %v6010 = vld [vmem:[%s6008 + $0x4] sm:$0xf]
      %v6011 = vld [vmem:[%s6008 + $0x8] sm:$0xf]
      %v6012 = vld [vmem:[%s6008 + $0xc] sm:$0xf]
      %v6017 = vunpack.c.l.b16 %v6009
      %v6018 = vunpack.c.l.b16 %v6010
      %v6019 = vunpack.c.l.b16 %v6011
      %v6020 = vunpack.c.l.b16 %v6012
      %v6021 = vpack.c.b16 %v6018, %v6017
      %v6022 = vpack.c.b16 %v6020, %v6019
      %v6026 = vsel %vm966, %v5984, 0
      %v6029 = vsel %vm966, %v5985, 0
      %v6032 = vsel %vm966, %v5986, 0
      %v6035 = vsel %vm966, %v5987, 0
      %v6038 = vsel %vm966, %v5988, 0
      %v6041 = vsel %vm966, %v5989, 0
      %v6044 = vsel %vm966, %v5990, 0
      %v6047 = vsel %vm966, %v5991, 0
      %v6050 = vsel %vm966, %v5992, 0
      %v6053 = vsel %vm966, %v5993, 0
      %v6056 = vsel %vm966, %v5994, 0
      %v6059 = vsel %vm966, %v5995, 0
      %v6062 = vsel %vm966, %v5996, 0
      %v6065 = vsel %vm966, %v5997, 0
      %v6068 = vsel %vm966, %v5998, 0
      %v6071 = vsel %vm966, %v5999, 0
      %v6074 = vsel %vm966, %v6000, 0
      %v6077 = vsel %vm966, %v6001, 0
      %v6080 = vsel %vm966, %v6002, 0
      %v6083 = vsel %vm966, %v6003, 0
      %v6086 = vsel %vm966, %v6004, 0
      %v6089 = vsel %vm966, %v6005, 0
      %v6092 = vsel %vm966, %v6006, 0
      %v6095 = vsel %vm966, %v6007, 0
      %6097 = vmatprep.subr.bf16.mxu0 0
      %6098 = vmatpush1.bf16.msra.mxu0 %v6021
      %6099 = vmatprep.subr.bf16.mxu0 0
      %6100 = vmatpush1.bf16.msra.mxu0 %v6022
      %6101 = vmatprep.subr.bf16.mxu0 0
      %6102 = vmatpush1.bf16.msra.mxu0 0
      %6103 = vmatprep.subr.bf16.mxu0 0
      %6104 = vmatpush1.bf16.msra.mxu0 0
      %6105 = vmatprep.subr.bf16.mxu0 0
      %6106 = vmatpush1.bf16.msra.mxu0 0
      %6107 = vmatprep.subr.bf16.mxu0 0
      %6108 = vmatpush1.bf16.msra.mxu0 0
      %6109 = vmatprep.subr.bf16.mxu0 0
      %6110 = vmatpush1.bf16.msra.mxu0 0
      %6111 = vmatprep.subr.bf16.mxu0 0
      %6112 = vmatpush1.bf16.msra.mxu0 0
      %6113 = vmatprep.subr.bf16.mxu0 0
      %6114 = vmatpush1.bf16.msra.mxu0 0
      %6115 = vmatprep.subr.bf16.mxu0 0
      %6116 = vmatpush1.bf16.msra.mxu0 0
      %6117 = vmatprep.subr.bf16.mxu0 0
      %6118 = vmatpush1.bf16.msra.mxu0 0
      %6119 = vmatprep.subr.bf16.mxu0 0
      %6120 = vmatpush1.bf16.msra.mxu0 0
      %6121 = vmatprep.subr.bf16.mxu0 0
      %6122 = vmatpush1.bf16.msra.mxu0 0
      %6123 = vmatprep.subr.bf16.mxu0 0
      %6124 = vmatpush1.bf16.msra.mxu0 0
      %6125 = vmatprep.subr.bf16.mxu0 0
      %6126 = vmatpush1.bf16.msra.mxu0 0
      %6127 = vmatprep.subr.bf16.mxu0 0
      %6128 = vmatpush1.bf16.msra.mxu0 0
      %6129 = vmatprep.mubr.bf16.mxu0 0
      %6130 = vmatmul.mubr.bf16.gmra.mrb[0].mxu0 %v6026
      %v6131 = vpop.f32.mrb[0].mxu0
      %v6132 = vadd.f32 0.0, %v6131
      %v6133 = vpop.f32.mrb[0].mxu0
      %v6134 = vpop.f32.mrb[0].mxu0
      %v6135 = vadd.f32 0.0, %v6134
      %v6136 = vpop.f32.mrb[0].mxu0
      %6137 = vmatprep.mubr.bf16.mxu0 0
      %6138 = vmatmul.mubr.bf16.gmra.mrb[0].mxu0 %v6029
      %v6139 = vpop.f32.mrb[0].mxu0
      %v6140 = vadd.f32 0.0, %v6139
      %v6141 = vpop.f32.mrb[0].mxu0
      %v6142 = vpop.f32.mrb[0].mxu0
      %v6143 = vadd.f32 0.0, %v6142
      %v6144 = vpop.f32.mrb[0].mxu0
      %6145 = vmatprep.mubr.bf16.mxu0 0
      %6146 = vmatmul.mubr.bf16.gmra.mrb[0].mxu0 %v6032
      %v6147 = vpop.f32.mrb[0].mxu0
      %v6148 = vadd.f32 0.0, %v6147
      %v6149 = vpop.f32.mrb[0].mxu0
      %v6150 = vpop.f32.mrb[0].mxu0
      %v6151 = vadd.f32 0.0, %v6150
      %v6152 = vpop.f32.mrb[0].mxu0
      %6153 = vmatprep.mubr.bf16.mxu0 0
      %6154 = vmatmul.mubr.bf16.gmra.mrb[0].mxu0 %v6035
      %v6155 = vpop.f32.mrb[0].mxu0
      %v6156 = vadd.f32 0.0, %v6155
      %v6157 = vpop.f32.mrb[0].mxu0
      %v6158 = vpop.f32.mrb[0].mxu0
      %v6159 = vadd.f32 0.0, %v6158
      %v6160 = vpop.f32.mrb[0].mxu0
      %6161 = vmatprep.mubr.bf16.mxu0 0
      %6162 = vmatmul.mubr.bf16.gmra.mrb[0].mxu0 %v6038
      %v6163 = vpop.f32.mrb[0].mxu0
      %v6164 = vadd.f32 0.0, %v6163
      %v6165 = vpop.f32.mrb[0].mxu0
      %v6166 = vpop.f32.mrb[0].mxu0
      %v6167 = vadd.f32 0.0, %v6166
      %v6168 = vpop.f32.mrb[0].mxu0
      %6169 = vmatprep.mubr.bf16.mxu0 0
      %6170 = vmatmul.mubr.bf16.gmra.mrb[0].mxu0 %v6041
      %v6171 = vpop.f32.mrb[0].mxu0
      %v6172 = vadd.f32 0.0, %v6171
      %v6173 = vpop.f32.mrb[0].mxu0
      %v6174 = vpop.f32.mrb[0].mxu0
      %v6175 = vadd.f32 0.0, %v6174
      %v6176 = vpop.f32.mrb[0].mxu0
      %6177 = vmatprep.mubr.bf16.mxu0 0
      %6178 = vmatmul.mubr.bf16.gmra.mrb[0].mxu0 %v6044
      %v6179 = vpop.f32.mrb[0].mxu0
      %v6180 = vadd.f32 0.0, %v6179
      %v6181 = vpop.f32.mrb[0].mxu0
      %v6182 = vpop.f32.mrb[0].mxu0
      %v6183 = vadd.f32 0.0, %v6182
      %v6184 = vpop.f32.mrb[0].mxu0
      %6185 = vmatprep.mubr.bf16.mxu0 0
      %6186 = vmatmul.mubr.bf16.gmra.mrb[0].mxu0 %v6047
      %v6187 = vpop.f32.mrb[0].mxu0
      %v6188 = vadd.f32 0.0, %v6187
      %v6189 = vpop.f32.mrb[0].mxu0
      %v6190 = vpop.f32.mrb[0].mxu0
      %v6191 = vadd.f32 0.0, %v6190
      %v6192 = vpop.f32.mrb[0].mxu0
      %6193 = vmatprep.mubr.bf16.mxu0 0
      %6194 = vmatmul.mubr.bf16.gmra.mrb[0].mxu0 %v6050
      %v6195 = vpop.f32.mrb[0].mxu0
      %v6196 = vadd.f32 0.0, %v6195
      %v6197 = vpop.f32.mrb[0].mxu0
      %v6198 = vpop.f32.mrb[0].mxu0
      %v6199 = vadd.f32 0.0, %v6198
      %v6200 = vpop.f32.mrb[0].mxu0
      %6201 = vmatprep.mubr.bf16.mxu0 0
      %6202 = vmatmul.mubr.bf16.gmra.mrb[0].mxu0 %v6053
      %v6203 = vpop.f32.mrb[0].mxu0
      %v6204 = vadd.f32 0.0, %v6203
      %v6205 = vpop.f32.mrb[0].mxu0
      %v6206 = vpop.f32.mrb[0].mxu0
      %v6207 = vadd.f32 0.0, %v6206
      %v6208 = vpop.f32.mrb[0].mxu0
      %6209 = vmatprep.mubr.bf16.mxu0 0
      %6210 = vmatmul.mubr.bf16.gmra.mrb[0].mxu0 %v6056
      %v6211 = vpop.f32.mrb[0].mxu0
      %v6212 = vadd.f32 0.0, %v6211
      %v6213 = vpop.f32.mrb[0].mxu0
      %v6214 = vpop.f32.mrb[0].mxu0
      %v6215 = vadd.f32 0.0, %v6214
      %v6216 = vpop.f32.mrb[0].mxu0
      %6217 = vmatprep.mubr.bf16.mxu0 0
      %6218 = vmatmul.mubr.bf16.gmra.mrb[0].mxu0 %v6059
      %v6219 = vpop.f32.mrb[0].mxu0
      %v6220 = vadd.f32 0.0, %v6219
      %v6221 = vpop.f32.mrb[0].mxu0
      %v6222 = vpop.f32.mrb[0].mxu0
      %v6223 = vadd.f32 0.0, %v6222
      %v6224 = vpop.f32.mrb[0].mxu0
      %6225 = vmatprep.mubr.bf16.mxu0 0
      %6226 = vmatmul.mubr.bf16.gmra.mrb[0].mxu0 %v6062
      %v6227 = vpop.f32.mrb[0].mxu0
      %v6228 = vadd.f32 0.0, %v6227
      %v6229 = vpop.f32.mrb[0].mxu0
      %v6230 = vpop.f32.mrb[0].mxu0
      %v6231 = vadd.f32 0.0, %v6230
      %v6232 = vpop.f32.mrb[0].mxu0
      %6233 = vmatprep.mubr.bf16.mxu0 0
      %6234 = vmatmul.mubr.bf16.gmra.mrb[0].mxu0 %v6065
      %v6235 = vpop.f32.mrb[0].mxu0
      %v6236 = vadd.f32 0.0, %v6235
      %v6237 = vpop.f32.mrb[0].mxu0
      %v6238 = vpop.f32.mrb[0].mxu0
      %v6239 = vadd.f32 0.0, %v6238
      %v6240 = vpop.f32.mrb[0].mxu0
      %6241 = vmatprep.mubr.bf16.mxu0 0
      %6242 = vmatmul.mubr.bf16.gmra.mrb[0].mxu0 %v6068
      %v6243 = vpop.f32.mrb[0].mxu0
      %v6244 = vadd.f32 0.0, %v6243
      %v6245 = vpop.f32.mrb[0].mxu0
      %v6246 = vpop.f32.mrb[0].mxu0
      %v6247 = vadd.f32 0.0, %v6246
      %v6248 = vpop.f32.mrb[0].mxu0
      %6249 = vmatprep.mubr.bf16.mxu0 0
      %6250 = vmatmul.mubr.bf16.gmra.mrb[0].mxu0 %v6071
      %v6251 = vpop.f32.mrb[0].mxu0
      %v6252 = vadd.f32 0.0, %v6251
      %v6253 = vpop.f32.mrb[0].mxu0
      %v6254 = vpop.f32.mrb[0].mxu0
      %v6255 = vadd.f32 0.0, %v6254
      %v6256 = vpop.f32.mrb[0].mxu0
      %6257 = vmatprep.mubr.bf16.mxu0 0
      %6258 = vmatmul.mubr.bf16.gmra.mrb[0].mxu0 %v6074
      %v6259 = vpop.f32.mrb[0].mxu0
      %v6260 = vadd.f32 0.0, %v6259
      %v6261 = vpop.f32.mrb[0].mxu0
      %v6262 = vpop.f32.mrb[0].mxu0
      %v6263 = vadd.f32 0.0, %v6262
      %v6264 = vpop.f32.mrb[0].mxu0
      %6265 = vmatprep.mubr.bf16.mxu0 0
      %6266 = vmatmul.mubr.bf16.gmra.mrb[0].mxu0 %v6077
      %v6267 = vpop.f32.mrb[0].mxu0
      %v6268 = vadd.f32 0.0, %v6267
      %v6269 = vpop.f32.mrb[0].mxu0
      %v6270 = vpop.f32.mrb[0].mxu0
      %v6271 = vadd.f32 0.0, %v6270
      %v6272 = vpop.f32.mrb[0].mxu0
      %6273 = vmatprep.mubr.bf16.mxu0 0
      %6274 = vmatmul.mubr.bf16.gmra.mrb[0].mxu0 %v6080
      %v6275 = vpop.f32.mrb[0].mxu0
      %v6276 = vadd.f32 0.0, %v6275
      %v6277 = vpop.f32.mrb[0].mxu0
      %v6278 = vpop.f32.mrb[0].mxu0
      %v6279 = vadd.f32 0.0, %v6278
      %v6280 = vpop.f32.mrb[0].mxu0
      %6281 = vmatprep.mubr.bf16.mxu0 0
      %6282 = vmatmul.mubr.bf16.gmra.mrb[0].mxu0 %v6083
      %v6283 = vpop.f32.mrb[0].mxu0
      %v6284 = vadd.f32 0.0, %v6283
      %v6285 = vpop.f32.mrb[0].mxu0
      %v6286 = vpop.f32.mrb[0].mxu0
      %v6287 = vadd.f32 0.0, %v6286
      %v6288 = vpop.f32.mrb[0].mxu0
      %6289 = vmatprep.mubr.bf16.mxu0 0
      %6290 = vmatmul.mubr.bf16.gmra.mrb[0].mxu0 %v6086
      %v6291 = vpop.f32.mrb[0].mxu0
      %v6292 = vadd.f32 0.0, %v6291
      %v6293 = vpop.f32.mrb[0].mxu0
      %v6294 = vpop.f32.mrb[0].mxu0
      %v6295 = vadd.f32 0.0, %v6294
      %v6296 = vpop.f32.mrb[0].mxu0
      %6297 = vmatprep.mubr.bf16.mxu0 0
      %6298 = vmatmul.mubr.bf16.gmra.mrb[0].mxu0 %v6089
      %v6299 = vpop.f32.mrb[0].mxu0
      %v6300 = vadd.f32 0.0, %v6299
      %v6301 = vpop.f32.mrb[0].mxu0
      %v6302 = vpop.f32.mrb[0].mxu0
      %v6303 = vadd.f32 0.0, %v6302
      %v6304 = vpop.f32.mrb[0].mxu0
      %6305 = vmatprep.mubr.bf16.mxu0 0
      %6306 = vmatmul.mubr.bf16.gmra.mrb[0].mxu0 %v6092
      %v6307 = vpop.f32.mrb[0].mxu0
      %v6308 = vadd.f32 0.0, %v6307
      %v6309 = vpop.f32.mrb[0].mxu0
      %v6310 = vpop.f32.mrb[0].mxu0
      %v6311 = vadd.f32 0.0, %v6310
      %v6312 = vpop.f32.mrb[0].mxu0
      %6313 = vmatprep.mubr.bf16.mxu0 0
      %6314 = vmatmul.mubr.bf16.gmra.mrb[0].mxu0 %v6095
      %v6315 = vpop.f32.mrb[0].mxu0
      %v6316 = vadd.f32 0.0, %v6315
      %v6317 = vpop.f32.mrb[0].mxu0
      %v6318 = vpop.f32.mrb[0].mxu0
      %v6319 = vadd.f32 0.0, %v6318
      %v6320 = vpop.f32.mrb[0].mxu0
      %6321 = vdwg.mxu0
      %v6326 = vunpack.c.l.b16 %v5932
      %v6327 = vunpack.c.l.b16 %v5933
      %v6328 = vunpack.c.l.b16 %v5934
      %v6329 = vunpack.c.l.b16 %v5935
      %v6330 = vpack.c.b16 %v6327, %v6326
      %v6331 = vpack.c.b16 %v6329, %v6328
      %v6335 = vsel %vm966, %v5908, 0
      %v6338 = vsel %vm966, %v5909, 0
      %v6341 = vsel %vm966, %v5910, 0
      %v6344 = vsel %vm966, %v5911, 0
      %v6347 = vsel %vm966, %v5912, 0
      %v6350 = vsel %vm966, %v5913, 0
      %v6353 = vsel %vm966, %v5914, 0
      %v6356 = vsel %vm966, %v5915, 0
      %v6359 = vsel %vm966, %v5916, 0
      %v6362 = vsel %vm966, %v5917, 0
      %v6365 = vsel %vm966, %v5918, 0
      %v6368 = vsel %vm966, %v5919, 0
      %v6371 = vsel %vm966, %v5920, 0
      %v6374 = vsel %vm966, %v5921, 0
      %v6377 = vsel %vm966, %v5922, 0
      %v6380 = vsel %vm966, %v5923, 0
      %v6383 = vsel %vm966, %v5924, 0
      %v6386 = vsel %vm966, %v5925, 0
      %v6389 = vsel %vm966, %v5926, 0
      %v6392 = vsel %vm966, %v5927, 0
      %v6395 = vsel %vm966, %v5928, 0
      %v6398 = vsel %vm966, %v5929, 0
      %v6401 = vsel %vm966, %v5930, 0
      %v6404 = vsel %vm966, %v5931, 0
      %6406 = vmatprep.subr.bf16.mxu0 0
      %6407 = vmatpush1.bf16.msra.mxu0 %v6330
      %6408 = vmatprep.subr.bf16.mxu0 0
      %6409 = vmatpush1.bf16.msra.mxu0 %v6331
      %6410 = vmatprep.subr.bf16.mxu0 0
      %6411 = vmatpush1.bf16.msra.mxu0 0
      %6412 = vmatprep.subr.bf16.mxu0 0
      %6413 = vmatpush1.bf16.msra.mxu0 0
      %6414 = vmatprep.subr.bf16.mxu0 0
      %6415 = vmatpush1.bf16.msra.mxu0 0
      %6416 = vmatprep.subr.bf16.mxu0 0
      %6417 = vmatpush1.bf16.msra.mxu0 0
      %6418 = vmatprep.subr.bf16.mxu0 0
      %6419 = vmatpush1.bf16.msra.mxu0 0
      %6420 = vmatprep.subr.bf16.mxu0 0
      %6421 = vmatpush1.bf16.msra.mxu0 0
      %6422 = vmatprep.subr.bf16.mxu0 0
      %6423 = vmatpush1.bf16.msra.mxu0 0
      %6424 = vmatprep.subr.bf16.mxu0 0
      %6425 = vmatpush1.bf16.msra.mxu0 0
      %6426 = vmatprep.subr.bf16.mxu0 0
      %6427 = vmatpush1.bf16.msra.mxu0 0
      %6428 = vmatprep.subr.bf16.mxu0 0
      %6429 = vmatpush1.bf16.msra.mxu0 0
      %6430 = vmatprep.subr.bf16.mxu0 0
      %6431 = vmatpush1.bf16.msra.mxu0 0
      %6432 = vmatprep.subr.bf16.mxu0 0
      %6433 = vmatpush1.bf16.msra.mxu0 0
      %6434 = vmatprep.subr.bf16.mxu0 0
      %6435 = vmatpush1.bf16.msra.mxu0 0
      %6436 = vmatprep.subr.bf16.mxu0 0
      %6437 = vmatpush1.bf16.msra.mxu0 0
      %6438 = vmatprep.mubr.bf16.mxu0 0
      %6439 = vmatmul.mubr.bf16.gmra.mrb[0].mxu0 %v6335
      %v6440 = vpop.f32.mrb[0].mxu0
      %v6441 = vadd.f32 %v6132, %v6440
      %v6442 = vpop.f32.mrb[0].mxu0
      %v6443 = vpop.f32.mrb[0].mxu0
      %v6444 = vadd.f32 %v6135, %v6443
      %v6445 = vpop.f32.mrb[0].mxu0
      %6446 = vmatprep.mubr.bf16.mxu0 0
      %6447 = vmatmul.mubr.bf16.gmra.mrb[0].mxu0 %v6338
      %v6448 = vpop.f32.mrb[0].mxu0
      %v6449 = vadd.f32 %v6140, %v6448
      %v6450 = vpop.f32.mrb[0].mxu0
      %v6451 = vpop.f32.mrb[0].mxu0
      %v6452 = vadd.f32 %v6143, %v6451
      %v6453 = vpop.f32.mrb[0].mxu0
      %6454 = vmatprep.mubr.bf16.mxu0 0
      %6455 = vmatmul.mubr.bf16.gmra.mrb[0].mxu0 %v6341
      %v6456 = vpop.f32.mrb[0].mxu0
      %v6457 = vadd.f32 %v6148, %v6456
      %v6458 = vpop.f32.mrb[0].mxu0
      %v6459 = vpop.f32.mrb[0].mxu0
      %v6460 = vadd.f32 %v6151, %v6459
      %v6461 = vpop.f32.mrb[0].mxu0
      %6462 = vmatprep.mubr.bf16.mxu0 0
      %6463 = vmatmul.mubr.bf16.gmra.mrb[0].mxu0 %v6344
      %v6464 = vpop.f32.mrb[0].mxu0
      %v6465 = vadd.f32 %v6156, %v6464
      %v6466 = vpop.f32.mrb[0].mxu0
      %v6467 = vpop.f32.mrb[0].mxu0
      %v6468 = vadd.f32 %v6159, %v6467
      %v6469 = vpop.f32.mrb[0].mxu0
      %6470 = vmatprep.mubr.bf16.mxu0 0
      %6471 = vmatmul.mubr.bf16.gmra.mrb[0].mxu0 %v6347
      %v6472 = vpop.f32.mrb[0].mxu0
      %v6473 = vadd.f32 %v6164, %v6472
      %v6474 = vpop.f32.mrb[0].mxu0
      %v6475 = vpop.f32.mrb[0].mxu0
      %v6476 = vadd.f32 %v6167, %v6475
      %v6477 = vpop.f32.mrb[0].mxu0
      %6478 = vmatprep.mubr.bf16.mxu0 0
      %6479 = vmatmul.mubr.bf16.gmra.mrb[0].mxu0 %v6350
      %v6480 = vpop.f32.mrb[0].mxu0
      %v6481 = vadd.f32 %v6172, %v6480
      %v6482 = vpop.f32.mrb[0].mxu0
      %v6483 = vpop.f32.mrb[0].mxu0
      %v6484 = vadd.f32 %v6175, %v6483
      %v6485 = vpop.f32.mrb[0].mxu0
      %6486 = vmatprep.mubr.bf16.mxu0 0
      %6487 = vmatmul.mubr.bf16.gmra.mrb[0].mxu0 %v6353
      %v6488 = vpop.f32.mrb[0].mxu0
      %v6489 = vadd.f32 %v6180, %v6488
      %v6490 = vpop.f32.mrb[0].mxu0
      %v6491 = vpop.f32.mrb[0].mxu0
      %v6492 = vadd.f32 %v6183, %v6491
      %v6493 = vpop.f32.mrb[0].mxu0
      %6494 = vmatprep.mubr.bf16.mxu0 0
      %6495 = vmatmul.mubr.bf16.gmra.mrb[0].mxu0 %v6356
      %v6496 = vpop.f32.mrb[0].mxu0
      %v6497 = vadd.f32 %v6188, %v6496
      %v6498 = vpop.f32.mrb[0].mxu0
      %v6499 = vpop.f32.mrb[0].mxu0
      %v6500 = vadd.f32 %v6191, %v6499
      %v6501 = vpop.f32.mrb[0].mxu0
      %6502 = vmatprep.mubr.bf16.mxu0 0
      %6503 = vmatmul.mubr.bf16.gmra.mrb[0].mxu0 %v6359
      %v6504 = vpop.f32.mrb[0].mxu0
      %v6505 = vadd.f32 %v6196, %v6504
      %v6506 = vpop.f32.mrb[0].mxu0
      %v6507 = vpop.f32.mrb[0].mxu0
      %v6508 = vadd.f32 %v6199, %v6507
      %v6509 = vpop.f32.mrb[0].mxu0
      %6510 = vmatprep.mubr.bf16.mxu0 0
      %6511 = vmatmul.mubr.bf16.gmra.mrb[0].mxu0 %v6362
      %v6512 = vpop.f32.mrb[0].mxu0
      %v6513 = vadd.f32 %v6204, %v6512
      %v6514 = vpop.f32.mrb[0].mxu0
      %v6515 = vpop.f32.mrb[0].mxu0
      %v6516 = vadd.f32 %v6207, %v6515
      %v6517 = vpop.f32.mrb[0].mxu0
      %6518 = vmatprep.mubr.bf16.mxu0 0
      %6519 = vmatmul.mubr.bf16.gmra.mrb[0].mxu0 %v6365
      %v6520 = vpop.f32.mrb[0].mxu0
      %v6521 = vadd.f32 %v6212, %v6520
      %v6522 = vpop.f32.mrb[0].mxu0
      %v6523 = vpop.f32.mrb[0].mxu0
      %v6524 = vadd.f32 %v6215, %v6523
      %v6525 = vpop.f32.mrb[0].mxu0
      %6526 = vmatprep.mubr.bf16.mxu0 0
      %6527 = vmatmul.mubr.bf16.gmra.mrb[0].mxu0 %v6368
      %v6528 = vpop.f32.mrb[0].mxu0
      %v6529 = vadd.f32 %v6220, %v6528
      %v6530 = vpop.f32.mrb[0].mxu0
      %v6531 = vpop.f32.mrb[0].mxu0
      %v6532 = vadd.f32 %v6223, %v6531
      %v6533 = vpop.f32.mrb[0].mxu0
      %6534 = vmatprep.mubr.bf16.mxu0 0
      %6535 = vmatmul.mubr.bf16.gmra.mrb[0].mxu0 %v6371
      %v6536 = vpop.f32.mrb[0].mxu0
      %v6537 = vadd.f32 %v6228, %v6536
      %v6538 = vpop.f32.mrb[0].mxu0
      %v6539 = vpop.f32.mrb[0].mxu0
      %v6540 = vadd.f32 %v6231, %v6539
      %v6541 = vpop.f32.mrb[0].mxu0
      %6542 = vmatprep.mubr.bf16.mxu0 0
      %6543 = vmatmul.mubr.bf16.gmra.mrb[0].mxu0 %v6374
      %v6544 = vpop.f32.mrb[0].mxu0
      %v6545 = vadd.f32 %v6236, %v6544
      %v6546 = vpop.f32.mrb[0].mxu0
      %v6547 = vpop.f32.mrb[0].mxu0
      %v6548 = vadd.f32 %v6239, %v6547
      %v6549 = vpop.f32.mrb[0].mxu0
      %6550 = vmatprep.mubr.bf16.mxu0 0
      %6551 = vmatmul.mubr.bf16.gmra.mrb[0].mxu0 %v6377
      %v6552 = vpop.f32.mrb[0].mxu0
      %v6553 = vadd.f32 %v6244, %v6552
      %v6554 = vpop.f32.mrb[0].mxu0
      %v6555 = vpop.f32.mrb[0].mxu0
      %v6556 = vadd.f32 %v6247, %v6555
      %v6557 = vpop.f32.mrb[0].mxu0
      %6558 = vmatprep.mubr.bf16.mxu0 0
      %6559 = vmatmul.mubr.bf16.gmra.mrb[0].mxu0 %v6380
      %v6560 = vpop.f32.mrb[0].mxu0
      %v6561 = vadd.f32 %v6252, %v6560
      %v6562 = vpop.f32.mrb[0].mxu0
      %v6563 = vpop.f32.mrb[0].mxu0
      %v6564 = vadd.f32 %v6255, %v6563
      %v6565 = vpop.f32.mrb[0].mxu0
      %6566 = vmatprep.mubr.bf16.mxu0 0
      %6567 = vmatmul.mubr.bf16.gmra.mrb[0].mxu0 %v6383
      %v6568 = vpop.f32.mrb[0].mxu0
      %v6569 = vadd.f32 %v6260, %v6568
      %v6570 = vpop.f32.mrb[0].mxu0
      %v6571 = vpop.f32.mrb[0].mxu0
      %v6572 = vadd.f32 %v6263, %v6571
      %v6573 = vpop.f32.mrb[0].mxu0
      %6574 = vmatprep.mubr.bf16.mxu0 0
      %6575 = vmatmul.mubr.bf16.gmra.mrb[0].mxu0 %v6386
      %v6576 = vpop.f32.mrb[0].mxu0
      %v6577 = vadd.f32 %v6268, %v6576
      %v6578 = vpop.f32.mrb[0].mxu0
      %v6579 = vpop.f32.mrb[0].mxu0
      %v6580 = vadd.f32 %v6271, %v6579
      %v6581 = vpop.f32.mrb[0].mxu0
      %6582 = vmatprep.mubr.bf16.mxu0 0
      %6583 = vmatmul.mubr.bf16.gmra.mrb[0].mxu0 %v6389
      %v6584 = vpop.f32.mrb[0].mxu0
      %v6585 = vadd.f32 %v6276, %v6584
      %v6586 = vpop.f32.mrb[0].mxu0
      %v6587 = vpop.f32.mrb[0].mxu0
      %v6588 = vadd.f32 %v6279, %v6587
      %v6589 = vpop.f32.mrb[0].mxu0
      %6590 = vmatprep.mubr.bf16.mxu0 0
      %6591 = vmatmul.mubr.bf16.gmra.mrb[0].mxu0 %v6392
      %v6592 = vpop.f32.mrb[0].mxu0
      %v6593 = vadd.f32 %v6284, %v6592
      %v6594 = vpop.f32.mrb[0].mxu0
      %v6595 = vpop.f32.mrb[0].mxu0
      %v6596 = vadd.f32 %v6287, %v6595
      %v6597 = vpop.f32.mrb[0].mxu0
      %6598 = vmatprep.mubr.bf16.mxu0 0
      %6599 = vmatmul.mubr.bf16.gmra.mrb[0].mxu0 %v6395
      %v6600 = vpop.f32.mrb[0].mxu0
      %v6601 = vadd.f32 %v6292, %v6600
      %v6602 = vpop.f32.mrb[0].mxu0
      %v6603 = vpop.f32.mrb[0].mxu0
      %v6604 = vadd.f32 %v6295, %v6603
      %v6605 = vpop.f32.mrb[0].mxu0
      %6606 = vmatprep.mubr.bf16.mxu0 0
      %6607 = vmatmul.mubr.bf16.gmra.mrb[0].mxu0 %v6398
      %v6608 = vpop.f32.mrb[0].mxu0
      %v6609 = vadd.f32 %v6300, %v6608
      %v6610 = vpop.f32.mrb[0].mxu0
      %v6611 = vpop.f32.mrb[0].mxu0
      %v6612 = vadd.f32 %v6303, %v6611
      %v6613 = vpop.f32.mrb[0].mxu0
      %6614 = vmatprep.mubr.bf16.mxu0 0
      %6615 = vmatmul.mubr.bf16.gmra.mrb[0].mxu0 %v6401
      %v6616 = vpop.f32.mrb[0].mxu0
      %v6617 = vadd.f32 %v6308, %v6616
      %v6618 = vpop.f32.mrb[0].mxu0
      %v6619 = vpop.f32.mrb[0].mxu0
      %v6620 = vadd.f32 %v6311, %v6619
      %v6621 = vpop.f32.mrb[0].mxu0
      %6622 = vmatprep.mubr.bf16.mxu0 0
      %6623 = vmatmul.mubr.bf16.gmra.mrb[0].mxu0 %v6404
      %v6624 = vpop.f32.mrb[0].mxu0
      %v6625 = vadd.f32 %v6316, %v6624
      %v6626 = vpop.f32.mrb[0].mxu0
      %v6627 = vpop.f32.mrb[0].mxu0
      %v6628 = vadd.f32 %v6319, %v6627
      %v6629 = vpop.f32.mrb[0].mxu0
      %6630 = vdwg.mxu0
      %v6631 = vld [vmem:[#allocation3 + $0x2] sm:$0xff]
      %v6632 = vld [vmem:[#allocation3 + $0xa] sm:$0xff]
      %v6633 = vld [vmem:[#allocation3 + $0x12] sm:$0xff]
      %v6634 = vld [vmem:[#allocation3 + $0x1a] sm:$0xff]
      %v6635 = vld [vmem:[#allocation3 + $0x22] sm:$0xff]
      %v6636 = vld [vmem:[#allocation3 + $0x2a] sm:$0xff]
      %v6637 = vld [vmem:[#allocation3 + $0x32] sm:$0xff]
      %v6638 = vld [vmem:[#allocation3 + $0x3a] sm:$0xff]
      %v6639 = vld [vmem:[#allocation3 + $0x42] sm:$0xff]
      %v6640 = vld [vmem:[#allocation3 + $0x4a] sm:$0xff]
      %v6641 = vld [vmem:[#allocation3 + $0x52] sm:$0xff]
      %v6642 = vld [vmem:[#allocation3 + $0x5a] sm:$0xff]
      %v6643 = vld [vmem:[#allocation3 + $0x62] sm:$0xff]
      %v6644 = vld [vmem:[#allocation3 + $0x6a] sm:$0xff]
      %v6645 = vld [vmem:[#allocation3 + $0x72] sm:$0xff]
      %v6646 = vld [vmem:[#allocation3 + $0x7a] sm:$0xff]
      %v6647 = vld [vmem:[#allocation3 + $0x82] sm:$0xff]
      %v6648 = vld [vmem:[#allocation3 + $0x8a] sm:$0xff]
      %v6649 = vld [vmem:[#allocation3 + $0x92] sm:$0xff]
      %v6650 = vld [vmem:[#allocation3 + $0x9a] sm:$0xff]
      %v6651 = vld [vmem:[#allocation3 + $0xa2] sm:$0xff]
      %v6652 = vld [vmem:[#allocation3 + $0xaa] sm:$0xff]
      %v6653 = vld [vmem:[#allocation3 + $0xb2] sm:$0xff]
      %v6654 = vld [vmem:[#allocation3 + $0xba] sm:$0xff]
      %v6655 = vld [vmem:[#allocation3 + $0xc2] sm:$0xff]
      %v6656 = vld [vmem:[#allocation3 + $0xca] sm:$0xff]
      %v6657 = vld [vmem:[#allocation3 + $0xd2] sm:$0xff]
      %v6658 = vld [vmem:[#allocation3 + $0xda] sm:$0xff]
      %v6659 = vld [vmem:[#allocation3 + $0xe2] sm:$0xff]
      %v6660 = vld [vmem:[#allocation3 + $0xea] sm:$0xff]
      %v6661 = vld [vmem:[#allocation3 + $0xf2] sm:$0xff]
      %v6662 = vld [vmem:[#allocation3 + $0xfa] sm:$0xff]
      %v6663 = vld [vmem:[#allocation3 + $0x102] sm:$0xff]
      %v6664 = vld [vmem:[#allocation3 + $0x10a] sm:$0xff]
      %v6665 = vld [vmem:[#allocation3 + $0x112] sm:$0xff]
      %v6666 = vld [vmem:[#allocation3 + $0x11a] sm:$0xff]
      %v6667 = vld [vmem:[#allocation3 + $0x122] sm:$0xff]
      %v6668 = vld [vmem:[#allocation3 + $0x12a] sm:$0xff]
      %v6669 = vld [vmem:[#allocation3 + $0x132] sm:$0xff]
      %v6670 = vld [vmem:[#allocation3 + $0x13a] sm:$0xff]
      %v6671 = vld [vmem:[#allocation3 + $0x142] sm:$0xff]
      %v6672 = vld [vmem:[#allocation3 + $0x14a] sm:$0xff]
      %v6673 = vld [vmem:[#allocation3 + $0x152] sm:$0xff]
      %v6674 = vld [vmem:[#allocation3 + $0x15a] sm:$0xff]
      %v6675 = vld [vmem:[#allocation3 + $0x162] sm:$0xff]
      %v6676 = vld [vmem:[#allocation3 + $0x16a] sm:$0xff]
      %v6677 = vld [vmem:[#allocation3 + $0x172] sm:$0xff]
      %v6678 = vld [vmem:[#allocation3 + $0x17a] sm:$0xff]
      %v6679 = vpack.c.bf16 %v6632, %v6631
      %v6680 = vpack.c.bf16 %v6634, %v6633
      %v6681 = vpack.c.bf16 %v6636, %v6635
      %v6682 = vpack.c.bf16 %v6638, %v6637
      %v6683 = vpack.c.bf16 %v6640, %v6639
      %v6684 = vpack.c.bf16 %v6642, %v6641
      %v6685 = vpack.c.bf16 %v6644, %v6643
      %v6686 = vpack.c.bf16 %v6646, %v6645
      %v6687 = vpack.c.bf16 %v6648, %v6647
      %v6688 = vpack.c.bf16 %v6650, %v6649
      %v6689 = vpack.c.bf16 %v6652, %v6651
      %v6690 = vpack.c.bf16 %v6654, %v6653
      %v6691 = vpack.c.bf16 %v6656, %v6655
      %v6692 = vpack.c.bf16 %v6658, %v6657
      %v6693 = vpack.c.bf16 %v6660, %v6659
      %v6694 = vpack.c.bf16 %v6662, %v6661
      %v6695 = vpack.c.bf16 %v6664, %v6663
      %v6696 = vpack.c.bf16 %v6666, %v6665
      %v6697 = vpack.c.bf16 %v6668, %v6667
      %v6698 = vpack.c.bf16 %v6670, %v6669
      %v6699 = vpack.c.bf16 %v6672, %v6671
      %v6700 = vpack.c.bf16 %v6674, %v6673
      %v6701 = vpack.c.bf16 %v6676, %v6675
      %v6702 = vpack.c.bf16 %v6678, %v6677
      %s6703 = scalar_lea.vmem %s3, 32
      %v6704 = vld [vmem:[%s6703] sm:$0xf]
      %v6705 = vld [vmem:[%s6703 + $0x4] sm:$0xf]
      %v6706 = vld [vmem:[%s6703 + $0x8] sm:$0xf]
      %v6707 = vld [vmem:[%s6703 + $0xc] sm:$0xf]
      %v6712 = vunpack.c.l.b16 %v6704
      %v6713 = vunpack.c.l.b16 %v6705
      %v6714 = vunpack.c.l.b16 %v6706
      %v6715 = vunpack.c.l.b16 %v6707
      %v6716 = vpack.c.b16 %v6713, %v6712
      %v6717 = vpack.c.b16 %v6715, %v6714
      %v6721 = vsel %vm966, %v6679, 0
      %v6724 = vsel %vm966, %v6680, 0
      %v6727 = vsel %vm966, %v6681, 0
      %v6730 = vsel %vm966, %v6682, 0
      %v6733 = vsel %vm966, %v6683, 0
      %v6736 = vsel %vm966, %v6684, 0
      %v6739 = vsel %vm966, %v6685, 0
      %v6742 = vsel %vm966, %v6686, 0
      %v6745 = vsel %vm966, %v6687, 0
      %v6748 = vsel %vm966, %v6688, 0
      %v6751 = vsel %vm966, %v6689, 0
      %v6754 = vsel %vm966, %v6690, 0
      %v6757 = vsel %vm966, %v6691, 0
      %v6760 = vsel %vm966, %v6692, 0
      %v6763 = vsel %vm966, %v6693, 0
      %v6766 = vsel %vm966, %v6694, 0
      %v6769 = vsel %vm966, %v6695, 0
      %v6772 = vsel %vm966, %v6696, 0
      %v6775 = vsel %vm966, %v6697, 0
      %v6778 = vsel %vm966, %v6698, 0
      %v6781 = vsel %vm966, %v6699, 0
      %v6784 = vsel %vm966, %v6700, 0
      %v6787 = vsel %vm966, %v6701, 0
      %v6790 = vsel %vm966, %v6702, 0
      %6792 = vmatprep.subr.bf16.mxu0 0
      %6793 = vmatpush1.bf16.msra.mxu0 %v6716
      %6794 = vmatprep.subr.bf16.mxu0 0
      %6795 = vmatpush1.bf16.msra.mxu0 %v6717
      %6796 = vmatprep.subr.bf16.mxu0 0
      %6797 = vmatpush1.bf16.msra.mxu0 0
      %6798 = vmatprep.subr.bf16.mxu0 0
      %6799 = vmatpush1.bf16.msra.mxu0 0
      %6800 = vmatprep.subr.bf16.mxu0 0
      %6801 = vmatpush1.bf16.msra.mxu0 0
      %6802 = vmatprep.subr.bf16.mxu0 0
      %6803 = vmatpush1.bf16.msra.mxu0 0
      %6804 = vmatprep.subr.bf16.mxu0 0
      %6805 = vmatpush1.bf16.msra.mxu0 0
      %6806 = vmatprep.subr.bf16.mxu0 0
      %6807 = vmatpush1.bf16.msra.mxu0 0
      %6808 = vmatprep.subr.bf16.mxu0 0
      %6809 = vmatpush1.bf16.msra.mxu0 0
      %6810 = vmatprep.subr.bf16.mxu0 0
      %6811 = vmatpush1.bf16.msra.mxu0 0
      %6812 = vmatprep.subr.bf16.mxu0 0
      %6813 = vmatpush1.bf16.msra.mxu0 0
      %6814 = vmatprep.subr.bf16.mxu0 0
      %6815 = vmatpush1.bf16.msra.mxu0 0
      %6816 = vmatprep.subr.bf16.mxu0 0
      %6817 = vmatpush1.bf16.msra.mxu0 0
      %6818 = vmatprep.subr.bf16.mxu0 0
      %6819 = vmatpush1.bf16.msra.mxu0 0
      %6820 = vmatprep.subr.bf16.mxu0 0
      %6821 = vmatpush1.bf16.msra.mxu0 0
      %6822 = vmatprep.subr.bf16.mxu0 0
      %6823 = vmatpush1.bf16.msra.mxu0 0
      %6824 = vmatprep.mubr.bf16.mxu0 0
      %6825 = vmatmul.mubr.bf16.gmra.mrb[0].mxu0 %v6721
      %v6826 = vpop.f32.mrb[0].mxu0
      %v6827 = vadd.f32 0.0, %v6826
      %v6828 = vpop.f32.mrb[0].mxu0
      %v6829 = vpop.f32.mrb[0].mxu0
      %v6830 = vadd.f32 0.0, %v6829
      %v6831 = vpop.f32.mrb[0].mxu0
      %6832 = vmatprep.mubr.bf16.mxu0 0
      %6833 = vmatmul.mubr.bf16.gmra.mrb[0].mxu0 %v6724
      %v6834 = vpop.f32.mrb[0].mxu0
      %v6835 = vadd.f32 0.0, %v6834
      %v6836 = vpop.f32.mrb[0].mxu0
      %v6837 = vpop.f32.mrb[0].mxu0
      %v6838 = vadd.f32 0.0, %v6837
      %v6839 = vpop.f32.mrb[0].mxu0
      %6840 = vmatprep.mubr.bf16.mxu0 0
      %6841 = vmatmul.mubr.bf16.gmra.mrb[0].mxu0 %v6727
      %v6842 = vpop.f32.mrb[0].mxu0
      %v6843 = vadd.f32 0.0, %v6842
      %v6844 = vpop.f32.mrb[0].mxu0
      %v6845 = vpop.f32.mrb[0].mxu0
      %v6846 = vadd.f32 0.0, %v6845
      %v6847 = vpop.f32.mrb[0].mxu0
      %6848 = vmatprep.mubr.bf16.mxu0 0
      %6849 = vmatmul.mubr.bf16.gmra.mrb[0].mxu0 %v6730
      %v6850 = vpop.f32.mrb[0].mxu0
      %v6851 = vadd.f32 0.0, %v6850
      %v6852 = vpop.f32.mrb[0].mxu0
      %v6853 = vpop.f32.mrb[0].mxu0
      %v6854 = vadd.f32 0.0, %v6853
      %v6855 = vpop.f32.mrb[0].mxu0
      %6856 = vmatprep.mubr.bf16.mxu0 0
      %6857 = vmatmul.mubr.bf16.gmra.mrb[0].mxu0 %v6733
      %v6858 = vpop.f32.mrb[0].mxu0
      %v6859 = vadd.f32 0.0, %v6858
      %v6860 = vpop.f32.mrb[0].mxu0
      %v6861 = vpop.f32.mrb[0].mxu0
      %v6862 = vadd.f32 0.0, %v6861
      %v6863 = vpop.f32.mrb[0].mxu0
      %6864 = vmatprep.mubr.bf16.mxu0 0
      %6865 = vmatmul.mubr.bf16.gmra.mrb[0].mxu0 %v6736
      %v6866 = vpop.f32.mrb[0].mxu0
      %v6867 = vadd.f32 0.0, %v6866
      %v6868 = vpop.f32.mrb[0].mxu0
      %v6869 = vpop.f32.mrb[0].mxu0
      %v6870 = vadd.f32 0.0, %v6869
      %v6871 = vpop.f32.mrb[0].mxu0
      %6872 = vmatprep.mubr.bf16.mxu0 0
      %6873 = vmatmul.mubr.bf16.gmra.mrb[0].mxu0 %v6739
      %v6874 = vpop.f32.mrb[0].mxu0
      %v6875 = vadd.f32 0.0, %v6874
      %v6876 = vpop.f32.mrb[0].mxu0
      %v6877 = vpop.f32.mrb[0].mxu0
      %v6878 = vadd.f32 0.0, %v6877
      %v6879 = vpop.f32.mrb[0].mxu0
      %6880 = vmatprep.mubr.bf16.mxu0 0
      %6881 = vmatmul.mubr.bf16.gmra.mrb[0].mxu0 %v6742
      %v6882 = vpop.f32.mrb[0].mxu0
      %v6883 = vadd.f32 0.0, %v6882
      %v6884 = vpop.f32.mrb[0].mxu0
      %v6885 = vpop.f32.mrb[0].mxu0
      %v6886 = vadd.f32 0.0, %v6885
      %v6887 = vpop.f32.mrb[0].mxu0
      %6888 = vmatprep.mubr.bf16.mxu0 0
      %6889 = vmatmul.mubr.bf16.gmra.mrb[0].mxu0 %v6745
      %v6890 = vpop.f32.mrb[0].mxu0
      %v6891 = vadd.f32 0.0, %v6890
      %v6892 = vpop.f32.mrb[0].mxu0
      %v6893 = vpop.f32.mrb[0].mxu0
      %v6894 = vadd.f32 0.0, %v6893
      %v6895 = vpop.f32.mrb[0].mxu0
      %6896 = vmatprep.mubr.bf16.mxu0 0
      %6897 = vmatmul.mubr.bf16.gmra.mrb[0].mxu0 %v6748
      %v6898 = vpop.f32.mrb[0].mxu0
      %v6899 = vadd.f32 0.0, %v6898
      %v6900 = vpop.f32.mrb[0].mxu0
      %v6901 = vpop.f32.mrb[0].mxu0
      %v6902 = vadd.f32 0.0, %v6901
      %v6903 = vpop.f32.mrb[0].mxu0
      %6904 = vmatprep.mubr.bf16.mxu0 0
      %6905 = vmatmul.mubr.bf16.gmra.mrb[0].mxu0 %v6751
      %v6906 = vpop.f32.mrb[0].mxu0
      %v6907 = vadd.f32 0.0, %v6906
      %v6908 = vpop.f32.mrb[0].mxu0
      %v6909 = vpop.f32.mrb[0].mxu0
      %v6910 = vadd.f32 0.0, %v6909
      %v6911 = vpop.f32.mrb[0].mxu0
      %6912 = vmatprep.mubr.bf16.mxu0 0
      %6913 = vmatmul.mubr.bf16.gmra.mrb[0].mxu0 %v6754
      %v6914 = vpop.f32.mrb[0].mxu0
      %v6915 = vadd.f32 0.0, %v6914
      %v6916 = vpop.f32.mrb[0].mxu0
      %v6917 = vpop.f32.mrb[0].mxu0
      %v6918 = vadd.f32 0.0, %v6917
      %v6919 = vpop.f32.mrb[0].mxu0
      %6920 = vmatprep.mubr.bf16.mxu0 0
      %6921 = vmatmul.mubr.bf16.gmra.mrb[0].mxu0 %v6757
      %v6922 = vpop.f32.mrb[0].mxu0
      %v6923 = vadd.f32 0.0, %v6922
      %v6924 = vpop.f32.mrb[0].mxu0
      %v6925 = vpop.f32.mrb[0].mxu0
      %v6926 = vadd.f32 0.0, %v6925
      %v6927 = vpop.f32.mrb[0].mxu0
      %6928 = vmatprep.mubr.bf16.mxu0 0
      %6929 = vmatmul.mubr.bf16.gmra.mrb[0].mxu0 %v6760
      %v6930 = vpop.f32.mrb[0].mxu0
      %v6931 = vadd.f32 0.0, %v6930
      %v6932 = vpop.f32.mrb[0].mxu0
      %v6933 = vpop.f32.mrb[0].mxu0
      %v6934 = vadd.f32 0.0, %v6933
      %v6935 = vpop.f32.mrb[0].mxu0
      %6936 = vmatprep.mubr.bf16.mxu0 0
      %6937 = vmatmul.mubr.bf16.gmra.mrb[0].mxu0 %v6763
      %v6938 = vpop.f32.mrb[0].mxu0
      %v6939 = vadd.f32 0.0, %v6938
      %v6940 = vpop.f32.mrb[0].mxu0
      %v6941 = vpop.f32.mrb[0].mxu0
      %v6942 = vadd.f32 0.0, %v6941
      %v6943 = vpop.f32.mrb[0].mxu0
      %6944 = vmatprep.mubr.bf16.mxu0 0
      %6945 = vmatmul.mubr.bf16.gmra.mrb[0].mxu0 %v6766
      %v6946 = vpop.f32.mrb[0].mxu0
      %v6947 = vadd.f32 0.0, %v6946
      %v6948 = vpop.f32.mrb[0].mxu0
      %v6949 = vpop.f32.mrb[0].mxu0
      %v6950 = vadd.f32 0.0, %v6949
      %v6951 = vpop.f32.mrb[0].mxu0
      %6952 = vmatprep.mubr.bf16.mxu0 0
      %6953 = vmatmul.mubr.bf16.gmra.mrb[0].mxu0 %v6769
      %v6954 = vpop.f32.mrb[0].mxu0
      %v6955 = vadd.f32 0.0, %v6954
      %v6956 = vpop.f32.mrb[0].mxu0
      %v6957 = vpop.f32.mrb[0].mxu0
      %v6958 = vadd.f32 0.0, %v6957
      %v6959 = vpop.f32.mrb[0].mxu0
      %6960 = vmatprep.mubr.bf16.mxu0 0
      %6961 = vmatmul.mubr.bf16.gmra.mrb[0].mxu0 %v6772
      %v6962 = vpop.f32.mrb[0].mxu0
      %v6963 = vadd.f32 0.0, %v6962
      %v6964 = vpop.f32.mrb[0].mxu0
      %v6965 = vpop.f32.mrb[0].mxu0
      %v6966 = vadd.f32 0.0, %v6965
      %v6967 = vpop.f32.mrb[0].mxu0
      %6968 = vmatprep.mubr.bf16.mxu0 0
      %6969 = vmatmul.mubr.bf16.gmra.mrb[0].mxu0 %v6775
      %v6970 = vpop.f32.mrb[0].mxu0
      %v6971 = vadd.f32 0.0, %v6970
      %v6972 = vpop.f32.mrb[0].mxu0
      %v6973 = vpop.f32.mrb[0].mxu0
      %v6974 = vadd.f32 0.0, %v6973
      %v6975 = vpop.f32.mrb[0].mxu0
      %6976 = vmatprep.mubr.bf16.mxu0 0
      %6977 = vmatmul.mubr.bf16.gmra.mrb[0].mxu0 %v6778
      %v6978 = vpop.f32.mrb[0].mxu0
      %v6979 = vadd.f32 0.0, %v6978
      %v6980 = vpop.f32.mrb[0].mxu0
      %v6981 = vpop.f32.mrb[0].mxu0
      %v6982 = vadd.f32 0.0, %v6981
      %v6983 = vpop.f32.mrb[0].mxu0
      %6984 = vmatprep.mubr.bf16.mxu0 0
      %6985 = vmatmul.mubr.bf16.gmra.mrb[0].mxu0 %v6781
      %v6986 = vpop.f32.mrb[0].mxu0
      %v6987 = vadd.f32 0.0, %v6986
      %v6988 = vpop.f32.mrb[0].mxu0
      %v6989 = vpop.f32.mrb[0].mxu0
      %v6990 = vadd.f32 0.0, %v6989
      %v6991 = vpop.f32.mrb[0].mxu0
      %6992 = vmatprep.mubr.bf16.mxu0 0
      %6993 = vmatmul.mubr.bf16.gmra.mrb[0].mxu0 %v6784
      %v6994 = vpop.f32.mrb[0].mxu0
      %v6995 = vadd.f32 0.0, %v6994
      %v6996 = vpop.f32.mrb[0].mxu0
      %v6997 = vpop.f32.mrb[0].mxu0
      %v6998 = vadd.f32 0.0, %v6997
      %v6999 = vpop.f32.mrb[0].mxu0
      %7000 = vmatprep.mubr.bf16.mxu0 0
      %7001 = vmatmul.mubr.bf16.gmra.mrb[0].mxu0 %v6787
      %v7002 = vpop.f32.mrb[0].mxu0
      %v7003 = vadd.f32 0.0, %v7002
      %v7004 = vpop.f32.mrb[0].mxu0
      %v7005 = vpop.f32.mrb[0].mxu0
      %v7006 = vadd.f32 0.0, %v7005
      %v7007 = vpop.f32.mrb[0].mxu0
      %7008 = vmatprep.mubr.bf16.mxu0 0
      %7009 = vmatmul.mubr.bf16.gmra.mrb[0].mxu0 %v6790
      %v7010 = vpop.f32.mrb[0].mxu0
      %v7011 = vadd.f32 0.0, %v7010
      %v7012 = vpop.f32.mrb[0].mxu0
      %v7013 = vpop.f32.mrb[0].mxu0
      %v7014 = vadd.f32 0.0, %v7013
      %v7015 = vpop.f32.mrb[0].mxu0
      %7016 = vdwg.mxu0
      %v7017 = vadd.f32 %v6441, %v6827
      %v7018 = vadd.f32 %v6444, %v6830
      %v7019 = vadd.f32 %v6449, %v6835
      %v7020 = vadd.f32 %v6452, %v6838
      %v7021 = vadd.f32 %v6457, %v6843
      %v7022 = vadd.f32 %v6460, %v6846
      %v7023 = vadd.f32 %v6465, %v6851
      %v7024 = vadd.f32 %v6468, %v6854
      %v7025 = vadd.f32 %v6473, %v6859
      %v7026 = vadd.f32 %v6476, %v6862
      %v7027 = vadd.f32 %v6481, %v6867
      %v7028 = vadd.f32 %v6484, %v6870
      %v7029 = vadd.f32 %v6489, %v6875
      %v7030 = vadd.f32 %v6492, %v6878
      %v7031 = vadd.f32 %v6497, %v6883
      %v7032 = vadd.f32 %v6500, %v6886
      %v7033 = vadd.f32 %v6505, %v6891
      %v7034 = vadd.f32 %v6508, %v6894
      %v7035 = vadd.f32 %v6513, %v6899
      %v7036 = vadd.f32 %v6516, %v6902
      %v7037 = vadd.f32 %v6521, %v6907
      %v7038 = vadd.f32 %v6524, %v6910
      %v7039 = vadd.f32 %v6529, %v6915
      %v7040 = vadd.f32 %v6532, %v6918
      %v7041 = vadd.f32 %v6537, %v6923
      %v7042 = vadd.f32 %v6540, %v6926
      %v7043 = vadd.f32 %v6545, %v6931
      %v7044 = vadd.f32 %v6548, %v6934
      %v7045 = vadd.f32 %v6553, %v6939
      %v7046 = vadd.f32 %v6556, %v6942
      %v7047 = vadd.f32 %v6561, %v6947
      %v7048 = vadd.f32 %v6564, %v6950
      %v7049 = vadd.f32 %v6569, %v6955
      %v7050 = vadd.f32 %v6572, %v6958
      %v7051 = vadd.f32 %v6577, %v6963
      %v7052 = vadd.f32 %v6580, %v6966
      %v7053 = vadd.f32 %v6585, %v6971
      %v7054 = vadd.f32 %v6588, %v6974
      %v7055 = vadd.f32 %v6593, %v6979
      %v7056 = vadd.f32 %v6596, %v6982
      %v7057 = vadd.f32 %v6601, %v6987
      %v7058 = vadd.f32 %v6604, %v6990
      %v7059 = vadd.f32 %v6609, %v6995
      %v7060 = vadd.f32 %v6612, %v6998
      %v7061 = vadd.f32 %v6617, %v7003
      %v7062 = vadd.f32 %v6620, %v7006
      %v7063 = vadd.f32 %v6625, %v7011
      %v7064 = vadd.f32 %v6628, %v7014
      %v7065 = vld [vmem:[#allocation3 + $0x18] sm:$0xff]
      %v7066 = vld [vmem:[#allocation3 + $0x20] sm:$0xff]
      %v7067 = vld [vmem:[#allocation3 + $0x28] sm:$0xff]
      %v7068 = vld [vmem:[#allocation3 + $0x30] sm:$0xff]
      %v7069 = vld [vmem:[#allocation3 + $0x38] sm:$0xff]
      %v7070 = vld [vmem:[#allocation3 + $0x40] sm:$0xff]
      %v7071 = vld [vmem:[#allocation3 + $0x48] sm:$0xff]
      %v7072 = vld [vmem:[#allocation3 + $0x50] sm:$0xff]
      %v7073 = vld [vmem:[#allocation3 + $0x58] sm:$0xff]
      %v7074 = vld [vmem:[#allocation3 + $0x60] sm:$0xff]
      %v7075 = vld [vmem:[#allocation3 + $0x68] sm:$0xff]
      %v7076 = vld [vmem:[#allocation3 + $0x70] sm:$0xff]
      %v7077 = vld [vmem:[#allocation3 + $0x78] sm:$0xff]
      %v7078 = vld [vmem:[#allocation3 + $0x80] sm:$0xff]
      %v7079 = vld [vmem:[#allocation3 + $0x88] sm:$0xff]
      %v7080 = vld [vmem:[#allocation3 + $0x90] sm:$0xff]
      %v7081 = vld [vmem:[#allocation3 + $0x98] sm:$0xff]
      %v7082 = vld [vmem:[#allocation3 + $0xa0] sm:$0xff]
      %v7083 = vld [vmem:[#allocation3 + $0xa8] sm:$0xff]
      %v7084 = vld [vmem:[#allocation3 + $0xb0] sm:$0xff]
      %v7085 = vld [vmem:[#allocation3 + $0xb8] sm:$0xff]
      %v7086 = vld [vmem:[#allocation3 + $0xc0] sm:$0xff]
      %v7087 = vld [vmem:[#allocation3 + $0xc8] sm:$0xff]
      %v7088 = vld [vmem:[#allocation3 + $0xd0] sm:$0xff]
      %v7089 = vld [vmem:[#allocation3 + $0xd8] sm:$0xff]
      %v7090 = vld [vmem:[#allocation3 + $0xe0] sm:$0xff]
      %v7091 = vld [vmem:[#allocation3 + $0xe8] sm:$0xff]
      %v7092 = vld [vmem:[#allocation3 + $0xf0] sm:$0xff]
      %v7093 = vld [vmem:[#allocation3 + $0xf8] sm:$0xff]
      %v7094 = vld [vmem:[#allocation3 + $0x100] sm:$0xff]
      %v7095 = vld [vmem:[#allocation3 + $0x108] sm:$0xff]
      %v7096 = vld [vmem:[#allocation3 + $0x110] sm:$0xff]
      %v7097 = vld [vmem:[#allocation3 + $0x118] sm:$0xff]
      %v7098 = vld [vmem:[#allocation3 + $0x120] sm:$0xff]
      %v7099 = vld [vmem:[#allocation3 + $0x128] sm:$0xff]
      %v7100 = vld [vmem:[#allocation3 + $0x130] sm:$0xff]
      %v7101 = vld [vmem:[#allocation3 + $0x138] sm:$0xff]
      %v7102 = vld [vmem:[#allocation3 + $0x140] sm:$0xff]
      %v7103 = vld [vmem:[#allocation3 + $0x148] sm:$0xff]
      %v7104 = vld [vmem:[#allocation3 + $0x150] sm:$0xff]
      %v7105 = vld [vmem:[#allocation3 + $0x158] sm:$0xff]
      %v7106 = vld [vmem:[#allocation3 + $0x160] sm:$0xff]
      %v7107 = vld [vmem:[#allocation3 + $0x168] sm:$0xff]
      %v7108 = vld [vmem:[#allocation3 + $0x170] sm:$0xff]
      %v7109 = vld [vmem:[#allocation3 + $0x178] sm:$0xff]
      %v7110 = vld [vmem:[#allocation3 + $0x180] sm:$0xff]
      %v7111 = vld [vmem:[#allocation3 + $0x188] sm:$0xff]
      %v7112 = vld [vmem:[#allocation3 + $0x190] sm:$0xff]
      %v7113 = vpack.c.bf16 %v7066, %v7065
      %v7114 = vpack.c.bf16 %v7068, %v7067
      %v7115 = vpack.c.bf16 %v7070, %v7069
      %v7116 = vpack.c.bf16 %v7072, %v7071
      %v7117 = vpack.c.bf16 %v7074, %v7073
      %v7118 = vpack.c.bf16 %v7076, %v7075
      %v7119 = vpack.c.bf16 %v7078, %v7077
      %v7120 = vpack.c.bf16 %v7080, %v7079
      %v7121 = vpack.c.bf16 %v7082, %v7081
      %v7122 = vpack.c.bf16 %v7084, %v7083
      %v7123 = vpack.c.bf16 %v7086, %v7085
      %v7124 = vpack.c.bf16 %v7088, %v7087
      %v7125 = vpack.c.bf16 %v7090, %v7089
      %v7126 = vpack.c.bf16 %v7092, %v7091
      %v7127 = vpack.c.bf16 %v7094, %v7093
      %v7128 = vpack.c.bf16 %v7096, %v7095
      %v7129 = vpack.c.bf16 %v7098, %v7097
      %v7130 = vpack.c.bf16 %v7100, %v7099
      %v7131 = vpack.c.bf16 %v7102, %v7101
      %v7132 = vpack.c.bf16 %v7104, %v7103
      %v7133 = vpack.c.bf16 %v7106, %v7105
      %v7134 = vpack.c.bf16 %v7108, %v7107
      %v7135 = vpack.c.bf16 %v7110, %v7109
      %v7136 = vpack.c.bf16 %v7112, %v7111
      %s7137 = scalar_lea.vmem %s3, 48
      %v7138 = vld [vmem:[%s7137] sm:$0xf]
      %v7139 = vld [vmem:[%s7137 + $0x4] sm:$0xf]
      %v7140 = vld [vmem:[%s7137 + $0x8] sm:$0xf]
      %v7141 = vld [vmem:[%s7137 + $0xc] sm:$0xf]
      %v7146 = vunpack.c.l.b16 %v7138
      %v7147 = vunpack.c.l.b16 %v7139
      %v7148 = vunpack.c.l.b16 %v7140
      %v7149 = vunpack.c.l.b16 %v7141
      %v7150 = vpack.c.b16 %v7147, %v7146
      %v7151 = vpack.c.b16 %v7149, %v7148
      %v7155 = vsel %vm966, %v7113, 0
      %v7158 = vsel %vm966, %v7114, 0
      %v7161 = vsel %vm966, %v7115, 0
      %v7164 = vsel %vm966, %v7116, 0
      %v7167 = vsel %vm966, %v7117, 0
      %v7170 = vsel %vm966, %v7118, 0
      %v7173 = vsel %vm966, %v7119, 0
      %v7176 = vsel %vm966, %v7120, 0
      %v7179 = vsel %vm966, %v7121, 0
      %v7182 = vsel %vm966, %v7122, 0
      %v7185 = vsel %vm966, %v7123, 0
      %v7188 = vsel %vm966, %v7124, 0
      %v7191 = vsel %vm966, %v7125, 0
      %v7194 = vsel %vm966, %v7126, 0
      %v7197 = vsel %vm966, %v7127, 0
      %v7200 = vsel %vm966, %v7128, 0
      %v7203 = vsel %vm966, %v7129, 0
      %v7206 = vsel %vm966, %v7130, 0
      %v7209 = vsel %vm966, %v7131, 0
      %v7212 = vsel %vm966, %v7132, 0
      %v7215 = vsel %vm966, %v7133, 0
      %v7218 = vsel %vm966, %v7134, 0
      %v7221 = vsel %vm966, %v7135, 0
      %v7224 = vsel %vm966, %v7136, 0
      %7226 = vmatprep.subr.bf16.mxu0 0
      %7227 = vmatpush1.bf16.msra.mxu0 %v7150
      %7228 = vmatprep.subr.bf16.mxu0 0
      %7229 = vmatpush1.bf16.msra.mxu0 %v7151
      %7230 = vmatprep.subr.bf16.mxu0 0
      %7231 = vmatpush1.bf16.msra.mxu0 0
      %7232 = vmatprep.subr.bf16.mxu0 0
      %7233 = vmatpush1.bf16.msra.mxu0 0
      %7234 = vmatprep.subr.bf16.mxu0 0
      %7235 = vmatpush1.bf16.msra.mxu0 0
      %7236 = vmatprep.subr.bf16.mxu0 0
      %7237 = vmatpush1.bf16.msra.mxu0 0
      %7238 = vmatprep.subr.bf16.mxu0 0
      %7239 = vmatpush1.bf16.msra.mxu0 0
      %7240 = vmatprep.subr.bf16.mxu0 0
      %7241 = vmatpush1.bf16.msra.mxu0 0
      %7242 = vmatprep.subr.bf16.mxu0 0
      %7243 = vmatpush1.bf16.msra.mxu0 0
      %7244 = vmatprep.subr.bf16.mxu0 0
      %7245 = vmatpush1.bf16.msra.mxu0 0
      %7246 = vmatprep.subr.bf16.mxu0 0
      %7247 = vmatpush1.bf16.msra.mxu0 0
      %7248 = vmatprep.subr.bf16.mxu0 0
      %7249 = vmatpush1.bf16.msra.mxu0 0
      %7250 = vmatprep.subr.bf16.mxu0 0
      %7251 = vmatpush1.bf16.msra.mxu0 0
      %7252 = vmatprep.subr.bf16.mxu0 0
      %7253 = vmatpush1.bf16.msra.mxu0 0
      %7254 = vmatprep.subr.bf16.mxu0 0
      %7255 = vmatpush1.bf16.msra.mxu0 0
      %7256 = vmatprep.subr.bf16.mxu0 0
      %7257 = vmatpush1.bf16.msra.mxu0 0
      %7258 = vmatprep.mubr.bf16.mxu0 0
      %7259 = vmatmul.mubr.bf16.gmra.mrb[0].mxu0 %v7155
      %v7260 = vpop.f32.mrb[0].mxu0
      %v7261 = vadd.f32 0.0, %v7260
      %v7262 = vpop.f32.mrb[0].mxu0
      %v7263 = vpop.f32.mrb[0].mxu0
      %v7264 = vadd.f32 0.0, %v7263
      %v7265 = vpop.f32.mrb[0].mxu0
      %7266 = vmatprep.mubr.bf16.mxu0 0
      %7267 = vmatmul.mubr.bf16.gmra.mrb[0].mxu0 %v7158
      %v7268 = vpop.f32.mrb[0].mxu0
      %v7269 = vadd.f32 0.0, %v7268
      %v7270 = vpop.f32.mrb[0].mxu0
      %v7271 = vpop.f32.mrb[0].mxu0
      %v7272 = vadd.f32 0.0, %v7271
      %v7273 = vpop.f32.mrb[0].mxu0
      %7274 = vmatprep.mubr.bf16.mxu0 0
      %7275 = vmatmul.mubr.bf16.gmra.mrb[0].mxu0 %v7161
      %v7276 = vpop.f32.mrb[0].mxu0
      %v7277 = vadd.f32 0.0, %v7276
      %v7278 = vpop.f32.mrb[0].mxu0
      %v7279 = vpop.f32.mrb[0].mxu0
      %v7280 = vadd.f32 0.0, %v7279
      %v7281 = vpop.f32.mrb[0].mxu0
      %7282 = vmatprep.mubr.bf16.mxu0 0
      %7283 = vmatmul.mubr.bf16.gmra.mrb[0].mxu0 %v7164
      %v7284 = vpop.f32.mrb[0].mxu0
      %v7285 = vadd.f32 0.0, %v7284
      %v7286 = vpop.f32.mrb[0].mxu0
      %v7287 = vpop.f32.mrb[0].mxu0
      %v7288 = vadd.f32 0.0, %v7287
      %v7289 = vpop.f32.mrb[0].mxu0
      %7290 = vmatprep.mubr.bf16.mxu0 0
      %7291 = vmatmul.mubr.bf16.gmra.mrb[0].mxu0 %v7167
      %v7292 = vpop.f32.mrb[0].mxu0
      %v7293 = vadd.f32 0.0, %v7292
      %v7294 = vpop.f32.mrb[0].mxu0
      %v7295 = vpop.f32.mrb[0].mxu0
      %v7296 = vadd.f32 0.0, %v7295
      %v7297 = vpop.f32.mrb[0].mxu0
      %7298 = vmatprep.mubr.bf16.mxu0 0
      %7299 = vmatmul.mubr.bf16.gmra.mrb[0].mxu0 %v7170
      %v7300 = vpop.f32.mrb[0].mxu0
      %v7301 = vadd.f32 0.0, %v7300
      %v7302 = vpop.f32.mrb[0].mxu0
      %v7303 = vpop.f32.mrb[0].mxu0
      %v7304 = vadd.f32 0.0, %v7303
      %v7305 = vpop.f32.mrb[0].mxu0
      %7306 = vmatprep.mubr.bf16.mxu0 0
      %7307 = vmatmul.mubr.bf16.gmra.mrb[0].mxu0 %v7173
      %v7308 = vpop.f32.mrb[0].mxu0
      %v7309 = vadd.f32 0.0, %v7308
      %v7310 = vpop.f32.mrb[0].mxu0
      %v7311 = vpop.f32.mrb[0].mxu0
      %v7312 = vadd.f32 0.0, %v7311
      %v7313 = vpop.f32.mrb[0].mxu0
      %7314 = vmatprep.mubr.bf16.mxu0 0
      %7315 = vmatmul.mubr.bf16.gmra.mrb[0].mxu0 %v7176
      %v7316 = vpop.f32.mrb[0].mxu0
      %v7317 = vadd.f32 0.0, %v7316
      %v7318 = vpop.f32.mrb[0].mxu0
      %v7319 = vpop.f32.mrb[0].mxu0
      %v7320 = vadd.f32 0.0, %v7319
      %v7321 = vpop.f32.mrb[0].mxu0
      %7322 = vmatprep.mubr.bf16.mxu0 0
      %7323 = vmatmul.mubr.bf16.gmra.mrb[0].mxu0 %v7179
      %v7324 = vpop.f32.mrb[0].mxu0
      %v7325 = vadd.f32 0.0, %v7324
      %v7326 = vpop.f32.mrb[0].mxu0
      %v7327 = vpop.f32.mrb[0].mxu0
      %v7328 = vadd.f32 0.0, %v7327
      %v7329 = vpop.f32.mrb[0].mxu0
      %7330 = vmatprep.mubr.bf16.mxu0 0
      %7331 = vmatmul.mubr.bf16.gmra.mrb[0].mxu0 %v7182
      %v7332 = vpop.f32.mrb[0].mxu0
      %v7333 = vadd.f32 0.0, %v7332
      %v7334 = vpop.f32.mrb[0].mxu0
      %v7335 = vpop.f32.mrb[0].mxu0
      %v7336 = vadd.f32 0.0, %v7335
      %v7337 = vpop.f32.mrb[0].mxu0
      %7338 = vmatprep.mubr.bf16.mxu0 0
      %7339 = vmatmul.mubr.bf16.gmra.mrb[0].mxu0 %v7185
      %v7340 = vpop.f32.mrb[0].mxu0
      %v7341 = vadd.f32 0.0, %v7340
      %v7342 = vpop.f32.mrb[0].mxu0
      %v7343 = vpop.f32.mrb[0].mxu0
      %v7344 = vadd.f32 0.0, %v7343
      %v7345 = vpop.f32.mrb[0].mxu0
      %7346 = vmatprep.mubr.bf16.mxu0 0
      %7347 = vmatmul.mubr.bf16.gmra.mrb[0].mxu0 %v7188
      %v7348 = vpop.f32.mrb[0].mxu0
      %v7349 = vadd.f32 0.0, %v7348
      %v7350 = vpop.f32.mrb[0].mxu0
      %v7351 = vpop.f32.mrb[0].mxu0
      %v7352 = vadd.f32 0.0, %v7351
      %v7353 = vpop.f32.mrb[0].mxu0
      %7354 = vmatprep.mubr.bf16.mxu0 0
      %7355 = vmatmul.mubr.bf16.gmra.mrb[0].mxu0 %v7191
      %v7356 = vpop.f32.mrb[0].mxu0
      %v7357 = vadd.f32 0.0, %v7356
      %v7358 = vpop.f32.mrb[0].mxu0
      %v7359 = vpop.f32.mrb[0].mxu0
      %v7360 = vadd.f32 0.0, %v7359
      %v7361 = vpop.f32.mrb[0].mxu0
      %7362 = vmatprep.mubr.bf16.mxu0 0
      %7363 = vmatmul.mubr.bf16.gmra.mrb[0].mxu0 %v7194
      %v7364 = vpop.f32.mrb[0].mxu0
      %v7365 = vadd.f32 0.0, %v7364
      %v7366 = vpop.f32.mrb[0].mxu0
      %v7367 = vpop.f32.mrb[0].mxu0
      %v7368 = vadd.f32 0.0, %v7367
      %v7369 = vpop.f32.mrb[0].mxu0
      %7370 = vmatprep.mubr.bf16.mxu0 0
      %7371 = vmatmul.mubr.bf16.gmra.mrb[0].mxu0 %v7197
      %v7372 = vpop.f32.mrb[0].mxu0
      %v7373 = vadd.f32 0.0, %v7372
      %v7374 = vpop.f32.mrb[0].mxu0
      %v7375 = vpop.f32.mrb[0].mxu0
      %v7376 = vadd.f32 0.0, %v7375
      %v7377 = vpop.f32.mrb[0].mxu0
      %7378 = vmatprep.mubr.bf16.mxu0 0
      %7379 = vmatmul.mubr.bf16.gmra.mrb[0].mxu0 %v7200
      %v7380 = vpop.f32.mrb[0].mxu0
      %v7381 = vadd.f32 0.0, %v7380
      %v7382 = vpop.f32.mrb[0].mxu0
      %v7383 = vpop.f32.mrb[0].mxu0
      %v7384 = vadd.f32 0.0, %v7383
      %v7385 = vpop.f32.mrb[0].mxu0
      %7386 = vmatprep.mubr.bf16.mxu0 0
      %7387 = vmatmul.mubr.bf16.gmra.mrb[0].mxu0 %v7203
      %v7388 = vpop.f32.mrb[0].mxu0
      %v7389 = vadd.f32 0.0, %v7388
      %v7390 = vpop.f32.mrb[0].mxu0
      %v7391 = vpop.f32.mrb[0].mxu0
      %v7392 = vadd.f32 0.0, %v7391
      %v7393 = vpop.f32.mrb[0].mxu0
      %7394 = vmatprep.mubr.bf16.mxu0 0
      %7395 = vmatmul.mubr.bf16.gmra.mrb[0].mxu0 %v7206
      %v7396 = vpop.f32.mrb[0].mxu0
      %v7397 = vadd.f32 0.0, %v7396
      %v7398 = vpop.f32.mrb[0].mxu0
      %v7399 = vpop.f32.mrb[0].mxu0
      %v7400 = vadd.f32 0.0, %v7399
      %v7401 = vpop.f32.mrb[0].mxu0
      %7402 = vmatprep.mubr.bf16.mxu0 0
      %7403 = vmatmul.mubr.bf16.gmra.mrb[0].mxu0 %v7209
      %v7404 = vpop.f32.mrb[0].mxu0
      %v7405 = vadd.f32 0.0, %v7404
      %v7406 = vpop.f32.mrb[0].mxu0
      %v7407 = vpop.f32.mrb[0].mxu0
      %v7408 = vadd.f32 0.0, %v7407
      %v7409 = vpop.f32.mrb[0].mxu0
      %7410 = vmatprep.mubr.bf16.mxu0 0
      %7411 = vmatmul.mubr.bf16.gmra.mrb[0].mxu0 %v7212
      %v7412 = vpop.f32.mrb[0].mxu0
      %v7413 = vadd.f32 0.0, %v7412
      %v7414 = vpop.f32.mrb[0].mxu0
      %v7415 = vpop.f32.mrb[0].mxu0
      %v7416 = vadd.f32 0.0, %v7415
      %v7417 = vpop.f32.mrb[0].mxu0
      %7418 = vmatprep.mubr.bf16.mxu0 0
      %7419 = vmatmul.mubr.bf16.gmra.mrb[0].mxu0 %v7215
      %v7420 = vpop.f32.mrb[0].mxu0
      %v7421 = vadd.f32 0.0, %v7420
      %v7422 = vpop.f32.mrb[0].mxu0
      %v7423 = vpop.f32.mrb[0].mxu0
      %v7424 = vadd.f32 0.0, %v7423
      %v7425 = vpop.f32.mrb[0].mxu0
      %7426 = vmatprep.mubr.bf16.mxu0 0
      %7427 = vmatmul.mubr.bf16.gmra.mrb[0].mxu0 %v7218
      %v7428 = vpop.f32.mrb[0].mxu0
      %v7429 = vadd.f32 0.0, %v7428
      %v7430 = vpop.f32.mrb[0].mxu0
      %v7431 = vpop.f32.mrb[0].mxu0
      %v7432 = vadd.f32 0.0, %v7431
      %v7433 = vpop.f32.mrb[0].mxu0
      %7434 = vmatprep.mubr.bf16.mxu0 0
      %7435 = vmatmul.mubr.bf16.gmra.mrb[0].mxu0 %v7221
      %v7436 = vpop.f32.mrb[0].mxu0
      %v7437 = vadd.f32 0.0, %v7436
      %v7438 = vpop.f32.mrb[0].mxu0
      %v7439 = vpop.f32.mrb[0].mxu0
      %v7440 = vadd.f32 0.0, %v7439
      %v7441 = vpop.f32.mrb[0].mxu0
      %7442 = vmatprep.mubr.bf16.mxu0 0
      %7443 = vmatmul.mubr.bf16.gmra.mrb[0].mxu0 %v7224
      %v7444 = vpop.f32.mrb[0].mxu0
      %v7445 = vadd.f32 0.0, %v7444
      %v7446 = vpop.f32.mrb[0].mxu0
      %v7447 = vpop.f32.mrb[0].mxu0
      %v7448 = vadd.f32 0.0, %v7447
      %v7449 = vpop.f32.mrb[0].mxu0
      %7450 = vdwg.mxu0
      %v7451 = vadd.f32 %v7017, %v7261
      %v7452 = vadd.f32 %v7018, %v7264
      %v7453 = vadd.f32 %v7019, %v7269
      %v7454 = vadd.f32 %v7020, %v7272
      %v7455 = vadd.f32 %v7021, %v7277
      %v7456 = vadd.f32 %v7022, %v7280
      %v7457 = vadd.f32 %v7023, %v7285
      %v7458 = vadd.f32 %v7024, %v7288
      %v7459 = vadd.f32 %v7025, %v7293
      %v7460 = vadd.f32 %v7026, %v7296
      %v7461 = vadd.f32 %v7027, %v7301
      %v7462 = vadd.f32 %v7028, %v7304
      %v7463 = vadd.f32 %v7029, %v7309
      %v7464 = vadd.f32 %v7030, %v7312
      %v7465 = vadd.f32 %v7031, %v7317
      %v7466 = vadd.f32 %v7032, %v7320
      %v7467 = vadd.f32 %v7033, %v7325
      %v7468 = vadd.f32 %v7034, %v7328
      %v7469 = vadd.f32 %v7035, %v7333
      %v7470 = vadd.f32 %v7036, %v7336
      %v7471 = vadd.f32 %v7037, %v7341
      %v7472 = vadd.f32 %v7038, %v7344
      %v7473 = vadd.f32 %v7039, %v7349
      %v7474 = vadd.f32 %v7040, %v7352
      %v7475 = vadd.f32 %v7041, %v7357
      %v7476 = vadd.f32 %v7042, %v7360
      %v7477 = vadd.f32 %v7043, %v7365
      %v7478 = vadd.f32 %v7044, %v7368
      %v7479 = vadd.f32 %v7045, %v7373
      %v7480 = vadd.f32 %v7046, %v7376
      %v7481 = vadd.f32 %v7047, %v7381
      %v7482 = vadd.f32 %v7048, %v7384
      %v7483 = vadd.f32 %v7049, %v7389
      %v7484 = vadd.f32 %v7050, %v7392
      %v7485 = vadd.f32 %v7051, %v7397
      %v7486 = vadd.f32 %v7052, %v7400
      %v7487 = vadd.f32 %v7053, %v7405
      %v7488 = vadd.f32 %v7054, %v7408
      %v7489 = vadd.f32 %v7055, %v7413
      %v7490 = vadd.f32 %v7056, %v7416
      %v7491 = vadd.f32 %v7057, %v7421
      %v7492 = vadd.f32 %v7058, %v7424
      %v7493 = vadd.f32 %v7059, %v7429
      %v7494 = vadd.f32 %v7060, %v7432
      %v7495 = vadd.f32 %v7061, %v7437
      %v7496 = vadd.f32 %v7062, %v7440
      %v7497 = vadd.f32 %v7063, %v7445
      %v7498 = vadd.f32 %v7064, %v7448
      %v7499 = vld [vmem:[#allocation3 + $0x19] sm:$0xff]
      %v7500 = vld [vmem:[#allocation3 + $0x21] sm:$0xff]
      %v7501 = vld [vmem:[#allocation3 + $0x29] sm:$0xff]
      %v7502 = vld [vmem:[#allocation3 + $0x31] sm:$0xff]
      %v7503 = vld [vmem:[#allocation3 + $0x39] sm:$0xff]
      %v7504 = vld [vmem:[#allocation3 + $0x41] sm:$0xff]
      %v7505 = vld [vmem:[#allocation3 + $0x49] sm:$0xff]
      %v7506 = vld [vmem:[#allocation3 + $0x51] sm:$0xff]
      %v7507 = vld [vmem:[#allocation3 + $0x59] sm:$0xff]
      %v7508 = vld [vmem:[#allocation3 + $0x61] sm:$0xff]
      %v7509 = vld [vmem:[#allocation3 + $0x69] sm:$0xff]
      %v7510 = vld [vmem:[#allocation3 + $0x71] sm:$0xff]
      %v7511 = vld [vmem:[#allocation3 + $0x79] sm:$0xff]
      %v7512 = vld [vmem:[#allocation3 + $0x81] sm:$0xff]
      %v7513 = vld [vmem:[#allocation3 + $0x89] sm:$0xff]
      %v7514 = vld [vmem:[#allocation3 + $0x91] sm:$0xff]
      %v7515 = vld [vmem:[#allocation3 + $0x99] sm:$0xff]
      %v7516 = vld [vmem:[#allocation3 + $0xa1] sm:$0xff]
      %v7517 = vld [vmem:[#allocation3 + $0xa9] sm:$0xff]
      %v7518 = vld [vmem:[#allocation3 + $0xb1] sm:$0xff]
      %v7519 = vld [vmem:[#allocation3 + $0xb9] sm:$0xff]
      %v7520 = vld [vmem:[#allocation3 + $0xc1] sm:$0xff]
      %v7521 = vld [vmem:[#allocation3 + $0xc9] sm:$0xff]
      %v7522 = vld [vmem:[#allocation3 + $0xd1] sm:$0xff]
      %v7523 = vld [vmem:[#allocation3 + $0xd9] sm:$0xff]
      %v7524 = vld [vmem:[#allocation3 + $0xe1] sm:$0xff]
      %v7525 = vld [vmem:[#allocation3 + $0xe9] sm:$0xff]
      %v7526 = vld [vmem:[#allocation3 + $0xf1] sm:$0xff]
      %v7527 = vld [vmem:[#allocation3 + $0xf9] sm:$0xff]
      %v7528 = vld [vmem:[#allocation3 + $0x101] sm:$0xff]
      %v7529 = vld [vmem:[#allocation3 + $0x109] sm:$0xff]
      %v7530 = vld [vmem:[#allocation3 + $0x111] sm:$0xff]
      %v7531 = vld [vmem:[#allocation3 + $0x119] sm:$0xff]
      %v7532 = vld [vmem:[#allocation3 + $0x121] sm:$0xff]
      %v7533 = vld [vmem:[#allocation3 + $0x129] sm:$0xff]
      %v7534 = vld [vmem:[#allocation3 + $0x131] sm:$0xff]
      %v7535 = vld [vmem:[#allocation3 + $0x139] sm:$0xff]
      %v7536 = vld [vmem:[#allocation3 + $0x141] sm:$0xff]
      %v7537 = vld [vmem:[#allocation3 + $0x149] sm:$0xff]
      %v7538 = vld [vmem:[#allocation3 + $0x151] sm:$0xff]
      %v7539 = vld [vmem:[#allocation3 + $0x159] sm:$0xff]
      %v7540 = vld [vmem:[#allocation3 + $0x161] sm:$0xff]
      %v7541 = vld [vmem:[#allocation3 + $0x169] sm:$0xff]
      %v7542 = vld [vmem:[#allocation3 + $0x171] sm:$0xff]
      %v7543 = vld [vmem:[#allocation3 + $0x179] sm:$0xff]
      %v7544 = vld [vmem:[#allocation3 + $0x181] sm:$0xff]
      %v7545 = vld [vmem:[#allocation3 + $0x189] sm:$0xff]
      %v7546 = vld [vmem:[#allocation3 + $0x191] sm:$0xff]
      %v7547 = vpack.c.bf16 %v7500, %v7499
      %v7548 = vpack.c.bf16 %v7502, %v7501
      %v7549 = vpack.c.bf16 %v7504, %v7503
      %v7550 = vpack.c.bf16 %v7506, %v7505
      %v7551 = vpack.c.bf16 %v7508, %v7507
      %v7552 = vpack.c.bf16 %v7510, %v7509
      %v7553 = vpack.c.bf16 %v7512, %v7511
      %v7554 = vpack.c.bf16 %v7514, %v7513
      %v7555 = vpack.c.bf16 %v7516, %v7515
      %v7556 = vpack.c.bf16 %v7518, %v7517
      %v7557 = vpack.c.bf16 %v7520, %v7519
      %v7558 = vpack.c.bf16 %v7522, %v7521
      %v7559 = vpack.c.bf16 %v7524, %v7523
      %v7560 = vpack.c.bf16 %v7526, %v7525
      %v7561 = vpack.c.bf16 %v7528, %v7527
      %v7562 = vpack.c.bf16 %v7530, %v7529
      %v7563 = vpack.c.bf16 %v7532, %v7531
      %v7564 = vpack.c.bf16 %v7534, %v7533
      %v7565 = vpack.c.bf16 %v7536, %v7535
      %v7566 = vpack.c.bf16 %v7538, %v7537
      %v7567 = vpack.c.bf16 %v7540, %v7539
      %v7568 = vpack.c.bf16 %v7542, %v7541
      %v7569 = vpack.c.bf16 %v7544, %v7543
      %v7570 = vpack.c.bf16 %v7546, %v7545
      %s7571 = scalar_lea.vmem %s3, 64
      %v7572 = vld [vmem:[%s7571] sm:$0xf]
      %v7573 = vld [vmem:[%s7571 + $0x4] sm:$0xf]
      %v7574 = vld [vmem:[%s7571 + $0x8] sm:$0xf]
      %v7575 = vld [vmem:[%s7571 + $0xc] sm:$0xf]
      %v7580 = vunpack.c.l.b16 %v7572
      %v7581 = vunpack.c.l.b16 %v7573
      %v7582 = vunpack.c.l.b16 %v7574
      %v7583 = vunpack.c.l.b16 %v7575
      %v7584 = vpack.c.b16 %v7581, %v7580
      %v7585 = vpack.c.b16 %v7583, %v7582
      %v7589 = vsel %vm966, %v7547, 0
      %v7592 = vsel %vm966, %v7548, 0
      %v7595 = vsel %vm966, %v7549, 0
      %v7598 = vsel %vm966, %v7550, 0
      %v7601 = vsel %vm966, %v7551, 0
      %v7604 = vsel %vm966, %v7552, 0
      %v7607 = vsel %vm966, %v7553, 0
      %v7610 = vsel %vm966, %v7554, 0
      %v7613 = vsel %vm966, %v7555, 0
      %v7616 = vsel %vm966, %v7556, 0
      %v7619 = vsel %vm966, %v7557, 0
      %v7622 = vsel %vm966, %v7558, 0
      %v7625 = vsel %vm966, %v7559, 0
      %v7628 = vsel %vm966, %v7560, 0
      %v7631 = vsel %vm966, %v7561, 0
      %v7634 = vsel %vm966, %v7562, 0
      %v7637 = vsel %vm966, %v7563, 0
      %v7640 = vsel %vm966, %v7564, 0
      %v7643 = vsel %vm966, %v7565, 0
      %v7646 = vsel %vm966, %v7566, 0
      %v7649 = vsel %vm966, %v7567, 0
      %v7652 = vsel %vm966, %v7568, 0
      %v7655 = vsel %vm966, %v7569, 0
      %v7658 = vsel %vm966, %v7570, 0
      %7660 = vmatprep.subr.bf16.mxu0 0
      %7661 = vmatpush1.bf16.msra.mxu0 %v7584
      %7662 = vmatprep.subr.bf16.mxu0 0
      %7663 = vmatpush1.bf16.msra.mxu0 %v7585
      %7664 = vmatprep.subr.bf16.mxu0 0
      %7665 = vmatpush1.bf16.msra.mxu0 0
      %7666 = vmatprep.subr.bf16.mxu0 0
      %7667 = vmatpush1.bf16.msra.mxu0 0
      %7668 = vmatprep.subr.bf16.mxu0 0
      %7669 = vmatpush1.bf16.msra.mxu0 0
      %7670 = vmatprep.subr.bf16.mxu0 0
      %7671 = vmatpush1.bf16.msra.mxu0 0
      %7672 = vmatprep.subr.bf16.mxu0 0
      %7673 = vmatpush1.bf16.msra.mxu0 0
      %7674 = vmatprep.subr.bf16.mxu0 0
      %7675 = vmatpush1.bf16.msra.mxu0 0
      %7676 = vmatprep.subr.bf16.mxu0 0
      %7677 = vmatpush1.bf16.msra.mxu0 0
      %7678 = vmatprep.subr.bf16.mxu0 0
      %7679 = vmatpush1.bf16.msra.mxu0 0
      %7680 = vmatprep.subr.bf16.mxu0 0
      %7681 = vmatpush1.bf16.msra.mxu0 0
      %7682 = vmatprep.subr.bf16.mxu0 0
      %7683 = vmatpush1.bf16.msra.mxu0 0
      %7684 = vmatprep.subr.bf16.mxu0 0
      %7685 = vmatpush1.bf16.msra.mxu0 0
      %7686 = vmatprep.subr.bf16.mxu0 0
      %7687 = vmatpush1.bf16.msra.mxu0 0
      %7688 = vmatprep.subr.bf16.mxu0 0
      %7689 = vmatpush1.bf16.msra.mxu0 0
      %7690 = vmatprep.subr.bf16.mxu0 0
      %7691 = vmatpush1.bf16.msra.mxu0 0
      %7692 = vmatprep.mubr.bf16.mxu0 0
      %7693 = vmatmul.mubr.bf16.gmra.mrb[0].mxu0 %v7589
      %v7694 = vpop.f32.mrb[0].mxu0
      %v7695 = vadd.f32 0.0, %v7694
      %v7696 = vpop.f32.mrb[0].mxu0
      %v7697 = vpop.f32.mrb[0].mxu0
      %v7698 = vadd.f32 0.0, %v7697
      %v7699 = vpop.f32.mrb[0].mxu0
      %7700 = vmatprep.mubr.bf16.mxu0 0
      %7701 = vmatmul.mubr.bf16.gmra.mrb[0].mxu0 %v7592
      %v7702 = vpop.f32.mrb[0].mxu0
      %v7703 = vadd.f32 0.0, %v7702
      %v7704 = vpop.f32.mrb[0].mxu0
      %v7705 = vpop.f32.mrb[0].mxu0
      %v7706 = vadd.f32 0.0, %v7705
      %v7707 = vpop.f32.mrb[0].mxu0
      %7708 = vmatprep.mubr.bf16.mxu0 0
      %7709 = vmatmul.mubr.bf16.gmra.mrb[0].mxu0 %v7595
      %v7710 = vpop.f32.mrb[0].mxu0
      %v7711 = vadd.f32 0.0, %v7710
      %v7712 = vpop.f32.mrb[0].mxu0
      %v7713 = vpop.f32.mrb[0].mxu0
      %v7714 = vadd.f32 0.0, %v7713
      %v7715 = vpop.f32.mrb[0].mxu0
      %7716 = vmatprep.mubr.bf16.mxu0 0
      %7717 = vmatmul.mubr.bf16.gmra.mrb[0].mxu0 %v7598
      %v7718 = vpop.f32.mrb[0].mxu0
      %v7719 = vadd.f32 0.0, %v7718
      %v7720 = vpop.f32.mrb[0].mxu0
      %v7721 = vpop.f32.mrb[0].mxu0
      %v7722 = vadd.f32 0.0, %v7721
      %v7723 = vpop.f32.mrb[0].mxu0
      %7724 = vmatprep.mubr.bf16.mxu0 0
      %7725 = vmatmul.mubr.bf16.gmra.mrb[0].mxu0 %v7601
      %v7726 = vpop.f32.mrb[0].mxu0
      %v7727 = vadd.f32 0.0, %v7726
      %v7728 = vpop.f32.mrb[0].mxu0
      %v7729 = vpop.f32.mrb[0].mxu0
      %v7730 = vadd.f32 0.0, %v7729
      %v7731 = vpop.f32.mrb[0].mxu0
      %7732 = vmatprep.mubr.bf16.mxu0 0
      %7733 = vmatmul.mubr.bf16.gmra.mrb[0].mxu0 %v7604
      %v7734 = vpop.f32.mrb[0].mxu0
      %v7735 = vadd.f32 0.0, %v7734
      %v7736 = vpop.f32.mrb[0].mxu0
      %v7737 = vpop.f32.mrb[0].mxu0
      %v7738 = vadd.f32 0.0, %v7737
      %v7739 = vpop.f32.mrb[0].mxu0
      %7740 = vmatprep.mubr.bf16.mxu0 0
      %7741 = vmatmul.mubr.bf16.gmra.mrb[0].mxu0 %v7607
      %v7742 = vpop.f32.mrb[0].mxu0
      %v7743 = vadd.f32 0.0, %v7742
      %v7744 = vpop.f32.mrb[0].mxu0
      %v7745 = vpop.f32.mrb[0].mxu0
      %v7746 = vadd.f32 0.0, %v7745
      %v7747 = vpop.f32.mrb[0].mxu0
      %7748 = vmatprep.mubr.bf16.mxu0 0
      %7749 = vmatmul.mubr.bf16.gmra.mrb[0].mxu0 %v7610
      %v7750 = vpop.f32.mrb[0].mxu0
      %v7751 = vadd.f32 0.0, %v7750
      %v7752 = vpop.f32.mrb[0].mxu0
      %v7753 = vpop.f32.mrb[0].mxu0
      %v7754 = vadd.f32 0.0, %v7753
      %v7755 = vpop.f32.mrb[0].mxu0
      %7756 = vmatprep.mubr.bf16.mxu0 0
      %7757 = vmatmul.mubr.bf16.gmra.mrb[0].mxu0 %v7613
      %v7758 = vpop.f32.mrb[0].mxu0
      %v7759 = vadd.f32 0.0, %v7758
      %v7760 = vpop.f32.mrb[0].mxu0
      %v7761 = vpop.f32.mrb[0].mxu0
      %v7762 = vadd.f32 0.0, %v7761
      %v7763 = vpop.f32.mrb[0].mxu0
      %7764 = vmatprep.mubr.bf16.mxu0 0
      %7765 = vmatmul.mubr.bf16.gmra.mrb[0].mxu0 %v7616
      %v7766 = vpop.f32.mrb[0].mxu0
      %v7767 = vadd.f32 0.0, %v7766
      %v7768 = vpop.f32.mrb[0].mxu0
      %v7769 = vpop.f32.mrb[0].mxu0
      %v7770 = vadd.f32 0.0, %v7769
      %v7771 = vpop.f32.mrb[0].mxu0
      %7772 = vmatprep.mubr.bf16.mxu0 0
      %7773 = vmatmul.mubr.bf16.gmra.mrb[0].mxu0 %v7619
      %v7774 = vpop.f32.mrb[0].mxu0
      %v7775 = vadd.f32 0.0, %v7774
      %v7776 = vpop.f32.mrb[0].mxu0
      %v7777 = vpop.f32.mrb[0].mxu0
      %v7778 = vadd.f32 0.0, %v7777
      %v7779 = vpop.f32.mrb[0].mxu0
      %7780 = vmatprep.mubr.bf16.mxu0 0
      %7781 = vmatmul.mubr.bf16.gmra.mrb[0].mxu0 %v7622
      %v7782 = vpop.f32.mrb[0].mxu0
      %v7783 = vadd.f32 0.0, %v7782
      %v7784 = vpop.f32.mrb[0].mxu0
      %v7785 = vpop.f32.mrb[0].mxu0
      %v7786 = vadd.f32 0.0, %v7785
      %v7787 = vpop.f32.mrb[0].mxu0
      %7788 = vmatprep.mubr.bf16.mxu0 0
      %7789 = vmatmul.mubr.bf16.gmra.mrb[0].mxu0 %v7625
      %v7790 = vpop.f32.mrb[0].mxu0
      %v7791 = vadd.f32 0.0, %v7790
      %v7792 = vpop.f32.mrb[0].mxu0
      %v7793 = vpop.f32.mrb[0].mxu0
      %v7794 = vadd.f32 0.0, %v7793
      %v7795 = vpop.f32.mrb[0].mxu0
      %7796 = vmatprep.mubr.bf16.mxu0 0
      %7797 = vmatmul.mubr.bf16.gmra.mrb[0].mxu0 %v7628
      %v7798 = vpop.f32.mrb[0].mxu0
      %v7799 = vadd.f32 0.0, %v7798
      %v7800 = vpop.f32.mrb[0].mxu0
      %v7801 = vpop.f32.mrb[0].mxu0
      %v7802 = vadd.f32 0.0, %v7801
      %v7803 = vpop.f32.mrb[0].mxu0
      %7804 = vmatprep.mubr.bf16.mxu0 0
      %7805 = vmatmul.mubr.bf16.gmra.mrb[0].mxu0 %v7631
      %v7806 = vpop.f32.mrb[0].mxu0
      %v7807 = vadd.f32 0.0, %v7806
      %v7808 = vpop.f32.mrb[0].mxu0
      %v7809 = vpop.f32.mrb[0].mxu0
      %v7810 = vadd.f32 0.0, %v7809
      %v7811 = vpop.f32.mrb[0].mxu0
      %7812 = vmatprep.mubr.bf16.mxu0 0
      %7813 = vmatmul.mubr.bf16.gmra.mrb[0].mxu0 %v7634
      %v7814 = vpop.f32.mrb[0].mxu0
      %v7815 = vadd.f32 0.0, %v7814
      %v7816 = vpop.f32.mrb[0].mxu0
      %v7817 = vpop.f32.mrb[0].mxu0
      %v7818 = vadd.f32 0.0, %v7817
      %v7819 = vpop.f32.mrb[0].mxu0
      %7820 = vmatprep.mubr.bf16.mxu0 0
      %7821 = vmatmul.mubr.bf16.gmra.mrb[0].mxu0 %v7637
      %v7822 = vpop.f32.mrb[0].mxu0
      %v7823 = vadd.f32 0.0, %v7822
      %v7824 = vpop.f32.mrb[0].mxu0
      %v7825 = vpop.f32.mrb[0].mxu0
      %v7826 = vadd.f32 0.0, %v7825
      %v7827 = vpop.f32.mrb[0].mxu0
      %7828 = vmatprep.mubr.bf16.mxu0 0
      %7829 = vmatmul.mubr.bf16.gmra.mrb[0].mxu0 %v7640
      %v7830 = vpop.f32.mrb[0].mxu0
      %v7831 = vadd.f32 0.0, %v7830
      %v7832 = vpop.f32.mrb[0].mxu0
      %v7833 = vpop.f32.mrb[0].mxu0
      %v7834 = vadd.f32 0.0, %v7833
      %v7835 = vpop.f32.mrb[0].mxu0
      %7836 = vmatprep.mubr.bf16.mxu0 0
      %7837 = vmatmul.mubr.bf16.gmra.mrb[0].mxu0 %v7643
      %v7838 = vpop.f32.mrb[0].mxu0
      %v7839 = vadd.f32 0.0, %v7838
      %v7840 = vpop.f32.mrb[0].mxu0
      %v7841 = vpop.f32.mrb[0].mxu0
      %v7842 = vadd.f32 0.0, %v7841
      %v7843 = vpop.f32.mrb[0].mxu0
      %7844 = vmatprep.mubr.bf16.mxu0 0
      %7845 = vmatmul.mubr.bf16.gmra.mrb[0].mxu0 %v7646
      %v7846 = vpop.f32.mrb[0].mxu0
      %v7847 = vadd.f32 0.0, %v7846
      %v7848 = vpop.f32.mrb[0].mxu0
      %v7849 = vpop.f32.mrb[0].mxu0
      %v7850 = vadd.f32 0.0, %v7849
      %v7851 = vpop.f32.mrb[0].mxu0
      %7852 = vmatprep.mubr.bf16.mxu0 0
      %7853 = vmatmul.mubr.bf16.gmra.mrb[0].mxu0 %v7649
      %v7854 = vpop.f32.mrb[0].mxu0
      %v7855 = vadd.f32 0.0, %v7854
      %v7856 = vpop.f32.mrb[0].mxu0
      %v7857 = vpop.f32.mrb[0].mxu0
      %v7858 = vadd.f32 0.0, %v7857
      %v7859 = vpop.f32.mrb[0].mxu0
      %7860 = vmatprep.mubr.bf16.mxu0 0
      %7861 = vmatmul.mubr.bf16.gmra.mrb[0].mxu0 %v7652
      %v7862 = vpop.f32.mrb[0].mxu0
      %v7863 = vadd.f32 0.0, %v7862
      %v7864 = vpop.f32.mrb[0].mxu0
      %v7865 = vpop.f32.mrb[0].mxu0
      %v7866 = vadd.f32 0.0, %v7865
      %v7867 = vpop.f32.mrb[0].mxu0
      %7868 = vmatprep.mubr.bf16.mxu0 0
      %7869 = vmatmul.mubr.bf16.gmra.mrb[0].mxu0 %v7655
      %v7870 = vpop.f32.mrb[0].mxu0
      %v7871 = vadd.f32 0.0, %v7870
      %v7872 = vpop.f32.mrb[0].mxu0
      %v7873 = vpop.f32.mrb[0].mxu0
      %v7874 = vadd.f32 0.0, %v7873
      %v7875 = vpop.f32.mrb[0].mxu0
      %7876 = vmatprep.mubr.bf16.mxu0 0
      %7877 = vmatmul.mubr.bf16.gmra.mrb[0].mxu0 %v7658
      %v7878 = vpop.f32.mrb[0].mxu0
      %v7879 = vadd.f32 0.0, %v7878
      %v7880 = vpop.f32.mrb[0].mxu0
      %v7881 = vpop.f32.mrb[0].mxu0
      %v7882 = vadd.f32 0.0, %v7881
      %v7883 = vpop.f32.mrb[0].mxu0
      %7884 = vdwg.mxu0
      %v7885 = vadd.f32 %v7451, %v7695
      %v7886 = vadd.f32 %v7452, %v7698
      %v7887 = vadd.f32 %v7453, %v7703
      %v7888 = vadd.f32 %v7454, %v7706
      %v7889 = vadd.f32 %v7455, %v7711
      %v7890 = vadd.f32 %v7456, %v7714
      %v7891 = vadd.f32 %v7457, %v7719
      %v7892 = vadd.f32 %v7458, %v7722
      %v7893 = vadd.f32 %v7459, %v7727
      %v7894 = vadd.f32 %v7460, %v7730
      %v7895 = vadd.f32 %v7461, %v7735
      %v7896 = vadd.f32 %v7462, %v7738
      %v7897 = vadd.f32 %v7463, %v7743
      %v7898 = vadd.f32 %v7464, %v7746
      %v7899 = vadd.f32 %v7465, %v7751
      %v7900 = vadd.f32 %v7466, %v7754
      %v7901 = vadd.f32 %v7467, %v7759
      %v7902 = vadd.f32 %v7468, %v7762
      %v7903 = vadd.f32 %v7469, %v7767
      %v7904 = vadd.f32 %v7470, %v7770
      %v7905 = vadd.f32 %v7471, %v7775
      %v7906 = vadd.f32 %v7472, %v7778
      %v7907 = vadd.f32 %v7473, %v7783
      %v7908 = vadd.f32 %v7474, %v7786
      %v7909 = vadd.f32 %v7475, %v7791
      %v7910 = vadd.f32 %v7476, %v7794
      %v7911 = vadd.f32 %v7477, %v7799
      %v7912 = vadd.f32 %v7478, %v7802
      %v7913 = vadd.f32 %v7479, %v7807
      %v7914 = vadd.f32 %v7480, %v7810
      %v7915 = vadd.f32 %v7481, %v7815
      %v7916 = vadd.f32 %v7482, %v7818
      %v7917 = vadd.f32 %v7483, %v7823
      %v7918 = vadd.f32 %v7484, %v7826
      %v7919 = vadd.f32 %v7485, %v7831
      %v7920 = vadd.f32 %v7486, %v7834
      %v7921 = vadd.f32 %v7487, %v7839
      %v7922 = vadd.f32 %v7488, %v7842
      %v7923 = vadd.f32 %v7489, %v7847
      %v7924 = vadd.f32 %v7490, %v7850
      %v7925 = vadd.f32 %v7491, %v7855
      %v7926 = vadd.f32 %v7492, %v7858
      %v7927 = vadd.f32 %v7493, %v7863
      %v7928 = vadd.f32 %v7494, %v7866
      %v7929 = vadd.f32 %v7495, %v7871
      %v7930 = vadd.f32 %v7496, %v7874
      %v7931 = vadd.f32 %v7497, %v7879
      %v7932 = vadd.f32 %v7498, %v7882
      %v7933 = vld [vmem:[#allocation3 + $0x1a] sm:$0xff]
      %v7934 = vld [vmem:[#allocation3 + $0x22] sm:$0xff]
      %v7935 = vld [vmem:[#allocation3 + $0x2a] sm:$0xff]
      %v7936 = vld [vmem:[#allocation3 + $0x32] sm:$0xff]
      %v7937 = vld [vmem:[#allocation3 + $0x3a] sm:$0xff]
      %v7938 = vld [vmem:[#allocation3 + $0x42] sm:$0xff]
      %v7939 = vld [vmem:[#allocation3 + $0x4a] sm:$0xff]
      %v7940 = vld [vmem:[#allocation3 + $0x52] sm:$0xff]
      %v7941 = vld [vmem:[#allocation3 + $0x5a] sm:$0xff]
      %v7942 = vld [vmem:[#allocation3 + $0x62] sm:$0xff]
      %v7943 = vld [vmem:[#allocation3 + $0x6a] sm:$0xff]
      %v7944 = vld [vmem:[#allocation3 + $0x72] sm:$0xff]
      %v7945 = vld [vmem:[#allocation3 + $0x7a] sm:$0xff]
      %v7946 = vld [vmem:[#allocation3 + $0x82] sm:$0xff]
      %v7947 = vld [vmem:[#allocation3 + $0x8a] sm:$0xff]
      %v7948 = vld [vmem:[#allocation3 + $0x92] sm:$0xff]
      %v7949 = vld [vmem:[#allocation3 + $0x9a] sm:$0xff]
      %v7950 = vld [vmem:[#allocation3 + $0xa2] sm:$0xff]
      %v7951 = vld [vmem:[#allocation3 + $0xaa] sm:$0xff]
      %v7952 = vld [vmem:[#allocation3 + $0xb2] sm:$0xff]
      %v7953 = vld [vmem:[#allocation3 + $0xba] sm:$0xff]
      %v7954 = vld [vmem:[#allocation3 + $0xc2] sm:$0xff]
      %v7955 = vld [vmem:[#allocation3 + $0xca] sm:$0xff]
      %v7956 = vld [vmem:[#allocation3 + $0xd2] sm:$0xff]
      %v7957 = vld [vmem:[#allocation3 + $0xda] sm:$0xff]
      %v7958 = vld [vmem:[#allocation3 + $0xe2] sm:$0xff]
      %v7959 = vld [vmem:[#allocation3 + $0xea] sm:$0xff]
      %v7960 = vld [vmem:[#allocation3 + $0xf2] sm:$0xff]
      %v7961 = vld [vmem:[#allocation3 + $0xfa] sm:$0xff]
      %v7962 = vld [vmem:[#allocation3 + $0x102] sm:$0xff]
      %v7963 = vld [vmem:[#allocation3 + $0x10a] sm:$0xff]
      %v7964 = vld [vmem:[#allocation3 + $0x112] sm:$0xff]
      %v7965 = vld [vmem:[#allocation3 + $0x11a] sm:$0xff]
      %v7966 = vld [vmem:[#allocation3 + $0x122] sm:$0xff]
      %v7967 = vld [vmem:[#allocation3 + $0x12a] sm:$0xff]
      %v7968 = vld [vmem:[#allocation3 + $0x132] sm:$0xff]
      %v7969 = vld [vmem:[#allocation3 + $0x13a] sm:$0xff]
      %v7970 = vld [vmem:[#allocation3 + $0x142] sm:$0xff]
      %v7971 = vld [vmem:[#allocation3 + $0x14a] sm:$0xff]
      %v7972 = vld [vmem:[#allocation3 + $0x152] sm:$0xff]
      %v7973 = vld [vmem:[#allocation3 + $0x15a] sm:$0xff]
      %v7974 = vld [vmem:[#allocation3 + $0x162] sm:$0xff]
      %v7975 = vld [vmem:[#allocation3 + $0x16a] sm:$0xff]
      %v7976 = vld [vmem:[#allocation3 + $0x172] sm:$0xff]
      %v7977 = vld [vmem:[#allocation3 + $0x17a] sm:$0xff]
      %v7978 = vld [vmem:[#allocation3 + $0x182] sm:$0xff]
      %v7979 = vld [vmem:[#allocation3 + $0x18a] sm:$0xff]
      %v7980 = vld [vmem:[#allocation3 + $0x192] sm:$0xff]
      %v7981 = vpack.c.bf16 %v7934, %v7933
      %v7982 = vpack.c.bf16 %v7936, %v7935
      %v7983 = vpack.c.bf16 %v7938, %v7937
      %v7984 = vpack.c.bf16 %v7940, %v7939
      %v7985 = vpack.c.bf16 %v7942, %v7941
      %v7986 = vpack.c.bf16 %v7944, %v7943
      %v7987 = vpack.c.bf16 %v7946, %v7945
      %v7988 = vpack.c.bf16 %v7948, %v7947
      %v7989 = vpack.c.bf16 %v7950, %v7949
      %v7990 = vpack.c.bf16 %v7952, %v7951
      %v7991 = vpack.c.bf16 %v7954, %v7953
      %v7992 = vpack.c.bf16 %v7956, %v7955
      %v7993 = vpack.c.bf16 %v7958, %v7957
      %v7994 = vpack.c.bf16 %v7960, %v7959
      %v7995 = vpack.c.bf16 %v7962, %v7961
      %v7996 = vpack.c.bf16 %v7964, %v7963
      %v7997 = vpack.c.bf16 %v7966, %v7965
      %v7998 = vpack.c.bf16 %v7968, %v7967
      %v7999 = vpack.c.bf16 %v7970, %v7969
      %v8000 = vpack.c.bf16 %v7972, %v7971
      %v8001 = vpack.c.bf16 %v7974, %v7973
      %v8002 = vpack.c.bf16 %v7976, %v7975
      %v8003 = vpack.c.bf16 %v7978, %v7977
      %v8004 = vpack.c.bf16 %v7980, %v7979
      %s8005 = scalar_lea.vmem %s3, 80
      %v8006 = vld [vmem:[%s8005] sm:$0xf]
      %v8007 = vld [vmem:[%s8005 + $0x4] sm:$0xf]
      %v8008 = vld [vmem:[%s8005 + $0x8] sm:$0xf]
      %v8009 = vld [vmem:[%s8005 + $0xc] sm:$0xf]
      %v8014 = vunpack.c.l.b16 %v8006
      %v8015 = vunpack.c.l.b16 %v8007
      %v8016 = vunpack.c.l.b16 %v8008
      %v8017 = vunpack.c.l.b16 %v8009
      %v8018 = vpack.c.b16 %v8015, %v8014
      %v8019 = vpack.c.b16 %v8017, %v8016
      %v8023 = vsel %vm966, %v7981, 0
      %v8026 = vsel %vm966, %v7982, 0
      %v8029 = vsel %vm966, %v7983, 0
      %v8032 = vsel %vm966, %v7984, 0
      %v8035 = vsel %vm966, %v7985, 0
      %v8038 = vsel %vm966, %v7986, 0
      %v8041 = vsel %vm966, %v7987, 0
      %v8044 = vsel %vm966, %v7988, 0
      %v8047 = vsel %vm966, %v7989, 0
      %v8050 = vsel %vm966, %v7990, 0
      %v8053 = vsel %vm966, %v7991, 0
      %v8056 = vsel %vm966, %v7992, 0
      %v8059 = vsel %vm966, %v7993, 0
      %v8062 = vsel %vm966, %v7994, 0
      %v8065 = vsel %vm966, %v7995, 0
      %v8068 = vsel %vm966, %v7996, 0
      %v8071 = vsel %vm966, %v7997, 0
      %v8074 = vsel %vm966, %v7998, 0
      %v8077 = vsel %vm966, %v7999, 0
      %v8080 = vsel %vm966, %v8000, 0
      %v8083 = vsel %vm966, %v8001, 0
      %v8086 = vsel %vm966, %v8002, 0
      %v8089 = vsel %vm966, %v8003, 0
      %v8092 = vsel %vm966, %v8004, 0
      %8094 = vmatprep.subr.bf16.mxu0 0
      %8095 = vmatpush1.bf16.msra.mxu0 %v8018
      %8096 = vmatprep.subr.bf16.mxu0 0
      %8097 = vmatpush1.bf16.msra.mxu0 %v8019
      %8098 = vmatprep.subr.bf16.mxu0 0
      %8099 = vmatpush1.bf16.msra.mxu0 0
      %8100 = vmatprep.subr.bf16.mxu0 0
      %8101 = vmatpush1.bf16.msra.mxu0 0
      %8102 = vmatprep.subr.bf16.mxu0 0
      %8103 = vmatpush1.bf16.msra.mxu0 0
      %8104 = vmatprep.subr.bf16.mxu0 0
      %8105 = vmatpush1.bf16.msra.mxu0 0
      %8106 = vmatprep.subr.bf16.mxu0 0
      %8107 = vmatpush1.bf16.msra.mxu0 0
      %8108 = vmatprep.subr.bf16.mxu0 0
      %8109 = vmatpush1.bf16.msra.mxu0 0
      %8110 = vmatprep.subr.bf16.mxu0 0
      %8111 = vmatpush1.bf16.msra.mxu0 0
      %8112 = vmatprep.subr.bf16.mxu0 0
      %8113 = vmatpush1.bf16.msra.mxu0 0
      %8114 = vmatprep.subr.bf16.mxu0 0
      %8115 = vmatpush1.bf16.msra.mxu0 0
      %8116 = vmatprep.subr.bf16.mxu0 0
      %8117 = vmatpush1.bf16.msra.mxu0 0
      %8118 = vmatprep.subr.bf16.mxu0 0
      %8119 = vmatpush1.bf16.msra.mxu0 0
      %8120 = vmatprep.subr.bf16.mxu0 0
      %8121 = vmatpush1.bf16.msra.mxu0 0
      %8122 = vmatprep.subr.bf16.mxu0 0
      %8123 = vmatpush1.bf16.msra.mxu0 0
      %8124 = vmatprep.subr.bf16.mxu0 0
      %8125 = vmatpush1.bf16.msra.mxu0 0
      %8126 = vmatprep.mubr.bf16.mxu0 0
      %8127 = vmatmul.mubr.bf16.gmra.mrb[0].mxu0 %v8023
      %v8128 = vpop.f32.mrb[0].mxu0
      %v8129 = vadd.f32 0.0, %v8128
      %v8130 = vpop.f32.mrb[0].mxu0
      %v8131 = vpop.f32.mrb[0].mxu0
      %v8132 = vadd.f32 0.0, %v8131
      %v8133 = vpop.f32.mrb[0].mxu0
      %8134 = vmatprep.mubr.bf16.mxu0 0
      %8135 = vmatmul.mubr.bf16.gmra.mrb[0].mxu0 %v8026
      %v8136 = vpop.f32.mrb[0].mxu0
      %v8137 = vadd.f32 0.0, %v8136
      %v8138 = vpop.f32.mrb[0].mxu0
      %v8139 = vpop.f32.mrb[0].mxu0
      %v8140 = vadd.f32 0.0, %v8139
      %v8141 = vpop.f32.mrb[0].mxu0
      %8142 = vmatprep.mubr.bf16.mxu0 0
      %8143 = vmatmul.mubr.bf16.gmra.mrb[0].mxu0 %v8029
      %v8144 = vpop.f32.mrb[0].mxu0
      %v8145 = vadd.f32 0.0, %v8144
      %v8146 = vpop.f32.mrb[0].mxu0
      %v8147 = vpop.f32.mrb[0].mxu0
      %v8148 = vadd.f32 0.0, %v8147
      %v8149 = vpop.f32.mrb[0].mxu0
      %8150 = vmatprep.mubr.bf16.mxu0 0
      %8151 = vmatmul.mubr.bf16.gmra.mrb[0].mxu0 %v8032
      %v8152 = vpop.f32.mrb[0].mxu0
      %v8153 = vadd.f32 0.0, %v8152
      %v8154 = vpop.f32.mrb[0].mxu0
      %v8155 = vpop.f32.mrb[0].mxu0
      %v8156 = vadd.f32 0.0, %v8155
      %v8157 = vpop.f32.mrb[0].mxu0
      %8158 = vmatprep.mubr.bf16.mxu0 0
      %8159 = vmatmul.mubr.bf16.gmra.mrb[0].mxu0 %v8035
      %v8160 = vpop.f32.mrb[0].mxu0
      %v8161 = vadd.f32 0.0, %v8160
      %v8162 = vpop.f32.mrb[0].mxu0
      %v8163 = vpop.f32.mrb[0].mxu0
      %v8164 = vadd.f32 0.0, %v8163
      %v8165 = vpop.f32.mrb[0].mxu0
      %8166 = vmatprep.mubr.bf16.mxu0 0
      %8167 = vmatmul.mubr.bf16.gmra.mrb[0].mxu0 %v8038
      %v8168 = vpop.f32.mrb[0].mxu0
      %v8169 = vadd.f32 0.0, %v8168
      %v8170 = vpop.f32.mrb[0].mxu0
      %v8171 = vpop.f32.mrb[0].mxu0
      %v8172 = vadd.f32 0.0, %v8171
      %v8173 = vpop.f32.mrb[0].mxu0
      %8174 = vmatprep.mubr.bf16.mxu0 0
      %8175 = vmatmul.mubr.bf16.gmra.mrb[0].mxu0 %v8041
      %v8176 = vpop.f32.mrb[0].mxu0
      %v8177 = vadd.f32 0.0, %v8176
      %v8178 = vpop.f32.mrb[0].mxu0
      %v8179 = vpop.f32.mrb[0].mxu0
      %v8180 = vadd.f32 0.0, %v8179
      %v8181 = vpop.f32.mrb[0].mxu0
      %8182 = vmatprep.mubr.bf16.mxu0 0
      %8183 = vmatmul.mubr.bf16.gmra.mrb[0].mxu0 %v8044
      %v8184 = vpop.f32.mrb[0].mxu0
      %v8185 = vadd.f32 0.0, %v8184
      %v8186 = vpop.f32.mrb[0].mxu0
      %v8187 = vpop.f32.mrb[0].mxu0
      %v8188 = vadd.f32 0.0, %v8187
      %v8189 = vpop.f32.mrb[0].mxu0
      %8190 = vmatprep.mubr.bf16.mxu0 0
      %8191 = vmatmul.mubr.bf16.gmra.mrb[0].mxu0 %v8047
      %v8192 = vpop.f32.mrb[0].mxu0
      %v8193 = vadd.f32 0.0, %v8192
      %v8194 = vpop.f32.mrb[0].mxu0
      %v8195 = vpop.f32.mrb[0].mxu0
      %v8196 = vadd.f32 0.0, %v8195
      %v8197 = vpop.f32.mrb[0].mxu0
      %8198 = vmatprep.mubr.bf16.mxu0 0
      %8199 = vmatmul.mubr.bf16.gmra.mrb[0].mxu0 %v8050
      %v8200 = vpop.f32.mrb[0].mxu0
      %v8201 = vadd.f32 0.0, %v8200
      %v8202 = vpop.f32.mrb[0].mxu0
      %v8203 = vpop.f32.mrb[0].mxu0
      %v8204 = vadd.f32 0.0, %v8203
      %v8205 = vpop.f32.mrb[0].mxu0
      %8206 = vmatprep.mubr.bf16.mxu0 0
      %8207 = vmatmul.mubr.bf16.gmra.mrb[0].mxu0 %v8053
      %v8208 = vpop.f32.mrb[0].mxu0
      %v8209 = vadd.f32 0.0, %v8208
      %v8210 = vpop.f32.mrb[0].mxu0
      %v8211 = vpop.f32.mrb[0].mxu0
      %v8212 = vadd.f32 0.0, %v8211
      %v8213 = vpop.f32.mrb[0].mxu0
      %8214 = vmatprep.mubr.bf16.mxu0 0
      %8215 = vmatmul.mubr.bf16.gmra.mrb[0].mxu0 %v8056
      %v8216 = vpop.f32.mrb[0].mxu0
      %v8217 = vadd.f32 0.0, %v8216
      %v8218 = vpop.f32.mrb[0].mxu0
      %v8219 = vpop.f32.mrb[0].mxu0
      %v8220 = vadd.f32 0.0, %v8219
      %v8221 = vpop.f32.mrb[0].mxu0
      %8222 = vmatprep.mubr.bf16.mxu0 0
      %8223 = vmatmul.mubr.bf16.gmra.mrb[0].mxu0 %v8059
      %v8224 = vpop.f32.mrb[0].mxu0
      %v8225 = vadd.f32 0.0, %v8224
      %v8226 = vpop.f32.mrb[0].mxu0
      %v8227 = vpop.f32.mrb[0].mxu0
      %v8228 = vadd.f32 0.0, %v8227
      %v8229 = vpop.f32.mrb[0].mxu0
      %8230 = vmatprep.mubr.bf16.mxu0 0
      %8231 = vmatmul.mubr.bf16.gmra.mrb[0].mxu0 %v8062
      %v8232 = vpop.f32.mrb[0].mxu0
      %v8233 = vadd.f32 0.0, %v8232
      %v8234 = vpop.f32.mrb[0].mxu0
      %v8235 = vpop.f32.mrb[0].mxu0
      %v8236 = vadd.f32 0.0, %v8235
      %v8237 = vpop.f32.mrb[0].mxu0
      %8238 = vmatprep.mubr.bf16.mxu0 0
      %8239 = vmatmul.mubr.bf16.gmra.mrb[0].mxu0 %v8065
      %v8240 = vpop.f32.mrb[0].mxu0
      %v8241 = vadd.f32 0.0, %v8240
      %v8242 = vpop.f32.mrb[0].mxu0
      %v8243 = vpop.f32.mrb[0].mxu0
      %v8244 = vadd.f32 0.0, %v8243
      %v8245 = vpop.f32.mrb[0].mxu0
      %8246 = vmatprep.mubr.bf16.mxu0 0
      %8247 = vmatmul.mubr.bf16.gmra.mrb[0].mxu0 %v8068
      %v8248 = vpop.f32.mrb[0].mxu0
      %v8249 = vadd.f32 0.0, %v8248
      %v8250 = vpop.f32.mrb[0].mxu0
      %v8251 = vpop.f32.mrb[0].mxu0
      %v8252 = vadd.f32 0.0, %v8251
      %v8253 = vpop.f32.mrb[0].mxu0
      %8254 = vmatprep.mubr.bf16.mxu0 0
      %8255 = vmatmul.mubr.bf16.gmra.mrb[0].mxu0 %v8071
      %v8256 = vpop.f32.mrb[0].mxu0
      %v8257 = vadd.f32 0.0, %v8256
      %v8258 = vpop.f32.mrb[0].mxu0
      %v8259 = vpop.f32.mrb[0].mxu0
      %v8260 = vadd.f32 0.0, %v8259
      %v8261 = vpop.f32.mrb[0].mxu0
      %8262 = vmatprep.mubr.bf16.mxu0 0
      %8263 = vmatmul.mubr.bf16.gmra.mrb[0].mxu0 %v8074
      %v8264 = vpop.f32.mrb[0].mxu0
      %v8265 = vadd.f32 0.0, %v8264
      %v8266 = vpop.f32.mrb[0].mxu0
      %v8267 = vpop.f32.mrb[0].mxu0
      %v8268 = vadd.f32 0.0, %v8267
      %v8269 = vpop.f32.mrb[0].mxu0
      %8270 = vmatprep.mubr.bf16.mxu0 0
      %8271 = vmatmul.mubr.bf16.gmra.mrb[0].mxu0 %v8077
      %v8272 = vpop.f32.mrb[0].mxu0
      %v8273 = vadd.f32 0.0, %v8272
      %v8274 = vpop.f32.mrb[0].mxu0
      %v8275 = vpop.f32.mrb[0].mxu0
      %v8276 = vadd.f32 0.0, %v8275
      %v8277 = vpop.f32.mrb[0].mxu0
      %8278 = vmatprep.mubr.bf16.mxu0 0
      %8279 = vmatmul.mubr.bf16.gmra.mrb[0].mxu0 %v8080
      %v8280 = vpop.f32.mrb[0].mxu0
      %v8281 = vadd.f32 0.0, %v8280
      %v8282 = vpop.f32.mrb[0].mxu0
      %v8283 = vpop.f32.mrb[0].mxu0
      %v8284 = vadd.f32 0.0, %v8283
      %v8285 = vpop.f32.mrb[0].mxu0
      %8286 = vmatprep.mubr.bf16.mxu0 0
      %8287 = vmatmul.mubr.bf16.gmra.mrb[0].mxu0 %v8083
      %v8288 = vpop.f32.mrb[0].mxu0
      %v8289 = vadd.f32 0.0, %v8288
      %v8290 = vpop.f32.mrb[0].mxu0
      %v8291 = vpop.f32.mrb[0].mxu0
      %v8292 = vadd.f32 0.0, %v8291
      %v8293 = vpop.f32.mrb[0].mxu0
      %8294 = vmatprep.mubr.bf16.mxu0 0
      %8295 = vmatmul.mubr.bf16.gmra.mrb[0].mxu0 %v8086
      %v8296 = vpop.f32.mrb[0].mxu0
      %v8297 = vadd.f32 0.0, %v8296
      %v8298 = vpop.f32.mrb[0].mxu0
      %v8299 = vpop.f32.mrb[0].mxu0
      %v8300 = vadd.f32 0.0, %v8299
      %v8301 = vpop.f32.mrb[0].mxu0
      %8302 = vmatprep.mubr.bf16.mxu0 0
      %8303 = vmatmul.mubr.bf16.gmra.mrb[0].mxu0 %v8089
      %v8304 = vpop.f32.mrb[0].mxu0
      %v8305 = vadd.f32 0.0, %v8304
      %v8306 = vpop.f32.mrb[0].mxu0
      %v8307 = vpop.f32.mrb[0].mxu0
      %v8308 = vadd.f32 0.0, %v8307
      %v8309 = vpop.f32.mrb[0].mxu0
      %8310 = vmatprep.mubr.bf16.mxu0 0
      %8311 = vmatmul.mubr.bf16.gmra.mrb[0].mxu0 %v8092
      %v8312 = vpop.f32.mrb[0].mxu0
      %v8313 = vadd.f32 0.0, %v8312
      %v8314 = vpop.f32.mrb[0].mxu0
      %v8315 = vpop.f32.mrb[0].mxu0
      %v8316 = vadd.f32 0.0, %v8315
      %v8317 = vpop.f32.mrb[0].mxu0
      %8318 = vdwg.mxu0
      %v8319 = vadd.f32 %v7885, %v8129
      %v8320 = vadd.f32 %v7886, %v8132
      %v8321 = vadd.f32 %v7887, %v8137
      %v8322 = vadd.f32 %v7888, %v8140
      %v8323 = vadd.f32 %v7889, %v8145
      %v8324 = vadd.f32 %v7890, %v8148
      %v8325 = vadd.f32 %v7891, %v8153
      %v8326 = vadd.f32 %v7892, %v8156
      %v8327 = vadd.f32 %v7893, %v8161
      %v8328 = vadd.f32 %v7894, %v8164
      %v8329 = vadd.f32 %v7895, %v8169
      %v8330 = vadd.f32 %v7896, %v8172
      %v8331 = vadd.f32 %v7897, %v8177
      %v8332 = vadd.f32 %v7898, %v8180
      %v8333 = vadd.f32 %v7899, %v8185
      %v8334 = vadd.f32 %v7900, %v8188
      %v8335 = vadd.f32 %v7901, %v8193
      %v8336 = vadd.f32 %v7902, %v8196
      %v8337 = vadd.f32 %v7903, %v8201
      %v8338 = vadd.f32 %v7904, %v8204
      %v8339 = vadd.f32 %v7905, %v8209
      %v8340 = vadd.f32 %v7906, %v8212
      %v8341 = vadd.f32 %v7907, %v8217
      %v8342 = vadd.f32 %v7908, %v8220
      %v8343 = vadd.f32 %v7909, %v8225
      %v8344 = vadd.f32 %v7910, %v8228
      %v8345 = vadd.f32 %v7911, %v8233
      %v8346 = vadd.f32 %v7912, %v8236
      %v8347 = vadd.f32 %v7913, %v8241
      %v8348 = vadd.f32 %v7914, %v8244
      %v8349 = vadd.f32 %v7915, %v8249
      %v8350 = vadd.f32 %v7916, %v8252
      %v8351 = vadd.f32 %v7917, %v8257
      %v8352 = vadd.f32 %v7918, %v8260
      %v8353 = vadd.f32 %v7919, %v8265
      %v8354 = vadd.f32 %v7920, %v8268
      %v8355 = vadd.f32 %v7921, %v8273
      %v8356 = vadd.f32 %v7922, %v8276
      %v8357 = vadd.f32 %v7923, %v8281
      %v8358 = vadd.f32 %v7924, %v8284
      %v8359 = vadd.f32 %v7925, %v8289
      %v8360 = vadd.f32 %v7926, %v8292
      %v8361 = vadd.f32 %v7927, %v8297
      %v8362 = vadd.f32 %v7928, %v8300
      %v8363 = vadd.f32 %v7929, %v8305
      %v8364 = vadd.f32 %v7930, %v8308
      %v8365 = vadd.f32 %v7931, %v8313
      %v8366 = vadd.f32 %v7932, %v8316
      %v8367 = vld [vmem:[#allocation3 + $0x30] sm:$0xff]
      %v8368 = vld [vmem:[#allocation3 + $0x38] sm:$0xff]
      %v8369 = vld [vmem:[#allocation3 + $0x40] sm:$0xff]
      %v8370 = vld [vmem:[#allocation3 + $0x48] sm:$0xff]
      %v8371 = vld [vmem:[#allocation3 + $0x50] sm:$0xff]
      %v8372 = vld [vmem:[#allocation3 + $0x58] sm:$0xff]
      %v8373 = vld [vmem:[#allocation3 + $0x60] sm:$0xff]
      %v8374 = vld [vmem:[#allocation3 + $0x68] sm:$0xff]
      %v8375 = vld [vmem:[#allocation3 + $0x70] sm:$0xff]
      %v8376 = vld [vmem:[#allocation3 + $0x78] sm:$0xff]
      %v8377 = vld [vmem:[#allocation3 + $0x80] sm:$0xff]
      %v8378 = vld [vmem:[#allocation3 + $0x88] sm:$0xff]
      %v8379 = vld [vmem:[#allocation3 + $0x90] sm:$0xff]
      %v8380 = vld [vmem:[#allocation3 + $0x98] sm:$0xff]
      %v8381 = vld [vmem:[#allocation3 + $0xa0] sm:$0xff]
      %v8382 = vld [vmem:[#allocation3 + $0xa8] sm:$0xff]
      %v8383 = vld [vmem:[#allocation3 + $0xb0] sm:$0xff]
      %v8384 = vld [vmem:[#allocation3 + $0xb8] sm:$0xff]
      %v8385 = vld [vmem:[#allocation3 + $0xc0] sm:$0xff]
      %v8386 = vld [vmem:[#allocation3 + $0xc8] sm:$0xff]
      %v8387 = vld [vmem:[#allocation3 + $0xd0] sm:$0xff]
      %v8388 = vld [vmem:[#allocation3 + $0xd8] sm:$0xff]
      %v8389 = vld [vmem:[#allocation3 + $0xe0] sm:$0xff]
      %v8390 = vld [vmem:[#allocation3 + $0xe8] sm:$0xff]
      %v8391 = vld [vmem:[#allocation3 + $0xf0] sm:$0xff]
      %v8392 = vld [vmem:[#allocation3 + $0xf8] sm:$0xff]
      %v8393 = vld [vmem:[#allocation3 + $0x100] sm:$0xff]
      %v8394 = vld [vmem:[#allocation3 + $0x108] sm:$0xff]
      %v8395 = vld [vmem:[#allocation3 + $0x110] sm:$0xff]
      %v8396 = vld [vmem:[#allocation3 + $0x118] sm:$0xff]
      %v8397 = vld [vmem:[#allocation3 + $0x120] sm:$0xff]
      %v8398 = vld [vmem:[#allocation3 + $0x128] sm:$0xff]
      %v8399 = vld [vmem:[#allocation3 + $0x130] sm:$0xff]
      %v8400 = vld [vmem:[#allocation3 + $0x138] sm:$0xff]
      %v8401 = vld [vmem:[#allocation3 + $0x140] sm:$0xff]
      %v8402 = vld [vmem:[#allocation3 + $0x148] sm:$0xff]
      %v8403 = vld [vmem:[#allocation3 + $0x150] sm:$0xff]
      %v8404 = vld [vmem:[#allocation3 + $0x158] sm:$0xff]
      %v8405 = vld [vmem:[#allocation3 + $0x160] sm:$0xff]
      %v8406 = vld [vmem:[#allocation3 + $0x168] sm:$0xff]
      %v8407 = vld [vmem:[#allocation3 + $0x170] sm:$0xff]
      %v8408 = vld [vmem:[#allocation3 + $0x178] sm:$0xff]
      %v8409 = vld [vmem:[#allocation3 + $0x180] sm:$0xff]
      %v8410 = vld [vmem:[#allocation3 + $0x188] sm:$0xff]
      %v8411 = vld [vmem:[#allocation3 + $0x190] sm:$0xff]
      %v8412 = vld [vmem:[#allocation3 + $0x198] sm:$0xff]
      %v8413 = vld [vmem:[#allocation3 + $0x1a0] sm:$0xff]
      %v8414 = vld [vmem:[#allocation3 + $0x1a8] sm:$0xff]
      %v8415 = vpack.c.bf16 %v8368, %v8367
      %v8416 = vpack.c.bf16 %v8370, %v8369
      %v8417 = vpack.c.bf16 %v8372, %v8371
      %v8418 = vpack.c.bf16 %v8374, %v8373
      %v8419 = vpack.c.bf16 %v8376, %v8375
      %v8420 = vpack.c.bf16 %v8378, %v8377
      %v8421 = vpack.c.bf16 %v8380, %v8379
      %v8422 = vpack.c.bf16 %v8382, %v8381
      %v8423 = vpack.c.bf16 %v8384, %v8383
      %v8424 = vpack.c.bf16 %v8386, %v8385
      %v8425 = vpack.c.bf16 %v8388, %v8387
      %v8426 = vpack.c.bf16 %v8390, %v8389
      %v8427 = vpack.c.bf16 %v8392, %v8391
      %v8428 = vpack.c.bf16 %v8394, %v8393
      %v8429 = vpack.c.bf16 %v8396, %v8395
      %v8430 = vpack.c.bf16 %v8398, %v8397
      %v8431 = vpack.c.bf16 %v8400, %v8399
      %v8432 = vpack.c.bf16 %v8402, %v8401
      %v8433 = vpack.c.bf16 %v8404, %v8403
      %v8434 = vpack.c.bf16 %v8406, %v8405
      %v8435 = vpack.c.bf16 %v8408, %v8407
      %v8436 = vpack.c.bf16 %v8410, %v8409
      %v8437 = vpack.c.bf16 %v8412, %v8411
      %v8438 = vpack.c.bf16 %v8414, %v8413
      %s8439 = scalar_lea.vmem %s3, 96
      %v8440 = vld [vmem:[%s8439] sm:$0xf]
      %v8441 = vld [vmem:[%s8439 + $0x4] sm:$0xf]
      %v8442 = vld [vmem:[%s8439 + $0x8] sm:$0xf]
      %v8443 = vld [vmem:[%s8439 + $0xc] sm:$0xf]
      %v8448 = vunpack.c.l.b16 %v8440
      %v8449 = vunpack.c.l.b16 %v8441
      %v8450 = vunpack.c.l.b16 %v8442
      %v8451 = vunpack.c.l.b16 %v8443
      %v8452 = vpack.c.b16 %v8449, %v8448
      %v8453 = vpack.c.b16 %v8451, %v8450
      %v8457 = vsel %vm966, %v8415, 0
      %v8460 = vsel %vm966, %v8416, 0
      %v8463 = vsel %vm966, %v8417, 0
      %v8466 = vsel %vm966, %v8418, 0
      %v8469 = vsel %vm966, %v8419, 0
      %v8472 = vsel %vm966, %v8420, 0
      %v8475 = vsel %vm966, %v8421, 0
      %v8478 = vsel %vm966, %v8422, 0
      %v8481 = vsel %vm966, %v8423, 0
      %v8484 = vsel %vm966, %v8424, 0
      %v8487 = vsel %vm966, %v8425, 0
      %v8490 = vsel %vm966, %v8426, 0
      %v8493 = vsel %vm966, %v8427, 0
      %v8496 = vsel %vm966, %v8428, 0
      %v8499 = vsel %vm966, %v8429, 0
      %v8502 = vsel %vm966, %v8430, 0
      %v8505 = vsel %vm966, %v8431, 0
      %v8508 = vsel %vm966, %v8432, 0
      %v8511 = vsel %vm966, %v8433, 0
      %v8514 = vsel %vm966, %v8434, 0
      %v8517 = vsel %vm966, %v8435, 0
      %v8520 = vsel %vm966, %v8436, 0
      %v8523 = vsel %vm966, %v8437, 0
      %v8526 = vsel %vm966, %v8438, 0
      %8528 = vmatprep.subr.bf16.mxu0 0
      %8529 = vmatpush1.bf16.msra.mxu0 %v8452
      %8530 = vmatprep.subr.bf16.mxu0 0
      %8531 = vmatpush1.bf16.msra.mxu0 %v8453
      %8532 = vmatprep.subr.bf16.mxu0 0
      %8533 = vmatpush1.bf16.msra.mxu0 0
      %8534 = vmatprep.subr.bf16.mxu0 0
      %8535 = vmatpush1.bf16.msra.mxu0 0
      %8536 = vmatprep.subr.bf16.mxu0 0
      %8537 = vmatpush1.bf16.msra.mxu0 0
      %8538 = vmatprep.subr.bf16.mxu0 0
      %8539 = vmatpush1.bf16.msra.mxu0 0
      %8540 = vmatprep.subr.bf16.mxu0 0
      %8541 = vmatpush1.bf16.msra.mxu0 0
      %8542 = vmatprep.subr.bf16.mxu0 0
      %8543 = vmatpush1.bf16.msra.mxu0 0
      %8544 = vmatprep.subr.bf16.mxu0 0
      %8545 = vmatpush1.bf16.msra.mxu0 0
      %8546 = vmatprep.subr.bf16.mxu0 0
      %8547 = vmatpush1.bf16.msra.mxu0 0
      %8548 = vmatprep.subr.bf16.mxu0 0
      %8549 = vmatpush1.bf16.msra.mxu0 0
      %8550 = vmatprep.subr.bf16.mxu0 0
      %8551 = vmatpush1.bf16.msra.mxu0 0
      %8552 = vmatprep.subr.bf16.mxu0 0
      %8553 = vmatpush1.bf16.msra.mxu0 0
      %8554 = vmatprep.subr.bf16.mxu0 0
      %8555 = vmatpush1.bf16.msra.mxu0 0
      %8556 = vmatprep.subr.bf16.mxu0 0
      %8557 = vmatpush1.bf16.msra.mxu0 0
      %8558 = vmatprep.subr.bf16.mxu0 0
      %8559 = vmatpush1.bf16.msra.mxu0 0
      %8560 = vmatprep.mubr.bf16.mxu0 0
      %8561 = vmatmul.mubr.bf16.gmra.mrb[0].mxu0 %v8457
      %v8562 = vpop.f32.mrb[0].mxu0
      %v8563 = vadd.f32 0.0, %v8562
      %v8564 = vpop.f32.mrb[0].mxu0
      %v8565 = vpop.f32.mrb[0].mxu0
      %v8566 = vadd.f32 0.0, %v8565
      %v8567 = vpop.f32.mrb[0].mxu0
      %8568 = vmatprep.mubr.bf16.mxu0 0
      %8569 = vmatmul.mubr.bf16.gmra.mrb[0].mxu0 %v8460
      %v8570 = vpop.f32.mrb[0].mxu0
      %v8571 = vadd.f32 0.0, %v8570
      %v8572 = vpop.f32.mrb[0].mxu0
      %v8573 = vpop.f32.mrb[0].mxu0
      %v8574 = vadd.f32 0.0, %v8573
      %v8575 = vpop.f32.mrb[0].mxu0
      %8576 = vmatprep.mubr.bf16.mxu0 0
      %8577 = vmatmul.mubr.bf16.gmra.mrb[0].mxu0 %v8463
      %v8578 = vpop.f32.mrb[0].mxu0
      %v8579 = vadd.f32 0.0, %v8578
      %v8580 = vpop.f32.mrb[0].mxu0
      %v8581 = vpop.f32.mrb[0].mxu0
      %v8582 = vadd.f32 0.0, %v8581
      %v8583 = vpop.f32.mrb[0].mxu0
      %8584 = vmatprep.mubr.bf16.mxu0 0
      %8585 = vmatmul.mubr.bf16.gmra.mrb[0].mxu0 %v8466
      %v8586 = vpop.f32.mrb[0].mxu0
      %v8587 = vadd.f32 0.0, %v8586
      %v8588 = vpop.f32.mrb[0].mxu0
      %v8589 = vpop.f32.mrb[0].mxu0
      %v8590 = vadd.f32 0.0, %v8589
      %v8591 = vpop.f32.mrb[0].mxu0
      %8592 = vmatprep.mubr.bf16.mxu0 0
      %8593 = vmatmul.mubr.bf16.gmra.mrb[0].mxu0 %v8469
      %v8594 = vpop.f32.mrb[0].mxu0
      %v8595 = vadd.f32 0.0, %v8594
      %v8596 = vpop.f32.mrb[0].mxu0
      %v8597 = vpop.f32.mrb[0].mxu0
      %v8598 = vadd.f32 0.0, %v8597
      %v8599 = vpop.f32.mrb[0].mxu0
      %8600 = vmatprep.mubr.bf16.mxu0 0
      %8601 = vmatmul.mubr.bf16.gmra.mrb[0].mxu0 %v8472
      %v8602 = vpop.f32.mrb[0].mxu0
      %v8603 = vadd.f32 0.0, %v8602
      %v8604 = vpop.f32.mrb[0].mxu0
      %v8605 = vpop.f32.mrb[0].mxu0
      %v8606 = vadd.f32 0.0, %v8605
      %v8607 = vpop.f32.mrb[0].mxu0
      %8608 = vmatprep.mubr.bf16.mxu0 0
      %8609 = vmatmul.mubr.bf16.gmra.mrb[0].mxu0 %v8475
      %v8610 = vpop.f32.mrb[0].mxu0
      %v8611 = vadd.f32 0.0, %v8610
      %v8612 = vpop.f32.mrb[0].mxu0
      %v8613 = vpop.f32.mrb[0].mxu0
      %v8614 = vadd.f32 0.0, %v8613
      %v8615 = vpop.f32.mrb[0].mxu0
      %8616 = vmatprep.mubr.bf16.mxu0 0
      %8617 = vmatmul.mubr.bf16.gmra.mrb[0].mxu0 %v8478
      %v8618 = vpop.f32.mrb[0].mxu0
      %v8619 = vadd.f32 0.0, %v8618
      %v8620 = vpop.f32.mrb[0].mxu0
      %v8621 = vpop.f32.mrb[0].mxu0
      %v8622 = vadd.f32 0.0, %v8621
      %v8623 = vpop.f32.mrb[0].mxu0
      %8624 = vmatprep.mubr.bf16.mxu0 0
      %8625 = vmatmul.mubr.bf16.gmra.mrb[0].mxu0 %v8481
      %v8626 = vpop.f32.mrb[0].mxu0
      %v8627 = vadd.f32 0.0, %v8626
      %v8628 = vpop.f32.mrb[0].mxu0
      %v8629 = vpop.f32.mrb[0].mxu0
      %v8630 = vadd.f32 0.0, %v8629
      %v8631 = vpop.f32.mrb[0].mxu0
      %8632 = vmatprep.mubr.bf16.mxu0 0
      %8633 = vmatmul.mubr.bf16.gmra.mrb[0].mxu0 %v8484
      %v8634 = vpop.f32.mrb[0].mxu0
      %v8635 = vadd.f32 0.0, %v8634
      %v8636 = vpop.f32.mrb[0].mxu0
      %v8637 = vpop.f32.mrb[0].mxu0
      %v8638 = vadd.f32 0.0, %v8637
      %v8639 = vpop.f32.mrb[0].mxu0
      %8640 = vmatprep.mubr.bf16.mxu0 0
      %8641 = vmatmul.mubr.bf16.gmra.mrb[0].mxu0 %v8487
      %v8642 = vpop.f32.mrb[0].mxu0
      %v8643 = vadd.f32 0.0, %v8642
      %v8644 = vpop.f32.mrb[0].mxu0
      %v8645 = vpop.f32.mrb[0].mxu0
      %v8646 = vadd.f32 0.0, %v8645
      %v8647 = vpop.f32.mrb[0].mxu0
      %8648 = vmatprep.mubr.bf16.mxu0 0
      %8649 = vmatmul.mubr.bf16.gmra.mrb[0].mxu0 %v8490
      %v8650 = vpop.f32.mrb[0].mxu0
      %v8651 = vadd.f32 0.0, %v8650
      %v8652 = vpop.f32.mrb[0].mxu0
      %v8653 = vpop.f32.mrb[0].mxu0
      %v8654 = vadd.f32 0.0, %v8653
      %v8655 = vpop.f32.mrb[0].mxu0
      %8656 = vmatprep.mubr.bf16.mxu0 0
      %8657 = vmatmul.mubr.bf16.gmra.mrb[0].mxu0 %v8493
      %v8658 = vpop.f32.mrb[0].mxu0
      %v8659 = vadd.f32 0.0, %v8658
      %v8660 = vpop.f32.mrb[0].mxu0
      %v8661 = vpop.f32.mrb[0].mxu0
      %v8662 = vadd.f32 0.0, %v8661
      %v8663 = vpop.f32.mrb[0].mxu0
      %8664 = vmatprep.mubr.bf16.mxu0 0
      %8665 = vmatmul.mubr.bf16.gmra.mrb[0].mxu0 %v8496
      %v8666 = vpop.f32.mrb[0].mxu0
      %v8667 = vadd.f32 0.0, %v8666
      %v8668 = vpop.f32.mrb[0].mxu0
      %v8669 = vpop.f32.mrb[0].mxu0
      %v8670 = vadd.f32 0.0, %v8669
      %v8671 = vpop.f32.mrb[0].mxu0
      %8672 = vmatprep.mubr.bf16.mxu0 0
      %8673 = vmatmul.mubr.bf16.gmra.mrb[0].mxu0 %v8499
      %v8674 = vpop.f32.mrb[0].mxu0
      %v8675 = vadd.f32 0.0, %v8674
      %v8676 = vpop.f32.mrb[0].mxu0
      %v8677 = vpop.f32.mrb[0].mxu0
      %v8678 = vadd.f32 0.0, %v8677
      %v8679 = vpop.f32.mrb[0].mxu0
      %8680 = vmatprep.mubr.bf16.mxu0 0
      %8681 = vmatmul.mubr.bf16.gmra.mrb[0].mxu0 %v8502
      %v8682 = vpop.f32.mrb[0].mxu0
      %v8683 = vadd.f32 0.0, %v8682
      %v8684 = vpop.f32.mrb[0].mxu0
      %v8685 = vpop.f32.mrb[0].mxu0
      %v8686 = vadd.f32 0.0, %v8685
      %v8687 = vpop.f32.mrb[0].mxu0
      %8688 = vmatprep.mubr.bf16.mxu0 0
      %8689 = vmatmul.mubr.bf16.gmra.mrb[0].mxu0 %v8505
      %v8690 = vpop.f32.mrb[0].mxu0
      %v8691 = vadd.f32 0.0, %v8690
      %v8692 = vpop.f32.mrb[0].mxu0
      %v8693 = vpop.f32.mrb[0].mxu0
      %v8694 = vadd.f32 0.0, %v8693
      %v8695 = vpop.f32.mrb[0].mxu0
      %8696 = vmatprep.mubr.bf16.mxu0 0
      %8697 = vmatmul.mubr.bf16.gmra.mrb[0].mxu0 %v8508
      %v8698 = vpop.f32.mrb[0].mxu0
      %v8699 = vadd.f32 0.0, %v8698
      %v8700 = vpop.f32.mrb[0].mxu0
      %v8701 = vpop.f32.mrb[0].mxu0
      %v8702 = vadd.f32 0.0, %v8701
      %v8703 = vpop.f32.mrb[0].mxu0
      %8704 = vmatprep.mubr.bf16.mxu0 0
      %8705 = vmatmul.mubr.bf16.gmra.mrb[0].mxu0 %v8511
      %v8706 = vpop.f32.mrb[0].mxu0
      %v8707 = vadd.f32 0.0, %v8706
      %v8708 = vpop.f32.mrb[0].mxu0
      %v8709 = vpop.f32.mrb[0].mxu0
      %v8710 = vadd.f32 0.0, %v8709
      %v8711 = vpop.f32.mrb[0].mxu0
      %8712 = vmatprep.mubr.bf16.mxu0 0
      %8713 = vmatmul.mubr.bf16.gmra.mrb[0].mxu0 %v8514
      %v8714 = vpop.f32.mrb[0].mxu0
      %v8715 = vadd.f32 0.0, %v8714
      %v8716 = vpop.f32.mrb[0].mxu0
      %v8717 = vpop.f32.mrb[0].mxu0
      %v8718 = vadd.f32 0.0, %v8717
      %v8719 = vpop.f32.mrb[0].mxu0
      %8720 = vmatprep.mubr.bf16.mxu0 0
      %8721 = vmatmul.mubr.bf16.gmra.mrb[0].mxu0 %v8517
      %v8722 = vpop.f32.mrb[0].mxu0
      %v8723 = vadd.f32 0.0, %v8722
      %v8724 = vpop.f32.mrb[0].mxu0
      %v8725 = vpop.f32.mrb[0].mxu0
      %v8726 = vadd.f32 0.0, %v8725
      %v8727 = vpop.f32.mrb[0].mxu0
      %8728 = vmatprep.mubr.bf16.mxu0 0
      %8729 = vmatmul.mubr.bf16.gmra.mrb[0].mxu0 %v8520
      %v8730 = vpop.f32.mrb[0].mxu0
      %v8731 = vadd.f32 0.0, %v8730
      %v8732 = vpop.f32.mrb[0].mxu0
      %v8733 = vpop.f32.mrb[0].mxu0
      %v8734 = vadd.f32 0.0, %v8733
      %v8735 = vpop.f32.mrb[0].mxu0
      %8736 = vmatprep.mubr.bf16.mxu0 0
      %8737 = vmatmul.mubr.bf16.gmra.mrb[0].mxu0 %v8523
      %v8738 = vpop.f32.mrb[0].mxu0
      %v8739 = vadd.f32 0.0, %v8738
      %v8740 = vpop.f32.mrb[0].mxu0
      %v8741 = vpop.f32.mrb[0].mxu0
      %v8742 = vadd.f32 0.0, %v8741
      %v8743 = vpop.f32.mrb[0].mxu0
      %8744 = vmatprep.mubr.bf16.mxu0 0
      %8745 = vmatmul.mubr.bf16.gmra.mrb[0].mxu0 %v8526
      %v8746 = vpop.f32.mrb[0].mxu0
      %v8747 = vadd.f32 0.0, %v8746
      %v8748 = vpop.f32.mrb[0].mxu0
      %v8749 = vpop.f32.mrb[0].mxu0
      %v8750 = vadd.f32 0.0, %v8749
      %v8751 = vpop.f32.mrb[0].mxu0
      %8752 = vdwg.mxu0
      %v8753 = vadd.f32 %v8319, %v8563
      %v8754 = vadd.f32 %v8320, %v8566
      %v8755 = vadd.f32 %v8321, %v8571
      %v8756 = vadd.f32 %v8322, %v8574
      %v8757 = vadd.f32 %v8323, %v8579
      %v8758 = vadd.f32 %v8324, %v8582
      %v8759 = vadd.f32 %v8325, %v8587
      %v8760 = vadd.f32 %v8326, %v8590
      %v8761 = vadd.f32 %v8327, %v8595
      %v8762 = vadd.f32 %v8328, %v8598
      %v8763 = vadd.f32 %v8329, %v8603
      %v8764 = vadd.f32 %v8330, %v8606
      %v8765 = vadd.f32 %v8331, %v8611
      %v8766 = vadd.f32 %v8332, %v8614
      %v8767 = vadd.f32 %v8333, %v8619
      %v8768 = vadd.f32 %v8334, %v8622
      %v8769 = vadd.f32 %v8335, %v8627
      %v8770 = vadd.f32 %v8336, %v8630
      %v8771 = vadd.f32 %v8337, %v8635
      %v8772 = vadd.f32 %v8338, %v8638
      %v8773 = vadd.f32 %v8339, %v8643
      %v8774 = vadd.f32 %v8340, %v8646
      %v8775 = vadd.f32 %v8341, %v8651
      %v8776 = vadd.f32 %v8342, %v8654
      %v8777 = vadd.f32 %v8343, %v8659
      %v8778 = vadd.f32 %v8344, %v8662
      %v8779 = vadd.f32 %v8345, %v8667
      %v8780 = vadd.f32 %v8346, %v8670
      %v8781 = vadd.f32 %v8347, %v8675
      %v8782 = vadd.f32 %v8348, %v8678
      %v8783 = vadd.f32 %v8349, %v8683
      %v8784 = vadd.f32 %v8350, %v8686
      %v8785 = vadd.f32 %v8351, %v8691
      %v8786 = vadd.f32 %v8352, %v8694
      %v8787 = vadd.f32 %v8353, %v8699
      %v8788 = vadd.f32 %v8354, %v8702
      %v8789 = vadd.f32 %v8355, %v8707
      %v8790 = vadd.f32 %v8356, %v8710
      %v8791 = vadd.f32 %v8357, %v8715
      %v8792 = vadd.f32 %v8358, %v8718
      %v8793 = vadd.f32 %v8359, %v8723
      %v8794 = vadd.f32 %v8360, %v8726
      %v8795 = vadd.f32 %v8361, %v8731
      %v8796 = vadd.f32 %v8362, %v8734
      %v8797 = vadd.f32 %v8363, %v8739
      %v8798 = vadd.f32 %v8364, %v8742
      %v8799 = vadd.f32 %v8365, %v8747
      %v8800 = vadd.f32 %v8366, %v8750
      %v8801 = vld [vmem:[#allocation3 + $0x31] sm:$0xff]
      %v8802 = vld [vmem:[#allocation3 + $0x39] sm:$0xff]
      %v8803 = vld [vmem:[#allocation3 + $0x41] sm:$0xff]
      %v8804 = vld [vmem:[#allocation3 + $0x49] sm:$0xff]
      %v8805 = vld [vmem:[#allocation3 + $0x51] sm:$0xff]
      %v8806 = vld [vmem:[#allocation3 + $0x59] sm:$0xff]
      %v8807 = vld [vmem:[#allocation3 + $0x61] sm:$0xff]
      %v8808 = vld [vmem:[#allocation3 + $0x69] sm:$0xff]
      %v8809 = vld [vmem:[#allocation3 + $0x71] sm:$0xff]
      %v8810 = vld [vmem:[#allocation3 + $0x79] sm:$0xff]
      %v8811 = vld [vmem:[#allocation3 + $0x81] sm:$0xff]
      %v8812 = vld [vmem:[#allocation3 + $0x89] sm:$0xff]
      %v8813 = vld [vmem:[#allocation3 + $0x91] sm:$0xff]
      %v8814 = vld [vmem:[#allocation3 + $0x99] sm:$0xff]
      %v8815 = vld [vmem:[#allocation3 + $0xa1] sm:$0xff]
      %v8816 = vld [vmem:[#allocation3 + $0xa9] sm:$0xff]
      %v8817 = vld [vmem:[#allocation3 + $0xb1] sm:$0xff]
      %v8818 = vld [vmem:[#allocation3 + $0xb9] sm:$0xff]
      %v8819 = vld [vmem:[#allocation3 + $0xc1] sm:$0xff]
      %v8820 = vld [vmem:[#allocation3 + $0xc9] sm:$0xff]
      %v8821 = vld [vmem:[#allocation3 + $0xd1] sm:$0xff]
      %v8822 = vld [vmem:[#allocation3 + $0xd9] sm:$0xff]
      %v8823 = vld [vmem:[#allocation3 + $0xe1] sm:$0xff]
      %v8824 = vld [vmem:[#allocation3 + $0xe9] sm:$0xff]
      %v8825 = vld [vmem:[#allocation3 + $0xf1] sm:$0xff]
      %v8826 = vld [vmem:[#allocation3 + $0xf9] sm:$0xff]
      %v8827 = vld [vmem:[#allocation3 + $0x101] sm:$0xff]
      %v8828 = vld [vmem:[#allocation3 + $0x109] sm:$0xff]
      %v8829 = vld [vmem:[#allocation3 + $0x111] sm:$0xff]
      %v8830 = vld [vmem:[#allocation3 + $0x119] sm:$0xff]
      %v8831 = vld [vmem:[#allocation3 + $0x121] sm:$0xff]
      %v8832 = vld [vmem:[#allocation3 + $0x129] sm:$0xff]
      %v8833 = vld [vmem:[#allocation3 + $0x131] sm:$0xff]
      %v8834 = vld [vmem:[#allocation3 + $0x139] sm:$0xff]
      %v8835 = vld [vmem:[#allocation3 + $0x141] sm:$0xff]
      %v8836 = vld [vmem:[#allocation3 + $0x149] sm:$0xff]
      %v8837 = vld [vmem:[#allocation3 + $0x151] sm:$0xff]
      %v8838 = vld [vmem:[#allocation3 + $0x159] sm:$0xff]
      %v8839 = vld [vmem:[#allocation3 + $0x161] sm:$0xff]
      %v8840 = vld [vmem:[#allocation3 + $0x169] sm:$0xff]
      %v8841 = vld [vmem:[#allocation3 + $0x171] sm:$0xff]
      %v8842 = vld [vmem:[#allocation3 + $0x179] sm:$0xff]
      %v8843 = vld [vmem:[#allocation3 + $0x181] sm:$0xff]
      %v8844 = vld [vmem:[#allocation3 + $0x189] sm:$0xff]
      %v8845 = vld [vmem:[#allocation3 + $0x191] sm:$0xff]
      %v8846 = vld [vmem:[#allocation3 + $0x199] sm:$0xff]
      %v8847 = vld [vmem:[#allocation3 + $0x1a1] sm:$0xff]
      %v8848 = vld [vmem:[#allocation3 + $0x1a9] sm:$0xff]
      %v8849 = vpack.c.bf16 %v8802, %v8801
      %v8850 = vpack.c.bf16 %v8804, %v8803
      %v8851 = vpack.c.bf16 %v8806, %v8805
      %v8852 = vpack.c.bf16 %v8808, %v8807
      %v8853 = vpack.c.bf16 %v8810, %v8809
      %v8854 = vpack.c.bf16 %v8812, %v8811
      %v8855 = vpack.c.bf16 %v8814, %v8813
      %v8856 = vpack.c.bf16 %v8816, %v8815
      %v8857 = vpack.c.bf16 %v8818, %v8817
      %v8858 = vpack.c.bf16 %v8820, %v8819
      %v8859 = vpack.c.bf16 %v8822, %v8821
      %v8860 = vpack.c.bf16 %v8824, %v8823
      %v8861 = vpack.c.bf16 %v8826, %v8825
      %v8862 = vpack.c.bf16 %v8828, %v8827
      %v8863 = vpack.c.bf16 %v8830, %v8829
      %v8864 = vpack.c.bf16 %v8832, %v8831
      %v8865 = vpack.c.bf16 %v8834, %v8833
      %v8866 = vpack.c.bf16 %v8836, %v8835
      %v8867 = vpack.c.bf16 %v8838, %v8837
      %v8868 = vpack.c.bf16 %v8840, %v8839
      %v8869 = vpack.c.bf16 %v8842, %v8841
      %v8870 = vpack.c.bf16 %v8844, %v8843
      %v8871 = vpack.c.bf16 %v8846, %v8845
      %v8872 = vpack.c.bf16 %v8848, %v8847
      %s8873 = scalar_lea.vmem %s3, 112
      %v8874 = vld [vmem:[%s8873] sm:$0xf]
      %v8875 = vld [vmem:[%s8873 + $0x4] sm:$0xf]
      %v8876 = vld [vmem:[%s8873 + $0x8] sm:$0xf]
      %v8877 = vld [vmem:[%s8873 + $0xc] sm:$0xf]
      %v8882 = vunpack.c.l.b16 %v8874
      %v8883 = vunpack.c.l.b16 %v8875
      %v8884 = vunpack.c.l.b16 %v8876
      %v8885 = vunpack.c.l.b16 %v8877
      %v8886 = vpack.c.b16 %v8883, %v8882
      %v8887 = vpack.c.b16 %v8885, %v8884
      %v8891 = vsel %vm966, %v8849, 0
      %v8894 = vsel %vm966, %v8850, 0
      %v8897 = vsel %vm966, %v8851, 0
      %v8900 = vsel %vm966, %v8852, 0
      %v8903 = vsel %vm966, %v8853, 0
      %v8906 = vsel %vm966, %v8854, 0
      %v8909 = vsel %vm966, %v8855, 0
      %v8912 = vsel %vm966, %v8856, 0
      %v8915 = vsel %vm966, %v8857, 0
      %v8918 = vsel %vm966, %v8858, 0
      %v8921 = vsel %vm966, %v8859, 0
      %v8924 = vsel %vm966, %v8860, 0
      %v8927 = vsel %vm966, %v8861, 0
      %v8930 = vsel %vm966, %v8862, 0
      %v8933 = vsel %vm966, %v8863, 0
      %v8936 = vsel %vm966, %v8864, 0
      %v8939 = vsel %vm966, %v8865, 0
      %v8942 = vsel %vm966, %v8866, 0
      %v8945 = vsel %vm966, %v8867, 0
      %v8948 = vsel %vm966, %v8868, 0
      %v8951 = vsel %vm966, %v8869, 0
      %v8954 = vsel %vm966, %v8870, 0
      %v8957 = vsel %vm966, %v8871, 0
      %v8960 = vsel %vm966, %v8872, 0
      %8962 = vmatprep.subr.bf16.mxu0 0
      %8963 = vmatpush1.bf16.msra.mxu0 %v8886
      %8964 = vmatprep.subr.bf16.mxu0 0
      %8965 = vmatpush1.bf16.msra.mxu0 %v8887
      %8966 = vmatprep.subr.bf16.mxu0 0
      %8967 = vmatpush1.bf16.msra.mxu0 0
      %8968 = vmatprep.subr.bf16.mxu0 0
      %8969 = vmatpush1.bf16.msra.mxu0 0
      %8970 = vmatprep.subr.bf16.mxu0 0
      %8971 = vmatpush1.bf16.msra.mxu0 0
      %8972 = vmatprep.subr.bf16.mxu0 0
      %8973 = vmatpush1.bf16.msra.mxu0 0
      %8974 = vmatprep.subr.bf16.mxu0 0
      %8975 = vmatpush1.bf16.msra.mxu0 0
      %8976 = vmatprep.subr.bf16.mxu0 0
      %8977 = vmatpush1.bf16.msra.mxu0 0
      %8978 = vmatprep.subr.bf16.mxu0 0
      %8979 = vmatpush1.bf16.msra.mxu0 0
      %8980 = vmatprep.subr.bf16.mxu0 0
      %8981 = vmatpush1.bf16.msra.mxu0 0
      %8982 = vmatprep.subr.bf16.mxu0 0
      %8983 = vmatpush1.bf16.msra.mxu0 0
      %8984 = vmatprep.subr.bf16.mxu0 0
      %8985 = vmatpush1.bf16.msra.mxu0 0
      %8986 = vmatprep.subr.bf16.mxu0 0
      %8987 = vmatpush1.bf16.msra.mxu0 0
      %8988 = vmatprep.subr.bf16.mxu0 0
      %8989 = vmatpush1.bf16.msra.mxu0 0
      %8990 = vmatprep.subr.bf16.mxu0 0
      %8991 = vmatpush1.bf16.msra.mxu0 0
      %8992 = vmatprep.subr.bf16.mxu0 0
      %8993 = vmatpush1.bf16.msra.mxu0 0
      %8994 = vmatprep.mubr.bf16.mxu0 0
      %8995 = vmatmul.mubr.bf16.gmra.mrb[0].mxu0 %v8891
      %v8996 = vpop.f32.mrb[0].mxu0
      %v8997 = vadd.f32 0.0, %v8996
      %v8998 = vpop.f32.mrb[0].mxu0
      %v8999 = vpop.f32.mrb[0].mxu0
      %v9000 = vadd.f32 0.0, %v8999
      %v9001 = vpop.f32.mrb[0].mxu0
      %9002 = vmatprep.mubr.bf16.mxu0 0
      %9003 = vmatmul.mubr.bf16.gmra.mrb[0].mxu0 %v8894
      %v9004 = vpop.f32.mrb[0].mxu0
      %v9005 = vadd.f32 0.0, %v9004
      %v9006 = vpop.f32.mrb[0].mxu0
      %v9007 = vpop.f32.mrb[0].mxu0
      %v9008 = vadd.f32 0.0, %v9007
      %v9009 = vpop.f32.mrb[0].mxu0
      %9010 = vmatprep.mubr.bf16.mxu0 0
      %9011 = vmatmul.mubr.bf16.gmra.mrb[0].mxu0 %v8897
      %v9012 = vpop.f32.mrb[0].mxu0
      %v9013 = vadd.f32 0.0, %v9012
      %v9014 = vpop.f32.mrb[0].mxu0
      %v9015 = vpop.f32.mrb[0].mxu0
      %v9016 = vadd.f32 0.0, %v9015
      %v9017 = vpop.f32.mrb[0].mxu0
      %9018 = vmatprep.mubr.bf16.mxu0 0
      %9019 = vmatmul.mubr.bf16.gmra.mrb[0].mxu0 %v8900
      %v9020 = vpop.f32.mrb[0].mxu0
      %v9021 = vadd.f32 0.0, %v9020
      %v9022 = vpop.f32.mrb[0].mxu0
      %v9023 = vpop.f32.mrb[0].mxu0
      %v9024 = vadd.f32 0.0, %v9023
      %v9025 = vpop.f32.mrb[0].mxu0
      %9026 = vmatprep.mubr.bf16.mxu0 0
      %9027 = vmatmul.mubr.bf16.gmra.mrb[0].mxu0 %v8903
      %v9028 = vpop.f32.mrb[0].mxu0
      %v9029 = vadd.f32 0.0, %v9028
      %v9030 = vpop.f32.mrb[0].mxu0
      %v9031 = vpop.f32.mrb[0].mxu0
      %v9032 = vadd.f32 0.0, %v9031
      %v9033 = vpop.f32.mrb[0].mxu0
      %9034 = vmatprep.mubr.bf16.mxu0 0
      %9035 = vmatmul.mubr.bf16.gmra.mrb[0].mxu0 %v8906
      %v9036 = vpop.f32.mrb[0].mxu0
      %v9037 = vadd.f32 0.0, %v9036
      %v9038 = vpop.f32.mrb[0].mxu0
      %v9039 = vpop.f32.mrb[0].mxu0
      %v9040 = vadd.f32 0.0, %v9039
      %v9041 = vpop.f32.mrb[0].mxu0
      %9042 = vmatprep.mubr.bf16.mxu0 0
      %9043 = vmatmul.mubr.bf16.gmra.mrb[0].mxu0 %v8909
      %v9044 = vpop.f32.mrb[0].mxu0
      %v9045 = vadd.f32 0.0, %v9044
      %v9046 = vpop.f32.mrb[0].mxu0
      %v9047 = vpop.f32.mrb[0].mxu0
      %v9048 = vadd.f32 0.0, %v9047
      %v9049 = vpop.f32.mrb[0].mxu0
      %9050 = vmatprep.mubr.bf16.mxu0 0
      %9051 = vmatmul.mubr.bf16.gmra.mrb[0].mxu0 %v8912
      %v9052 = vpop.f32.mrb[0].mxu0
      %v9053 = vadd.f32 0.0, %v9052
      %v9054 = vpop.f32.mrb[0].mxu0
      %v9055 = vpop.f32.mrb[0].mxu0
      %v9056 = vadd.f32 0.0, %v9055
      %v9057 = vpop.f32.mrb[0].mxu0
      %9058 = vmatprep.mubr.bf16.mxu0 0
      %9059 = vmatmul.mubr.bf16.gmra.mrb[0].mxu0 %v8915
      %v9060 = vpop.f32.mrb[0].mxu0
      %v9061 = vadd.f32 0.0, %v9060
      %v9062 = vpop.f32.mrb[0].mxu0
      %v9063 = vpop.f32.mrb[0].mxu0
      %v9064 = vadd.f32 0.0, %v9063
      %v9065 = vpop.f32.mrb[0].mxu0
      %9066 = vmatprep.mubr.bf16.mxu0 0
      %9067 = vmatmul.mubr.bf16.gmra.mrb[0].mxu0 %v8918
      %v9068 = vpop.f32.mrb[0].mxu0
      %v9069 = vadd.f32 0.0, %v9068
      %v9070 = vpop.f32.mrb[0].mxu0
      %v9071 = vpop.f32.mrb[0].mxu0
      %v9072 = vadd.f32 0.0, %v9071
      %v9073 = vpop.f32.mrb[0].mxu0
      %9074 = vmatprep.mubr.bf16.mxu0 0
      %9075 = vmatmul.mubr.bf16.gmra.mrb[0].mxu0 %v8921
      %v9076 = vpop.f32.mrb[0].mxu0
      %v9077 = vadd.f32 0.0, %v9076
      %v9078 = vpop.f32.mrb[0].mxu0
      %v9079 = vpop.f32.mrb[0].mxu0
      %v9080 = vadd.f32 0.0, %v9079
      %v9081 = vpop.f32.mrb[0].mxu0
      %9082 = vmatprep.mubr.bf16.mxu0 0
      %9083 = vmatmul.mubr.bf16.gmra.mrb[0].mxu0 %v8924
      %v9084 = vpop.f32.mrb[0].mxu0
      %v9085 = vadd.f32 0.0, %v9084
      %v9086 = vpop.f32.mrb[0].mxu0
      %v9087 = vpop.f32.mrb[0].mxu0
      %v9088 = vadd.f32 0.0, %v9087
      %v9089 = vpop.f32.mrb[0].mxu0
      %9090 = vmatprep.mubr.bf16.mxu0 0
      %9091 = vmatmul.mubr.bf16.gmra.mrb[0].mxu0 %v8927
      %v9092 = vpop.f32.mrb[0].mxu0
      %v9093 = vadd.f32 0.0, %v9092
      %v9094 = vpop.f32.mrb[0].mxu0
      %v9095 = vpop.f32.mrb[0].mxu0
      %v9096 = vadd.f32 0.0, %v9095
      %v9097 = vpop.f32.mrb[0].mxu0
      %9098 = vmatprep.mubr.bf16.mxu0 0
      %9099 = vmatmul.mubr.bf16.gmra.mrb[0].mxu0 %v8930
      %v9100 = vpop.f32.mrb[0].mxu0
      %v9101 = vadd.f32 0.0, %v9100
      %v9102 = vpop.f32.mrb[0].mxu0
      %v9103 = vpop.f32.mrb[0].mxu0
      %v9104 = vadd.f32 0.0, %v9103
      %v9105 = vpop.f32.mrb[0].mxu0
      %9106 = vmatprep.mubr.bf16.mxu0 0
      %9107 = vmatmul.mubr.bf16.gmra.mrb[0].mxu0 %v8933
      %v9108 = vpop.f32.mrb[0].mxu0
      %v9109 = vadd.f32 0.0, %v9108
      %v9110 = vpop.f32.mrb[0].mxu0
      %v9111 = vpop.f32.mrb[0].mxu0
      %v9112 = vadd.f32 0.0, %v9111
      %v9113 = vpop.f32.mrb[0].mxu0
      %9114 = vmatprep.mubr.bf16.mxu0 0
      %9115 = vmatmul.mubr.bf16.gmra.mrb[0].mxu0 %v8936
      %v9116 = vpop.f32.mrb[0].mxu0
      %v9117 = vadd.f32 0.0, %v9116
      %v9118 = vpop.f32.mrb[0].mxu0
      %v9119 = vpop.f32.mrb[0].mxu0
      %v9120 = vadd.f32 0.0, %v9119
      %v9121 = vpop.f32.mrb[0].mxu0
      %9122 = vmatprep.mubr.bf16.mxu0 0
      %9123 = vmatmul.mubr.bf16.gmra.mrb[0].mxu0 %v8939
      %v9124 = vpop.f32.mrb[0].mxu0
      %v9125 = vadd.f32 0.0, %v9124
      %v9126 = vpop.f32.mrb[0].mxu0
      %v9127 = vpop.f32.mrb[0].mxu0
      %v9128 = vadd.f32 0.0, %v9127
      %v9129 = vpop.f32.mrb[0].mxu0
      %9130 = vmatprep.mubr.bf16.mxu0 0
      %9131 = vmatmul.mubr.bf16.gmra.mrb[0].mxu0 %v8942
      %v9132 = vpop.f32.mrb[0].mxu0
      %v9133 = vadd.f32 0.0, %v9132
      %v9134 = vpop.f32.mrb[0].mxu0
      %v9135 = vpop.f32.mrb[0].mxu0
      %v9136 = vadd.f32 0.0, %v9135
      %v9137 = vpop.f32.mrb[0].mxu0
      %9138 = vmatprep.mubr.bf16.mxu0 0
      %9139 = vmatmul.mubr.bf16.gmra.mrb[0].mxu0 %v8945
      %v9140 = vpop.f32.mrb[0].mxu0
      %v9141 = vadd.f32 0.0, %v9140
      %v9142 = vpop.f32.mrb[0].mxu0
      %v9143 = vpop.f32.mrb[0].mxu0
      %v9144 = vadd.f32 0.0, %v9143
      %v9145 = vpop.f32.mrb[0].mxu0
      %9146 = vmatprep.mubr.bf16.mxu0 0
      %9147 = vmatmul.mubr.bf16.gmra.mrb[0].mxu0 %v8948
      %v9148 = vpop.f32.mrb[0].mxu0
      %v9149 = vadd.f32 0.0, %v9148
      %v9150 = vpop.f32.mrb[0].mxu0
      %v9151 = vpop.f32.mrb[0].mxu0
      %v9152 = vadd.f32 0.0, %v9151
      %v9153 = vpop.f32.mrb[0].mxu0
      %9154 = vmatprep.mubr.bf16.mxu0 0
      %9155 = vmatmul.mubr.bf16.gmra.mrb[0].mxu0 %v8951
      %v9156 = vpop.f32.mrb[0].mxu0
      %v9157 = vadd.f32 0.0, %v9156
      %v9158 = vpop.f32.mrb[0].mxu0
      %v9159 = vpop.f32.mrb[0].mxu0
      %v9160 = vadd.f32 0.0, %v9159
      %v9161 = vpop.f32.mrb[0].mxu0
      %9162 = vmatprep.mubr.bf16.mxu0 0
      %9163 = vmatmul.mubr.bf16.gmra.mrb[0].mxu0 %v8954
      %v9164 = vpop.f32.mrb[0].mxu0
      %v9165 = vadd.f32 0.0, %v9164
      %v9166 = vpop.f32.mrb[0].mxu0
      %v9167 = vpop.f32.mrb[0].mxu0
      %v9168 = vadd.f32 0.0, %v9167
      %v9169 = vpop.f32.mrb[0].mxu0
      %9170 = vmatprep.mubr.bf16.mxu0 0
      %9171 = vmatmul.mubr.bf16.gmra.mrb[0].mxu0 %v8957
      %v9172 = vpop.f32.mrb[0].mxu0
      %v9173 = vadd.f32 0.0, %v9172
      %v9174 = vpop.f32.mrb[0].mxu0
      %v9175 = vpop.f32.mrb[0].mxu0
      %v9176 = vadd.f32 0.0, %v9175
      %v9177 = vpop.f32.mrb[0].mxu0
      %9178 = vmatprep.mubr.bf16.mxu0 0
      %9179 = vmatmul.mubr.bf16.gmra.mrb[0].mxu0 %v8960
      %v9180 = vpop.f32.mrb[0].mxu0
      %v9181 = vadd.f32 0.0, %v9180
      %v9182 = vpop.f32.mrb[0].mxu0
      %v9183 = vpop.f32.mrb[0].mxu0
      %v9184 = vadd.f32 0.0, %v9183
      %v9185 = vpop.f32.mrb[0].mxu0
      %9186 = vdwg.mxu0
      %v9187 = vadd.f32 %v8753, %v8997
      %v9188 = vadd.f32 %v8754, %v9000
      %v9189 = vadd.f32 %v8755, %v9005
      %v9190 = vadd.f32 %v8756, %v9008
      %v9191 = vadd.f32 %v8757, %v9013
      %v9192 = vadd.f32 %v8758, %v9016
      %v9193 = vadd.f32 %v8759, %v9021
      %v9194 = vadd.f32 %v8760, %v9024
      %v9195 = vadd.f32 %v8761, %v9029
      %v9196 = vadd.f32 %v8762, %v9032
      %v9197 = vadd.f32 %v8763, %v9037
      %v9198 = vadd.f32 %v8764, %v9040
      %v9199 = vadd.f32 %v8765, %v9045
      %v9200 = vadd.f32 %v8766, %v9048
      %v9201 = vadd.f32 %v8767, %v9053
      %v9202 = vadd.f32 %v8768, %v9056
      %v9203 = vadd.f32 %v8769, %v9061
      %v9204 = vadd.f32 %v8770, %v9064
      %v9205 = vadd.f32 %v8771, %v9069
      %v9206 = vadd.f32 %v8772, %v9072
      %v9207 = vadd.f32 %v8773, %v9077
      %v9208 = vadd.f32 %v8774, %v9080
      %v9209 = vadd.f32 %v8775, %v9085
      %v9210 = vadd.f32 %v8776, %v9088
      %v9211 = vadd.f32 %v8777, %v9093
      %v9212 = vadd.f32 %v8778, %v9096
      %v9213 = vadd.f32 %v8779, %v9101
      %v9214 = vadd.f32 %v8780, %v9104
      %v9215 = vadd.f32 %v8781, %v9109
      %v9216 = vadd.f32 %v8782, %v9112
      %v9217 = vadd.f32 %v8783, %v9117
      %v9218 = vadd.f32 %v8784, %v9120
      %v9219 = vadd.f32 %v8785, %v9125
      %v9220 = vadd.f32 %v8786, %v9128
      %v9221 = vadd.f32 %v8787, %v9133
      %v9222 = vadd.f32 %v8788, %v9136
      %v9223 = vadd.f32 %v8789, %v9141
      %v9224 = vadd.f32 %v8790, %v9144
      %v9225 = vadd.f32 %v8791, %v9149
      %v9226 = vadd.f32 %v8792, %v9152
      %v9227 = vadd.f32 %v8793, %v9157
      %v9228 = vadd.f32 %v8794, %v9160
      %v9229 = vadd.f32 %v8795, %v9165
      %v9230 = vadd.f32 %v8796, %v9168
      %v9231 = vadd.f32 %v8797, %v9173
      %v9232 = vadd.f32 %v8798, %v9176
      %v9233 = vadd.f32 %v8799, %v9181
      %v9234 = vadd.f32 %v8800, %v9184
      %v9235 = vld [vmem:[#allocation3 + $0x32] sm:$0xff]
      %v9236 = vld [vmem:[#allocation3 + $0x3a] sm:$0xff]
      %v9237 = vld [vmem:[#allocation3 + $0x42] sm:$0xff]
      %v9238 = vld [vmem:[#allocation3 + $0x4a] sm:$0xff]
      %v9239 = vld [vmem:[#allocation3 + $0x52] sm:$0xff]
      %v9240 = vld [vmem:[#allocation3 + $0x5a] sm:$0xff]
      %v9241 = vld [vmem:[#allocation3 + $0x62] sm:$0xff]
      %v9242 = vld [vmem:[#allocation3 + $0x6a] sm:$0xff]
      %v9243 = vld [vmem:[#allocation3 + $0x72] sm:$0xff]
      %v9244 = vld [vmem:[#allocation3 + $0x7a] sm:$0xff]
      %v9245 = vld [vmem:[#allocation3 + $0x82] sm:$0xff]
      %v9246 = vld [vmem:[#allocation3 + $0x8a] sm:$0xff]
      %v9247 = vld [vmem:[#allocation3 + $0x92] sm:$0xff]
      %v9248 = vld [vmem:[#allocation3 + $0x9a] sm:$0xff]
      %v9249 = vld [vmem:[#allocation3 + $0xa2] sm:$0xff]
      %v9250 = vld [vmem:[#allocation3 + $0xaa] sm:$0xff]
      %v9251 = vld [vmem:[#allocation3 + $0xb2] sm:$0xff]
      %v9252 = vld [vmem:[#allocation3 + $0xba] sm:$0xff]
      %v9253 = vld [vmem:[#allocation3 + $0xc2] sm:$0xff]
      %v9254 = vld [vmem:[#allocation3 + $0xca] sm:$0xff]
      %v9255 = vld [vmem:[#allocation3 + $0xd2] sm:$0xff]
      %v9256 = vld [vmem:[#allocation3 + $0xda] sm:$0xff]
      %v9257 = vld [vmem:[#allocation3 + $0xe2] sm:$0xff]
      %v9258 = vld [vmem:[#allocation3 + $0xea] sm:$0xff]
      %v9259 = vld [vmem:[#allocation3 + $0xf2] sm:$0xff]
      %v9260 = vld [vmem:[#allocation3 + $0xfa] sm:$0xff]
      %v9261 = vld [vmem:[#allocation3 + $0x102] sm:$0xff]
      %v9262 = vld [vmem:[#allocation3 + $0x10a] sm:$0xff]
      %v9263 = vld [vmem:[#allocation3 + $0x112] sm:$0xff]
      %v9264 = vld [vmem:[#allocation3 + $0x11a] sm:$0xff]
      %v9265 = vld [vmem:[#allocation3 + $0x122] sm:$0xff]
      %v9266 = vld [vmem:[#allocation3 + $0x12a] sm:$0xff]
      %v9267 = vld [vmem:[#allocation3 + $0x132] sm:$0xff]
      %v9268 = vld [vmem:[#allocation3 + $0x13a] sm:$0xff]
      %v9269 = vld [vmem:[#allocation3 + $0x142] sm:$0xff]
      %v9270 = vld [vmem:[#allocation3 + $0x14a] sm:$0xff]
      %v9271 = vld [vmem:[#allocation3 + $0x152] sm:$0xff]
      %v9272 = vld [vmem:[#allocation3 + $0x15a] sm:$0xff]
      %v9273 = vld [vmem:[#allocation3 + $0x162] sm:$0xff]
      %v9274 = vld [vmem:[#allocation3 + $0x16a] sm:$0xff]
      %v9275 = vld [vmem:[#allocation3 + $0x172] sm:$0xff]
      %v9276 = vld [vmem:[#allocation3 + $0x17a] sm:$0xff]
      %v9277 = vld [vmem:[#allocation3 + $0x182] sm:$0xff]
      %v9278 = vld [vmem:[#allocation3 + $0x18a] sm:$0xff]
      %v9279 = vld [vmem:[#allocation3 + $0x192] sm:$0xff]
      %v9280 = vld [vmem:[#allocation3 + $0x19a] sm:$0xff]
      %v9281 = vld [vmem:[#allocation3 + $0x1a2] sm:$0xff]
      %v9282 = vld [vmem:[#allocation3 + $0x1aa] sm:$0xff]
      %v9283 = vpack.c.bf16 %v9236, %v9235
      %v9284 = vpack.c.bf16 %v9238, %v9237
      %v9285 = vpack.c.bf16 %v9240, %v9239
      %v9286 = vpack.c.bf16 %v9242, %v9241
      %v9287 = vpack.c.bf16 %v9244, %v9243
      %v9288 = vpack.c.bf16 %v9246, %v9245
      %v9289 = vpack.c.bf16 %v9248, %v9247
      %v9290 = vpack.c.bf16 %v9250, %v9249
      %v9291 = vpack.c.bf16 %v9252, %v9251
      %v9292 = vpack.c.bf16 %v9254, %v9253
      %v9293 = vpack.c.bf16 %v9256, %v9255
      %v9294 = vpack.c.bf16 %v9258, %v9257
      %v9295 = vpack.c.bf16 %v9260, %v9259
      %v9296 = vpack.c.bf16 %v9262, %v9261
      %v9297 = vpack.c.bf16 %v9264, %v9263
      %v9298 = vpack.c.bf16 %v9266, %v9265
      %v9299 = vpack.c.bf16 %v9268, %v9267
      %v9300 = vpack.c.bf16 %v9270, %v9269
      %v9301 = vpack.c.bf16 %v9272, %v9271
      %v9302 = vpack.c.bf16 %v9274, %v9273
      %v9303 = vpack.c.bf16 %v9276, %v9275
      %v9304 = vpack.c.bf16 %v9278, %v9277
      %v9305 = vpack.c.bf16 %v9280, %v9279
      %v9306 = vpack.c.bf16 %v9282, %v9281
      %s9307 = scalar_lea.vmem %s3, 128
      %v9308 = vld [vmem:[%s9307] sm:$0xf]
      %v9309 = vld [vmem:[%s9307 + $0x4] sm:$0xf]
      %v9310 = vld [vmem:[%s9307 + $0x8] sm:$0xf]
      %v9311 = vld [vmem:[%s9307 + $0xc] sm:$0xf]
      %v9316 = vunpack.c.l.b16 %v9308
      %v9317 = vunpack.c.l.b16 %v9309
      %v9318 = vunpack.c.l.b16 %v9310
      %v9319 = vunpack.c.l.b16 %v9311
      %v9320 = vpack.c.b16 %v9317, %v9316
      %v9321 = vpack.c.b16 %v9319, %v9318
      %v9325 = vsel %vm966, %v9283, 0
      %v9328 = vsel %vm966, %v9284, 0
      %v9331 = vsel %vm966, %v9285, 0
      %v9334 = vsel %vm966, %v9286, 0
      %v9337 = vsel %vm966, %v9287, 0
      %v9340 = vsel %vm966, %v9288, 0
      %v9343 = vsel %vm966, %v9289, 0
      %v9346 = vsel %vm966, %v9290, 0
      %v9349 = vsel %vm966, %v9291, 0
      %v9352 = vsel %vm966, %v9292, 0
      %v9355 = vsel %vm966, %v9293, 0
      %v9358 = vsel %vm966, %v9294, 0
      %v9361 = vsel %vm966, %v9295, 0
      %v9364 = vsel %vm966, %v9296, 0
      %v9367 = vsel %vm966, %v9297, 0
      %v9370 = vsel %vm966, %v9298, 0
      %v9373 = vsel %vm966, %v9299, 0
      %v9376 = vsel %vm966, %v9300, 0
      %v9379 = vsel %vm966, %v9301, 0
      %v9382 = vsel %vm966, %v9302, 0
      %v9385 = vsel %vm966, %v9303, 0
      %v9388 = vsel %vm966, %v9304, 0
      %v9391 = vsel %vm966, %v9305, 0
      %v9394 = vsel %vm966, %v9306, 0
      %9396 = vmatprep.subr.bf16.mxu0 0
      %9397 = vmatpush1.bf16.msra.mxu0 %v9320
      %9398 = vmatprep.subr.bf16.mxu0 0
      %9399 = vmatpush1.bf16.msra.mxu0 %v9321
      %9400 = vmatprep.subr.bf16.mxu0 0
      %9401 = vmatpush1.bf16.msra.mxu0 0
      %9402 = vmatprep.subr.bf16.mxu0 0
      %9403 = vmatpush1.bf16.msra.mxu0 0
      %9404 = vmatprep.subr.bf16.mxu0 0
      %9405 = vmatpush1.bf16.msra.mxu0 0
      %9406 = vmatprep.subr.bf16.mxu0 0
      %9407 = vmatpush1.bf16.msra.mxu0 0
      %9408 = vmatprep.subr.bf16.mxu0 0
      %9409 = vmatpush1.bf16.msra.mxu0 0
      %9410 = vmatprep.subr.bf16.mxu0 0
      %9411 = vmatpush1.bf16.msra.mxu0 0
      %9412 = vmatprep.subr.bf16.mxu0 0
      %9413 = vmatpush1.bf16.msra.mxu0 0
      %9414 = vmatprep.subr.bf16.mxu0 0
      %9415 = vmatpush1.bf16.msra.mxu0 0
      %9416 = vmatprep.subr.bf16.mxu0 0
      %9417 = vmatpush1.bf16.msra.mxu0 0
      %9418 = vmatprep.subr.bf16.mxu0 0
      %9419 = vmatpush1.bf16.msra.mxu0 0
      %9420 = vmatprep.subr.bf16.mxu0 0
      %9421 = vmatpush1.bf16.msra.mxu0 0
      %9422 = vmatprep.subr.bf16.mxu0 0
      %9423 = vmatpush1.bf16.msra.mxu0 0
      %9424 = vmatprep.subr.bf16.mxu0 0
      %9425 = vmatpush1.bf16.msra.mxu0 0
      %9426 = vmatprep.subr.bf16.mxu0 0
      %9427 = vmatpush1.bf16.msra.mxu0 0
      %9428 = vmatprep.mubr.bf16.mxu0 0
      %9429 = vmatmul.mubr.bf16.gmra.mrb[0].mxu0 %v9325
      %v9430 = vpop.f32.mrb[0].mxu0
      %v9431 = vadd.f32 0.0, %v9430
      %v9432 = vpop.f32.mrb[0].mxu0
      %v9433 = vpop.f32.mrb[0].mxu0
      %v9434 = vadd.f32 0.0, %v9433
      %v9435 = vpop.f32.mrb[0].mxu0
      %9436 = vmatprep.mubr.bf16.mxu0 0
      %9437 = vmatmul.mubr.bf16.gmra.mrb[0].mxu0 %v9328
      %v9438 = vpop.f32.mrb[0].mxu0
      %v9439 = vadd.f32 0.0, %v9438
      %v9440 = vpop.f32.mrb[0].mxu0
      %v9441 = vpop.f32.mrb[0].mxu0
      %v9442 = vadd.f32 0.0, %v9441
      %v9443 = vpop.f32.mrb[0].mxu0
      %9444 = vmatprep.mubr.bf16.mxu0 0
      %9445 = vmatmul.mubr.bf16.gmra.mrb[0].mxu0 %v9331
      %v9446 = vpop.f32.mrb[0].mxu0
      %v9447 = vadd.f32 0.0, %v9446
      %v9448 = vpop.f32.mrb[0].mxu0
      %v9449 = vpop.f32.mrb[0].mxu0
      %v9450 = vadd.f32 0.0, %v9449
      %v9451 = vpop.f32.mrb[0].mxu0
      %9452 = vmatprep.mubr.bf16.mxu0 0
      %9453 = vmatmul.mubr.bf16.gmra.mrb[0].mxu0 %v9334
      %v9454 = vpop.f32.mrb[0].mxu0
      %v9455 = vadd.f32 0.0, %v9454
      %v9456 = vpop.f32.mrb[0].mxu0
      %v9457 = vpop.f32.mrb[0].mxu0
      %v9458 = vadd.f32 0.0, %v9457
      %v9459 = vpop.f32.mrb[0].mxu0
      %9460 = vmatprep.mubr.bf16.mxu0 0
      %9461 = vmatmul.mubr.bf16.gmra.mrb[0].mxu0 %v9337
      %v9462 = vpop.f32.mrb[0].mxu0
      %v9463 = vadd.f32 0.0, %v9462
      %v9464 = vpop.f32.mrb[0].mxu0
      %v9465 = vpop.f32.mrb[0].mxu0
      %v9466 = vadd.f32 0.0, %v9465
      %v9467 = vpop.f32.mrb[0].mxu0
      %9468 = vmatprep.mubr.bf16.mxu0 0
      %9469 = vmatmul.mubr.bf16.gmra.mrb[0].mxu0 %v9340
      %v9470 = vpop.f32.mrb[0].mxu0
      %v9471 = vadd.f32 0.0, %v9470
      %v9472 = vpop.f32.mrb[0].mxu0
      %v9473 = vpop.f32.mrb[0].mxu0
      %v9474 = vadd.f32 0.0, %v9473
      %v9475 = vpop.f32.mrb[0].mxu0
      %9476 = vmatprep.mubr.bf16.mxu0 0
      %9477 = vmatmul.mubr.bf16.gmra.mrb[0].mxu0 %v9343
      %v9478 = vpop.f32.mrb[0].mxu0
      %v9479 = vadd.f32 0.0, %v9478
      %v9480 = vpop.f32.mrb[0].mxu0
      %v9481 = vpop.f32.mrb[0].mxu0
      %v9482 = vadd.f32 0.0, %v9481
      %v9483 = vpop.f32.mrb[0].mxu0
      %9484 = vmatprep.mubr.bf16.mxu0 0
      %9485 = vmatmul.mubr.bf16.gmra.mrb[0].mxu0 %v9346
      %v9486 = vpop.f32.mrb[0].mxu0
      %v9487 = vadd.f32 0.0, %v9486
      %v9488 = vpop.f32.mrb[0].mxu0
      %v9489 = vpop.f32.mrb[0].mxu0
      %v9490 = vadd.f32 0.0, %v9489
      %v9491 = vpop.f32.mrb[0].mxu0
      %9492 = vmatprep.mubr.bf16.mxu0 0
      %9493 = vmatmul.mubr.bf16.gmra.mrb[0].mxu0 %v9349
      %v9494 = vpop.f32.mrb[0].mxu0
      %v9495 = vadd.f32 0.0, %v9494
      %v9496 = vpop.f32.mrb[0].mxu0
      %v9497 = vpop.f32.mrb[0].mxu0
      %v9498 = vadd.f32 0.0, %v9497
      %v9499 = vpop.f32.mrb[0].mxu0
      %9500 = vmatprep.mubr.bf16.mxu0 0
      %9501 = vmatmul.mubr.bf16.gmra.mrb[0].mxu0 %v9352
      %v9502 = vpop.f32.mrb[0].mxu0
      %v9503 = vadd.f32 0.0, %v9502
      %v9504 = vpop.f32.mrb[0].mxu0
      %v9505 = vpop.f32.mrb[0].mxu0
      %v9506 = vadd.f32 0.0, %v9505
      %v9507 = vpop.f32.mrb[0].mxu0
      %9508 = vmatprep.mubr.bf16.mxu0 0
      %9509 = vmatmul.mubr.bf16.gmra.mrb[0].mxu0 %v9355
      %v9510 = vpop.f32.mrb[0].mxu0
      %v9511 = vadd.f32 0.0, %v9510
      %v9512 = vpop.f32.mrb[0].mxu0
      %v9513 = vpop.f32.mrb[0].mxu0
      %v9514 = vadd.f32 0.0, %v9513
      %v9515 = vpop.f32.mrb[0].mxu0
      %9516 = vmatprep.mubr.bf16.mxu0 0
      %9517 = vmatmul.mubr.bf16.gmra.mrb[0].mxu0 %v9358
      %v9518 = vpop.f32.mrb[0].mxu0
      %v9519 = vadd.f32 0.0, %v9518
      %v9520 = vpop.f32.mrb[0].mxu0
      %v9521 = vpop.f32.mrb[0].mxu0
      %v9522 = vadd.f32 0.0, %v9521
      %v9523 = vpop.f32.mrb[0].mxu0
      %9524 = vmatprep.mubr.bf16.mxu0 0
      %9525 = vmatmul.mubr.bf16.gmra.mrb[0].mxu0 %v9361
      %v9526 = vpop.f32.mrb[0].mxu0
      %v9527 = vadd.f32 0.0, %v9526
      %v9528 = vpop.f32.mrb[0].mxu0
      %v9529 = vpop.f32.mrb[0].mxu0
      %v9530 = vadd.f32 0.0, %v9529
      %v9531 = vpop.f32.mrb[0].mxu0
      %9532 = vmatprep.mubr.bf16.mxu0 0
      %9533 = vmatmul.mubr.bf16.gmra.mrb[0].mxu0 %v9364
      %v9534 = vpop.f32.mrb[0].mxu0
      %v9535 = vadd.f32 0.0, %v9534
      %v9536 = vpop.f32.mrb[0].mxu0
      %v9537 = vpop.f32.mrb[0].mxu0
      %v9538 = vadd.f32 0.0, %v9537
      %v9539 = vpop.f32.mrb[0].mxu0
      %9540 = vmatprep.mubr.bf16.mxu0 0
      %9541 = vmatmul.mubr.bf16.gmra.mrb[0].mxu0 %v9367
      %v9542 = vpop.f32.mrb[0].mxu0
      %v9543 = vadd.f32 0.0, %v9542
      %v9544 = vpop.f32.mrb[0].mxu0
      %v9545 = vpop.f32.mrb[0].mxu0
      %v9546 = vadd.f32 0.0, %v9545
      %v9547 = vpop.f32.mrb[0].mxu0
      %9548 = vmatprep.mubr.bf16.mxu0 0
      %9549 = vmatmul.mubr.bf16.gmra.mrb[0].mxu0 %v9370
      %v9550 = vpop.f32.mrb[0].mxu0
      %v9551 = vadd.f32 0.0, %v9550
      %v9552 = vpop.f32.mrb[0].mxu0
      %v9553 = vpop.f32.mrb[0].mxu0
      %v9554 = vadd.f32 0.0, %v9553
      %v9555 = vpop.f32.mrb[0].mxu0
      %9556 = vmatprep.mubr.bf16.mxu0 0
      %9557 = vmatmul.mubr.bf16.gmra.mrb[0].mxu0 %v9373
      %v9558 = vpop.f32.mrb[0].mxu0
      %v9559 = vadd.f32 0.0, %v9558
      %v9560 = vpop.f32.mrb[0].mxu0
      %v9561 = vpop.f32.mrb[0].mxu0
      %v9562 = vadd.f32 0.0, %v9561
      %v9563 = vpop.f32.mrb[0].mxu0
      %9564 = vmatprep.mubr.bf16.mxu0 0
      %9565 = vmatmul.mubr.bf16.gmra.mrb[0].mxu0 %v9376
      %v9566 = vpop.f32.mrb[0].mxu0
      %v9567 = vadd.f32 0.0, %v9566
      %v9568 = vpop.f32.mrb[0].mxu0
      %v9569 = vpop.f32.mrb[0].mxu0
      %v9570 = vadd.f32 0.0, %v9569
      %v9571 = vpop.f32.mrb[0].mxu0
      %9572 = vmatprep.mubr.bf16.mxu0 0
      %9573 = vmatmul.mubr.bf16.gmra.mrb[0].mxu0 %v9379
      %v9574 = vpop.f32.mrb[0].mxu0
      %v9575 = vadd.f32 0.0, %v9574
      %v9576 = vpop.f32.mrb[0].mxu0
      %v9577 = vpop.f32.mrb[0].mxu0
      %v9578 = vadd.f32 0.0, %v9577
      %v9579 = vpop.f32.mrb[0].mxu0
      %9580 = vmatprep.mubr.bf16.mxu0 0
      %9581 = vmatmul.mubr.bf16.gmra.mrb[0].mxu0 %v9382
      %v9582 = vpop.f32.mrb[0].mxu0
      %v9583 = vadd.f32 0.0, %v9582
      %v9584 = vpop.f32.mrb[0].mxu0
      %v9585 = vpop.f32.mrb[0].mxu0
      %v9586 = vadd.f32 0.0, %v9585
      %v9587 = vpop.f32.mrb[0].mxu0
      %9588 = vmatprep.mubr.bf16.mxu0 0
      %9589 = vmatmul.mubr.bf16.gmra.mrb[0].mxu0 %v9385
      %v9590 = vpop.f32.mrb[0].mxu0
      %v9591 = vadd.f32 0.0, %v9590
      %v9592 = vpop.f32.mrb[0].mxu0
      %v9593 = vpop.f32.mrb[0].mxu0
      %v9594 = vadd.f32 0.0, %v9593
      %v9595 = vpop.f32.mrb[0].mxu0
      %9596 = vmatprep.mubr.bf16.mxu0 0
      %9597 = vmatmul.mubr.bf16.gmra.mrb[0].mxu0 %v9388
      %v9598 = vpop.f32.mrb[0].mxu0
      %v9599 = vadd.f32 0.0, %v9598
      %v9600 = vpop.f32.mrb[0].mxu0
      %v9601 = vpop.f32.mrb[0].mxu0
      %v9602 = vadd.f32 0.0, %v9601
      %v9603 = vpop.f32.mrb[0].mxu0
      %9604 = vmatprep.mubr.bf16.mxu0 0
      %9605 = vmatmul.mubr.bf16.gmra.mrb[0].mxu0 %v9391
      %v9606 = vpop.f32.mrb[0].mxu0
      %v9607 = vadd.f32 0.0, %v9606
      %v9608 = vpop.f32.mrb[0].mxu0
      %v9609 = vpop.f32.mrb[0].mxu0
      %v9610 = vadd.f32 0.0, %v9609
      %v9611 = vpop.f32.mrb[0].mxu0
      %9612 = vmatprep.mubr.bf16.mxu0 0
      %9613 = vmatmul.mubr.bf16.gmra.mrb[0].mxu0 %v9394
      %v9614 = vpop.f32.mrb[0].mxu0
      %v9615 = vadd.f32 0.0, %v9614
      %v9616 = vpop.f32.mrb[0].mxu0
      %v9617 = vpop.f32.mrb[0].mxu0
      %v9618 = vadd.f32 0.0, %v9617
      %v9619 = vpop.f32.mrb[0].mxu0
      %9620 = vdwg.mxu0
      %v9621 = vadd.f32 %v9187, %v9431
      %v9622 = vadd.f32 %v9188, %v9434
      %v9623 = vadd.f32 %v9189, %v9439
      %v9624 = vadd.f32 %v9190, %v9442
      %v9625 = vadd.f32 %v9191, %v9447
      %v9626 = vadd.f32 %v9192, %v9450
      %v9627 = vadd.f32 %v9193, %v9455
      %v9628 = vadd.f32 %v9194, %v9458
      %v9629 = vadd.f32 %v9195, %v9463
      %v9630 = vadd.f32 %v9196, %v9466
      %v9631 = vadd.f32 %v9197, %v9471
      %v9632 = vadd.f32 %v9198, %v9474
      %v9633 = vadd.f32 %v9199, %v9479
      %v9634 = vadd.f32 %v9200, %v9482
      %v9635 = vadd.f32 %v9201, %v9487
      %v9636 = vadd.f32 %v9202, %v9490
      %v9637 = vadd.f32 %v9203, %v9495
      %v9638 = vadd.f32 %v9204, %v9498
      %v9639 = vadd.f32 %v9205, %v9503
      %v9640 = vadd.f32 %v9206, %v9506
      %v9641 = vadd.f32 %v9207, %v9511
      %v9642 = vadd.f32 %v9208, %v9514
      %v9643 = vadd.f32 %v9209, %v9519
      %v9644 = vadd.f32 %v9210, %v9522
      %v9645 = vadd.f32 %v9211, %v9527
      %v9646 = vadd.f32 %v9212, %v9530
      %v9647 = vadd.f32 %v9213, %v9535
      %v9648 = vadd.f32 %v9214, %v9538
      %v9649 = vadd.f32 %v9215, %v9543
      %v9650 = vadd.f32 %v9216, %v9546
      %v9651 = vadd.f32 %v9217, %v9551
      %v9652 = vadd.f32 %v9218, %v9554
      %v9653 = vadd.f32 %v9219, %v9559
      %v9654 = vadd.f32 %v9220, %v9562
      %v9655 = vadd.f32 %v9221, %v9567
      %v9656 = vadd.f32 %v9222, %v9570
      %v9657 = vadd.f32 %v9223, %v9575
      %v9658 = vadd.f32 %v9224, %v9578
      %v9659 = vadd.f32 %v9225, %v9583
      %v9660 = vadd.f32 %v9226, %v9586
      %v9661 = vadd.f32 %v9227, %v9591
      %v9662 = vadd.f32 %v9228, %v9594
      %v9663 = vadd.f32 %v9229, %v9599
      %v9664 = vadd.f32 %v9230, %v9602
      %v9665 = vadd.f32 %v9231, %v9607
      %v9666 = vadd.f32 %v9232, %v9610
      %v9667 = vadd.f32 %v9233, %v9615
      %v9668 = vadd.f32 %v9234, %v9618
      %v9669 = vld [vmem:[%s266 + $0x32] sm:$0xff]
      %v9670 = vld [vmem:[%s266 + $0x3a] sm:$0xff]
      %v9671 = vld [vmem:[%s266 + $0x42] sm:$0xff]
      %v9672 = vld [vmem:[%s266 + $0x4a] sm:$0xff]
      %v9673 = vld [vmem:[%s266 + $0x52] sm:$0xff]
      %v9674 = vld [vmem:[%s266 + $0x5a] sm:$0xff]
      %v9675 = vld [vmem:[%s266 + $0x62] sm:$0xff]
      %v9676 = vld [vmem:[%s266 + $0x6a] sm:$0xff]
      %v9677 = vld [vmem:[%s266 + $0x72] sm:$0xff]
      %v9678 = vld [vmem:[%s266 + $0x7a] sm:$0xff]
      %v9679 = vld [vmem:[%s266 + $0x82] sm:$0xff]
      %v9680 = vld [vmem:[%s266 + $0x8a] sm:$0xff]
      %v9681 = vld [vmem:[%s266 + $0x92] sm:$0xff]
      %v9682 = vld [vmem:[%s266 + $0x9a] sm:$0xff]
      %v9683 = vld [vmem:[%s266 + $0xa2] sm:$0xff]
      %v9684 = vld [vmem:[%s266 + $0xaa] sm:$0xff]
      %v9685 = vld [vmem:[%s266 + $0xb2] sm:$0xff]
      %v9686 = vld [vmem:[%s266 + $0xba] sm:$0xff]
      %v9687 = vld [vmem:[%s266 + $0xc2] sm:$0xff]
      %v9688 = vld [vmem:[%s266 + $0xca] sm:$0xff]
      %v9689 = vld [vmem:[%s266 + $0xd2] sm:$0xff]
      %v9690 = vld [vmem:[%s266 + $0xda] sm:$0xff]
      %v9691 = vld [vmem:[%s266 + $0xe2] sm:$0xff]
      %v9692 = vld [vmem:[%s266 + $0xea] sm:$0xff]
      %v9693 = vld [vmem:[%s266 + $0xf2] sm:$0xff]
      %v9694 = vld [vmem:[%s266 + $0xfa] sm:$0xff]
      %v9695 = vld [vmem:[%s266 + $0x102] sm:$0xff]
      %v9696 = vld [vmem:[%s266 + $0x10a] sm:$0xff]
      %v9697 = vld [vmem:[%s266 + $0x112] sm:$0xff]
      %v9698 = vld [vmem:[%s266 + $0x11a] sm:$0xff]
      %v9699 = vld [vmem:[%s266 + $0x122] sm:$0xff]
      %v9700 = vld [vmem:[%s266 + $0x12a] sm:$0xff]
      %v9701 = vld [vmem:[%s266 + $0x132] sm:$0xff]
      %v9702 = vld [vmem:[%s266 + $0x13a] sm:$0xff]
      %v9703 = vld [vmem:[%s266 + $0x142] sm:$0xff]
      %v9704 = vld [vmem:[%s266 + $0x14a] sm:$0xff]
      %v9705 = vld [vmem:[%s266 + $0x152] sm:$0xff]
      %v9706 = vld [vmem:[%s266 + $0x15a] sm:$0xff]
      %v9707 = vld [vmem:[%s266 + $0x162] sm:$0xff]
      %v9708 = vld [vmem:[%s266 + $0x16a] sm:$0xff]
      %v9709 = vld [vmem:[%s266 + $0x172] sm:$0xff]
      %v9710 = vld [vmem:[%s266 + $0x17a] sm:$0xff]
      %v9711 = vld [vmem:[%s266 + $0x182] sm:$0xff]
      %v9712 = vld [vmem:[%s266 + $0x18a] sm:$0xff]
      %v9713 = vld [vmem:[%s266 + $0x192] sm:$0xff]
      %v9714 = vld [vmem:[%s266 + $0x19a] sm:$0xff]
      %v9715 = vld [vmem:[%s266 + $0x1a2] sm:$0xff]
      %v9716 = vld [vmem:[%s266 + $0x1aa] sm:$0xff]
      %v9717 = vlaneseq
      %v9718 = vshrl.u32 %v9717, 7
      %v9719 = vsub.s32 0, %v9718
      %v9720 = vrot.slane %v286, %v9719
      %v9721 = vadd.f32 %v9621, %v9720
      %v9722 = vadd.f32 %v9622, %v9720
      %v9723 = vadd.f32 %v9623, %v9720
      %v9724 = vadd.f32 %v9624, %v9720
      %v9725 = vadd.f32 %v9625, %v9720
      %v9726 = vadd.f32 %v9626, %v9720
      %v9727 = vadd.f32 %v9627, %v9720
      %v9728 = vadd.f32 %v9628, %v9720
      %v9729 = vadd.f32 %v9629, %v9720
      %v9730 = vadd.f32 %v9630, %v9720
      %v9731 = vadd.f32 %v9631, %v9720
      %v9732 = vadd.f32 %v9632, %v9720
      %v9733 = vadd.f32 %v9633, %v9720
      %v9734 = vadd.f32 %v9634, %v9720
      %v9735 = vadd.f32 %v9635, %v9720
      %v9736 = vadd.f32 %v9636, %v9720
      %v9737 = vadd.f32 %v9637, %v9720
      %v9738 = vadd.f32 %v9638, %v9720
      %v9739 = vadd.f32 %v9639, %v9720
      %v9740 = vadd.f32 %v9640, %v9720
      %v9741 = vadd.f32 %v9641, %v9720
      %v9742 = vadd.f32 %v9642, %v9720
      %v9743 = vadd.f32 %v9643, %v9720
      %v9744 = vadd.f32 %v9644, %v9720
      %v9745 = vadd.f32 %v9645, %v9720
      %v9746 = vadd.f32 %v9646, %v9720
      %v9747 = vadd.f32 %v9647, %v9720
      %v9748 = vadd.f32 %v9648, %v9720
      %v9749 = vadd.f32 %v9649, %v9720
      %v9750 = vadd.f32 %v9650, %v9720
      %v9751 = vadd.f32 %v9651, %v9720
      %v9752 = vadd.f32 %v9652, %v9720
      %v9753 = vadd.f32 %v9653, %v9720
      %v9754 = vadd.f32 %v9654, %v9720
      %v9755 = vadd.f32 %v9655, %v9720
      %v9756 = vadd.f32 %v9656, %v9720
      %v9757 = vadd.f32 %v9657, %v9720
      %v9758 = vadd.f32 %v9658, %v9720
      %v9759 = vadd.f32 %v9659, %v9720
      %v9760 = vadd.f32 %v9660, %v9720
      %v9761 = vadd.f32 %v9661, %v9720
      %v9762 = vadd.f32 %v9662, %v9720
      %v9763 = vadd.f32 %v9663, %v9720
      %v9764 = vadd.f32 %v9664, %v9720
      %v9765 = vadd.f32 %v9665, %v9720
      %v9766 = vadd.f32 %v9666, %v9720
      %v9767 = vadd.f32 %v9667, %v9720
      %v9768 = vadd.f32 %v9668, %v9720
      %v9769 = vadd.f32 %v9721, %v9669
      %v9770 = vadd.f32 %v9722, %v9670
      %v9771 = vadd.f32 %v9723, %v9671
      %v9772 = vadd.f32 %v9724, %v9672
      %v9773 = vadd.f32 %v9725, %v9673
      %v9774 = vadd.f32 %v9726, %v9674
      %v9775 = vadd.f32 %v9727, %v9675
      %v9776 = vadd.f32 %v9728, %v9676
      %v9777 = vadd.f32 %v9729, %v9677
      %v9778 = vadd.f32 %v9730, %v9678
      %v9779 = vadd.f32 %v9731, %v9679
      %v9780 = vadd.f32 %v9732, %v9680
      %v9781 = vadd.f32 %v9733, %v9681
      %v9782 = vadd.f32 %v9734, %v9682
      %v9783 = vadd.f32 %v9735, %v9683
      %v9784 = vadd.f32 %v9736, %v9684
      %v9785 = vadd.f32 %v9737, %v9685
      %v9786 = vadd.f32 %v9738, %v9686
      %v9787 = vadd.f32 %v9739, %v9687
      %v9788 = vadd.f32 %v9740, %v9688
      %v9789 = vadd.f32 %v9741, %v9689
      %v9790 = vadd.f32 %v9742, %v9690
      %v9791 = vadd.f32 %v9743, %v9691
      %v9792 = vadd.f32 %v9744, %v9692
      %v9793 = vadd.f32 %v9745, %v9693
      %v9794 = vadd.f32 %v9746, %v9694
      %v9795 = vadd.f32 %v9747, %v9695
      %v9796 = vadd.f32 %v9748, %v9696
      %v9797 = vadd.f32 %v9749, %v9697
      %v9798 = vadd.f32 %v9750, %v9698
      %v9799 = vadd.f32 %v9751, %v9699
      %v9800 = vadd.f32 %v9752, %v9700
      %v9801 = vadd.f32 %v9753, %v9701
      %v9802 = vadd.f32 %v9754, %v9702
      %v9803 = vadd.f32 %v9755, %v9703
      %v9804 = vadd.f32 %v9756, %v9704
      %v9805 = vadd.f32 %v9757, %v9705
      %v9806 = vadd.f32 %v9758, %v9706
      %v9807 = vadd.f32 %v9759, %v9707
      %v9808 = vadd.f32 %v9760, %v9708
      %v9809 = vadd.f32 %v9761, %v9709
      %v9810 = vadd.f32 %v9762, %v9710
      %v9811 = vadd.f32 %v9763, %v9711
      %v9812 = vadd.f32 %v9764, %v9712
      %v9813 = vadd.f32 %v9765, %v9713
      %v9814 = vadd.f32 %v9766, %v9714
      %v9815 = vadd.f32 %v9767, %v9715
      %v9816 = vadd.f32 %v9768, %v9716
      %9817 = vst.msk [vmem:[%s280] sm:$0xff] %vm966, %v9769
      %9818 = vst.msk [vmem:[%s280 + $0x8] sm:$0xff] %vm966, %v9770
      %9819 = vst.msk [vmem:[%s280 + $0x10] sm:$0xff] %vm966, %v9771
      %9820 = vst.msk [vmem:[%s280 + $0x18] sm:$0xff] %vm966, %v9772
      %9821 = vst.msk [vmem:[%s280 + $0x20] sm:$0xff] %vm966, %v9773
      %9822 = vst.msk [vmem:[%s280 + $0x28] sm:$0xff] %vm966, %v9774
      %9823 = vst.msk [vmem:[%s280 + $0x30] sm:$0xff] %vm966, %v9775
      %9824 = vst.msk [vmem:[%s280 + $0x38] sm:$0xff] %vm966, %v9776
      %9825 = vst.msk [vmem:[%s280 + $0x40] sm:$0xff] %vm966, %v9777
      %9826 = vst.msk [vmem:[%s280 + $0x48] sm:$0xff] %vm966, %v9778
      %9827 = vst.msk [vmem:[%s280 + $0x50] sm:$0xff] %vm966, %v9779
      %9828 = vst.msk [vmem:[%s280 + $0x58] sm:$0xff] %vm966, %v9780
      %9829 = vst.msk [vmem:[%s280 + $0x60] sm:$0xff] %vm966, %v9781
      %9830 = vst.msk [vmem:[%s280 + $0x68] sm:$0xff] %vm966, %v9782
      %9831 = vst.msk [vmem:[%s280 + $0x70] sm:$0xff] %vm966, %v9783
      %9832 = vst.msk [vmem:[%s280 + $0x78] sm:$0xff] %vm966, %v9784
      %9833 = vst.msk [vmem:[%s280 + $0x80] sm:$0xff] %vm966, %v9785
      %9834 = vst.msk [vmem:[%s280 + $0x88] sm:$0xff] %vm966, %v9786
      %9835 = vst.msk [vmem:[%s280 + $0x90] sm:$0xff] %vm966, %v9787
      %9836 = vst.msk [vmem:[%s280 + $0x98] sm:$0xff] %vm966, %v9788
      %9837 = vst.msk [vmem:[%s280 + $0xa0] sm:$0xff] %vm966, %v9789
      %9838 = vst.msk [vmem:[%s280 + $0xa8] sm:$0xff] %vm966, %v9790
      %9839 = vst.msk [vmem:[%s280 + $0xb0] sm:$0xff] %vm966, %v9791
      %9840 = vst.msk [vmem:[%s280 + $0xb8] sm:$0xff] %vm966, %v9792
      %9841 = vst.msk [vmem:[%s280 + $0xc0] sm:$0xff] %vm966, %v9793
      %9842 = vst.msk [vmem:[%s280 + $0xc8] sm:$0xff] %vm966, %v9794
      %9843 = vst.msk [vmem:[%s280 + $0xd0] sm:$0xff] %vm966, %v9795
      %9844 = vst.msk [vmem:[%s280 + $0xd8] sm:$0xff] %vm966, %v9796
      %9845 = vst.msk [vmem:[%s280 + $0xe0] sm:$0xff] %vm966, %v9797
      %9846 = vst.msk [vmem:[%s280 + $0xe8] sm:$0xff] %vm966, %v9798
      %9847 = vst.msk [vmem:[%s280 + $0xf0] sm:$0xff] %vm966, %v9799
      %9848 = vst.msk [vmem:[%s280 + $0xf8] sm:$0xff] %vm966, %v9800
      %9849 = vst.msk [vmem:[%s280 + $0x100] sm:$0xff] %vm966, %v9801
      %9850 = vst.msk [vmem:[%s280 + $0x108] sm:$0xff] %vm966, %v9802
      %9851 = vst.msk [vmem:[%s280 + $0x110] sm:$0xff] %vm966, %v9803
      %9852 = vst.msk [vmem:[%s280 + $0x118] sm:$0xff] %vm966, %v9804
      %9853 = vst.msk [vmem:[%s280 + $0x120] sm:$0xff] %vm966, %v9805
      %9854 = vst.msk [vmem:[%s280 + $0x128] sm:$0xff] %vm966, %v9806
      %9855 = vst.msk [vmem:[%s280 + $0x130] sm:$0xff] %vm966, %v9807
      %9856 = vst.msk [vmem:[%s280 + $0x138] sm:$0xff] %vm966, %v9808
      %9857 = vst.msk [vmem:[%s280 + $0x140] sm:$0xff] %vm966, %v9809
      %9858 = vst.msk [vmem:[%s280 + $0x148] sm:$0xff] %vm966, %v9810
      %9859 = vst.msk [vmem:[%s280 + $0x150] sm:$0xff] %vm966, %v9811
      %9860 = vst.msk [vmem:[%s280 + $0x158] sm:$0xff] %vm966, %v9812
      %9861 = vst.msk [vmem:[%s280 + $0x160] sm:$0xff] %vm966, %v9813
      %9862 = vst.msk [vmem:[%s280 + $0x168] sm:$0xff] %vm966, %v9814
      %9863 = vst.msk [vmem:[%s280 + $0x170] sm:$0xff] %vm966, %v9815
      %9864 = vst.msk [vmem:[%s280 + $0x178] sm:$0xff] %vm966, %v9816
      %p9865 = scmp.lt.s32.totalorder %s20, 1
      %s9866 = scalar_select %p9865, %s20, 1
      %p9867 = scmp.lt.s32.totalorder %s21, 0
      %s9868 = scalar_select %p9867, %s21, 0
      %s9869 = smul.addr %s9868, 48
      %s9870 = smul.addr %s9866, 48
      %s9871 = sadd.s32 %s9869, %s9870
      %s9872 = smul.addr %s9871, 8
      %s9873 = scalar_lea.vmem %s5, %s9872
      // Predicated region
      $region41: #{basic_ds_block2_forward.1} parent=39 // pred_check
        %p9874 = pneg %p165
      $region42: #{basic_ds_block2_forward.1} parent=39 // pred_check_branch
        %9876 = sbr.rel (%p9874) target = $region44
      $region43: #{basic_ds_block2_forward.1} parent=39 // pred_region
        _
      $region44: #{basic_ds_block2_forward.1} parent=39 // pred_fallthru
        _
    $region40: #{basic_ds_block2_forward.1} parent=5 // pred_fallthru
      _
    %p9877 = scmp.le.s32.totalorder 2, %s11
    // Predicated region
    $region45: #{basic_ds_block2_forward.1} parent=5 // pred_check
      %p9878 = pneg %p9877
    $region46: #{basic_ds_block2_forward.1} parent=5 // pred_check_branch
      %9880 = sbr.rel (%p9878) target = $region48
    $region47: #{basic_ds_block2_forward.1} parent=5 // pred_region
      %s9881 = ssub.s32 %s11, 2
      // Predicated region
      $region49: #{basic_ds_block2_forward.1} parent=47 // pred_check
        %p9882 = pneg %p171
      $region50: #{basic_ds_block2_forward.1} parent=47 // pred_check_branch
        %9884 = sbr.rel (%p9882) target = $region52
      $region51: #{basic_ds_block2_forward.1} parent=47 // pred_region
        %p9885 = scmp.lt.s32.totalorder %s22, 1
        %s9886 = scalar_select %p9885, %s22, 1
        %p9887 = scmp.lt.s32.totalorder %s23, 0
        %s9888 = scalar_select %p9887, %s23, 0
        %s9889 = smul.addr %s9888, 48
        %s9890 = smul.addr %s9886, 48
        %s9891 = sadd.s32 %s9889, %s9890
        %s9892 = smul.addr %s9891, 8
        %s9893 = scalar_lea.vmem %s5, %s9892
      $region52: #{basic_ds_block2_forward.1} parent=47 // pred_fallthru
        _
    $region48: #{basic_ds_block2_forward.1} parent=5 // pred_fallthru
      _
  $region6: #{basic_ds_block2_forward.1} parent=0 // loop_footer
    %s15 = sadd.s32 1, %s11
  $region7: #{basic_ds_block2_forward.1} parent=0 // loop_footer_branch
    %10 = sbr.rel target = $region3
  $region8: #{basic_ds_block2_forward.1} parent=0 // loop_exit
    _

</llo_original>
